<compile_context>
chip_gen: v7x
topology: tpu7x:2x2x1
jax: 0.10.0
libtpu: 0.0.40
codegen_flags: <defaults>
</compile_context>

<pallas_src>
import functools

import jax
import jax.numpy as jnp
from jax.experimental import pallas as pl
from jax.experimental.pallas import tpu as pltpu

VOCAB = 50   # vocab_size
EMB = 32     # embedding_dim
HID = 500    # LSTM hidden size (fixed by the module)
FC0 = 300    # fc0 output dim (fixed by the module)
B = 2        # batch
S = 8        # sequence length

# Lane/sublane-aligned padded dims
HP = 512       # 500 -> 512  (gate slices land on vreg lane boundaries)
FC0P = 384     # 300 -> 384
VOCABP = 128   # 50  -> 128  (lane-dense logits store)
BP = 8         # batch 2 -> 8 (one full sublane tile)


# ---------------------------------------------------------------------------
# Fused Pallas kernel: full LSTM time loop + FC head in one invocation
# ---------------------------------------------------------------------------
def _fused_lstm_head_kernel(x_ref, h0_ref, c0_ref, wih_ref, b_ref,
                            b0_ref, b1_ref,
                            whh_hbm, w0_hbm, w1_hbm,
                            h_out_ref, c_out_ref, logits_ref,
                            whh_buf, w0_buf, w1_buf, dma_sem,
                            *, seq_len, batch, hp):
    # Kick off the big weight copies immediately; they overlap the hoisted
    # input-path matmul below (and the first LSTM steps for W0/W1).
    cp_whh = pltpu.make_async_copy(whh_hbm, whh_buf, dma_sem.at[0])
    cp_w0 = pltpu.make_async_copy(w0_hbm, w0_buf, dma_sem.at[1])
    cp_w1 = pltpu.make_async_copy(w1_hbm, w1_buf, dma_sem.at[2])
    cp_whh.start()
    cp_w0.start()
    cp_w1.start()

    # Input-path matmul hoisted out of the recurrence (independent of h):
    # (S*BP, E) @ (E, 4*HP) + bias, computed once.
    gates_x = (jnp.dot(x_ref[...], wih_ref[...],
                       preferred_element_type=jnp.float32) + b_ref[...])

    h = h0_ref[...]          # (BP, HP) f32
    c = c0_ref[...]          # (BP, HP) f32

    cp_whh.wait()            # W_hh needed from here on

    # Statically unrolled time loop; only h @ W_hh stays on the serial chain.
    # Per-gate dots so gate-k EUP work overlaps gate-(k+1) MXU work.
    for t in range(seq_len):
        gx = gates_x[t * batch:(t + 1) * batch, :]      # (BP, 4*HP), tile-aligned
        h_b = h.astype(jnp.bfloat16)

        def gate(k):
            return gx[:, k * hp:(k + 1) * hp] + jnp.dot(
                h_b, whh_buf[:, k * hp:(k + 1) * hp],
                preferred_element_type=jnp.float32)

        i_g = jax.nn.sigmoid(gate(0))
        f_g = jax.nn.sigmoid(gate(1))
        g_g = jnp.tanh(gate(2))
        o_g = jax.nn.sigmoid(gate(3))
        c = f_g * c + i_g * g_g
        h = o_g * jnp.tanh(c)

    # Write final state once (no per-step stores).
    h_out_ref[...] = h
    c_out_ref[...] = c

    # Fused head: logits = sigmoid(h @ W0 + b0) @ W1 + b1
    cp_w0.wait()
    a = jax.nn.sigmoid(
        jnp.dot(h.astype(jnp.bfloat16), w0_buf[...],
                preferred_element_type=jnp.float32) + b0_ref[...])
    cp_w1.wait()
    logits_ref[...] = (jnp.dot(a.astype(jnp.bfloat16), w1_buf[...],
                               preferred_element_type=jnp.float32) + b1_ref[...])


def fused_forward(x_flat, h0p, c0p, params):
    """x_flat: (S*BP, E) bf16 time-major flattened embeddings; h0p/c0p: (BP, HP) f32."""
    bp = h0p.shape[0]
    s_ = x_flat.shape[0] // bp
    kernel = functools.partial(_fused_lstm_head_kernel,
                               seq_len=s_, batch=bp, hp=HP)
    vmem = pl.BlockSpec(memory_space=pltpu.MemorySpace.VMEM)
    hbm = pl.BlockSpec(memory_space=pl.ANY)
    return pl.pallas_call(
        kernel,
        out_shape=(jax.ShapeDtypeStruct((bp, HP), jnp.float32),
                   jax.ShapeDtypeStruct((bp, HP), jnp.float32),
                   jax.ShapeDtypeStruct((bp, VOCABP), jnp.float32)),
        in_specs=[vmem, vmem, vmem, vmem, vmem, vmem, vmem,   # x, h0, c0, Wih, b, b0, b1
                  hbm, hbm, hbm],                             # Whh, W0, W1 (manual DMA)
        out_specs=(vmem, vmem, vmem),
        scratch_shapes=[
            pltpu.VMEM((HP, 4 * HP), jnp.bfloat16),      # W_hh buffer
            pltpu.VMEM((HP, FC0P), jnp.bfloat16),        # W_fc0 buffer
            pltpu.VMEM((FC0P, VOCABP), jnp.bfloat16),    # W_fc1 buffer
            pltpu.SemaphoreType.DMA((3,)),
        ],
        compiler_params=pltpu.CompilerParams(vmem_limit_bytes=32 * 1024 * 1024),
    )(x_flat, h0p, c0p,
      params["wih_p"], params["b_p"], params["b0_p"], params["b1_p"],
      params["whh_p"], params["w0_p"], params["w1_p"])


# ---------------------------------------------------------------------------
# Model wrapper (mirrors LSTMModel.forward, eval mode)
# ---------------------------------------------------------------------------
def model_forward(params, tokens, hidden):
    h0, c0 = hidden                                   # each (1, B, H)
    b_ = tokens.shape[0]
    s_ = tokens.shape[1]
    embeds = jnp.take(params["emb"], tokens, axis=0)  # (B, S, E); glue, not hot path
    # dropout(embeds): identity in eval mode
    x_t = jnp.swapaxes(embeds, 0, 1)                  # (S, B, E) time-major
    x_pad = jnp.zeros((s_, BP, EMB), jnp.float32).at[:, :b_].set(x_t)
    x_flat = x_pad.reshape(s_ * BP, EMB).astype(jnp.bfloat16)
    h0p = jnp.zeros((BP, HP), jnp.float32).at[:b_, :HID].set(h0[0])
    c0p = jnp.zeros((BP, HP), jnp.float32).at[:b_, :HID].set(c0[0])

    h_p, c_p, logits_p = fused_forward(x_flat, h0p, c0p, params)

    h_n = h_p[:b_, :HID]
    c_n = c_p[:b_, :HID]
    logits = logits_p[:b_, :VOCAB]
    return logits, (h_n[None], c_n[None])


# ---------------------------------------------------------------------------
# Weight packing (torch layouts -> padded, gate-stacked, lane-aligned, bf16)
# ---------------------------------------------------------------------------
def pack_params(emb, Wih, Whh, bih, bhh, W0, b0, W1, b1):
    wih_g = Wih.reshape(4, HID, EMB)        # (4, H, E), gate order i,f,g,o
    whh_g = Whh.reshape(4, HID, HID)        # (4, H, H)
    b_g = (bih + bhh).reshape(4, HID)

    wih_p = jnp.zeros((EMB, 4 * HP), jnp.float32)
    whh_p = jnp.zeros((HP, 4 * HP), jnp.float32)
    b_p = jnp.zeros((1, 4 * HP), jnp.float32)
    for k in range(4):
        wih_p = wih_p.at[:, k * HP:k * HP + HID].set(wih_g[k].T)
        whh_p = whh_p.at[:HID, k * HP:k * HP + HID].set(whh_g[k].T)
        b_p = b_p.at[0, k * HP:k * HP + HID].set(b_g[k])

    w0_p = jnp.zeros((HP, FC0P), jnp.float32).at[:HID, :FC0].set(W0.T)
    b0_p = jnp.zeros((1, FC0P), jnp.float32).at[0, :FC0].set(b0)
    w1_p = jnp.zeros((FC0P, VOCABP), jnp.float32).at[:FC0, :VOCAB].set(W1.T)
    b1_p = jnp.zeros((1, VOCABP), jnp.float32).at[0, :VOCAB].set(b1)

    return dict(emb=emb,
                wih_p=wih_p.astype(jnp.bfloat16),
                whh_p=whh_p.astype(jnp.bfloat16),
                b_p=b_p,
                w0_p=w0_p.astype(jnp.bfloat16), b0_p=b0_p,
                w1_p=w1_p.astype(jnp.bfloat16), b1_p=b1_p)


# ---------------------------------------------------------------------------
# Main
# ---------------------------------------------------------------------------
if __name__ == "__main__":
    key = jax.random.PRNGKey(0)
    ks = jax.random.split(key, 10)
    s_h = 1.0 / jnp.sqrt(jnp.float32(HID))
    s_f = 1.0 / jnp.sqrt(jnp.float32(FC0))

    emb = jax.random.normal(ks[0], (VOCAB, EMB), jnp.float32) * 0.1
    Wih = jax.random.uniform(ks[1], (4 * HID, EMB), jnp.float32, -s_h, s_h)
    Whh = jax.random.uniform(ks[2], (4 * HID, HID), jnp.float32, -s_h, s_h)
    bih = jax.random.uniform(ks[3], (4 * HID,), jnp.float32, -s_h, s_h)
    bhh = jax.random.uniform(ks[4], (4 * HID,), jnp.float32, -s_h, s_h)
    W0 = jax.random.uniform(ks[5], (FC0, HID), jnp.float32, -s_h, s_h)
    b0 = jax.random.uniform(ks[6], (FC0,), jnp.float32, -s_h, s_h)
    W1 = jax.random.uniform(ks[7], (VOCAB, FC0), jnp.float32, -s_f, s_f)
    b1 = jax.random.uniform(ks[8], (VOCAB,), jnp.float32, -s_f, s_f)

    params = pack_params(emb, Wih, Whh, bih, bhh, W0, b0, W1, b1)

    tokens = jax.random.randint(ks[9], (B, S), 0, VOCAB, jnp.int32)
    h0 = jnp.zeros((1, B, HID), jnp.float32)
    c0 = jnp.zeros((1, B, HID), jnp.float32)

    logits, (h_n, c_n) = model_forward(params, tokens, (h0, c0))
    jax.block_until_ready((logits, h_n, c_n))

    # ---- pure-f32 reference (same math as torch.nn.LSTM + heads) ----
    HI = jax.lax.Precision.HIGHEST
    embeds_ref = emb[tokens]

    def step(carry, x_t):
        h, c = carry
        gates = (jnp.dot(x_t, Wih.T, precision=HI) + bih
                 + jnp.dot(h, Whh.T, precision=HI) + bhh)
        ig, fg, gg, og = jnp.split(gates, 4, axis=-1)
        c = jax.nn.sigmoid(fg) * c + jax.nn.sigmoid(ig) * jnp.tanh(gg)
        h = jax.nn.sigmoid(og) * jnp.tanh(c)
        return (h, c), None

    (h_ref, c_ref), _ = jax.lax.scan(step, (h0[0], c0[0]),
                                     jnp.swapaxes(embeds_ref, 0, 1))
    a_ref = jax.nn.sigmoid(jnp.dot(h_ref, W0.T, precision=HI) + b0)
    logits_ref = jnp.dot(a_ref, W1.T, precision=HI) + b1

    # Tolerance relaxed vs v1 (2e-4 -> 2e-2) because matmul operands are bf16;
    # observed drift is ~1e-3 against the pure-f32 reference.
    assert jnp.allclose(h_n[0], h_ref, atol=2e-2), "LSTM hidden mismatch"
    assert jnp.allclose(c_n[0], c_ref, atol=2e-2), "LSTM cell mismatch"
    assert jnp.allclose(logits, logits_ref, atol=2e-2), "logits mismatch"

    print("KERNEL_OK")
</pallas_src>

<mosaic_0001>
module attributes {stable_mosaic.version = 11 : i64} {
  func.func @_fused_lstm_head_kernel(%arg0: memref<64x32xbf16, #tpu.memory_space<vmem>>, %arg1: memref<8x512xf32, #tpu.memory_space<vmem>>, %arg2: memref<8x512xf32, #tpu.memory_space<vmem>>, %arg3: memref<32x2048xbf16, #tpu.memory_space<vmem>>, %arg4: memref<1x2048xf32, #tpu.memory_space<vmem>>, %arg5: memref<1x384xf32, #tpu.memory_space<vmem>>, %arg6: memref<1x128xf32, #tpu.memory_space<vmem>>, %arg7: memref<512x2048xbf16, #tpu.memory_space<any>>, %arg8: memref<512x384xbf16, #tpu.memory_space<any>>, %arg9: memref<384x128xbf16, #tpu.memory_space<any>>, %arg10: memref<8x512xf32, #tpu.memory_space<vmem>>, %arg11: memref<8x512xf32, #tpu.memory_space<vmem>>, %arg12: memref<8x128xf32, #tpu.memory_space<vmem>>, %arg13: memref<512x2048xbf16, #tpu.memory_space<vmem>>, %arg14: memref<512x384xbf16, #tpu.memory_space<vmem>>, %arg15: memref<384x128xbf16, #tpu.memory_space<vmem>>, %arg16: memref<3x!tpu.dma_semaphore, #tpu.memory_space<semaphore_mem>>) attributes {dimension_semantics = [], scalar_prefetch = 0 : i64, scratch_operands = 4 : i64, tpu.core_type = #tpu.core_type<tc>} {
    %c0_i32 = arith.constant 0 : i32
    %0 = tpu.memref_slice %arg16[%c0_i32] : memref<3x!tpu.dma_semaphore, #tpu.memory_space<semaphore_mem>> -> memref<1x!tpu.dma_semaphore, #tpu.memory_space<semaphore_mem>>
    %1 = tpu.memref_squeeze %0 : memref<1x!tpu.dma_semaphore, #tpu.memory_space<semaphore_mem>> -> memref<!tpu.dma_semaphore, #tpu.memory_space<semaphore_mem>>
    tpu.enqueue_dma source(%arg7 : memref<512x2048xbf16, #tpu.memory_space<any>>) target(%arg13 : memref<512x2048xbf16, #tpu.memory_space<vmem>>) target_semaphore(%1 : memref<!tpu.dma_semaphore, #tpu.memory_space<semaphore_mem>>)
    %c1_i32 = arith.constant 1 : i32
    %2 = tpu.memref_slice %arg16[%c1_i32] : memref<3x!tpu.dma_semaphore, #tpu.memory_space<semaphore_mem>> -> memref<1x!tpu.dma_semaphore, #tpu.memory_space<semaphore_mem>>
    %3 = tpu.memref_squeeze %2 : memref<1x!tpu.dma_semaphore, #tpu.memory_space<semaphore_mem>> -> memref<!tpu.dma_semaphore, #tpu.memory_space<semaphore_mem>>
    tpu.enqueue_dma source(%arg8 : memref<512x384xbf16, #tpu.memory_space<any>>) target(%arg14 : memref<512x384xbf16, #tpu.memory_space<vmem>>) target_semaphore(%3 : memref<!tpu.dma_semaphore, #tpu.memory_space<semaphore_mem>>)
    %c2_i32 = arith.constant 2 : i32
    %4 = tpu.memref_slice %arg16[%c2_i32] : memref<3x!tpu.dma_semaphore, #tpu.memory_space<semaphore_mem>> -> memref<1x!tpu.dma_semaphore, #tpu.memory_space<semaphore_mem>>
    %5 = tpu.memref_squeeze %4 : memref<1x!tpu.dma_semaphore, #tpu.memory_space<semaphore_mem>> -> memref<!tpu.dma_semaphore, #tpu.memory_space<semaphore_mem>>
    tpu.enqueue_dma source(%arg9 : memref<384x128xbf16, #tpu.memory_space<any>>) target(%arg15 : memref<384x128xbf16, #tpu.memory_space<vmem>>) target_semaphore(%5 : memref<!tpu.dma_semaphore, #tpu.memory_space<semaphore_mem>>)
    %c0 = arith.constant 0 : index
    %c0_0 = arith.constant 0 : index
    %6 = vector.load %arg0[%c0, %c0_0] : memref<64x32xbf16, #tpu.memory_space<vmem>>, vector<64x32xbf16>
    %c0_1 = arith.constant 0 : index
    %c0_2 = arith.constant 0 : index
    %7 = vector.load %arg3[%c0_1, %c0_2] : memref<32x2048xbf16, #tpu.memory_space<vmem>>, vector<32x2048xbf16>
    %cst = arith.constant dense<0.000000e+00> : vector<64x2048xf32>
    %8 = tpu.matmul %6, %7, %cst {dimension_numbers = #tpu.dot_dimension_numbers<[1], [0], [0], [1], [0, 0, 1, 1], [], []>} : vector<64x32xbf16>, vector<32x2048xbf16>, vector<64x2048xf32> -> vector<64x2048xf32>
    %c0_3 = arith.constant 0 : index
    %c0_4 = arith.constant 0 : index
    %9 = vector.load %arg4[%c0_3, %c0_4] : memref<1x2048xf32, #tpu.memory_space<vmem>>, vector<1x2048xf32>
    %10 = vector.broadcast %9 : vector<1x2048xf32> to vector<64x2048xf32>
    %11 = arith.addf %8, %10 : vector<64x2048xf32>
    %c0_5 = arith.constant 0 : index
    %c0_6 = arith.constant 0 : index
    %12 = vector.load %arg1[%c0_5, %c0_6] : memref<8x512xf32, #tpu.memory_space<vmem>>, vector<8x512xf32>
    %c0_7 = arith.constant 0 : index
    %c0_8 = arith.constant 0 : index
    %13 = vector.load %arg2[%c0_7, %c0_8] : memref<8x512xf32, #tpu.memory_space<vmem>>, vector<8x512xf32>
    %c0_i32_9 = arith.constant 0 : i32
    %14 = tpu.memref_slice %arg16[%c0_i32_9] : memref<3x!tpu.dma_semaphore, #tpu.memory_space<semaphore_mem>> -> memref<1x!tpu.dma_semaphore, #tpu.memory_space<semaphore_mem>>
    %15 = tpu.memref_squeeze %14 : memref<1x!tpu.dma_semaphore, #tpu.memory_space<semaphore_mem>> -> memref<!tpu.dma_semaphore, #tpu.memory_space<semaphore_mem>>
    tpu.wait_dma2 semaphore(%15 : memref<!tpu.dma_semaphore, #tpu.memory_space<semaphore_mem>>) src(%arg7 : memref<512x2048xbf16, #tpu.memory_space<any>>) dst(%arg13 : memref<512x2048xbf16, #tpu.memory_space<vmem>>)
    %16 = vector.extract_strided_slice %11 {offsets = [0, 0], sizes = [8, 2048], strides = [1, 1]} : vector<64x2048xf32> to vector<8x2048xf32>
    %17 = arith.truncf %12 : vector<8x512xf32> to vector<8x512xbf16>
    %18 = vector.extract_strided_slice %16 {offsets = [0, 0], sizes = [8, 512], strides = [1, 1]} : vector<8x2048xf32> to vector<8x512xf32>
    %c0_10 = arith.constant 0 : index
    %c0_11 = arith.constant 0 : index
    %19 = vector.load %arg13[%c0_10, %c0_11] : memref<512x2048xbf16, #tpu.memory_space<vmem>>, vector<512x512xbf16>
    %cst_12 = arith.constant dense<0.000000e+00> : vector<8x512xf32>
    %20 = tpu.matmul %17, %19, %cst_12 {dimension_numbers = #tpu.dot_dimension_numbers<[1], [0], [0], [1], [0, 0, 1, 1], [], []>} : vector<8x512xbf16>, vector<512x512xbf16>, vector<8x512xf32> -> vector<8x512xf32>
    %21 = arith.addf %18, %20 : vector<8x512xf32>
    %22 = arith.negf %21 : vector<8x512xf32>
    %23 = math.exp %22 : vector<8x512xf32>
    %cst_13 = arith.constant 1.000000e+00 : f32
    %24 = vector.broadcast %cst_13 : f32 to vector<8x512xf32>
    %25 = arith.addf %24, %23 : vector<8x512xf32>
    %26 = arith.divf %24, %25 : vector<8x512xf32>
    %27 = vector.extract_strided_slice %16 {offsets = [0, 512], sizes = [8, 512], strides = [1, 1]} : vector<8x2048xf32> to vector<8x512xf32>
    %c0_14 = arith.constant 0 : index
    %c512 = arith.constant 512 : index
    %28 = vector.load %arg13[%c0_14, %c512] : memref<512x2048xbf16, #tpu.memory_space<vmem>>, vector<512x512xbf16>
    %cst_15 = arith.constant dense<0.000000e+00> : vector<8x512xf32>
    %29 = tpu.matmul %17, %28, %cst_15 {dimension_numbers = #tpu.dot_dimension_numbers<[1], [0], [0], [1], [0, 0, 1, 1], [], []>} : vector<8x512xbf16>, vector<512x512xbf16>, vector<8x512xf32> -> vector<8x512xf32>
    %30 = arith.addf %27, %29 : vector<8x512xf32>
    %31 = arith.negf %30 : vector<8x512xf32>
    %32 = math.exp %31 : vector<8x512xf32>
    %cst_16 = arith.constant 1.000000e+00 : f32
    %33 = vector.broadcast %cst_16 : f32 to vector<8x512xf32>
    %34 = arith.addf %33, %32 : vector<8x512xf32>
    %35 = arith.divf %33, %34 : vector<8x512xf32>
    %36 = vector.extract_strided_slice %16 {offsets = [0, 1024], sizes = [8, 512], strides = [1, 1]} : vector<8x2048xf32> to vector<8x512xf32>
    %c0_17 = arith.constant 0 : index
    %c1024 = arith.constant 1024 : index
    %37 = vector.load %arg13[%c0_17, %c1024] : memref<512x2048xbf16, #tpu.memory_space<vmem>>, vector<512x512xbf16>
    %cst_18 = arith.constant dense<0.000000e+00> : vector<8x512xf32>
    %38 = tpu.matmul %17, %37, %cst_18 {dimension_numbers = #tpu.dot_dimension_numbers<[1], [0], [0], [1], [0, 0, 1, 1], [], []>} : vector<8x512xbf16>, vector<512x512xbf16>, vector<8x512xf32> -> vector<8x512xf32>
    %39 = arith.addf %36, %38 : vector<8x512xf32>
    %40 = math.tanh %39 : vector<8x512xf32>
    %41 = vector.extract_strided_slice %16 {offsets = [0, 1536], sizes = [8, 512], strides = [1, 1]} : vector<8x2048xf32> to vector<8x512xf32>
    %c0_19 = arith.constant 0 : index
    %c1536 = arith.constant 1536 : index
    %42 = vector.load %arg13[%c0_19, %c1536] : memref<512x2048xbf16, #tpu.memory_space<vmem>>, vector<512x512xbf16>
    %cst_20 = arith.constant dense<0.000000e+00> : vector<8x512xf32>
    %43 = tpu.matmul %17, %42, %cst_20 {dimension_numbers = #tpu.dot_dimension_numbers<[1], [0], [0], [1], [0, 0, 1, 1], [], []>} : vector<8x512xbf16>, vector<512x512xbf16>, vector<8x512xf32> -> vector<8x512xf32>
    %44 = arith.addf %41, %43 : vector<8x512xf32>
    %45 = arith.negf %44 : vector<8x512xf32>
    %46 = math.exp %45 : vector<8x512xf32>
    %cst_21 = arith.constant 1.000000e+00 : f32
    %47 = vector.broadcast %cst_21 : f32 to vector<8x512xf32>
    %48 = arith.addf %47, %46 : vector<8x512xf32>
    %49 = arith.divf %47, %48 : vector<8x512xf32>
    %50 = arith.mulf %35, %13 : vector<8x512xf32>
    %51 = arith.mulf %26, %40 : vector<8x512xf32>
    %52 = arith.addf %50, %51 : vector<8x512xf32>
    %53 = math.tanh %52 : vector<8x512xf32>
    %54 = arith.mulf %49, %53 : vector<8x512xf32>
    %55 = vector.extract_strided_slice %11 {offsets = [8, 0], sizes = [8, 2048], strides = [1, 1]} : vector<64x2048xf32> to vector<8x2048xf32>
    %56 = arith.truncf %54 : vector<8x512xf32> to vector<8x512xbf16>
    %57 = vector.extract_strided_slice %55 {offsets = [0, 0], sizes = [8, 512], strides = [1, 1]} : vector<8x2048xf32> to vector<8x512xf32>
    %c0_22 = arith.constant 0 : index
    %c0_23 = arith.constant 0 : index
    %58 = vector.load %arg13[%c0_22, %c0_23] : memref<512x2048xbf16, #tpu.memory_space<vmem>>, vector<512x512xbf16>
    %cst_24 = arith.constant dense<0.000000e+00> : vector<8x512xf32>
    %59 = tpu.matmul %56, %58, %cst_24 {dimension_numbers = #tpu.dot_dimension_numbers<[1], [0], [0], [1], [0, 0, 1, 1], [], []>} : vector<8x512xbf16>, vector<512x512xbf16>, vector<8x512xf32> -> vector<8x512xf32>
    %60 = arith.addf %57, %59 : vector<8x512xf32>
    %61 = arith.negf %60 : vector<8x512xf32>
    %62 = math.exp %61 : vector<8x512xf32>
    %cst_25 = arith.constant 1.000000e+00 : f32
    %63 = vector.broadcast %cst_25 : f32 to vector<8x512xf32>
    %64 = arith.addf %63, %62 : vector<8x512xf32>
    %65 = arith.divf %63, %64 : vector<8x512xf32>
    %66 = vector.extract_strided_slice %55 {offsets = [0, 512], sizes = [8, 512], strides = [1, 1]} : vector<8x2048xf32> to vector<8x512xf32>
    %c0_26 = arith.constant 0 : index
    %c512_27 = arith.constant 512 : index
    %67 = vector.load %arg13[%c0_26, %c512_27] : memref<512x2048xbf16, #tpu.memory_space<vmem>>, vector<512x512xbf16>
    %cst_28 = arith.constant dense<0.000000e+00> : vector<8x512xf32>
    %68 = tpu.matmul %56, %67, %cst_28 {dimension_numbers = #tpu.dot_dimension_numbers<[1], [0], [0], [1], [0, 0, 1, 1], [], []>} : vector<8x512xbf16>, vector<512x512xbf16>, vector<8x512xf32> -> vector<8x512xf32>
    %69 = arith.addf %66, %68 : vector<8x512xf32>
    %70 = arith.negf %69 : vector<8x512xf32>
    %71 = math.exp %70 : vector<8x512xf32>
    %cst_29 = arith.constant 1.000000e+00 : f32
    %72 = vector.broadcast %cst_29 : f32 to vector<8x512xf32>
    %73 = arith.addf %72, %71 : vector<8x512xf32>
    %74 = arith.divf %72, %73 : vector<8x512xf32>
    %75 = vector.extract_strided_slice %55 {offsets = [0, 1024], sizes = [8, 512], strides = [1, 1]} : vector<8x2048xf32> to vector<8x512xf32>
    %c0_30 = arith.constant 0 : index
    %c1024_31 = arith.constant 1024 : index
    %76 = vector.load %arg13[%c0_30, %c1024_31] : memref<512x2048xbf16, #tpu.memory_space<vmem>>, vector<512x512xbf16>
    %cst_32 = arith.constant dense<0.000000e+00> : vector<8x512xf32>
    %77 = tpu.matmul %56, %76, %cst_32 {dimension_numbers = #tpu.dot_dimension_numbers<[1], [0], [0], [1], [0, 0, 1, 1], [], []>} : vector<8x512xbf16>, vector<512x512xbf16>, vector<8x512xf32> -> vector<8x512xf32>
    %78 = arith.addf %75, %77 : vector<8x512xf32>
    %79 = math.tanh %78 : vector<8x512xf32>
    %80 = vector.extract_strided_slice %55 {offsets = [0, 1536], sizes = [8, 512], strides = [1, 1]} : vector<8x2048xf32> to vector<8x512xf32>
    %c0_33 = arith.constant 0 : index
    %c1536_34 = arith.constant 1536 : index
    %81 = vector.load %arg13[%c0_33, %c1536_34] : memref<512x2048xbf16, #tpu.memory_space<vmem>>, vector<512x512xbf16>
    %cst_35 = arith.constant dense<0.000000e+00> : vector<8x512xf32>
    %82 = tpu.matmul %56, %81, %cst_35 {dimension_numbers = #tpu.dot_dimension_numbers<[1], [0], [0], [1], [0, 0, 1, 1], [], []>} : vector<8x512xbf16>, vector<512x512xbf16>, vector<8x512xf32> -> vector<8x512xf32>
    %83 = arith.addf %80, %82 : vector<8x512xf32>
    %84 = arith.negf %83 : vector<8x512xf32>
    %85 = math.exp %84 : vector<8x512xf32>
    %cst_36 = arith.constant 1.000000e+00 : f32
    %86 = vector.broadcast %cst_36 : f32 to vector<8x512xf32>
    %87 = arith.addf %86, %85 : vector<8x512xf32>
    %88 = arith.divf %86, %87 : vector<8x512xf32>
    %89 = arith.mulf %74, %52 : vector<8x512xf32>
    %90 = arith.mulf %65, %79 : vector<8x512xf32>
    %91 = arith.addf %89, %90 : vector<8x512xf32>
    %92 = math.tanh %91 : vector<8x512xf32>
    %93 = arith.mulf %88, %92 : vector<8x512xf32>
    %94 = vector.extract_strided_slice %11 {offsets = [16, 0], sizes = [8, 2048], strides = [1, 1]} : vector<64x2048xf32> to vector<8x2048xf32>
    %95 = arith.truncf %93 : vector<8x512xf32> to vector<8x512xbf16>
    %96 = vector.extract_strided_slice %94 {offsets = [0, 0], sizes = [8, 512], strides = [1, 1]} : vector<8x2048xf32> to vector<8x512xf32>
    %c0_37 = arith.constant 0 : index
    %c0_38 = arith.constant 0 : index
    %97 = vector.load %arg13[%c0_37, %c0_38] : memref<512x2048xbf16, #tpu.memory_space<vmem>>, vector<512x512xbf16>
    %cst_39 = arith.constant dense<0.000000e+00> : vector<8x512xf32>
    %98 = tpu.matmul %95, %97, %cst_39 {dimension_numbers = #tpu.dot_dimension_numbers<[1], [0], [0], [1], [0, 0, 1, 1], [], []>} : vector<8x512xbf16>, vector<512x512xbf16>, vector<8x512xf32> -> vector<8x512xf32>
    %99 = arith.addf %96, %98 : vector<8x512xf32>
    %100 = arith.negf %99 : vector<8x512xf32>
    %101 = math.exp %100 : vector<8x512xf32>
    %cst_40 = arith.constant 1.000000e+00 : f32
    %102 = vector.broadcast %cst_40 : f32 to vector<8x512xf32>
    %103 = arith.addf %102, %101 : vector<8x512xf32>
    %104 = arith.divf %102, %103 : vector<8x512xf32>
    %105 = vector.extract_strided_slice %94 {offsets = [0, 512], sizes = [8, 512], strides = [1, 1]} : vector<8x2048xf32> to vector<8x512xf32>
    %c0_41 = arith.constant 0 : index
    %c512_42 = arith.constant 512 : index
    %106 = vector.load %arg13[%c0_41, %c512_42] : memref<512x2048xbf16, #tpu.memory_space<vmem>>, vector<512x512xbf16>
    %cst_43 = arith.constant dense<0.000000e+00> : vector<8x512xf32>
    %107 = tpu.matmul %95, %106, %cst_43 {dimension_numbers = #tpu.dot_dimension_numbers<[1], [0], [0], [1], [0, 0, 1, 1], [], []>} : vector<8x512xbf16>, vector<512x512xbf16>, vector<8x512xf32> -> vector<8x512xf32>
    %108 = arith.addf %105, %107 : vector<8x512xf32>
    %109 = arith.negf %108 : vector<8x512xf32>
    %110 = math.exp %109 : vector<8x512xf32>
    %cst_44 = arith.constant 1.000000e+00 : f32
    %111 = vector.broadcast %cst_44 : f32 to vector<8x512xf32>
    %112 = arith.addf %111, %110 : vector<8x512xf32>
    %113 = arith.divf %111, %112 : vector<8x512xf32>
    %114 = vector.extract_strided_slice %94 {offsets = [0, 1024], sizes = [8, 512], strides = [1, 1]} : vector<8x2048xf32> to vector<8x512xf32>
    %c0_45 = arith.constant 0 : index
    %c1024_46 = arith.constant 1024 : index
    %115 = vector.load %arg13[%c0_45, %c1024_46] : memref<512x2048xbf16, #tpu.memory_space<vmem>>, vector<512x512xbf16>
    %cst_47 = arith.constant dense<0.000000e+00> : vector<8x512xf32>
    %116 = tpu.matmul %95, %115, %cst_47 {dimension_numbers = #tpu.dot_dimension_numbers<[1], [0], [0], [1], [0, 0, 1, 1], [], []>} : vector<8x512xbf16>, vector<512x512xbf16>, vector<8x512xf32> -> vector<8x512xf32>
    %117 = arith.addf %114, %116 : vector<8x512xf32>
    %118 = math.tanh %117 : vector<8x512xf32>
    %119 = vector.extract_strided_slice %94 {offsets = [0, 1536], sizes = [8, 512], strides = [1, 1]} : vector<8x2048xf32> to vector<8x512xf32>
    %c0_48 = arith.constant 0 : index
    %c1536_49 = arith.constant 1536 : index
    %120 = vector.load %arg13[%c0_48, %c1536_49] : memref<512x2048xbf16, #tpu.memory_space<vmem>>, vector<512x512xbf16>
    %cst_50 = arith.constant dense<0.000000e+00> : vector<8x512xf32>
    %121 = tpu.matmul %95, %120, %cst_50 {dimension_numbers = #tpu.dot_dimension_numbers<[1], [0], [0], [1], [0, 0, 1, 1], [], []>} : vector<8x512xbf16>, vector<512x512xbf16>, vector<8x512xf32> -> vector<8x512xf32>
    %122 = arith.addf %119, %121 : vector<8x512xf32>
    %123 = arith.negf %122 : vector<8x512xf32>
    %124 = math.exp %123 : vector<8x512xf32>
    %cst_51 = arith.constant 1.000000e+00 : f32
    %125 = vector.broadcast %cst_51 : f32 to vector<8x512xf32>
    %126 = arith.addf %125, %124 : vector<8x512xf32>
    %127 = arith.divf %125, %126 : vector<8x512xf32>
    %128 = arith.mulf %113, %91 : vector<8x512xf32>
    %129 = arith.mulf %104, %118 : vector<8x512xf32>
    %130 = arith.addf %128, %129 : vector<8x512xf32>
    %131 = math.tanh %130 : vector<8x512xf32>
    %132 = arith.mulf %127, %131 : vector<8x512xf32>
    %133 = vector.extract_strided_slice %11 {offsets = [24, 0], sizes = [8, 2048], strides = [1, 1]} : vector<64x2048xf32> to vector<8x2048xf32>
    %134 = arith.truncf %132 : vector<8x512xf32> to vector<8x512xbf16>
    %135 = vector.extract_strided_slice %133 {offsets = [0, 0], sizes = [8, 512], strides = [1, 1]} : vector<8x2048xf32> to vector<8x512xf32>
    %c0_52 = arith.constant 0 : index
    %c0_53 = arith.constant 0 : index
    %136 = vector.load %arg13[%c0_52, %c0_53] : memref<512x2048xbf16, #tpu.memory_space<vmem>>, vector<512x512xbf16>
    %cst_54 = arith.constant dense<0.000000e+00> : vector<8x512xf32>
    %137 = tpu.matmul %134, %136, %cst_54 {dimension_numbers = #tpu.dot_dimension_numbers<[1], [0], [0], [1], [0, 0, 1, 1], [], []>} : vector<8x512xbf16>, vector<512x512xbf16>, vector<8x512xf32> -> vector<8x512xf32>
    %138 = arith.addf %135, %137 : vector<8x512xf32>
    %139 = arith.negf %138 : vector<8x512xf32>
    %140 = math.exp %139 : vector<8x512xf32>
    %cst_55 = arith.constant 1.000000e+00 : f32
    %141 = vector.broadcast %cst_55 : f32 to vector<8x512xf32>
    %142 = arith.addf %141, %140 : vector<8x512xf32>
    %143 = arith.divf %141, %142 : vector<8x512xf32>
    %144 = vector.extract_strided_slice %133 {offsets = [0, 512], sizes = [8, 512], strides = [1, 1]} : vector<8x2048xf32> to vector<8x512xf32>
    %c0_56 = arith.constant 0 : index
    %c512_57 = arith.constant 512 : index
    %145 = vector.load %arg13[%c0_56, %c512_57] : memref<512x2048xbf16, #tpu.memory_space<vmem>>, vector<512x512xbf16>
    %cst_58 = arith.constant dense<0.000000e+00> : vector<8x512xf32>
    %146 = tpu.matmul %134, %145, %cst_58 {dimension_numbers = #tpu.dot_dimension_numbers<[1], [0], [0], [1], [0, 0, 1, 1], [], []>} : vector<8x512xbf16>, vector<512x512xbf16>, vector<8x512xf32> -> vector<8x512xf32>
    %147 = arith.addf %144, %146 : vector<8x512xf32>
    %148 = arith.negf %147 : vector<8x512xf32>
    %149 = math.exp %148 : vector<8x512xf32>
    %cst_59 = arith.constant 1.000000e+00 : f32
    %150 = vector.broadcast %cst_59 : f32 to vector<8x512xf32>
    %151 = arith.addf %150, %149 : vector<8x512xf32>
    %152 = arith.divf %150, %151 : vector<8x512xf32>
    %153 = vector.extract_strided_slice %133 {offsets = [0, 1024], sizes = [8, 512], strides = [1, 1]} : vector<8x2048xf32> to vector<8x512xf32>
    %c0_60 = arith.constant 0 : index
    %c1024_61 = arith.constant 1024 : index
    %154 = vector.load %arg13[%c0_60, %c1024_61] : memref<512x2048xbf16, #tpu.memory_space<vmem>>, vector<512x512xbf16>
    %cst_62 = arith.constant dense<0.000000e+00> : vector<8x512xf32>
    %155 = tpu.matmul %134, %154, %cst_62 {dimension_numbers = #tpu.dot_dimension_numbers<[1], [0], [0], [1], [0, 0, 1, 1], [], []>} : vector<8x512xbf16>, vector<512x512xbf16>, vector<8x512xf32> -> vector<8x512xf32>
    %156 = arith.addf %153, %155 : vector<8x512xf32>
    %157 = math.tanh %156 : vector<8x512xf32>
    %158 = vector.extract_strided_slice %133 {offsets = [0, 1536], sizes = [8, 512], strides = [1, 1]} : vector<8x2048xf32> to vector<8x512xf32>
    %c0_63 = arith.constant 0 : index
    %c1536_64 = arith.constant 1536 : index
    %159 = vector.load %arg13[%c0_63, %c1536_64] : memref<512x2048xbf16, #tpu.memory_space<vmem>>, vector<512x512xbf16>
    %cst_65 = arith.constant dense<0.000000e+00> : vector<8x512xf32>
    %160 = tpu.matmul %134, %159, %cst_65 {dimension_numbers = #tpu.dot_dimension_numbers<[1], [0], [0], [1], [0, 0, 1, 1], [], []>} : vector<8x512xbf16>, vector<512x512xbf16>, vector<8x512xf32> -> vector<8x512xf32>
    %161 = arith.addf %158, %160 : vector<8x512xf32>
    %162 = arith.negf %161 : vector<8x512xf32>
    %163 = math.exp %162 : vector<8x512xf32>
    %cst_66 = arith.constant 1.000000e+00 : f32
    %164 = vector.broadcast %cst_66 : f32 to vector<8x512xf32>
    %165 = arith.addf %164, %163 : vector<8x512xf32>
    %166 = arith.divf %164, %165 : vector<8x512xf32>
    %167 = arith.mulf %152, %130 : vector<8x512xf32>
    %168 = arith.mulf %143, %157 : vector<8x512xf32>
    %169 = arith.addf %167, %168 : vector<8x512xf32>
    %170 = math.tanh %169 : vector<8x512xf32>
    %171 = arith.mulf %166, %170 : vector<8x512xf32>
    %172 = vector.extract_strided_slice %11 {offsets = [32, 0], sizes = [8, 2048], strides = [1, 1]} : vector<64x2048xf32> to vector<8x2048xf32>
    %173 = arith.truncf %171 : vector<8x512xf32> to vector<8x512xbf16>
    %174 = vector.extract_strided_slice %172 {offsets = [0, 0], sizes = [8, 512], strides = [1, 1]} : vector<8x2048xf32> to vector<8x512xf32>
    %c0_67 = arith.constant 0 : index
    %c0_68 = arith.constant 0 : index
    %175 = vector.load %arg13[%c0_67, %c0_68] : memref<512x2048xbf16, #tpu.memory_space<vmem>>, vector<512x512xbf16>
    %cst_69 = arith.constant dense<0.000000e+00> : vector<8x512xf32>
    %176 = tpu.matmul %173, %175, %cst_69 {dimension_numbers = #tpu.dot_dimension_numbers<[1], [0], [0], [1], [0, 0, 1, 1], [], []>} : vector<8x512xbf16>, vector<512x512xbf16>, vector<8x512xf32> -> vector<8x512xf32>
    %177 = arith.addf %174, %176 : vector<8x512xf32>
    %178 = arith.negf %177 : vector<8x512xf32>
    %179 = math.exp %178 : vector<8x512xf32>
    %cst_70 = arith.constant 1.000000e+00 : f32
    %180 = vector.broadcast %cst_70 : f32 to vector<8x512xf32>
    %181 = arith.addf %180, %179 : vector<8x512xf32>
    %182 = arith.divf %180, %181 : vector<8x512xf32>
    %183 = vector.extract_strided_slice %172 {offsets = [0, 512], sizes = [8, 512], strides = [1, 1]} : vector<8x2048xf32> to vector<8x512xf32>
    %c0_71 = arith.constant 0 : index
    %c512_72 = arith.constant 512 : index
    %184 = vector.load %arg13[%c0_71, %c512_72] : memref<512x2048xbf16, #tpu.memory_space<vmem>>, vector<512x512xbf16>
    %cst_73 = arith.constant dense<0.000000e+00> : vector<8x512xf32>
    %185 = tpu.matmul %173, %184, %cst_73 {dimension_numbers = #tpu.dot_dimension_numbers<[1], [0], [0], [1], [0, 0, 1, 1], [], []>} : vector<8x512xbf16>, vector<512x512xbf16>, vector<8x512xf32> -> vector<8x512xf32>
    %186 = arith.addf %183, %185 : vector<8x512xf32>
    %187 = arith.negf %186 : vector<8x512xf32>
    %188 = math.exp %187 : vector<8x512xf32>
    %cst_74 = arith.constant 1.000000e+00 : f32
    %189 = vector.broadcast %cst_74 : f32 to vector<8x512xf32>
    %190 = arith.addf %189, %188 : vector<8x512xf32>
    %191 = arith.divf %189, %190 : vector<8x512xf32>
    %192 = vector.extract_strided_slice %172 {offsets = [0, 1024], sizes = [8, 512], strides = [1, 1]} : vector<8x2048xf32> to vector<8x512xf32>
    %c0_75 = arith.constant 0 : index
    %c1024_76 = arith.constant 1024 : index
    %193 = vector.load %arg13[%c0_75, %c1024_76] : memref<512x2048xbf16, #tpu.memory_space<vmem>>, vector<512x512xbf16>
    %cst_77 = arith.constant dense<0.000000e+00> : vector<8x512xf32>
    %194 = tpu.matmul %173, %193, %cst_77 {dimension_numbers = #tpu.dot_dimension_numbers<[1], [0], [0], [1], [0, 0, 1, 1], [], []>} : vector<8x512xbf16>, vector<512x512xbf16>, vector<8x512xf32> -> vector<8x512xf32>
    %195 = arith.addf %192, %194 : vector<8x512xf32>
    %196 = math.tanh %195 : vector<8x512xf32>
    %197 = vector.extract_strided_slice %172 {offsets = [0, 1536], sizes = [8, 512], strides = [1, 1]} : vector<8x2048xf32> to vector<8x512xf32>
    %c0_78 = arith.constant 0 : index
    %c1536_79 = arith.constant 1536 : index
    %198 = vector.load %arg13[%c0_78, %c1536_79] : memref<512x2048xbf16, #tpu.memory_space<vmem>>, vector<512x512xbf16>
    %cst_80 = arith.constant dense<0.000000e+00> : vector<8x512xf32>
    %199 = tpu.matmul %173, %198, %cst_80 {dimension_numbers = #tpu.dot_dimension_numbers<[1], [0], [0], [1], [0, 0, 1, 1], [], []>} : vector<8x512xbf16>, vector<512x512xbf16>, vector<8x512xf32> -> vector<8x512xf32>
    %200 = arith.addf %197, %199 : vector<8x512xf32>
    %201 = arith.negf %200 : vector<8x512xf32>
    %202 = math.exp %201 : vector<8x512xf32>
    %cst_81 = arith.constant 1.000000e+00 : f32
    %203 = vector.broadcast %cst_81 : f32 to vector<8x512xf32>
    %204 = arith.addf %203, %202 : vector<8x512xf32>
    %205 = arith.divf %203, %204 : vector<8x512xf32>
    %206 = arith.mulf %191, %169 : vector<8x512xf32>
    %207 = arith.mulf %182, %196 : vector<8x512xf32>
    %208 = arith.addf %206, %207 : vector<8x512xf32>
    %209 = math.tanh %208 : vector<8x512xf32>
    %210 = arith.mulf %205, %209 : vector<8x512xf32>
    %211 = vector.extract_strided_slice %11 {offsets = [40, 0], sizes = [8, 2048], strides = [1, 1]} : vector<64x2048xf32> to vector<8x2048xf32>
    %212 = arith.truncf %210 : vector<8x512xf32> to vector<8x512xbf16>
    %213 = vector.extract_strided_slice %211 {offsets = [0, 0], sizes = [8, 512], strides = [1, 1]} : vector<8x2048xf32> to vector<8x512xf32>
    %c0_82 = arith.constant 0 : index
    %c0_83 = arith.constant 0 : index
    %214 = vector.load %arg13[%c0_82, %c0_83] : memref<512x2048xbf16, #tpu.memory_space<vmem>>, vector<512x512xbf16>
    %cst_84 = arith.constant dense<0.000000e+00> : vector<8x512xf32>
    %215 = tpu.matmul %212, %214, %cst_84 {dimension_numbers = #tpu.dot_dimension_numbers<[1], [0], [0], [1], [0, 0, 1, 1], [], []>} : vector<8x512xbf16>, vector<512x512xbf16>, vector<8x512xf32> -> vector<8x512xf32>
    %216 = arith.addf %213, %215 : vector<8x512xf32>
    %217 = arith.negf %216 : vector<8x512xf32>
    %218 = math.exp %217 : vector<8x512xf32>
    %cst_85 = arith.constant 1.000000e+00 : f32
    %219 = vector.broadcast %cst_85 : f32 to vector<8x512xf32>
    %220 = arith.addf %219, %218 : vector<8x512xf32>
    %221 = arith.divf %219, %220 : vector<8x512xf32>
    %222 = vector.extract_strided_slice %211 {offsets = [0, 512], sizes = [8, 512], strides = [1, 1]} : vector<8x2048xf32> to vector<8x512xf32>
    %c0_86 = arith.constant 0 : index
    %c512_87 = arith.constant 512 : index
    %223 = vector.load %arg13[%c0_86, %c512_87] : memref<512x2048xbf16, #tpu.memory_space<vmem>>, vector<512x512xbf16>
    %cst_88 = arith.constant dense<0.000000e+00> : vector<8x512xf32>
    %224 = tpu.matmul %212, %223, %cst_88 {dimension_numbers = #tpu.dot_dimension_numbers<[1], [0], [0], [1], [0, 0, 1, 1], [], []>} : vector<8x512xbf16>, vector<512x512xbf16>, vector<8x512xf32> -> vector<8x512xf32>
    %225 = arith.addf %222, %224 : vector<8x512xf32>
    %226 = arith.negf %225 : vector<8x512xf32>
    %227 = math.exp %226 : vector<8x512xf32>
    %cst_89 = arith.constant 1.000000e+00 : f32
    %228 = vector.broadcast %cst_89 : f32 to vector<8x512xf32>
    %229 = arith.addf %228, %227 : vector<8x512xf32>
    %230 = arith.divf %228, %229 : vector<8x512xf32>
    %231 = vector.extract_strided_slice %211 {offsets = [0, 1024], sizes = [8, 512], strides = [1, 1]} : vector<8x2048xf32> to vector<8x512xf32>
    %c0_90 = arith.constant 0 : index
    %c1024_91 = arith.constant 1024 : index
    %232 = vector.load %arg13[%c0_90, %c1024_91] : memref<512x2048xbf16, #tpu.memory_space<vmem>>, vector<512x512xbf16>
    %cst_92 = arith.constant dense<0.000000e+00> : vector<8x512xf32>
    %233 = tpu.matmul %212, %232, %cst_92 {dimension_numbers = #tpu.dot_dimension_numbers<[1], [0], [0], [1], [0, 0, 1, 1], [], []>} : vector<8x512xbf16>, vector<512x512xbf16>, vector<8x512xf32> -> vector<8x512xf32>
    %234 = arith.addf %231, %233 : vector<8x512xf32>
    %235 = math.tanh %234 : vector<8x512xf32>
    %236 = vector.extract_strided_slice %211 {offsets = [0, 1536], sizes = [8, 512], strides = [1, 1]} : vector<8x2048xf32> to vector<8x512xf32>
    %c0_93 = arith.constant 0 : index
    %c1536_94 = arith.constant 1536 : index
    %237 = vector.load %arg13[%c0_93, %c1536_94] : memref<512x2048xbf16, #tpu.memory_space<vmem>>, vector<512x512xbf16>
    %cst_95 = arith.constant dense<0.000000e+00> : vector<8x512xf32>
    %238 = tpu.matmul %212, %237, %cst_95 {dimension_numbers = #tpu.dot_dimension_numbers<[1], [0], [0], [1], [0, 0, 1, 1], [], []>} : vector<8x512xbf16>, vector<512x512xbf16>, vector<8x512xf32> -> vector<8x512xf32>
    %239 = arith.addf %236, %238 : vector<8x512xf32>
    %240 = arith.negf %239 : vector<8x512xf32>
    %241 = math.exp %240 : vector<8x512xf32>
    %cst_96 = arith.constant 1.000000e+00 : f32
    %242 = vector.broadcast %cst_96 : f32 to vector<8x512xf32>
    %243 = arith.addf %242, %241 : vector<8x512xf32>
    %244 = arith.divf %242, %243 : vector<8x512xf32>
    %245 = arith.mulf %230, %208 : vector<8x512xf32>
    %246 = arith.mulf %221, %235 : vector<8x512xf32>
    %247 = arith.addf %245, %246 : vector<8x512xf32>
    %248 = math.tanh %247 : vector<8x512xf32>
    %249 = arith.mulf %244, %248 : vector<8x512xf32>
    %250 = vector.extract_strided_slice %11 {offsets = [48, 0], sizes = [8, 2048], strides = [1, 1]} : vector<64x2048xf32> to vector<8x2048xf32>
    %251 = arith.truncf %249 : vector<8x512xf32> to vector<8x512xbf16>
    %252 = vector.extract_strided_slice %250 {offsets = [0, 0], sizes = [8, 512], strides = [1, 1]} : vector<8x2048xf32> to vector<8x512xf32>
    %c0_97 = arith.constant 0 : index
    %c0_98 = arith.constant 0 : index
    %253 = vector.load %arg13[%c0_97, %c0_98] : memref<512x2048xbf16, #tpu.memory_space<vmem>>, vector<512x512xbf16>
    %cst_99 = arith.constant dense<0.000000e+00> : vector<8x512xf32>
    %254 = tpu.matmul %251, %253, %cst_99 {dimension_numbers = #tpu.dot_dimension_numbers<[1], [0], [0], [1], [0, 0, 1, 1], [], []>} : vector<8x512xbf16>, vector<512x512xbf16>, vector<8x512xf32> -> vector<8x512xf32>
    %255 = arith.addf %252, %254 : vector<8x512xf32>
    %256 = arith.negf %255 : vector<8x512xf32>
    %257 = math.exp %256 : vector<8x512xf32>
    %cst_100 = arith.constant 1.000000e+00 : f32
    %258 = vector.broadcast %cst_100 : f32 to vector<8x512xf32>
    %259 = arith.addf %258, %257 : vector<8x512xf32>
    %260 = arith.divf %258, %259 : vector<8x512xf32>
    %261 = vector.extract_strided_slice %250 {offsets = [0, 512], sizes = [8, 512], strides = [1, 1]} : vector<8x2048xf32> to vector<8x512xf32>
    %c0_101 = arith.constant 0 : index
    %c512_102 = arith.constant 512 : index
    %262 = vector.load %arg13[%c0_101, %c512_102] : memref<512x2048xbf16, #tpu.memory_space<vmem>>, vector<512x512xbf16>
    %cst_103 = arith.constant dense<0.000000e+00> : vector<8x512xf32>
    %263 = tpu.matmul %251, %262, %cst_103 {dimension_numbers = #tpu.dot_dimension_numbers<[1], [0], [0], [1], [0, 0, 1, 1], [], []>} : vector<8x512xbf16>, vector<512x512xbf16>, vector<8x512xf32> -> vector<8x512xf32>
    %264 = arith.addf %261, %263 : vector<8x512xf32>
    %265 = arith.negf %264 : vector<8x512xf32>
    %266 = math.exp %265 : vector<8x512xf32>
    %cst_104 = arith.constant 1.000000e+00 : f32
    %267 = vector.broadcast %cst_104 : f32 to vector<8x512xf32>
    %268 = arith.addf %267, %266 : vector<8x512xf32>
    %269 = arith.divf %267, %268 : vector<8x512xf32>
    %270 = vector.extract_strided_slice %250 {offsets = [0, 1024], sizes = [8, 512], strides = [1, 1]} : vector<8x2048xf32> to vector<8x512xf32>
    %c0_105 = arith.constant 0 : index
    %c1024_106 = arith.constant 1024 : index
    %271 = vector.load %arg13[%c0_105, %c1024_106] : memref<512x2048xbf16, #tpu.memory_space<vmem>>, vector<512x512xbf16>
    %cst_107 = arith.constant dense<0.000000e+00> : vector<8x512xf32>
    %272 = tpu.matmul %251, %271, %cst_107 {dimension_numbers = #tpu.dot_dimension_numbers<[1], [0], [0], [1], [0, 0, 1, 1], [], []>} : vector<8x512xbf16>, vector<512x512xbf16>, vector<8x512xf32> -> vector<8x512xf32>
    %273 = arith.addf %270, %272 : vector<8x512xf32>
    %274 = math.tanh %273 : vector<8x512xf32>
    %275 = vector.extract_strided_slice %250 {offsets = [0, 1536], sizes = [8, 512], strides = [1, 1]} : vector<8x2048xf32> to vector<8x512xf32>
    %c0_108 = arith.constant 0 : index
    %c1536_109 = arith.constant 1536 : index
    %276 = vector.load %arg13[%c0_108, %c1536_109] : memref<512x2048xbf16, #tpu.memory_space<vmem>>, vector<512x512xbf16>
    %cst_110 = arith.constant dense<0.000000e+00> : vector<8x512xf32>
    %277 = tpu.matmul %251, %276, %cst_110 {dimension_numbers = #tpu.dot_dimension_numbers<[1], [0], [0], [1], [0, 0, 1, 1], [], []>} : vector<8x512xbf16>, vector<512x512xbf16>, vector<8x512xf32> -> vector<8x512xf32>
    %278 = arith.addf %275, %277 : vector<8x512xf32>
    %279 = arith.negf %278 : vector<8x512xf32>
    %280 = math.exp %279 : vector<8x512xf32>
    %cst_111 = arith.constant 1.000000e+00 : f32
    %281 = vector.broadcast %cst_111 : f32 to vector<8x512xf32>
    %282 = arith.addf %281, %280 : vector<8x512xf32>
    %283 = arith.divf %281, %282 : vector<8x512xf32>
    %284 = arith.mulf %269, %247 : vector<8x512xf32>
    %285 = arith.mulf %260, %274 : vector<8x512xf32>
    %286 = arith.addf %284, %285 : vector<8x512xf32>
    %287 = math.tanh %286 : vector<8x512xf32>
    %288 = arith.mulf %283, %287 : vector<8x512xf32>
    %289 = vector.extract_strided_slice %11 {offsets = [56, 0], sizes = [8, 2048], strides = [1, 1]} : vector<64x2048xf32> to vector<8x2048xf32>
    %290 = arith.truncf %288 : vector<8x512xf32> to vector<8x512xbf16>
    %291 = vector.extract_strided_slice %289 {offsets = [0, 0], sizes = [8, 512], strides = [1, 1]} : vector<8x2048xf32> to vector<8x512xf32>
    %c0_112 = arith.constant 0 : index
    %c0_113 = arith.constant 0 : index
    %292 = vector.load %arg13[%c0_112, %c0_113] : memref<512x2048xbf16, #tpu.memory_space<vmem>>, vector<512x512xbf16>
    %cst_114 = arith.constant dense<0.000000e+00> : vector<8x512xf32>
    %293 = tpu.matmul %290, %292, %cst_114 {dimension_numbers = #tpu.dot_dimension_numbers<[1], [0], [0], [1], [0, 0, 1, 1], [], []>} : vector<8x512xbf16>, vector<512x512xbf16>, vector<8x512xf32> -> vector<8x512xf32>
    %294 = arith.addf %291, %293 : vector<8x512xf32>
    %295 = arith.negf %294 : vector<8x512xf32>
    %296 = math.exp %295 : vector<8x512xf32>
    %cst_115 = arith.constant 1.000000e+00 : f32
    %297 = vector.broadcast %cst_115 : f32 to vector<8x512xf32>
    %298 = arith.addf %297, %296 : vector<8x512xf32>
    %299 = arith.divf %297, %298 : vector<8x512xf32>
    %300 = vector.extract_strided_slice %289 {offsets = [0, 512], sizes = [8, 512], strides = [1, 1]} : vector<8x2048xf32> to vector<8x512xf32>
    %c0_116 = arith.constant 0 : index
    %c512_117 = arith.constant 512 : index
    %301 = vector.load %arg13[%c0_116, %c512_117] : memref<512x2048xbf16, #tpu.memory_space<vmem>>, vector<512x512xbf16>
    %cst_118 = arith.constant dense<0.000000e+00> : vector<8x512xf32>
    %302 = tpu.matmul %290, %301, %cst_118 {dimension_numbers = #tpu.dot_dimension_numbers<[1], [0], [0], [1], [0, 0, 1, 1], [], []>} : vector<8x512xbf16>, vector<512x512xbf16>, vector<8x512xf32> -> vector<8x512xf32>
    %303 = arith.addf %300, %302 : vector<8x512xf32>
    %304 = arith.negf %303 : vector<8x512xf32>
    %305 = math.exp %304 : vector<8x512xf32>
    %cst_119 = arith.constant 1.000000e+00 : f32
    %306 = vector.broadcast %cst_119 : f32 to vector<8x512xf32>
    %307 = arith.addf %306, %305 : vector<8x512xf32>
    %308 = arith.divf %306, %307 : vector<8x512xf32>
    %309 = vector.extract_strided_slice %289 {offsets = [0, 1024], sizes = [8, 512], strides = [1, 1]} : vector<8x2048xf32> to vector<8x512xf32>
    %c0_120 = arith.constant 0 : index
    %c1024_121 = arith.constant 1024 : index
    %310 = vector.load %arg13[%c0_120, %c1024_121] : memref<512x2048xbf16, #tpu.memory_space<vmem>>, vector<512x512xbf16>
    %cst_122 = arith.constant dense<0.000000e+00> : vector<8x512xf32>
    %311 = tpu.matmul %290, %310, %cst_122 {dimension_numbers = #tpu.dot_dimension_numbers<[1], [0], [0], [1], [0, 0, 1, 1], [], []>} : vector<8x512xbf16>, vector<512x512xbf16>, vector<8x512xf32> -> vector<8x512xf32>
    %312 = arith.addf %309, %311 : vector<8x512xf32>
    %313 = math.tanh %312 : vector<8x512xf32>
    %314 = vector.extract_strided_slice %289 {offsets = [0, 1536], sizes = [8, 512], strides = [1, 1]} : vector<8x2048xf32> to vector<8x512xf32>
    %c0_123 = arith.constant 0 : index
    %c1536_124 = arith.constant 1536 : index
    %315 = vector.load %arg13[%c0_123, %c1536_124] : memref<512x2048xbf16, #tpu.memory_space<vmem>>, vector<512x512xbf16>
    %cst_125 = arith.constant dense<0.000000e+00> : vector<8x512xf32>
    %316 = tpu.matmul %290, %315, %cst_125 {dimension_numbers = #tpu.dot_dimension_numbers<[1], [0], [0], [1], [0, 0, 1, 1], [], []>} : vector<8x512xbf16>, vector<512x512xbf16>, vector<8x512xf32> -> vector<8x512xf32>
    %317 = arith.addf %314, %316 : vector<8x512xf32>
    %318 = arith.negf %317 : vector<8x512xf32>
    %319 = math.exp %318 : vector<8x512xf32>
    %cst_126 = arith.constant 1.000000e+00 : f32
    %320 = vector.broadcast %cst_126 : f32 to vector<8x512xf32>
    %321 = arith.addf %320, %319 : vector<8x512xf32>
    %322 = arith.divf %320, %321 : vector<8x512xf32>
    %323 = arith.mulf %308, %286 : vector<8x512xf32>
    %324 = arith.mulf %299, %313 : vector<8x512xf32>
    %325 = arith.addf %323, %324 : vector<8x512xf32>
    %326 = math.tanh %325 : vector<8x512xf32>
    %327 = arith.mulf %322, %326 : vector<8x512xf32>
    %c0_127 = arith.constant 0 : index
    %c0_128 = arith.constant 0 : index
    %328 = vector.load %arg10[%c0_127, %c0_128] : memref<8x512xf32, #tpu.memory_space<vmem>>, vector<8x512xf32>
    tpu.vector_store %arg10[%c0_127, %c0_128], %327 {strides = array<i32>} : memref<8x512xf32, #tpu.memory_space<vmem>>, vector<8x512xf32>,
    %c0_129 = arith.constant 0 : index
    %c0_130 = arith.constant 0 : index
    %329 = vector.load %arg11[%c0_129, %c0_130] : memref<8x512xf32, #tpu.memory_space<vmem>>, vector<8x512xf32>
    tpu.vector_store %arg11[%c0_129, %c0_130], %325 {strides = array<i32>} : memref<8x512xf32, #tpu.memory_space<vmem>>, vector<8x512xf32>,
    %c1_i32_131 = arith.constant 1 : i32
    %330 = tpu.memref_slice %arg16[%c1_i32_131] : memref<3x!tpu.dma_semaphore, #tpu.memory_space<semaphore_mem>> -> memref<1x!tpu.dma_semaphore, #tpu.memory_space<semaphore_mem>>
    %331 = tpu.memref_squeeze %330 : memref<1x!tpu.dma_semaphore, #tpu.memory_space<semaphore_mem>> -> memref<!tpu.dma_semaphore, #tpu.memory_space<semaphore_mem>>
    tpu.wait_dma2 semaphore(%331 : memref<!tpu.dma_semaphore, #tpu.memory_space<semaphore_mem>>) src(%arg8 : memref<512x384xbf16, #tpu.memory_space<any>>) dst(%arg14 : memref<512x384xbf16, #tpu.memory_space<vmem>>)
    %332 = arith.truncf %327 : vector<8x512xf32> to vector<8x512xbf16>
    %c0_132 = arith.constant 0 : index
    %c0_133 = arith.constant 0 : index
    %333 = vector.load %arg14[%c0_132, %c0_133] : memref<512x384xbf16, #tpu.memory_space<vmem>>, vector<512x384xbf16>
    %cst_134 = arith.constant dense<0.000000e+00> : vector<8x384xf32>
    %334 = tpu.matmul %332, %333, %cst_134 {dimension_numbers = #tpu.dot_dimension_numbers<[1], [0], [0], [1], [0, 0, 1, 1], [], []>} : vector<8x512xbf16>, vector<512x384xbf16>, vector<8x384xf32> -> vector<8x384xf32>
    %c0_135 = arith.constant 0 : index
    %c0_136 = arith.constant 0 : index
    %335 = vector.load %arg5[%c0_135, %c0_136] : memref<1x384xf32, #tpu.memory_space<vmem>>, vector<1x384xf32>
    %336 = vector.broadcast %335 : vector<1x384xf32> to vector<8x384xf32>
    %337 = arith.addf %334, %336 : vector<8x384xf32>
    %338 = arith.negf %337 : vector<8x384xf32>
    %339 = math.exp %338 : vector<8x384xf32>
    %cst_137 = arith.constant 1.000000e+00 : f32
    %340 = vector.broadcast %cst_137 : f32 to vector<8x384xf32>
    %341 = arith.addf %340, %339 : vector<8x384xf32>
    %342 = arith.divf %340, %341 : vector<8x384xf32>
    %c2_i32_138 = arith.constant 2 : i32
    %343 = tpu.memref_slice %arg16[%c2_i32_138] : memref<3x!tpu.dma_semaphore, #tpu.memory_space<semaphore_mem>> -> memref<1x!tpu.dma_semaphore, #tpu.memory_space<semaphore_mem>>
    %344 = tpu.memref_squeeze %343 : memref<1x!tpu.dma_semaphore, #tpu.memory_space<semaphore_mem>> -> memref<!tpu.dma_semaphore, #tpu.memory_space<semaphore_mem>>
    tpu.wait_dma2 semaphore(%344 : memref<!tpu.dma_semaphore, #tpu.memory_space<semaphore_mem>>) src(%arg9 : memref<384x128xbf16, #tpu.memory_space<any>>) dst(%arg15 : memref<384x128xbf16, #tpu.memory_space<vmem>>)
    %345 = arith.truncf %342 : vector<8x384xf32> to vector<8x384xbf16>
    %c0_139 = arith.constant 0 : index
    %c0_140 = arith.constant 0 : index
    %346 = vector.load %arg15[%c0_139, %c0_140] : memref<384x128xbf16, #tpu.memory_space<vmem>>, vector<384x128xbf16>
    %cst_141 = arith.constant dense<0.000000e+00> : vector<8x128xf32>
    %347 = tpu.matmul %345, %346, %cst_141 {dimension_numbers = #tpu.dot_dimension_numbers<[1], [0], [0], [1], [0, 0, 1, 1], [], []>} : vector<8x384xbf16>, vector<384x128xbf16>, vector<8x128xf32> -> vector<8x128xf32>
    %c0_142 = arith.constant 0 : index
    %c0_143 = arith.constant 0 : index
    %348 = vector.load %arg6[%c0_142, %c0_143] : memref<1x128xf32, #tpu.memory_space<vmem>>, vector<1x128xf32>
    %349 = vector.broadcast %348 : vector<1x128xf32> to vector<8x128xf32>
    %350 = arith.addf %347, %349 : vector<8x128xf32>
    %c0_144 = arith.constant 0 : index
    %c0_145 = arith.constant 0 : index
    %351 = vector.load %arg12[%c0_144, %c0_145] : memref<8x128xf32, #tpu.memory_space<vmem>>, vector<8x128xf32>
    tpu.vector_store %arg12[%c0_144, %c0_145], %350 {strides = array<i32>} : memref<8x128xf32, #tpu.memory_space<vmem>>, vector<8x128xf32>,
    return
  }
}

</mosaic_0001>

<llo_original>
// kernel: tpu_custom_call.1
$region0: #{tpu_custom_call.1}
  #allocation0 [shape = 'u32[]', space=smem, size = 0x4, offset = 0x4, fixed_abs, tag = 'smem constant byte address 0x4 - core index']
  #allocation1 [shape = 'u32[144,128]{1,0:T(1,128)}', space=vmem, size = 0x12000, scoped, tag = 'internal scratch']
  #allocation2 [shape = 'bf16[512,2048]{1,0:T(16,128)(2,1)}', space=vmem, size = 0x200000, scoped, tag = 'scratch operand']
  #allocation3 [shape = 'bf16[512,384]{1,0:T(16,128)(2,1)}', space=vmem, size = 0x60000, scoped, tag = 'scratch operand']
  #allocation4 [shape = 'bf16[384,128]{1,0:T(16,128)(2,1)}', space=vmem, size = 0x18000, scoped, tag = 'scratch operand']
  #allocation5 [shape = 's32[3]{0}', space=sflag, size = 0xc, scoped, tag = 'scratch operand']
  #allocation21 [shape = 's32[]', space=sflag, size = 0x4, offset = 0, fixed_abs, tag = 'sflag constant byte address 0x0 - dummy sync flag']
  #allocation23 [shape = 's32[]', space=sflag, size = 0x4, offset = 0, fixed_abs, tag = 'sflag constant byte address 0x0 - dummy sync flag']
  #allocation25 [shape = 's32[]', space=sflag, size = 0x4, offset = 0, fixed_abs, tag = 'sflag constant byte address 0x0 - dummy sync flag']
  #allocation26 [shape = 's32[]', space=sflag, size = 0x4, offset = 0, fixed_abs, tag = 'sflag constant byte address 0x0 - dummy sync flag']
  #allocation27 [shape = 'u32[]', space=smem, size = 0x4, offset = 0x44, fixed_abs, tag = 'smem constant byte address 0x44 - assertion arg 0']
  #allocation28 [shape = 'u32[]', space=smem, size = 0x4, offset = 0x48, fixed_abs, tag = 'smem constant byte address 0x48 - assertion arg 1']
  %s0 = inlined_call_operand.vmem [shape: bf16[64,32], index: 0, kind: input, shape index: {}]
  %s1 = inlined_call_operand.hbm [shape: f32[8,512], index: 1, kind: input, shape index: {}]
  %s2 = inlined_call_operand.hbm [shape: f32[8,512], index: 2, kind: input, shape index: {}]
  %s3 = inlined_call_operand.hbm [shape: bf16[32,2048], index: 3, kind: input, shape index: {}]
  %s4 = inlined_call_operand.hbm [shape: f32[1,2048], index: 4, kind: input, shape index: {}]
  %s5 = inlined_call_operand.hbm [shape: f32[1,384], index: 5, kind: input, shape index: {}]
  %s6 = inlined_call_operand.hbm [shape: f32[1,128], index: 6, kind: input, shape index: {}]
  %s7 = inlined_call_operand.hbm [shape: bf16[512,2048], index: 7, kind: input, shape index: {}]
  %s8 = inlined_call_operand.hbm [shape: bf16[512,384], index: 8, kind: input, shape index: {}]
  %s9 = inlined_call_operand.hbm [shape: bf16[384,128], index: 9, kind: input, shape index: {}]
  %s10 = inlined_call_operand.hbm [shape: f32[8,512], index: 10, kind: output, shape index: {0}]
  %s11 = inlined_call_operand.hbm [shape: f32[8,512], index: 11, kind: output, shape index: {1}]
  %s12 = inlined_call_operand.hbm [shape: f32[8,128], index: 12, kind: output, shape index: {2}]
  %13 = xla_tuple %s10, %s11, %s12
  %s14 = sld [smem:[#allocation0]]
  $region82: #{tpu_custom_call.1} parent=0
    _
  %s16 = ssub.s32 1, %s14
  %s17 = scalar_select 0, %s16, %s14
  $region1: #{tpu_custom_call.1} parent=0
    #allocation6 [shape = 'u8[16384]{0}', space=vmem, size = 0x4000, scoped, tag = 'input window, operand 1, single buffered']
    #allocation7 [shape = 's32[1]{0}', space=sflag, size = 0x4, scoped, tag = 'scoped memory for tpu_custom_call.1']
    #allocation8 [shape = 's32[1]{0}', space=sflag, size = 0x4, scoped, tag = 'scoped memory for tpu_custom_call.1']
    #allocation9 [shape = 'u8[16384]{0}', space=vmem, size = 0x4000, scoped, tag = 'input window, operand 2, single buffered']
    #allocation10 [shape = 's32[1]{0}', space=sflag, size = 0x4, scoped, tag = 'scoped memory for tpu_custom_call.1']
    #allocation11 [shape = 'u8[131072]{0}', space=vmem, size = 0x20000, scoped, tag = 'input window, operand 3, single buffered']
    #allocation12 [shape = 'u8[8192]{0}', space=vmem, size = 0x2000, scoped, tag = 'input window, operand 4, single buffered']
    #allocation13 [shape = 's32[1]{0}', space=sflag, size = 0x4, scoped, tag = 'scoped memory for tpu_custom_call.1']
    #allocation14 [shape = 'u8[1536]{0}', space=vmem, size = 0x800, scoped, tag = 'input window, operand 5, single buffered']
    #allocation15 [shape = 'u8[512]{0}', space=vmem, size = 0x400, scoped, tag = 'input window, operand 6, single buffered']
    #allocation16 [shape = 's32[1]{0}', space=sflag, size = 0x4, scoped, tag = 'scoped memory for tpu_custom_call.1']
    #allocation17 [shape = 'u8[16384]{0}', space=vmem, size = 0x4000, scoped, tag = 'output window, operand 0, single buffered']
    #allocation18 [shape = 'u8[16384]{0}', space=vmem, size = 0x4000, scoped, tag = 'output window, operand 1, single buffered']
    #allocation19 [shape = 's32[1]{0}', space=sflag, size = 0x4, scoped, tag = 'scoped memory for tpu_custom_call.1']
    #allocation20 [shape = 'u8[4096]{0}', space=vmem, size = 0x1000, scoped, tag = 'output window, operand 2, single buffered']
    #allocation22 [shape = 'u32[9]{0}', space=smem, size = 0x24, scoped, tag = 'DMA stride descriptor']
    #allocation24 [shape = 'u32[9]{0}', space=smem, size = 0x24, scoped, tag = 'DMA stride descriptor']
    %18 = vsyncpa [#allocation7], 0
    %19 = vsyncpa [#allocation10], 0
    %20 = vsyncpa [#allocation13], 0
    %21 = vsyncpa [#allocation16], 0
    %22 = vsyncpa [#allocation8], 0
    %23 = vsyncpa [#allocation19], 0
    // Predicated region
    $region2: #{tpu_custom_call.1} parent=1 // pred_check
      _
    $region3: #{tpu_custom_call.1} parent=1 // pred_check_branch
      %25 = sbr.rel (0) target = $region5
    $region4: #{tpu_custom_call.1} parent=1 // pred_region
      _
    $region5: #{tpu_custom_call.1} parent=1 // pred_fallthru
      _
    // Predicated region
    $region6: #{tpu_custom_call.1} parent=1 // pred_check
      _
    $region7: #{tpu_custom_call.1} parent=1 // pred_check_branch
      %27 = sbr.rel (0) target = $region9
    $region8: #{tpu_custom_call.1} parent=1 // pred_region
      %s29 = ssub.s32 512, 512
      %30 = vsyncadd [#allocation7], %s29
      %s32 = sshll.u32 [#allocation6], 4
      %s33 = int_to_ptr.vmem [resolvable:$true] %s32
      %35 = dma.hbm_to_vmem [thread:$0]  %s1, 512, %s33, [#allocation7]
    $region9: #{tpu_custom_call.1} parent=1 // pred_fallthru
      _
    // Predicated region
    $region10: #{tpu_custom_call.1} parent=1 // pred_check
      _
    $region11: #{tpu_custom_call.1} parent=1 // pred_check_branch
      %37 = sbr.rel (0) target = $region13
    $region12: #{tpu_custom_call.1} parent=1 // pred_region
      %s39 = ssub.s32 512, 512
      %40 = vsyncadd [#allocation10], %s39
      %s42 = sshll.u32 [#allocation9], 4
      %s43 = int_to_ptr.vmem [resolvable:$true] %s42
      %45 = dma.hbm_to_vmem [thread:$0]  %s2, 512, %s43, [#allocation10]
    $region13: #{tpu_custom_call.1} parent=1 // pred_fallthru
      _
    // Predicated region
    $region14: #{tpu_custom_call.1} parent=1 // pred_check
      _
    $region15: #{tpu_custom_call.1} parent=1 // pred_check_branch
      %47 = sbr.rel (0) target = $region17
    $region16: #{tpu_custom_call.1} parent=1 // pred_region
      %s49 = ssub.s32 4096, 4096
      %50 = vsyncadd [#allocation10], %s49
      %s51 = sshll.u32 [#allocation11], 4
      %s52 = int_to_ptr.vmem [resolvable:$true] %s51
      %57 = dma.hbm_to_vmem [thread:$0]  %s3, 4096, %s52, [#allocation10], 1024, 1024, 64
    $region17: #{tpu_custom_call.1} parent=1 // pred_fallthru
      _
    // Predicated region
    $region18: #{tpu_custom_call.1} parent=1 // pred_check
      _
    $region19: #{tpu_custom_call.1} parent=1 // pred_check_branch
      %59 = sbr.rel (0) target = $region21
    $region20: #{tpu_custom_call.1} parent=1 // pred_region
      %s61 = ssub.s32 256, 256
      %62 = vsyncadd [#allocation13], %s61
      %s64 = sshll.u32 [#allocation12], 4
      %s65 = int_to_ptr.vmem [resolvable:$true] %s64
      %67 = dma.hbm_to_vmem [thread:$0]  %s4, 256, %s65, [#allocation13]
    $region21: #{tpu_custom_call.1} parent=1 // pred_fallthru
      _
    // Predicated region
    $region22: #{tpu_custom_call.1} parent=1 // pred_check
      _
    $region23: #{tpu_custom_call.1} parent=1 // pred_check_branch
      %69 = sbr.rel (0) target = $region25
    $region24: #{tpu_custom_call.1} parent=1 // pred_region
      %s71 = ssub.s32 48, 48
      %72 = vsyncadd [#allocation13], %s71
      %s74 = sshll.u32 [#allocation14], 4
      %s75 = int_to_ptr.vmem [resolvable:$true] %s74
      %77 = dma.hbm_to_vmem [thread:$0]  %s5, 48, %s75, [#allocation13]
    $region25: #{tpu_custom_call.1} parent=1 // pred_fallthru
      _
    // Predicated region
    $region26: #{tpu_custom_call.1} parent=1 // pred_check
      _
    $region27: #{tpu_custom_call.1} parent=1 // pred_check_branch
      %79 = sbr.rel (0) target = $region29
    $region28: #{tpu_custom_call.1} parent=1 // pred_region
      %s81 = ssub.s32 16, 16
      %82 = vsyncadd [#allocation16], %s81
      %s84 = sshll.u32 [#allocation15], 4
      %s85 = int_to_ptr.vmem [resolvable:$true] %s84
      %87 = dma.hbm_to_vmem [thread:$0]  %s6, 16, %s85, [#allocation16]
    $region29: #{tpu_custom_call.1} parent=1 // pred_fallthru
      _
    // Predicated region
    $region30: #{tpu_custom_call.1} parent=1 // pred_check
      _
    $region31: #{tpu_custom_call.1} parent=1 // pred_check_branch
      %89 = sbr.rel (0) target = $region33
    $region32: #{tpu_custom_call.1} parent=1 // pred_region
      %90 = dma.done [#allocation7], 512
    $region33: #{tpu_custom_call.1} parent=1 // pred_fallthru
      _
    // Predicated region
    $region34: #{tpu_custom_call.1} parent=1 // pred_check
      _
    $region35: #{tpu_custom_call.1} parent=1 // pred_check_branch
      %92 = sbr.rel (0) target = $region37
    $region36: #{tpu_custom_call.1} parent=1 // pred_region
      %93 = dma.done [#allocation10], 512
    $region37: #{tpu_custom_call.1} parent=1 // pred_fallthru
      _
    // Predicated region
    $region38: #{tpu_custom_call.1} parent=1 // pred_check
      _
    $region39: #{tpu_custom_call.1} parent=1 // pred_check_branch
      %95 = sbr.rel (0) target = $region41
    $region40: #{tpu_custom_call.1} parent=1 // pred_region
      %96 = dma.done [#allocation10], 4096
    $region41: #{tpu_custom_call.1} parent=1 // pred_fallthru
      _
    // Predicated region
    $region42: #{tpu_custom_call.1} parent=1 // pred_check
      _
    $region43: #{tpu_custom_call.1} parent=1 // pred_check_branch
      %98 = sbr.rel (0) target = $region45
    $region44: #{tpu_custom_call.1} parent=1 // pred_region
      %99 = dma.done [#allocation13], 256
    $region45: #{tpu_custom_call.1} parent=1 // pred_fallthru
      _
    // Predicated region
    $region46: #{tpu_custom_call.1} parent=1 // pred_check
      _
    $region47: #{tpu_custom_call.1} parent=1 // pred_check_branch
      %101 = sbr.rel (0) target = $region49
    $region48: #{tpu_custom_call.1} parent=1 // pred_region
      %102 = dma.done [#allocation13], 48
    $region49: #{tpu_custom_call.1} parent=1 // pred_fallthru
      _
    // Predicated region
    $region50: #{tpu_custom_call.1} parent=1 // pred_check
      _
    $region51: #{tpu_custom_call.1} parent=1 // pred_check_branch
      %104 = sbr.rel (0) target = $region53
    $region52: #{tpu_custom_call.1} parent=1 // pred_region
      %105 = dma.done [#allocation16], 16
    $region53: #{tpu_custom_call.1} parent=1 // pred_fallthru
      _
    %s108 = sshll.u32 1, 14
    %s109 = sxor.u32 4294967295, %s108
    %s111 = sld [smem:[#allocation0]]
    %s112 = sadd.s32 2, %s111
    %s114 = sshll.u32 7, 26
    %s115 = sxor.u32 4294967295, %s114
    %s116 = sand.u32 0, %s115
    %s117 = sshll.u32 %s112, 26
    %s118 = sor.u32 %s116, %s117
    %s119 = sshll.u32 [#allocation2], 4
    %s120 = int_to_ptr.vmem [resolvable:$true] %s119
    %123 = sst [smem:[#allocation22]] 2048
    %s124 = scalar_lea.smem [#allocation22], 1
    %125 = sst [smem:[%s124]] 2048
    %s126 = scalar_lea.smem [#allocation22], 2
    %127 = sst [smem:[%s126]] 16
    %s128 = scalar_lea.smem [#allocation22], 3
    %129 = sst [smem:[%s128]] 64
    %s130 = scalar_lea.smem [#allocation22], 4
    %131 = sst [smem:[%s130]] 128
    %s132 = scalar_lea.smem [#allocation22], 5
    %133 = sst [smem:[%s132]] 2
    %s134 = scalar_lea.smem [#allocation22], 6
    %135 = sst [smem:[%s134]] 1024
    %s136 = scalar_lea.smem [#allocation22], 7
    %137 = sst [smem:[%s136]] 64
    %s138 = scalar_lea.smem [#allocation22], 8
    %139 = sst [smem:[%s138]] 4
    %141 = dma.general %s7, 65536, %s120, [#allocation5], [#allocation21], [#allocation22], %s118, 0
    %s142 = scalar_lea.sflag [#allocation5], 1
    %s144 = sshll.u32 1, 14
    %s145 = sxor.u32 4294967295, %s144
    %s147 = sadd.s32 2, %s111
    %s149 = sshll.u32 7, 26
    %s150 = sxor.u32 4294967295, %s149
    %s151 = sand.u32 0, %s150
    %s152 = sshll.u32 %s147, 26
    %s153 = sor.u32 %s151, %s152
    %s154 = sshll.u32 [#allocation3], 4
    %s155 = int_to_ptr.vmem [resolvable:$true] %s154
    %158 = sst [smem:[#allocation24]] 384
    %s159 = scalar_lea.smem [#allocation24], 1
    %160 = sst [smem:[%s159]] 384
    %s161 = scalar_lea.smem [#allocation24], 2
    %162 = sst [smem:[%s161]] 3
    %s163 = scalar_lea.smem [#allocation24], 3
    %164 = sst [smem:[%s163]] 64
    %s165 = scalar_lea.smem [#allocation24], 4
    %166 = sst [smem:[%s165]] 128
    %s167 = scalar_lea.smem [#allocation24], 5
    %168 = sst [smem:[%s167]] 2
    %s169 = scalar_lea.smem [#allocation24], 6
    %170 = sst [smem:[%s169]] 192
    %s171 = scalar_lea.smem [#allocation24], 7
    %172 = sst [smem:[%s171]] 64
    %s173 = scalar_lea.smem [#allocation24], 8
    %174 = sst [smem:[%s173]] 4
    %176 = dma.general %s8, 12288, %s155, %s142, [#allocation23], [#allocation24], %s153, 0
    %s177 = scalar_lea.sflag [#allocation5], 2
    // Predicated region
    $region54: #{tpu_custom_call.1} parent=1 // pred_check
      _
    $region55: #{tpu_custom_call.1} parent=1 // pred_check_branch
      %179 = sbr.rel target = $region57
    $region56: #{tpu_custom_call.1} parent=1 // pred_region
      %180 = sst [smem:[#allocation27]] [#allocation26]
      %181 = sst [smem:[#allocation28]] [#allocation25]
    $region57: #{tpu_custom_call.1} parent=1 // pred_fallthru
      _
    %183 = shalt.err (0)
    %s185 = sshll.u32 [#allocation4], 4
    %s186 = int_to_ptr.vmem [resolvable:$true] %s185
    %188 = dma.hbm_to_vmem [thread:$0]  %s9, 3072, %s186, %s177
    %v189 = vld [vmem:[%s0] sm:$0xf]
    %v190 = vld [vmem:[%s0 + $0x4] sm:$0xf]
    %v191 = vld [vmem:[%s0 + $0x8] sm:$0xf]
    %v192 = vld [vmem:[%s0 + $0xc] sm:$0xf]
    %v193 = vld [vmem:[%s0 + $0x10] sm:$0xf]
    %v194 = vld [vmem:[%s0 + $0x14] sm:$0xf]
    %v195 = vld [vmem:[%s0 + $0x18] sm:$0xf]
    %v196 = vld [vmem:[%s0 + $0x1c] sm:$0xf]
    %v197 = vld [vmem:[#allocation11] sm:$0xff]
    %v198 = vld [vmem:[#allocation11 + $0x8] sm:$0xff]
    %v199 = vld [vmem:[#allocation11 + $0x10] sm:$0xff]
    %v200 = vld [vmem:[#allocation11 + $0x18] sm:$0xff]
    %v201 = vld [vmem:[#allocation11 + $0x20] sm:$0xff]
    %v202 = vld [vmem:[#allocation11 + $0x28] sm:$0xff]
    %v203 = vld [vmem:[#allocation11 + $0x30] sm:$0xff]
    %v204 = vld [vmem:[#allocation11 + $0x38] sm:$0xff]
    %v205 = vld [vmem:[#allocation11 + $0x40] sm:$0xff]
    %v206 = vld [vmem:[#allocation11 + $0x48] sm:$0xff]
    %v207 = vld [vmem:[#allocation11 + $0x50] sm:$0xff]
    %v208 = vld [vmem:[#allocation11 + $0x58] sm:$0xff]
    %v209 = vld [vmem:[#allocation11 + $0x60] sm:$0xff]
    %v210 = vld [vmem:[#allocation11 + $0x68] sm:$0xff]
    %v211 = vld [vmem:[#allocation11 + $0x70] sm:$0xff]
    %v212 = vld [vmem:[#allocation11 + $0x78] sm:$0xff]
    %v213 = vld [vmem:[#allocation11 + $0x80] sm:$0xff]
    %v214 = vld [vmem:[#allocation11 + $0x88] sm:$0xff]
    %v215 = vld [vmem:[#allocation11 + $0x90] sm:$0xff]
    %v216 = vld [vmem:[#allocation11 + $0x98] sm:$0xff]
    %v217 = vld [vmem:[#allocation11 + $0xa0] sm:$0xff]
    %v218 = vld [vmem:[#allocation11 + $0xa8] sm:$0xff]
    %v219 = vld [vmem:[#allocation11 + $0xb0] sm:$0xff]
    %v220 = vld [vmem:[#allocation11 + $0xb8] sm:$0xff]
    %v221 = vld [vmem:[#allocation11 + $0xc0] sm:$0xff]
    %v222 = vld [vmem:[#allocation11 + $0xc8] sm:$0xff]
    %v223 = vld [vmem:[#allocation11 + $0xd0] sm:$0xff]
    %v224 = vld [vmem:[#allocation11 + $0xd8] sm:$0xff]
    %v225 = vld [vmem:[#allocation11 + $0xe0] sm:$0xff]
    %v226 = vld [vmem:[#allocation11 + $0xe8] sm:$0xff]
    %v227 = vld [vmem:[#allocation11 + $0xf0] sm:$0xff]
    %v228 = vld [vmem:[#allocation11 + $0xf8] sm:$0xff]
    %v229 = vld [vmem:[#allocation12] sm:$0xff]
    %v230 = vld [vmem:[#allocation12 + $0x8] sm:$0xff]
    %v233 = vlaneseq
    %v234 = vshrl.u32 %v233, 7
    %v235 = vsub.s32 0, %v234
    %v236 = vrot.slane %v229, %v235
    %v237 = vlaneseq
    %v238 = vshrl.u32 %v237, 7
    %v239 = vsub.s32 1, %v238
    %v240 = vrot.slane %v229, %v239
    %v241 = vlaneseq
    %v242 = vshrl.u32 %v241, 7
    %v243 = vsub.s32 2, %v242
    %v244 = vrot.slane %v229, %v243
    %v245 = vlaneseq
    %v246 = vshrl.u32 %v245, 7
    %v247 = vsub.s32 3, %v246
    %v248 = vrot.slane %v229, %v247
    %v249 = vlaneseq
    %v250 = vshrl.u32 %v249, 7
    %v251 = vsub.s32 4, %v250
    %v252 = vrot.slane %v229, %v251
    %v253 = vlaneseq
    %v254 = vshrl.u32 %v253, 7
    %v255 = vsub.s32 5, %v254
    %v256 = vrot.slane %v229, %v255
    %v257 = vlaneseq
    %v258 = vshrl.u32 %v257, 7
    %v259 = vsub.s32 6, %v258
    %v260 = vrot.slane %v229, %v259
    %v261 = vlaneseq
    %v262 = vshrl.u32 %v261, 7
    %v263 = vsub.s32 7, %v262
    %v264 = vrot.slane %v229, %v263
    %v265 = vlaneseq
    %v266 = vshrl.u32 %v265, 7
    %v267 = vsub.s32 0, %v266
    %v268 = vrot.slane %v230, %v267
    %v269 = vlaneseq
    %v270 = vshrl.u32 %v269, 7
    %v271 = vsub.s32 1, %v270
    %v272 = vrot.slane %v230, %v271
    %v273 = vlaneseq
    %v274 = vshrl.u32 %v273, 7
    %v275 = vsub.s32 2, %v274
    %v276 = vrot.slane %v230, %v275
    %v277 = vlaneseq
    %v278 = vshrl.u32 %v277, 7
    %v279 = vsub.s32 3, %v278
    %v280 = vrot.slane %v230, %v279
    %v281 = vlaneseq
    %v282 = vshrl.u32 %v281, 7
    %v283 = vsub.s32 4, %v282
    %v284 = vrot.slane %v230, %v283
    %v285 = vlaneseq
    %v286 = vshrl.u32 %v285, 7
    %v287 = vsub.s32 5, %v286
    %v288 = vrot.slane %v230, %v287
    %v289 = vlaneseq
    %v290 = vshrl.u32 %v289, 7
    %v291 = vsub.s32 6, %v290
    %v292 = vrot.slane %v230, %v291
    %v293 = vlaneseq
    %v294 = vshrl.u32 %v293, 7
    %v295 = vsub.s32 7, %v294
    %v296 = vrot.slane %v230, %v295
    %v321 = vunpack.c.l.b16 %v189
    %v322 = vunpack.c.l.b16 %v190
    %v323 = vunpack.c.l.b16 %v191
    %v324 = vunpack.c.l.b16 %v192
    %v325 = vunpack.c.l.b16 %v193
    %v326 = vunpack.c.l.b16 %v194
    %v327 = vunpack.c.l.b16 %v195
    %v328 = vunpack.c.l.b16 %v196
    %v329 = vpack.c.b16 %v322, %v321
    %v330 = vpack.c.b16 %v324, %v323
    %v331 = vpack.c.b16 %v326, %v325
    %v332 = vpack.c.b16 %v328, %v327
    %v365 = vunpack.c.l.b16 %v197
    %v366 = vunpack.c.h.b16 %v197
    %v367 = vunpack.c.l.b16 %v198
    %v368 = vunpack.c.h.b16 %v198
    %v369 = vunpack.c.l.b16 %v199
    %v370 = vunpack.c.h.b16 %v199
    %v371 = vunpack.c.l.b16 %v200
    %v372 = vunpack.c.h.b16 %v200
    %v373 = vunpack.c.l.b16 %v201
    %v374 = vunpack.c.h.b16 %v201
    %v375 = vunpack.c.l.b16 %v202
    %v376 = vunpack.c.h.b16 %v202
    %v377 = vunpack.c.l.b16 %v203
    %v378 = vunpack.c.h.b16 %v203
    %v379 = vunpack.c.l.b16 %v204
    %v380 = vunpack.c.h.b16 %v204
    %v381 = vunpack.c.l.b16 %v205
    %v382 = vunpack.c.h.b16 %v205
    %v383 = vunpack.c.l.b16 %v206
    %v384 = vunpack.c.h.b16 %v206
    %v385 = vunpack.c.l.b16 %v207
    %v386 = vunpack.c.h.b16 %v207
    %v387 = vunpack.c.l.b16 %v208
    %v388 = vunpack.c.h.b16 %v208
    %v389 = vunpack.c.l.b16 %v209
    %v390 = vunpack.c.h.b16 %v209
    %v391 = vunpack.c.l.b16 %v210
    %v392 = vunpack.c.h.b16 %v210
    %v393 = vunpack.c.l.b16 %v211
    %v394 = vunpack.c.h.b16 %v211
    %v395 = vunpack.c.l.b16 %v212
    %v396 = vunpack.c.h.b16 %v212
    %v397 = vunpack.c.l.b16 %v213
    %v398 = vunpack.c.h.b16 %v213
    %v399 = vunpack.c.l.b16 %v214
    %v400 = vunpack.c.h.b16 %v214
    %v401 = vunpack.c.l.b16 %v215
    %v402 = vunpack.c.h.b16 %v215
    %v403 = vunpack.c.l.b16 %v216
    %v404 = vunpack.c.h.b16 %v216
    %v405 = vunpack.c.l.b16 %v217
    %v406 = vunpack.c.h.b16 %v217
    %v407 = vunpack.c.l.b16 %v218
    %v408 = vunpack.c.h.b16 %v218
    %v409 = vunpack.c.l.b16 %v219
    %v410 = vunpack.c.h.b16 %v219
    %v411 = vunpack.c.l.b16 %v220
    %v412 = vunpack.c.h.b16 %v220
    %v413 = vunpack.c.l.b16 %v221
    %v414 = vunpack.c.h.b16 %v221
    %v415 = vunpack.c.l.b16 %v222
    %v416 = vunpack.c.h.b16 %v222
    %v417 = vunpack.c.l.b16 %v223
    %v418 = vunpack.c.h.b16 %v223
    %v419 = vunpack.c.l.b16 %v224
    %v420 = vunpack.c.h.b16 %v224
    %v421 = vunpack.c.l.b16 %v225
    %v422 = vunpack.c.h.b16 %v225
    %v423 = vunpack.c.l.b16 %v226
    %v424 = vunpack.c.h.b16 %v226
    %v425 = vunpack.c.l.b16 %v227
    %v426 = vunpack.c.h.b16 %v227
    %v427 = vunpack.c.l.b16 %v228
    %v428 = vunpack.c.h.b16 %v228
    %v429 = vpack.c.b16 %v381, %v365
    %v430 = vpack.c.b16 %v382, %v366
    %v431 = vpack.c.b16 %v383, %v367
    %v432 = vpack.c.b16 %v384, %v368
    %v433 = vpack.c.b16 %v385, %v369
    %v434 = vpack.c.b16 %v386, %v370
    %v435 = vpack.c.b16 %v387, %v371
    %v436 = vpack.c.b16 %v388, %v372
    %v437 = vpack.c.b16 %v389, %v373
    %v438 = vpack.c.b16 %v390, %v374
    %v439 = vpack.c.b16 %v391, %v375
    %v440 = vpack.c.b16 %v392, %v376
    %v441 = vpack.c.b16 %v393, %v377
    %v442 = vpack.c.b16 %v394, %v378
    %v443 = vpack.c.b16 %v395, %v379
    %v444 = vpack.c.b16 %v396, %v380
    %v445 = vpack.c.b16 %v413, %v397
    %v446 = vpack.c.b16 %v414, %v398
    %v447 = vpack.c.b16 %v415, %v399
    %v448 = vpack.c.b16 %v416, %v400
    %v449 = vpack.c.b16 %v417, %v401
    %v450 = vpack.c.b16 %v418, %v402
    %v451 = vpack.c.b16 %v419, %v403
    %v452 = vpack.c.b16 %v420, %v404
    %v453 = vpack.c.b16 %v421, %v405
    %v454 = vpack.c.b16 %v422, %v406
    %v455 = vpack.c.b16 %v423, %v407
    %v456 = vpack.c.b16 %v424, %v408
    %v457 = vpack.c.b16 %v425, %v409
    %v458 = vpack.c.b16 %v426, %v410
    %v459 = vpack.c.b16 %v427, %v411
    %v460 = vpack.c.b16 %v428, %v412
    %vm493 = vcmask 261120
    %v495 = vsel %vm493, %v329, 0
    %v498 = vsel %vm493, %v330, 0
    %v501 = vsel %vm493, %v331, 0
    %v504 = vsel %vm493, %v332, 0
    %506 = vmatprep.subr.bf16.mxu0 %v430
    %507 = vmatpush1.bf16.msra.mxu0 %v429
    %508 = vmatprep.subr.bf16.mxu0 %v446
    %509 = vmatpush1.bf16.msra.mxu0 %v445
    %510 = vmatprep.subr.bf16.mxu0 0
    %511 = vmatpush1.bf16.msra.mxu0 0
    %512 = vmatprep.subr.bf16.mxu0 0
    %513 = vmatpush1.bf16.msra.mxu0 0
    %514 = vmatprep.subr.bf16.mxu0 0
    %515 = vmatpush1.bf16.msra.mxu0 0
    %516 = vmatprep.subr.bf16.mxu0 0
    %517 = vmatpush1.bf16.msra.mxu0 0
    %518 = vmatprep.subr.bf16.mxu0 0
    %519 = vmatpush1.bf16.msra.mxu0 0
    %520 = vmatprep.subr.bf16.mxu0 0
    %521 = vmatpush1.bf16.msra.mxu0 0
    %522 = vmatprep.subr.bf16.mxu0 0
    %523 = vmatpush1.bf16.msra.mxu0 0
    %524 = vmatprep.subr.bf16.mxu0 0
    %525 = vmatpush1.bf16.msra.mxu0 0
    %526 = vmatprep.subr.bf16.mxu0 0
    %527 = vmatpush1.bf16.msra.mxu0 0
    %528 = vmatprep.subr.bf16.mxu0 0
    %529 = vmatpush1.bf16.msra.mxu0 0
    %530 = vmatprep.subr.bf16.mxu0 0
    %531 = vmatpush1.bf16.msra.mxu0 0
    %532 = vmatprep.subr.bf16.mxu0 0
    %533 = vmatpush1.bf16.msra.mxu0 0
    %534 = vmatprep.subr.bf16.mxu0 0
    %535 = vmatpush1.bf16.msra.mxu0 0
    %536 = vmatprep.subr.bf16.mxu0 0
    %537 = vmatpush1.bf16.msra.mxu0 0
    %538 = vmatprep.mubr.bf16.mxu0 0
    %539 = vmatmul.mubr.bf16.gmra.mrb[0].mxu0 %v495
    %v540 = vpop.f32.mrb[0].mxu0
    %v541 = vadd.f32 %v236, %v540
    %v542 = vpop.f32.mrb[0].mxu0
    %v543 = vadd.f32 %v240, %v542
    %v544 = vpop.f32.mrb[0].mxu0
    %v545 = vadd.f32 %v236, %v544
    %v546 = vpop.f32.mrb[0].mxu0
    %v547 = vadd.f32 %v240, %v546
    %548 = vmatprep.mubr.bf16.mxu0 0
    %549 = vmatmul.mubr.bf16.gmra.mrb[0].mxu0 %v498
    %v550 = vpop.f32.mrb[0].mxu0
    %v551 = vadd.f32 %v236, %v550
    %v552 = vpop.f32.mrb[0].mxu0
    %v553 = vadd.f32 %v240, %v552
    %v554 = vpop.f32.mrb[0].mxu0
    %v555 = vadd.f32 %v236, %v554
    %v556 = vpop.f32.mrb[0].mxu0
    %v557 = vadd.f32 %v240, %v556
    %558 = vmatprep.mubr.bf16.mxu0 0
    %559 = vmatmul.mubr.bf16.gmra.mrb[0].mxu0 %v501
    %v560 = vpop.f32.mrb[0].mxu0
    %v561 = vadd.f32 %v236, %v560
    %v562 = vpop.f32.mrb[0].mxu0
    %v563 = vadd.f32 %v240, %v562
    %v564 = vpop.f32.mrb[0].mxu0
    %v565 = vadd.f32 %v236, %v564
    %v566 = vpop.f32.mrb[0].mxu0
    %v567 = vadd.f32 %v240, %v566
    %568 = vmatprep.mubr.bf16.mxu0 0
    %569 = vmatmul.mubr.bf16.gmra.mrb[0].mxu0 %v504
    %v570 = vpop.f32.mrb[0].mxu0
    %v571 = vadd.f32 %v236, %v570
    %v572 = vpop.f32.mrb[0].mxu0
    %v573 = vadd.f32 %v240, %v572
    %v574 = vpop.f32.mrb[0].mxu0
    %v575 = vadd.f32 %v236, %v574
    %v576 = vpop.f32.mrb[0].mxu0
    %v577 = vadd.f32 %v240, %v576
    %578 = vdwg.mxu0
    %579 = vmatprep.subr.bf16.mxu0 %v432
    %580 = vmatpush1.bf16.msra.mxu0 %v431
    %581 = vmatprep.subr.bf16.mxu0 %v448
    %582 = vmatpush1.bf16.msra.mxu0 %v447
    %583 = vmatprep.subr.bf16.mxu0 0
    %584 = vmatpush1.bf16.msra.mxu0 0
    %585 = vmatprep.subr.bf16.mxu0 0
    %586 = vmatpush1.bf16.msra.mxu0 0
    %587 = vmatprep.subr.bf16.mxu0 0
    %588 = vmatpush1.bf16.msra.mxu0 0
    %589 = vmatprep.subr.bf16.mxu0 0
    %590 = vmatpush1.bf16.msra.mxu0 0
    %591 = vmatprep.subr.bf16.mxu0 0
    %592 = vmatpush1.bf16.msra.mxu0 0
    %593 = vmatprep.subr.bf16.mxu0 0
    %594 = vmatpush1.bf16.msra.mxu0 0
    %595 = vmatprep.subr.bf16.mxu0 0
    %596 = vmatpush1.bf16.msra.mxu0 0
    %597 = vmatprep.subr.bf16.mxu0 0
    %598 = vmatpush1.bf16.msra.mxu0 0
    %599 = vmatprep.subr.bf16.mxu0 0
    %600 = vmatpush1.bf16.msra.mxu0 0
    %601 = vmatprep.subr.bf16.mxu0 0
    %602 = vmatpush1.bf16.msra.mxu0 0
    %603 = vmatprep.subr.bf16.mxu0 0
    %604 = vmatpush1.bf16.msra.mxu0 0
    %605 = vmatprep.subr.bf16.mxu0 0
    %606 = vmatpush1.bf16.msra.mxu0 0
    %607 = vmatprep.subr.bf16.mxu0 0
    %608 = vmatpush1.bf16.msra.mxu0 0
    %609 = vmatprep.subr.bf16.mxu0 0
    %610 = vmatpush1.bf16.msra.mxu0 0
    %611 = vmatprep.mubr.bf16.mxu0 0
    %612 = vmatmul.mubr.bf16.gmra.mrb[0].mxu0 %v495
    %v613 = vpop.f32.mrb[0].mxu0
    %v614 = vadd.f32 %v244, %v613
    %v615 = vpop.f32.mrb[0].mxu0
    %v616 = vadd.f32 %v248, %v615
    %v617 = vpop.f32.mrb[0].mxu0
    %v618 = vadd.f32 %v244, %v617
    %v619 = vpop.f32.mrb[0].mxu0
    %v620 = vadd.f32 %v248, %v619
    %621 = vmatprep.mubr.bf16.mxu0 0
    %622 = vmatmul.mubr.bf16.gmra.mrb[0].mxu0 %v498
    %v623 = vpop.f32.mrb[0].mxu0
    %v624 = vadd.f32 %v244, %v623
    %v625 = vpop.f32.mrb[0].mxu0
    %v626 = vadd.f32 %v248, %v625
    %v627 = vpop.f32.mrb[0].mxu0
    %v628 = vadd.f32 %v244, %v627
    %v629 = vpop.f32.mrb[0].mxu0
    %v630 = vadd.f32 %v248, %v629
    %631 = vmatprep.mubr.bf16.mxu0 0
    %632 = vmatmul.mubr.bf16.gmra.mrb[0].mxu0 %v501
    %v633 = vpop.f32.mrb[0].mxu0
    %v634 = vadd.f32 %v244, %v633
    %v635 = vpop.f32.mrb[0].mxu0
    %v636 = vadd.f32 %v248, %v635
    %v637 = vpop.f32.mrb[0].mxu0
    %v638 = vadd.f32 %v244, %v637
    %v639 = vpop.f32.mrb[0].mxu0
    %v640 = vadd.f32 %v248, %v639
    %641 = vmatprep.mubr.bf16.mxu0 0
    %642 = vmatmul.mubr.bf16.gmra.mrb[0].mxu0 %v504
    %v643 = vpop.f32.mrb[0].mxu0
    %v644 = vadd.f32 %v244, %v643
    %v645 = vpop.f32.mrb[0].mxu0
    %v646 = vadd.f32 %v248, %v645
    %v647 = vpop.f32.mrb[0].mxu0
    %v648 = vadd.f32 %v244, %v647
    %v649 = vpop.f32.mrb[0].mxu0
    %v650 = vadd.f32 %v248, %v649
    %651 = vdwg.mxu0
    %652 = vmatprep.subr.bf16.mxu0 %v434
    %653 = vmatpush1.bf16.msra.mxu0 %v433
    %654 = vmatprep.subr.bf16.mxu0 %v450
    %655 = vmatpush1.bf16.msra.mxu0 %v449
    %656 = vmatprep.subr.bf16.mxu0 0
    %657 = vmatpush1.bf16.msra.mxu0 0
    %658 = vmatprep.subr.bf16.mxu0 0
    %659 = vmatpush1.bf16.msra.mxu0 0
    %660 = vmatprep.subr.bf16.mxu0 0
    %661 = vmatpush1.bf16.msra.mxu0 0
    %662 = vmatprep.subr.bf16.mxu0 0
    %663 = vmatpush1.bf16.msra.mxu0 0
    %664 = vmatprep.subr.bf16.mxu0 0
    %665 = vmatpush1.bf16.msra.mxu0 0
    %666 = vmatprep.subr.bf16.mxu0 0
    %667 = vmatpush1.bf16.msra.mxu0 0
    %668 = vmatprep.subr.bf16.mxu0 0
    %669 = vmatpush1.bf16.msra.mxu0 0
    %670 = vmatprep.subr.bf16.mxu0 0
    %671 = vmatpush1.bf16.msra.mxu0 0
    %672 = vmatprep.subr.bf16.mxu0 0
    %673 = vmatpush1.bf16.msra.mxu0 0
    %674 = vmatprep.subr.bf16.mxu0 0
    %675 = vmatpush1.bf16.msra.mxu0 0
    %676 = vmatprep.subr.bf16.mxu0 0
    %677 = vmatpush1.bf16.msra.mxu0 0
    %678 = vmatprep.subr.bf16.mxu0 0
    %679 = vmatpush1.bf16.msra.mxu0 0
    %680 = vmatprep.subr.bf16.mxu0 0
    %681 = vmatpush1.bf16.msra.mxu0 0
    %682 = vmatprep.subr.bf16.mxu0 0
    %683 = vmatpush1.bf16.msra.mxu0 0
    %684 = vmatprep.mubr.bf16.mxu0 0
    %685 = vmatmul.mubr.bf16.gmra.mrb[0].mxu0 %v495
    %v686 = vpop.f32.mrb[0].mxu0
    %v687 = vadd.f32 %v252, %v686
    %v688 = vpop.f32.mrb[0].mxu0
    %v689 = vadd.f32 %v256, %v688
    %v690 = vpop.f32.mrb[0].mxu0
    %v691 = vadd.f32 %v252, %v690
    %v692 = vpop.f32.mrb[0].mxu0
    %v693 = vadd.f32 %v256, %v692
    %694 = vmatprep.mubr.bf16.mxu0 0
    %695 = vmatmul.mubr.bf16.gmra.mrb[0].mxu0 %v498
    %v696 = vpop.f32.mrb[0].mxu0
    %v697 = vadd.f32 %v252, %v696
    %v698 = vpop.f32.mrb[0].mxu0
    %v699 = vadd.f32 %v256, %v698
    %v700 = vpop.f32.mrb[0].mxu0
    %v701 = vadd.f32 %v252, %v700
    %v702 = vpop.f32.mrb[0].mxu0
    %v703 = vadd.f32 %v256, %v702
    %704 = vmatprep.mubr.bf16.mxu0 0
    %705 = vmatmul.mubr.bf16.gmra.mrb[0].mxu0 %v501
    %v706 = vpop.f32.mrb[0].mxu0
    %v707 = vadd.f32 %v252, %v706
    %v708 = vpop.f32.mrb[0].mxu0
    %v709 = vadd.f32 %v256, %v708
    %v710 = vpop.f32.mrb[0].mxu0
    %v711 = vadd.f32 %v252, %v710
    %v712 = vpop.f32.mrb[0].mxu0
    %v713 = vadd.f32 %v256, %v712
    %714 = vmatprep.mubr.bf16.mxu0 0
    %715 = vmatmul.mubr.bf16.gmra.mrb[0].mxu0 %v504
    %v716 = vpop.f32.mrb[0].mxu0
    %v717 = vadd.f32 %v252, %v716
    %v718 = vpop.f32.mrb[0].mxu0
    %v719 = vadd.f32 %v256, %v718
    %v720 = vpop.f32.mrb[0].mxu0
    %v721 = vadd.f32 %v252, %v720
    %v722 = vpop.f32.mrb[0].mxu0
    %v723 = vadd.f32 %v256, %v722
    %724 = vdwg.mxu0
    %725 = vmatprep.subr.bf16.mxu0 %v436
    %726 = vmatpush1.bf16.msra.mxu0 %v435
    %727 = vmatprep.subr.bf16.mxu0 %v452
    %728 = vmatpush1.bf16.msra.mxu0 %v451
    %729 = vmatprep.subr.bf16.mxu0 0
    %730 = vmatpush1.bf16.msra.mxu0 0
    %731 = vmatprep.subr.bf16.mxu0 0
    %732 = vmatpush1.bf16.msra.mxu0 0
    %733 = vmatprep.subr.bf16.mxu0 0
    %734 = vmatpush1.bf16.msra.mxu0 0
    %735 = vmatprep.subr.bf16.mxu0 0
    %736 = vmatpush1.bf16.msra.mxu0 0
    %737 = vmatprep.subr.bf16.mxu0 0
    %738 = vmatpush1.bf16.msra.mxu0 0
    %739 = vmatprep.subr.bf16.mxu0 0
    %740 = vmatpush1.bf16.msra.mxu0 0
    %741 = vmatprep.subr.bf16.mxu0 0
    %742 = vmatpush1.bf16.msra.mxu0 0
    %743 = vmatprep.subr.bf16.mxu0 0
    %744 = vmatpush1.bf16.msra.mxu0 0
    %745 = vmatprep.subr.bf16.mxu0 0
    %746 = vmatpush1.bf16.msra.mxu0 0
    %747 = vmatprep.subr.bf16.mxu0 0
    %748 = vmatpush1.bf16.msra.mxu0 0
    %749 = vmatprep.subr.bf16.mxu0 0
    %750 = vmatpush1.bf16.msra.mxu0 0
    %751 = vmatprep.subr.bf16.mxu0 0
    %752 = vmatpush1.bf16.msra.mxu0 0
    %753 = vmatprep.subr.bf16.mxu0 0
    %754 = vmatpush1.bf16.msra.mxu0 0
    %755 = vmatprep.subr.bf16.mxu0 0
    %756 = vmatpush1.bf16.msra.mxu0 0
    %757 = vmatprep.mubr.bf16.mxu0 0
    %758 = vmatmul.mubr.bf16.gmra.mrb[0].mxu0 %v495
    %v759 = vpop.f32.mrb[0].mxu0
    %v760 = vadd.f32 %v260, %v759
    %v761 = vpop.f32.mrb[0].mxu0
    %v762 = vadd.f32 %v264, %v761
    %v763 = vpop.f32.mrb[0].mxu0
    %v764 = vadd.f32 %v260, %v763
    %v765 = vpop.f32.mrb[0].mxu0
    %v766 = vadd.f32 %v264, %v765
    %767 = vmatprep.mubr.bf16.mxu0 0
    %768 = vmatmul.mubr.bf16.gmra.mrb[0].mxu0 %v498
    %v769 = vpop.f32.mrb[0].mxu0
    %v770 = vadd.f32 %v260, %v769
    %v771 = vpop.f32.mrb[0].mxu0
    %v772 = vadd.f32 %v264, %v771
    %v773 = vpop.f32.mrb[0].mxu0
    %v774 = vadd.f32 %v260, %v773
    %v775 = vpop.f32.mrb[0].mxu0
    %v776 = vadd.f32 %v264, %v775
    %777 = vmatprep.mubr.bf16.mxu0 0
    %778 = vmatmul.mubr.bf16.gmra.mrb[0].mxu0 %v501
    %v779 = vpop.f32.mrb[0].mxu0
    %v780 = vadd.f32 %v260, %v779
    %v781 = vpop.f32.mrb[0].mxu0
    %v782 = vadd.f32 %v264, %v781
    %v783 = vpop.f32.mrb[0].mxu0
    %v784 = vadd.f32 %v260, %v783
    %v785 = vpop.f32.mrb[0].mxu0
    %v786 = vadd.f32 %v264, %v785
    %787 = vmatprep.mubr.bf16.mxu0 0
    %788 = vmatmul.mubr.bf16.gmra.mrb[0].mxu0 %v504
    %v789 = vpop.f32.mrb[0].mxu0
    %v790 = vadd.f32 %v260, %v789
    %v791 = vpop.f32.mrb[0].mxu0
    %v792 = vadd.f32 %v264, %v791
    %v793 = vpop.f32.mrb[0].mxu0
    %v794 = vadd.f32 %v260, %v793
    %v795 = vpop.f32.mrb[0].mxu0
    %v796 = vadd.f32 %v264, %v795
    %797 = vdwg.mxu0
    %798 = vmatprep.subr.bf16.mxu0 %v438
    %799 = vmatpush1.bf16.msra.mxu0 %v437
    %800 = vmatprep.subr.bf16.mxu0 %v454
    %801 = vmatpush1.bf16.msra.mxu0 %v453
    %802 = vmatprep.subr.bf16.mxu0 0
    %803 = vmatpush1.bf16.msra.mxu0 0
    %804 = vmatprep.subr.bf16.mxu0 0
    %805 = vmatpush1.bf16.msra.mxu0 0
    %806 = vmatprep.subr.bf16.mxu0 0
    %807 = vmatpush1.bf16.msra.mxu0 0
    %808 = vmatprep.subr.bf16.mxu0 0
    %809 = vmatpush1.bf16.msra.mxu0 0
    %810 = vmatprep.subr.bf16.mxu0 0
    %811 = vmatpush1.bf16.msra.mxu0 0
    %812 = vmatprep.subr.bf16.mxu0 0
    %813 = vmatpush1.bf16.msra.mxu0 0
    %814 = vmatprep.subr.bf16.mxu0 0
    %815 = vmatpush1.bf16.msra.mxu0 0
    %816 = vmatprep.subr.bf16.mxu0 0
    %817 = vmatpush1.bf16.msra.mxu0 0
    %818 = vmatprep.subr.bf16.mxu0 0
    %819 = vmatpush1.bf16.msra.mxu0 0
    %820 = vmatprep.subr.bf16.mxu0 0
    %821 = vmatpush1.bf16.msra.mxu0 0
    %822 = vmatprep.subr.bf16.mxu0 0
    %823 = vmatpush1.bf16.msra.mxu0 0
    %824 = vmatprep.subr.bf16.mxu0 0
    %825 = vmatpush1.bf16.msra.mxu0 0
    %826 = vmatprep.subr.bf16.mxu0 0
    %827 = vmatpush1.bf16.msra.mxu0 0
    %828 = vmatprep.subr.bf16.mxu0 0
    %829 = vmatpush1.bf16.msra.mxu0 0
    %830 = vmatprep.mubr.bf16.mxu0 0
    %831 = vmatmul.mubr.bf16.gmra.mrb[0].mxu0 %v495
    %v832 = vpop.f32.mrb[0].mxu0
    %v833 = vadd.f32 %v268, %v832
    %v834 = vpop.f32.mrb[0].mxu0
    %v835 = vadd.f32 %v272, %v834
    %v836 = vpop.f32.mrb[0].mxu0
    %v837 = vadd.f32 %v268, %v836
    %v838 = vpop.f32.mrb[0].mxu0
    %v839 = vadd.f32 %v272, %v838
    %840 = vmatprep.mubr.bf16.mxu0 0
    %841 = vmatmul.mubr.bf16.gmra.mrb[0].mxu0 %v498
    %v842 = vpop.f32.mrb[0].mxu0
    %v843 = vadd.f32 %v268, %v842
    %v844 = vpop.f32.mrb[0].mxu0
    %v845 = vadd.f32 %v272, %v844
    %v846 = vpop.f32.mrb[0].mxu0
    %v847 = vadd.f32 %v268, %v846
    %v848 = vpop.f32.mrb[0].mxu0
    %v849 = vadd.f32 %v272, %v848
    %850 = vmatprep.mubr.bf16.mxu0 0
    %851 = vmatmul.mubr.bf16.gmra.mrb[0].mxu0 %v501
    %v852 = vpop.f32.mrb[0].mxu0
    %v853 = vadd.f32 %v268, %v852
    %v854 = vpop.f32.mrb[0].mxu0
    %v855 = vadd.f32 %v272, %v854
    %v856 = vpop.f32.mrb[0].mxu0
    %v857 = vadd.f32 %v268, %v856
    %v858 = vpop.f32.mrb[0].mxu0
    %v859 = vadd.f32 %v272, %v858
    %860 = vmatprep.mubr.bf16.mxu0 0
    %861 = vmatmul.mubr.bf16.gmra.mrb[0].mxu0 %v504
    %v862 = vpop.f32.mrb[0].mxu0
    %v863 = vadd.f32 %v268, %v862
    %v864 = vpop.f32.mrb[0].mxu0
    %v865 = vadd.f32 %v272, %v864
    %v866 = vpop.f32.mrb[0].mxu0
    %v867 = vadd.f32 %v268, %v866
    %v868 = vpop.f32.mrb[0].mxu0
    %v869 = vadd.f32 %v272, %v868
    %870 = vdwg.mxu0
    %871 = vmatprep.subr.bf16.mxu0 %v440
    %872 = vmatpush1.bf16.msra.mxu0 %v439
    %873 = vmatprep.subr.bf16.mxu0 %v456
    %874 = vmatpush1.bf16.msra.mxu0 %v455
    %875 = vmatprep.subr.bf16.mxu0 0
    %876 = vmatpush1.bf16.msra.mxu0 0
    %877 = vmatprep.subr.bf16.mxu0 0
    %878 = vmatpush1.bf16.msra.mxu0 0
    %879 = vmatprep.subr.bf16.mxu0 0
    %880 = vmatpush1.bf16.msra.mxu0 0
    %881 = vmatprep.subr.bf16.mxu0 0
    %882 = vmatpush1.bf16.msra.mxu0 0
    %883 = vmatprep.subr.bf16.mxu0 0
    %884 = vmatpush1.bf16.msra.mxu0 0
    %885 = vmatprep.subr.bf16.mxu0 0
    %886 = vmatpush1.bf16.msra.mxu0 0
    %887 = vmatprep.subr.bf16.mxu0 0
    %888 = vmatpush1.bf16.msra.mxu0 0
    %889 = vmatprep.subr.bf16.mxu0 0
    %890 = vmatpush1.bf16.msra.mxu0 0
    %891 = vmatprep.subr.bf16.mxu0 0
    %892 = vmatpush1.bf16.msra.mxu0 0
    %893 = vmatprep.subr.bf16.mxu0 0
    %894 = vmatpush1.bf16.msra.mxu0 0
    %895 = vmatprep.subr.bf16.mxu0 0
    %896 = vmatpush1.bf16.msra.mxu0 0
    %897 = vmatprep.subr.bf16.mxu0 0
    %898 = vmatpush1.bf16.msra.mxu0 0
    %899 = vmatprep.subr.bf16.mxu0 0
    %900 = vmatpush1.bf16.msra.mxu0 0
    %901 = vmatprep.subr.bf16.mxu0 0
    %902 = vmatpush1.bf16.msra.mxu0 0
    %903 = vmatprep.mubr.bf16.mxu0 0
    %904 = vmatmul.mubr.bf16.gmra.mrb[0].mxu0 %v495
    %v905 = vpop.f32.mrb[0].mxu0
    %v906 = vadd.f32 %v276, %v905
    %v907 = vpop.f32.mrb[0].mxu0
    %v908 = vadd.f32 %v280, %v907
    %v909 = vpop.f32.mrb[0].mxu0
    %v910 = vadd.f32 %v276, %v909
    %v911 = vpop.f32.mrb[0].mxu0
    %v912 = vadd.f32 %v280, %v911
    %913 = vmatprep.mubr.bf16.mxu0 0
    %914 = vmatmul.mubr.bf16.gmra.mrb[0].mxu0 %v498
    %v915 = vpop.f32.mrb[0].mxu0
    %v916 = vadd.f32 %v276, %v915
    %v917 = vpop.f32.mrb[0].mxu0
    %v918 = vadd.f32 %v280, %v917
    %v919 = vpop.f32.mrb[0].mxu0
    %v920 = vadd.f32 %v276, %v919
    %v921 = vpop.f32.mrb[0].mxu0
    %v922 = vadd.f32 %v280, %v921
    %923 = vmatprep.mubr.bf16.mxu0 0
    %924 = vmatmul.mubr.bf16.gmra.mrb[0].mxu0 %v501
    %v925 = vpop.f32.mrb[0].mxu0
    %v926 = vadd.f32 %v276, %v925
    %v927 = vpop.f32.mrb[0].mxu0
    %v928 = vadd.f32 %v280, %v927
    %v929 = vpop.f32.mrb[0].mxu0
    %v930 = vadd.f32 %v276, %v929
    %v931 = vpop.f32.mrb[0].mxu0
    %v932 = vadd.f32 %v280, %v931
    %933 = vmatprep.mubr.bf16.mxu0 0
    %934 = vmatmul.mubr.bf16.gmra.mrb[0].mxu0 %v504
    %v935 = vpop.f32.mrb[0].mxu0
    %v936 = vadd.f32 %v276, %v935
    %v937 = vpop.f32.mrb[0].mxu0
    %v938 = vadd.f32 %v280, %v937
    %v939 = vpop.f32.mrb[0].mxu0
    %v940 = vadd.f32 %v276, %v939
    %v941 = vpop.f32.mrb[0].mxu0
    %v942 = vadd.f32 %v280, %v941
    %943 = vdwg.mxu0
    %944 = vmatprep.subr.bf16.mxu0 %v442
    %945 = vmatpush1.bf16.msra.mxu0 %v441
    %946 = vmatprep.subr.bf16.mxu0 %v458
    %947 = vmatpush1.bf16.msra.mxu0 %v457
    %948 = vmatprep.subr.bf16.mxu0 0
    %949 = vmatpush1.bf16.msra.mxu0 0
    %950 = vmatprep.subr.bf16.mxu0 0
    %951 = vmatpush1.bf16.msra.mxu0 0
    %952 = vmatprep.subr.bf16.mxu0 0
    %953 = vmatpush1.bf16.msra.mxu0 0
    %954 = vmatprep.subr.bf16.mxu0 0
    %955 = vmatpush1.bf16.msra.mxu0 0
    %956 = vmatprep.subr.bf16.mxu0 0
    %957 = vmatpush1.bf16.msra.mxu0 0
    %958 = vmatprep.subr.bf16.mxu0 0
    %959 = vmatpush1.bf16.msra.mxu0 0
    %960 = vmatprep.subr.bf16.mxu0 0
    %961 = vmatpush1.bf16.msra.mxu0 0
    %962 = vmatprep.subr.bf16.mxu0 0
    %963 = vmatpush1.bf16.msra.mxu0 0
    %964 = vmatprep.subr.bf16.mxu0 0
    %965 = vmatpush1.bf16.msra.mxu0 0
    %966 = vmatprep.subr.bf16.mxu0 0
    %967 = vmatpush1.bf16.msra.mxu0 0
    %968 = vmatprep.subr.bf16.mxu0 0
    %969 = vmatpush1.bf16.msra.mxu0 0
    %970 = vmatprep.subr.bf16.mxu0 0
    %971 = vmatpush1.bf16.msra.mxu0 0
    %972 = vmatprep.subr.bf16.mxu0 0
    %973 = vmatpush1.bf16.msra.mxu0 0
    %974 = vmatprep.subr.bf16.mxu0 0
    %975 = vmatpush1.bf16.msra.mxu0 0
    %976 = vmatprep.mubr.bf16.mxu0 0
    %977 = vmatmul.mubr.bf16.gmra.mrb[0].mxu0 %v495
    %v978 = vpop.f32.mrb[0].mxu0
    %v979 = vadd.f32 %v284, %v978
    %v980 = vpop.f32.mrb[0].mxu0
    %v981 = vadd.f32 %v288, %v980
    %v982 = vpop.f32.mrb[0].mxu0
    %v983 = vadd.f32 %v284, %v982
    %v984 = vpop.f32.mrb[0].mxu0
    %v985 = vadd.f32 %v288, %v984
    %986 = vmatprep.mubr.bf16.mxu0 0
    %987 = vmatmul.mubr.bf16.gmra.mrb[0].mxu0 %v498
    %v988 = vpop.f32.mrb[0].mxu0
    %v989 = vadd.f32 %v284, %v988
    %v990 = vpop.f32.mrb[0].mxu0
    %v991 = vadd.f32 %v288, %v990
    %v992 = vpop.f32.mrb[0].mxu0
    %v993 = vadd.f32 %v284, %v992
    %v994 = vpop.f32.mrb[0].mxu0
    %v995 = vadd.f32 %v288, %v994
    %996 = vmatprep.mubr.bf16.mxu0 0
    %997 = vmatmul.mubr.bf16.gmra.mrb[0].mxu0 %v501
    %v998 = vpop.f32.mrb[0].mxu0
    %v999 = vadd.f32 %v284, %v998
    %v1000 = vpop.f32.mrb[0].mxu0
    %v1001 = vadd.f32 %v288, %v1000
    %v1002 = vpop.f32.mrb[0].mxu0
    %v1003 = vadd.f32 %v284, %v1002
    %v1004 = vpop.f32.mrb[0].mxu0
    %v1005 = vadd.f32 %v288, %v1004
    %1006 = vmatprep.mubr.bf16.mxu0 0
    %1007 = vmatmul.mubr.bf16.gmra.mrb[0].mxu0 %v504
    %v1008 = vpop.f32.mrb[0].mxu0
    %v1009 = vadd.f32 %v284, %v1008
    %v1010 = vpop.f32.mrb[0].mxu0
    %v1011 = vadd.f32 %v288, %v1010
    %v1012 = vpop.f32.mrb[0].mxu0
    %v1013 = vadd.f32 %v284, %v1012
    %v1014 = vpop.f32.mrb[0].mxu0
    %v1015 = vadd.f32 %v288, %v1014
    %1016 = vdwg.mxu0
    %1017 = vmatprep.subr.bf16.mxu0 %v444
    %1018 = vmatpush1.bf16.msra.mxu0 %v443
    %1019 = vmatprep.subr.bf16.mxu0 %v460
    %1020 = vmatpush1.bf16.msra.mxu0 %v459
    %1021 = vmatprep.subr.bf16.mxu0 0
    %1022 = vmatpush1.bf16.msra.mxu0 0
    %1023 = vmatprep.subr.bf16.mxu0 0
    %1024 = vmatpush1.bf16.msra.mxu0 0
    %1025 = vmatprep.subr.bf16.mxu0 0
    %1026 = vmatpush1.bf16.msra.mxu0 0
    %1027 = vmatprep.subr.bf16.mxu0 0
    %1028 = vmatpush1.bf16.msra.mxu0 0
    %1029 = vmatprep.subr.bf16.mxu0 0
    %1030 = vmatpush1.bf16.msra.mxu0 0
    %1031 = vmatprep.subr.bf16.mxu0 0
    %1032 = vmatpush1.bf16.msra.mxu0 0
    %1033 = vmatprep.subr.bf16.mxu0 0
    %1034 = vmatpush1.bf16.msra.mxu0 0
    %1035 = vmatprep.subr.bf16.mxu0 0
    %1036 = vmatpush1.bf16.msra.mxu0 0
    %1037 = vmatprep.subr.bf16.mxu0 0
    %1038 = vmatpush1.bf16.msra.mxu0 0
    %1039 = vmatprep.subr.bf16.mxu0 0
    %1040 = vmatpush1.bf16.msra.mxu0 0
    %1041 = vmatprep.subr.bf16.mxu0 0
    %1042 = vmatpush1.bf16.msra.mxu0 0
    %1043 = vmatprep.subr.bf16.mxu0 0
    %1044 = vmatpush1.bf16.msra.mxu0 0
    %1045 = vmatprep.subr.bf16.mxu0 0
    %1046 = vmatpush1.bf16.msra.mxu0 0
    %1047 = vmatprep.subr.bf16.mxu0 0
    %1048 = vmatpush1.bf16.msra.mxu0 0
    %1049 = vmatprep.mubr.bf16.mxu0 0
    %1050 = vmatmul.mubr.bf16.gmra.mrb[0].mxu0 %v495
    %v1051 = vpop.f32.mrb[0].mxu0
    %v1052 = vadd.f32 %v292, %v1051
    %v1053 = vpop.f32.mrb[0].mxu0
    %v1054 = vadd.f32 %v296, %v1053
    %v1055 = vpop.f32.mrb[0].mxu0
    %v1056 = vadd.f32 %v292, %v1055
    %v1057 = vpop.f32.mrb[0].mxu0
    %v1058 = vadd.f32 %v296, %v1057
    %1059 = vmatprep.mubr.bf16.mxu0 0
    %1060 = vmatmul.mubr.bf16.gmra.mrb[0].mxu0 %v498
    %v1061 = vpop.f32.mrb[0].mxu0
    %v1062 = vadd.f32 %v292, %v1061
    %v1063 = vpop.f32.mrb[0].mxu0
    %v1064 = vadd.f32 %v296, %v1063
    %v1065 = vpop.f32.mrb[0].mxu0
    %v1066 = vadd.f32 %v292, %v1065
    %v1067 = vpop.f32.mrb[0].mxu0
    %v1068 = vadd.f32 %v296, %v1067
    %1069 = vmatprep.mubr.bf16.mxu0 0
    %1070 = vmatmul.mubr.bf16.gmra.mrb[0].mxu0 %v501
    %v1071 = vpop.f32.mrb[0].mxu0
    %v1072 = vadd.f32 %v292, %v1071
    %v1073 = vpop.f32.mrb[0].mxu0
    %v1074 = vadd.f32 %v296, %v1073
    %v1075 = vpop.f32.mrb[0].mxu0
    %v1076 = vadd.f32 %v292, %v1075
    %v1077 = vpop.f32.mrb[0].mxu0
    %v1078 = vadd.f32 %v296, %v1077
    %1079 = vmatprep.mubr.bf16.mxu0 0
    %1080 = vmatmul.mubr.bf16.gmra.mrb[0].mxu0 %v504
    %v1081 = vpop.f32.mrb[0].mxu0
    %v1082 = vadd.f32 %v292, %v1081
    %v1083 = vpop.f32.mrb[0].mxu0
    %v1084 = vadd.f32 %v296, %v1083
    %v1085 = vpop.f32.mrb[0].mxu0
    %v1086 = vadd.f32 %v292, %v1085
    %v1087 = vpop.f32.mrb[0].mxu0
    %v1088 = vadd.f32 %v296, %v1087
    %1089 = vdwg.mxu0
    %v1090 = vld [vmem:[#allocation6] sm:$0xff]
    %v1091 = vld [vmem:[#allocation6 + $0x8] sm:$0xff]
    %v1092 = vld [vmem:[#allocation6 + $0x10] sm:$0xff]
    %v1093 = vld [vmem:[#allocation6 + $0x18] sm:$0xff]
    %v1094 = vld [vmem:[#allocation9] sm:$0xff]
    %v1095 = vld [vmem:[#allocation9 + $0x8] sm:$0xff]
    %v1096 = vld [vmem:[#allocation9 + $0x10] sm:$0xff]
    %v1097 = vld [vmem:[#allocation9 + $0x18] sm:$0xff]
    %s1098 = smul.u32 4, 64
    %s1099 = smul.u32 %s1098, 16
    %s1100 = sshll.u32 %s1099, 4
    %1101 = dma.done [#allocation5], %s1100
    %v1102 = vpack.c.bf16 %v1090, %v1090
    %v1103 = vpack.c.bf16 %v1091, %v1091
    %v1104 = vpack.c.bf16 %v1092, %v1092
    %v1105 = vpack.c.bf16 %v1093, %v1093
    %v1106 = vld [vmem:[#allocation2] sm:$0xff]
    %v1107 = vld [vmem:[#allocation2 + $0x8] sm:$0xff]
    %v1108 = vld [vmem:[#allocation2 + $0x10] sm:$0xff]
    %v1109 = vld [vmem:[#allocation2 + $0x18] sm:$0xff]
    %v1110 = vld [vmem:[#allocation2 + $0x80] sm:$0xff]
    %v1111 = vld [vmem:[#allocation2 + $0x88] sm:$0xff]
    %v1112 = vld [vmem:[#allocation2 + $0x90] sm:$0xff]
    %v1113 = vld [vmem:[#allocation2 + $0x98] sm:$0xff]
    %v1114 = vld [vmem:[#allocation2 + $0x100] sm:$0xff]
    %v1115 = vld [vmem:[#allocation2 + $0x108] sm:$0xff]
    %v1116 = vld [vmem:[#allocation2 + $0x110] sm:$0xff]
    %v1117 = vld [vmem:[#allocation2 + $0x118] sm:$0xff]
    %v1118 = vld [vmem:[#allocation2 + $0x180] sm:$0xff]
    %v1119 = vld [vmem:[#allocation2 + $0x188] sm:$0xff]
    %v1120 = vld [vmem:[#allocation2 + $0x190] sm:$0xff]
    %v1121 = vld [vmem:[#allocation2 + $0x198] sm:$0xff]
    %v1122 = vld [vmem:[#allocation2 + $0x200] sm:$0xff]
    %v1123 = vld [vmem:[#allocation2 + $0x208] sm:$0xff]
    %v1124 = vld [vmem:[#allocation2 + $0x210] sm:$0xff]
    %v1125 = vld [vmem:[#allocation2 + $0x218] sm:$0xff]
    %v1126 = vld [vmem:[#allocation2 + $0x280] sm:$0xff]
    %v1127 = vld [vmem:[#allocation2 + $0x288] sm:$0xff]
    %v1128 = vld [vmem:[#allocation2 + $0x290] sm:$0xff]
    %v1129 = vld [vmem:[#allocation2 + $0x298] sm:$0xff]
    %v1130 = vld [vmem:[#allocation2 + $0x300] sm:$0xff]
    %v1131 = vld [vmem:[#allocation2 + $0x308] sm:$0xff]
    %v1132 = vld [vmem:[#allocation2 + $0x310] sm:$0xff]
    %v1133 = vld [vmem:[#allocation2 + $0x318] sm:$0xff]
    %v1134 = vld [vmem:[#allocation2 + $0x380] sm:$0xff]
    %v1135 = vld [vmem:[#allocation2 + $0x388] sm:$0xff]
    %v1136 = vld [vmem:[#allocation2 + $0x390] sm:$0xff]
    %v1137 = vld [vmem:[#allocation2 + $0x398] sm:$0xff]
    %v1138 = vld [vmem:[#allocation2 + $0x400] sm:$0xff]
    %v1139 = vld [vmem:[#allocation2 + $0x408] sm:$0xff]
    %v1140 = vld [vmem:[#allocation2 + $0x410] sm:$0xff]
    %v1141 = vld [vmem:[#allocation2 + $0x418] sm:$0xff]
    %v1142 = vld [vmem:[#allocation2 + $0x480] sm:$0xff]
    %v1143 = vld [vmem:[#allocation2 + $0x488] sm:$0xff]
    %v1144 = vld [vmem:[#allocation2 + $0x490] sm:$0xff]
    %v1145 = vld [vmem:[#allocation2 + $0x498] sm:$0xff]
    %v1146 = vld [vmem:[#allocation2 + $0x500] sm:$0xff]
    %v1147 = vld [vmem:[#allocation2 + $0x508] sm:$0xff]
    %v1148 = vld [vmem:[#allocation2 + $0x510] sm:$0xff]
    %v1149 = vld [vmem:[#allocation2 + $0x518] sm:$0xff]
    %v1150 = vld [vmem:[#allocation2 + $0x580] sm:$0xff]
    %v1151 = vld [vmem:[#allocation2 + $0x588] sm:$0xff]
    %v1152 = vld [vmem:[#allocation2 + $0x590] sm:$0xff]
    %v1153 = vld [vmem:[#allocation2 + $0x598] sm:$0xff]
    %v1154 = vld [vmem:[#allocation2 + $0x600] sm:$0xff]
    %v1155 = vld [vmem:[#allocation2 + $0x608] sm:$0xff]
    %v1156 = vld [vmem:[#allocation2 + $0x610] sm:$0xff]
    %v1157 = vld [vmem:[#allocation2 + $0x618] sm:$0xff]
    %v1158 = vld [vmem:[#allocation2 + $0x680] sm:$0xff]
    %v1159 = vld [vmem:[#allocation2 + $0x688] sm:$0xff]
    %v1160 = vld [vmem:[#allocation2 + $0x690] sm:$0xff]
    %v1161 = vld [vmem:[#allocation2 + $0x698] sm:$0xff]
    %v1162 = vld [vmem:[#allocation2 + $0x700] sm:$0xff]
    %v1163 = vld [vmem:[#allocation2 + $0x708] sm:$0xff]
    %v1164 = vld [vmem:[#allocation2 + $0x710] sm:$0xff]
    %v1165 = vld [vmem:[#allocation2 + $0x718] sm:$0xff]
    %v1166 = vld [vmem:[#allocation2 + $0x780] sm:$0xff]
    %v1167 = vld [vmem:[#allocation2 + $0x788] sm:$0xff]
    %v1168 = vld [vmem:[#allocation2 + $0x790] sm:$0xff]
    %v1169 = vld [vmem:[#allocation2 + $0x798] sm:$0xff]
    %v1170 = vld [vmem:[#allocation2 + $0x800] sm:$0xff]
    %v1171 = vld [vmem:[#allocation2 + $0x808] sm:$0xff]
    %v1172 = vld [vmem:[#allocation2 + $0x810] sm:$0xff]
    %v1173 = vld [vmem:[#allocation2 + $0x818] sm:$0xff]
    %v1174 = vld [vmem:[#allocation2 + $0x880] sm:$0xff]
    %v1175 = vld [vmem:[#allocation2 + $0x888] sm:$0xff]
    %v1176 = vld [vmem:[#allocation2 + $0x890] sm:$0xff]
    %v1177 = vld [vmem:[#allocation2 + $0x898] sm:$0xff]
    %v1178 = vld [vmem:[#allocation2 + $0x900] sm:$0xff]
    %v1179 = vld [vmem:[#allocation2 + $0x908] sm:$0xff]
    %v1180 = vld [vmem:[#allocation2 + $0x910] sm:$0xff]
    %v1181 = vld [vmem:[#allocation2 + $0x918] sm:$0xff]
    %v1182 = vld [vmem:[#allocation2 + $0x980] sm:$0xff]
    %v1183 = vld [vmem:[#allocation2 + $0x988] sm:$0xff]
    %v1184 = vld [vmem:[#allocation2 + $0x990] sm:$0xff]
    %v1185 = vld [vmem:[#allocation2 + $0x998] sm:$0xff]
    %v1186 = vld [vmem:[#allocation2 + $0xa00] sm:$0xff]
    %v1187 = vld [vmem:[#allocation2 + $0xa08] sm:$0xff]
    %v1188 = vld [vmem:[#allocation2 + $0xa10] sm:$0xff]
    %v1189 = vld [vmem:[#allocation2 + $0xa18] sm:$0xff]
    %v1190 = vld [vmem:[#allocation2 + $0xa80] sm:$0xff]
    %v1191 = vld [vmem:[#allocation2 + $0xa88] sm:$0xff]
    %v1192 = vld [vmem:[#allocation2 + $0xa90] sm:$0xff]
    %v1193 = vld [vmem:[#allocation2 + $0xa98] sm:$0xff]
    %v1194 = vld [vmem:[#allocation2 + $0xb00] sm:$0xff]
    %v1195 = vld [vmem:[#allocation2 + $0xb08] sm:$0xff]
    %v1196 = vld [vmem:[#allocation2 + $0xb10] sm:$0xff]
    %v1197 = vld [vmem:[#allocation2 + $0xb18] sm:$0xff]
    %v1198 = vld [vmem:[#allocation2 + $0xb80] sm:$0xff]
    %v1199 = vld [vmem:[#allocation2 + $0xb88] sm:$0xff]
    %v1200 = vld [vmem:[#allocation2 + $0xb90] sm:$0xff]
    %v1201 = vld [vmem:[#allocation2 + $0xb98] sm:$0xff]
    %v1202 = vld [vmem:[#allocation2 + $0xc00] sm:$0xff]
    %v1203 = vld [vmem:[#allocation2 + $0xc08] sm:$0xff]
    %v1204 = vld [vmem:[#allocation2 + $0xc10] sm:$0xff]
    %v1205 = vld [vmem:[#allocation2 + $0xc18] sm:$0xff]
    %v1206 = vld [vmem:[#allocation2 + $0xc80] sm:$0xff]
    %v1207 = vld [vmem:[#allocation2 + $0xc88] sm:$0xff]
    %v1208 = vld [vmem:[#allocation2 + $0xc90] sm:$0xff]
    %v1209 = vld [vmem:[#allocation2 + $0xc98] sm:$0xff]
    %v1210 = vld [vmem:[#allocation2 + $0xd00] sm:$0xff]
    %v1211 = vld [vmem:[#allocation2 + $0xd08] sm:$0xff]
    %v1212 = vld [vmem:[#allocation2 + $0xd10] sm:$0xff]
    %v1213 = vld [vmem:[#allocation2 + $0xd18] sm:$0xff]
    %v1214 = vld [vmem:[#allocation2 + $0xd80] sm:$0xff]
    %v1215 = vld [vmem:[#allocation2 + $0xd88] sm:$0xff]
    %v1216 = vld [vmem:[#allocation2 + $0xd90] sm:$0xff]
    %v1217 = vld [vmem:[#allocation2 + $0xd98] sm:$0xff]
    %v1218 = vld [vmem:[#allocation2 + $0xe00] sm:$0xff]
    %v1219 = vld [vmem:[#allocation2 + $0xe08] sm:$0xff]
    %v1220 = vld [vmem:[#allocation2 + $0xe10] sm:$0xff]
    %v1221 = vld [vmem:[#allocation2 + $0xe18] sm:$0xff]
    %v1222 = vld [vmem:[#allocation2 + $0xe80] sm:$0xff]
    %v1223 = vld [vmem:[#allocation2 + $0xe88] sm:$0xff]
    %v1224 = vld [vmem:[#allocation2 + $0xe90] sm:$0xff]
    %v1225 = vld [vmem:[#allocation2 + $0xe98] sm:$0xff]
    %v1226 = vld [vmem:[#allocation2 + $0xf00] sm:$0xff]
    %v1227 = vld [vmem:[#allocation2 + $0xf08] sm:$0xff]
    %v1228 = vld [vmem:[#allocation2 + $0xf10] sm:$0xff]
    %v1229 = vld [vmem:[#allocation2 + $0xf18] sm:$0xff]
    %v1230 = vld [vmem:[#allocation2 + $0xf80] sm:$0xff]
    %v1231 = vld [vmem:[#allocation2 + $0xf88] sm:$0xff]
    %v1232 = vld [vmem:[#allocation2 + $0xf90] sm:$0xff]
    %v1233 = vld [vmem:[#allocation2 + $0xf98] sm:$0xff]
    %1234 = vmatprep.subr.bf16.mxu0 %v1107
    %1235 = vmatpush1.bf16.msra.mxu0 %v1106
    %1236 = vmatprep.subr.bf16.mxu0 %v1111
    %1237 = vmatpush1.bf16.msra.mxu0 %v1110
    %1238 = vmatprep.subr.bf16.mxu0 %v1115
    %1239 = vmatpush1.bf16.msra.mxu0 %v1114
    %1240 = vmatprep.subr.bf16.mxu0 %v1119
    %1241 = vmatpush1.bf16.msra.mxu0 %v1118
    %1242 = vmatprep.subr.bf16.mxu0 %v1123
    %1243 = vmatpush1.bf16.msra.mxu0 %v1122
    %1244 = vmatprep.subr.bf16.mxu0 %v1127
    %1245 = vmatpush1.bf16.msra.mxu0 %v1126
    %1246 = vmatprep.subr.bf16.mxu0 %v1131
    %1247 = vmatpush1.bf16.msra.mxu0 %v1130
    %1248 = vmatprep.subr.bf16.mxu0 %v1135
    %1249 = vmatpush1.bf16.msra.mxu0 %v1134
    %1250 = vmatprep.subr.bf16.mxu0 %v1139
    %1251 = vmatpush1.bf16.msra.mxu0 %v1138
    %1252 = vmatprep.subr.bf16.mxu0 %v1143
    %1253 = vmatpush1.bf16.msra.mxu0 %v1142
    %1254 = vmatprep.subr.bf16.mxu0 %v1147
    %1255 = vmatpush1.bf16.msra.mxu0 %v1146
    %1256 = vmatprep.subr.bf16.mxu0 %v1151
    %1257 = vmatpush1.bf16.msra.mxu0 %v1150
    %1258 = vmatprep.subr.bf16.mxu0 %v1155
    %1259 = vmatpush1.bf16.msra.mxu0 %v1154
    %1260 = vmatprep.subr.bf16.mxu0 %v1159
    %1261 = vmatpush1.bf16.msra.mxu0 %v1158
    %1262 = vmatprep.subr.bf16.mxu0 %v1163
    %1263 = vmatpush1.bf16.msra.mxu0 %v1162
    %1264 = vmatprep.subr.bf16.mxu0 %v1167
    %1265 = vmatpush1.bf16.msra.mxu0 %v1166
    %1266 = vmatprep.mubr.bf16.mxu0 %v1103
    %1267 = vmatmul.mubr.bf16.gmra.mrb[0].mxu0 %v1102
    %v1268 = vpop.f32.mrb[0].mxu0
    %v1269 = vadd.f32 0.0, %v1268
    %v1270 = vpop.f32.mrb[0].mxu0
    %v1271 = vadd.f32 0.0, %v1270
    %v1272 = vpop.f32.mrb[0].mxu0
    %v1273 = vpop.f32.mrb[0].mxu0
    %1274 = vdwg.mxu0
    %1275 = vmatprep.subr.bf16.mxu0 %v1171
    %1276 = vmatpush1.bf16.msra.mxu0 %v1170
    %1277 = vmatprep.subr.bf16.mxu0 %v1175
    %1278 = vmatpush1.bf16.msra.mxu0 %v1174
    %1279 = vmatprep.subr.bf16.mxu0 %v1179
    %1280 = vmatpush1.bf16.msra.mxu0 %v1178
    %1281 = vmatprep.subr.bf16.mxu0 %v1183
    %1282 = vmatpush1.bf16.msra.mxu0 %v1182
    %1283 = vmatprep.subr.bf16.mxu0 %v1187
    %1284 = vmatpush1.bf16.msra.mxu0 %v1186
    %1285 = vmatprep.subr.bf16.mxu0 %v1191
    %1286 = vmatpush1.bf16.msra.mxu0 %v1190
    %1287 = vmatprep.subr.bf16.mxu0 %v1195
    %1288 = vmatpush1.bf16.msra.mxu0 %v1194
    %1289 = vmatprep.subr.bf16.mxu0 %v1199
    %1290 = vmatpush1.bf16.msra.mxu0 %v1198
    %1291 = vmatprep.subr.bf16.mxu0 %v1203
    %1292 = vmatpush1.bf16.msra.mxu0 %v1202
    %1293 = vmatprep.subr.bf16.mxu0 %v1207
    %1294 = vmatpush1.bf16.msra.mxu0 %v1206
    %1295 = vmatprep.subr.bf16.mxu0 %v1211
    %1296 = vmatpush1.bf16.msra.mxu0 %v1210
    %1297 = vmatprep.subr.bf16.mxu0 %v1215
    %1298 = vmatpush1.bf16.msra.mxu0 %v1214
    %1299 = vmatprep.subr.bf16.mxu0 %v1219
    %1300 = vmatpush1.bf16.msra.mxu0 %v1218
    %1301 = vmatprep.subr.bf16.mxu0 %v1223
    %1302 = vmatpush1.bf16.msra.mxu0 %v1222
    %1303 = vmatprep.subr.bf16.mxu0 %v1227
    %1304 = vmatpush1.bf16.msra.mxu0 %v1226
    %1305 = vmatprep.subr.bf16.mxu0 %v1231
    %1306 = vmatpush1.bf16.msra.mxu0 %v1230
    %1307 = vmatprep.mubr.bf16.mxu0 %v1105
    %1308 = vmatmul.mubr.bf16.gmra.mrb[0].mxu0 %v1104
    %v1309 = vpop.f32.mrb[0].mxu0
    %v1310 = vadd.f32 %v1269, %v1309
    %v1311 = vpop.f32.mrb[0].mxu0
    %v1312 = vadd.f32 %v1271, %v1311
    %v1313 = vpop.f32.mrb[0].mxu0
    %v1314 = vpop.f32.mrb[0].mxu0
    %1315 = vdwg.mxu0
    %1316 = vmatprep.subr.bf16.mxu0 %v1109
    %1317 = vmatpush1.bf16.msra.mxu0 %v1108
    %1318 = vmatprep.subr.bf16.mxu0 %v1113
    %1319 = vmatpush1.bf16.msra.mxu0 %v1112
    %1320 = vmatprep.subr.bf16.mxu0 %v1117
    %1321 = vmatpush1.bf16.msra.mxu0 %v1116
    %1322 = vmatprep.subr.bf16.mxu0 %v1121
    %1323 = vmatpush1.bf16.msra.mxu0 %v1120
    %1324 = vmatprep.subr.bf16.mxu0 %v1125
    %1325 = vmatpush1.bf16.msra.mxu0 %v1124
    %1326 = vmatprep.subr.bf16.mxu0 %v1129
    %1327 = vmatpush1.bf16.msra.mxu0 %v1128
    %1328 = vmatprep.subr.bf16.mxu0 %v1133
    %1329 = vmatpush1.bf16.msra.mxu0 %v1132
    %1330 = vmatprep.subr.bf16.mxu0 %v1137
    %1331 = vmatpush1.bf16.msra.mxu0 %v1136
    %1332 = vmatprep.subr.bf16.mxu0 %v1141
    %1333 = vmatpush1.bf16.msra.mxu0 %v1140
    %1334 = vmatprep.subr.bf16.mxu0 %v1145
    %1335 = vmatpush1.bf16.msra.mxu0 %v1144
    %1336 = vmatprep.subr.bf16.mxu0 %v1149
    %1337 = vmatpush1.bf16.msra.mxu0 %v1148
    %1338 = vmatprep.subr.bf16.mxu0 %v1153
    %1339 = vmatpush1.bf16.msra.mxu0 %v1152
    %1340 = vmatprep.subr.bf16.mxu0 %v1157
    %1341 = vmatpush1.bf16.msra.mxu0 %v1156
    %1342 = vmatprep.subr.bf16.mxu0 %v1161
    %1343 = vmatpush1.bf16.msra.mxu0 %v1160
    %1344 = vmatprep.subr.bf16.mxu0 %v1165
    %1345 = vmatpush1.bf16.msra.mxu0 %v1164
    %1346 = vmatprep.subr.bf16.mxu0 %v1169
    %1347 = vmatpush1.bf16.msra.mxu0 %v1168
    %1348 = vmatprep.mubr.bf16.mxu0 %v1103
    %1349 = vmatmul.mubr.bf16.gmra.mrb[0].mxu0 %v1102
    %v1350 = vpop.f32.mrb[0].mxu0
    %v1351 = vadd.f32 0.0, %v1350
    %v1352 = vpop.f32.mrb[0].mxu0
    %v1353 = vadd.f32 0.0, %v1352
    %v1354 = vpop.f32.mrb[0].mxu0
    %v1355 = vpop.f32.mrb[0].mxu0
    %1356 = vdwg.mxu0
    %1357 = vmatprep.subr.bf16.mxu0 %v1173
    %1358 = vmatpush1.bf16.msra.mxu0 %v1172
    %1359 = vmatprep.subr.bf16.mxu0 %v1177
    %1360 = vmatpush1.bf16.msra.mxu0 %v1176
    %1361 = vmatprep.subr.bf16.mxu0 %v1181
    %1362 = vmatpush1.bf16.msra.mxu0 %v1180
    %1363 = vmatprep.subr.bf16.mxu0 %v1185
    %1364 = vmatpush1.bf16.msra.mxu0 %v1184
    %1365 = vmatprep.subr.bf16.mxu0 %v1189
    %1366 = vmatpush1.bf16.msra.mxu0 %v1188
    %1367 = vmatprep.subr.bf16.mxu0 %v1193
    %1368 = vmatpush1.bf16.msra.mxu0 %v1192
    %1369 = vmatprep.subr.bf16.mxu0 %v1197
    %1370 = vmatpush1.bf16.msra.mxu0 %v1196
    %1371 = vmatprep.subr.bf16.mxu0 %v1201
    %1372 = vmatpush1.bf16.msra.mxu0 %v1200
    %1373 = vmatprep.subr.bf16.mxu0 %v1205
    %1374 = vmatpush1.bf16.msra.mxu0 %v1204
    %1375 = vmatprep.subr.bf16.mxu0 %v1209
    %1376 = vmatpush1.bf16.msra.mxu0 %v1208
    %1377 = vmatprep.subr.bf16.mxu0 %v1213
    %1378 = vmatpush1.bf16.msra.mxu0 %v1212
    %1379 = vmatprep.subr.bf16.mxu0 %v1217
    %1380 = vmatpush1.bf16.msra.mxu0 %v1216
    %1381 = vmatprep.subr.bf16.mxu0 %v1221
    %1382 = vmatpush1.bf16.msra.mxu0 %v1220
    %1383 = vmatprep.subr.bf16.mxu0 %v1225
    %1384 = vmatpush1.bf16.msra.mxu0 %v1224
    %1385 = vmatprep.subr.bf16.mxu0 %v1229
    %1386 = vmatpush1.bf16.msra.mxu0 %v1228
    %1387 = vmatprep.subr.bf16.mxu0 %v1233
    %1388 = vmatpush1.bf16.msra.mxu0 %v1232
    %1389 = vmatprep.mubr.bf16.mxu0 %v1105
    %1390 = vmatmul.mubr.bf16.gmra.mrb[0].mxu0 %v1104
    %v1391 = vpop.f32.mrb[0].mxu0
    %v1392 = vadd.f32 %v1351, %v1391
    %v1393 = vpop.f32.mrb[0].mxu0
    %v1394 = vadd.f32 %v1353, %v1393
    %v1395 = vpop.f32.mrb[0].mxu0
    %v1396 = vpop.f32.mrb[0].mxu0
    %1397 = vdwg.mxu0
    %v1398 = vadd.f32 %v541, %v1310
    %v1399 = vadd.f32 %v543, %v1312
    %v1400 = vadd.f32 %v614, %v1392
    %v1401 = vadd.f32 %v616, %v1394
    %v1402 = vxor.u32 %v1398, 2147483648
    %v1403 = vxor.u32 %v1399, 2147483648
    %v1404 = vxor.u32 %v1400, 2147483648
    %v1405 = vxor.u32 %v1401, 2147483648
    %v1406 = vmul.f32 %v1402, 1.442695
    %v1407 = vpow.pop %v1406
    %v1408 = vmul.f32 %v1403, 1.442695
    %v1409 = vpow.pop %v1408
    %v1410 = vmul.f32 %v1404, 1.442695
    %v1411 = vpow.pop %v1410
    %v1412 = vmul.f32 %v1405, 1.442695
    %v1413 = vpow.pop %v1412
    %v1414 = vadd.f32 %v1407, 1.0
    %v1415 = vadd.f32 %v1409, 1.0
    %v1416 = vadd.f32 %v1411, 1.0
    %v1417 = vadd.f32 %v1413, 1.0
    %v1418 = vrcp.pop %v1414
    %v1419 = vmul.f32 1.0, %v1418
    %v1420 = vrcp.pop %v1415
    %v1421 = vmul.f32 1.0, %v1420
    %v1422 = vrcp.pop %v1416
    %v1423 = vmul.f32 1.0, %v1422
    %v1424 = vrcp.pop %v1417
    %v1425 = vmul.f32 1.0, %v1424
    %v1426 = vld [vmem:[#allocation2 + $0x20] sm:$0xff]
    %v1427 = vld [vmem:[#allocation2 + $0x28] sm:$0xff]
    %v1428 = vld [vmem:[#allocation2 + $0x30] sm:$0xff]
    %v1429 = vld [vmem:[#allocation2 + $0x38] sm:$0xff]
    %v1430 = vld [vmem:[#allocation2 + $0xa0] sm:$0xff]
    %v1431 = vld [vmem:[#allocation2 + $0xa8] sm:$0xff]
    %v1432 = vld [vmem:[#allocation2 + $0xb0] sm:$0xff]
    %v1433 = vld [vmem:[#allocation2 + $0xb8] sm:$0xff]
    %v1434 = vld [vmem:[#allocation2 + $0x120] sm:$0xff]
    %v1435 = vld [vmem:[#allocation2 + $0x128] sm:$0xff]
    %v1436 = vld [vmem:[#allocation2 + $0x130] sm:$0xff]
    %v1437 = vld [vmem:[#allocation2 + $0x138] sm:$0xff]
    %v1438 = vld [vmem:[#allocation2 + $0x1a0] sm:$0xff]
    %v1439 = vld [vmem:[#allocation2 + $0x1a8] sm:$0xff]
    %v1440 = vld [vmem:[#allocation2 + $0x1b0] sm:$0xff]
    %v1441 = vld [vmem:[#allocation2 + $0x1b8] sm:$0xff]
    %v1442 = vld [vmem:[#allocation2 + $0x220] sm:$0xff]
    %v1443 = vld [vmem:[#allocation2 + $0x228] sm:$0xff]
    %v1444 = vld [vmem:[#allocation2 + $0x230] sm:$0xff]
    %v1445 = vld [vmem:[#allocation2 + $0x238] sm:$0xff]
    %v1446 = vld [vmem:[#allocation2 + $0x2a0] sm:$0xff]
    %v1447 = vld [vmem:[#allocation2 + $0x2a8] sm:$0xff]
    %v1448 = vld [vmem:[#allocation2 + $0x2b0] sm:$0xff]
    %v1449 = vld [vmem:[#allocation2 + $0x2b8] sm:$0xff]
    %v1450 = vld [vmem:[#allocation2 + $0x320] sm:$0xff]
    %v1451 = vld [vmem:[#allocation2 + $0x328] sm:$0xff]
    %v1452 = vld [vmem:[#allocation2 + $0x330] sm:$0xff]
    %v1453 = vld [vmem:[#allocation2 + $0x338] sm:$0xff]
    %v1454 = vld [vmem:[#allocation2 + $0x3a0] sm:$0xff]
    %v1455 = vld [vmem:[#allocation2 + $0x3a8] sm:$0xff]
    %v1456 = vld [vmem:[#allocation2 + $0x3b0] sm:$0xff]
    %v1457 = vld [vmem:[#allocation2 + $0x3b8] sm:$0xff]
    %v1458 = vld [vmem:[#allocation2 + $0x420] sm:$0xff]
    %v1459 = vld [vmem:[#allocation2 + $0x428] sm:$0xff]
    %v1460 = vld [vmem:[#allocation2 + $0x430] sm:$0xff]
    %v1461 = vld [vmem:[#allocation2 + $0x438] sm:$0xff]
    %v1462 = vld [vmem:[#allocation2 + $0x4a0] sm:$0xff]
    %v1463 = vld [vmem:[#allocation2 + $0x4a8] sm:$0xff]
    %v1464 = vld [vmem:[#allocation2 + $0x4b0] sm:$0xff]
    %v1465 = vld [vmem:[#allocation2 + $0x4b8] sm:$0xff]
    %v1466 = vld [vmem:[#allocation2 + $0x520] sm:$0xff]
    %v1467 = vld [vmem:[#allocation2 + $0x528] sm:$0xff]
    %v1468 = vld [vmem:[#allocation2 + $0x530] sm:$0xff]
    %v1469 = vld [vmem:[#allocation2 + $0x538] sm:$0xff]
    %v1470 = vld [vmem:[#allocation2 + $0x5a0] sm:$0xff]
    %v1471 = vld [vmem:[#allocation2 + $0x5a8] sm:$0xff]
    %v1472 = vld [vmem:[#allocation2 + $0x5b0] sm:$0xff]
    %v1473 = vld [vmem:[#allocation2 + $0x5b8] sm:$0xff]
    %v1474 = vld [vmem:[#allocation2 + $0x620] sm:$0xff]
    %v1475 = vld [vmem:[#allocation2 + $0x628] sm:$0xff]
    %v1476 = vld [vmem:[#allocation2 + $0x630] sm:$0xff]
    %v1477 = vld [vmem:[#allocation2 + $0x638] sm:$0xff]
    %v1478 = vld [vmem:[#allocation2 + $0x6a0] sm:$0xff]
    %v1479 = vld [vmem:[#allocation2 + $0x6a8] sm:$0xff]
    %v1480 = vld [vmem:[#allocation2 + $0x6b0] sm:$0xff]
    %v1481 = vld [vmem:[#allocation2 + $0x6b8] sm:$0xff]
    %v1482 = vld [vmem:[#allocation2 + $0x720] sm:$0xff]
    %v1483 = vld [vmem:[#allocation2 + $0x728] sm:$0xff]
    %v1484 = vld [vmem:[#allocation2 + $0x730] sm:$0xff]
    %v1485 = vld [vmem:[#allocation2 + $0x738] sm:$0xff]
    %v1486 = vld [vmem:[#allocation2 + $0x7a0] sm:$0xff]
    %v1487 = vld [vmem:[#allocation2 + $0x7a8] sm:$0xff]
    %v1488 = vld [vmem:[#allocation2 + $0x7b0] sm:$0xff]
    %v1489 = vld [vmem:[#allocation2 + $0x7b8] sm:$0xff]
    %v1490 = vld [vmem:[#allocation2 + $0x820] sm:$0xff]
    %v1491 = vld [vmem:[#allocation2 + $0x828] sm:$0xff]
    %v1492 = vld [vmem:[#allocation2 + $0x830] sm:$0xff]
    %v1493 = vld [vmem:[#allocation2 + $0x838] sm:$0xff]
    %v1494 = vld [vmem:[#allocation2 + $0x8a0] sm:$0xff]
    %v1495 = vld [vmem:[#allocation2 + $0x8a8] sm:$0xff]
    %v1496 = vld [vmem:[#allocation2 + $0x8b0] sm:$0xff]
    %v1497 = vld [vmem:[#allocation2 + $0x8b8] sm:$0xff]
    %v1498 = vld [vmem:[#allocation2 + $0x920] sm:$0xff]
    %v1499 = vld [vmem:[#allocation2 + $0x928] sm:$0xff]
    %v1500 = vld [vmem:[#allocation2 + $0x930] sm:$0xff]
    %v1501 = vld [vmem:[#allocation2 + $0x938] sm:$0xff]
    %v1502 = vld [vmem:[#allocation2 + $0x9a0] sm:$0xff]
    %v1503 = vld [vmem:[#allocation2 + $0x9a8] sm:$0xff]
    %v1504 = vld [vmem:[#allocation2 + $0x9b0] sm:$0xff]
    %v1505 = vld [vmem:[#allocation2 + $0x9b8] sm:$0xff]
    %v1506 = vld [vmem:[#allocation2 + $0xa20] sm:$0xff]
    %v1507 = vld [vmem:[#allocation2 + $0xa28] sm:$0xff]
    %v1508 = vld [vmem:[#allocation2 + $0xa30] sm:$0xff]
    %v1509 = vld [vmem:[#allocation2 + $0xa38] sm:$0xff]
    %v1510 = vld [vmem:[#allocation2 + $0xaa0] sm:$0xff]
    %v1511 = vld [vmem:[#allocation2 + $0xaa8] sm:$0xff]
    %v1512 = vld [vmem:[#allocation2 + $0xab0] sm:$0xff]
    %v1513 = vld [vmem:[#allocation2 + $0xab8] sm:$0xff]
    %v1514 = vld [vmem:[#allocation2 + $0xb20] sm:$0xff]
    %v1515 = vld [vmem:[#allocation2 + $0xb28] sm:$0xff]
    %v1516 = vld [vmem:[#allocation2 + $0xb30] sm:$0xff]
    %v1517 = vld [vmem:[#allocation2 + $0xb38] sm:$0xff]
    %v1518 = vld [vmem:[#allocation2 + $0xba0] sm:$0xff]
    %v1519 = vld [vmem:[#allocation2 + $0xba8] sm:$0xff]
    %v1520 = vld [vmem:[#allocation2 + $0xbb0] sm:$0xff]
    %v1521 = vld [vmem:[#allocation2 + $0xbb8] sm:$0xff]
    %v1522 = vld [vmem:[#allocation2 + $0xc20] sm:$0xff]
    %v1523 = vld [vmem:[#allocation2 + $0xc28] sm:$0xff]
    %v1524 = vld [vmem:[#allocation2 + $0xc30] sm:$0xff]
    %v1525 = vld [vmem:[#allocation2 + $0xc38] sm:$0xff]
    %v1526 = vld [vmem:[#allocation2 + $0xca0] sm:$0xff]
    %v1527 = vld [vmem:[#allocation2 + $0xca8] sm:$0xff]
    %v1528 = vld [vmem:[#allocation2 + $0xcb0] sm:$0xff]
    %v1529 = vld [vmem:[#allocation2 + $0xcb8] sm:$0xff]
    %v1530 = vld [vmem:[#allocation2 + $0xd20] sm:$0xff]
    %v1531 = vld [vmem:[#allocation2 + $0xd28] sm:$0xff]
    %v1532 = vld [vmem:[#allocation2 + $0xd30] sm:$0xff]
    %v1533 = vld [vmem:[#allocation2 + $0xd38] sm:$0xff]
    %v1534 = vld [vmem:[#allocation2 + $0xda0] sm:$0xff]
    %v1535 = vld [vmem:[#allocation2 + $0xda8] sm:$0xff]
    %v1536 = vld [vmem:[#allocation2 + $0xdb0] sm:$0xff]
    %v1537 = vld [vmem:[#allocation2 + $0xdb8] sm:$0xff]
    %v1538 = vld [vmem:[#allocation2 + $0xe20] sm:$0xff]
    %v1539 = vld [vmem:[#allocation2 + $0xe28] sm:$0xff]
    %v1540 = vld [vmem:[#allocation2 + $0xe30] sm:$0xff]
    %v1541 = vld [vmem:[#allocation2 + $0xe38] sm:$0xff]
    %v1542 = vld [vmem:[#allocation2 + $0xea0] sm:$0xff]
    %v1543 = vld [vmem:[#allocation2 + $0xea8] sm:$0xff]
    %v1544 = vld [vmem:[#allocation2 + $0xeb0] sm:$0xff]
    %v1545 = vld [vmem:[#allocation2 + $0xeb8] sm:$0xff]
    %v1546 = vld [vmem:[#allocation2 + $0xf20] sm:$0xff]
    %v1547 = vld [vmem:[#allocation2 + $0xf28] sm:$0xff]
    %v1548 = vld [vmem:[#allocation2 + $0xf30] sm:$0xff]
    %v1549 = vld [vmem:[#allocation2 + $0xf38] sm:$0xff]
    %v1550 = vld [vmem:[#allocation2 + $0xfa0] sm:$0xff]
    %v1551 = vld [vmem:[#allocation2 + $0xfa8] sm:$0xff]
    %v1552 = vld [vmem:[#allocation2 + $0xfb0] sm:$0xff]
    %v1553 = vld [vmem:[#allocation2 + $0xfb8] sm:$0xff]
    %1554 = vmatprep.subr.bf16.mxu0 %v1427
    %1555 = vmatpush1.bf16.msra.mxu0 %v1426
    %1556 = vmatprep.subr.bf16.mxu0 %v1431
    %1557 = vmatpush1.bf16.msra.mxu0 %v1430
    %1558 = vmatprep.subr.bf16.mxu0 %v1435
    %1559 = vmatpush1.bf16.msra.mxu0 %v1434
    %1560 = vmatprep.subr.bf16.mxu0 %v1439
    %1561 = vmatpush1.bf16.msra.mxu0 %v1438
    %1562 = vmatprep.subr.bf16.mxu0 %v1443
    %1563 = vmatpush1.bf16.msra.mxu0 %v1442
    %1564 = vmatprep.subr.bf16.mxu0 %v1447
    %1565 = vmatpush1.bf16.msra.mxu0 %v1446
    %1566 = vmatprep.subr.bf16.mxu0 %v1451
    %1567 = vmatpush1.bf16.msra.mxu0 %v1450
    %1568 = vmatprep.subr.bf16.mxu0 %v1455
    %1569 = vmatpush1.bf16.msra.mxu0 %v1454
    %1570 = vmatprep.subr.bf16.mxu0 %v1459
    %1571 = vmatpush1.bf16.msra.mxu0 %v1458
    %1572 = vmatprep.subr.bf16.mxu0 %v1463
    %1573 = vmatpush1.bf16.msra.mxu0 %v1462
    %1574 = vmatprep.subr.bf16.mxu0 %v1467
    %1575 = vmatpush1.bf16.msra.mxu0 %v1466
    %1576 = vmatprep.subr.bf16.mxu0 %v1471
    %1577 = vmatpush1.bf16.msra.mxu0 %v1470
    %1578 = vmatprep.subr.bf16.mxu0 %v1475
    %1579 = vmatpush1.bf16.msra.mxu0 %v1474
    %1580 = vmatprep.subr.bf16.mxu0 %v1479
    %1581 = vmatpush1.bf16.msra.mxu0 %v1478
    %1582 = vmatprep.subr.bf16.mxu0 %v1483
    %1583 = vmatpush1.bf16.msra.mxu0 %v1482
    %1584 = vmatprep.subr.bf16.mxu0 %v1487
    %1585 = vmatpush1.bf16.msra.mxu0 %v1486
    %1586 = vmatprep.mubr.bf16.mxu0 %v1103
    %1587 = vmatmul.mubr.bf16.gmra.mrb[0].mxu0 %v1102
    %v1588 = vpop.f32.mrb[0].mxu0
    %v1589 = vadd.f32 0.0, %v1588
    %v1590 = vpop.f32.mrb[0].mxu0
    %v1591 = vadd.f32 0.0, %v1590
    %v1592 = vpop.f32.mrb[0].mxu0
    %v1593 = vpop.f32.mrb[0].mxu0
    %1594 = vdwg.mxu0
    %1595 = vmatprep.subr.bf16.mxu0 %v1491
    %1596 = vmatpush1.bf16.msra.mxu0 %v1490
    %1597 = vmatprep.subr.bf16.mxu0 %v1495
    %1598 = vmatpush1.bf16.msra.mxu0 %v1494
    %1599 = vmatprep.subr.bf16.mxu0 %v1499
    %1600 = vmatpush1.bf16.msra.mxu0 %v1498
    %1601 = vmatprep.subr.bf16.mxu0 %v1503
    %1602 = vmatpush1.bf16.msra.mxu0 %v1502
    %1603 = vmatprep.subr.bf16.mxu0 %v1507
    %1604 = vmatpush1.bf16.msra.mxu0 %v1506
    %1605 = vmatprep.subr.bf16.mxu0 %v1511
    %1606 = vmatpush1.bf16.msra.mxu0 %v1510
    %1607 = vmatprep.subr.bf16.mxu0 %v1515
    %1608 = vmatpush1.bf16.msra.mxu0 %v1514
    %1609 = vmatprep.subr.bf16.mxu0 %v1519
    %1610 = vmatpush1.bf16.msra.mxu0 %v1518
    %1611 = vmatprep.subr.bf16.mxu0 %v1523
    %1612 = vmatpush1.bf16.msra.mxu0 %v1522
    %1613 = vmatprep.subr.bf16.mxu0 %v1527
    %1614 = vmatpush1.bf16.msra.mxu0 %v1526
    %1615 = vmatprep.subr.bf16.mxu0 %v1531
    %1616 = vmatpush1.bf16.msra.mxu0 %v1530
    %1617 = vmatprep.subr.bf16.mxu0 %v1535
    %1618 = vmatpush1.bf16.msra.mxu0 %v1534
    %1619 = vmatprep.subr.bf16.mxu0 %v1539
    %1620 = vmatpush1.bf16.msra.mxu0 %v1538
    %1621 = vmatprep.subr.bf16.mxu0 %v1543
    %1622 = vmatpush1.bf16.msra.mxu0 %v1542
    %1623 = vmatprep.subr.bf16.mxu0 %v1547
    %1624 = vmatpush1.bf16.msra.mxu0 %v1546
    %1625 = vmatprep.subr.bf16.mxu0 %v1551
    %1626 = vmatpush1.bf16.msra.mxu0 %v1550
    %1627 = vmatprep.mubr.bf16.mxu0 %v1105
    %1628 = vmatmul.mubr.bf16.gmra.mrb[0].mxu0 %v1104
    %v1629 = vpop.f32.mrb[0].mxu0
    %v1630 = vadd.f32 %v1589, %v1629
    %v1631 = vpop.f32.mrb[0].mxu0
    %v1632 = vadd.f32 %v1591, %v1631
    %v1633 = vpop.f32.mrb[0].mxu0
    %v1634 = vpop.f32.mrb[0].mxu0
    %1635 = vdwg.mxu0
    %1636 = vmatprep.subr.bf16.mxu0 %v1429
    %1637 = vmatpush1.bf16.msra.mxu0 %v1428
    %1638 = vmatprep.subr.bf16.mxu0 %v1433
    %1639 = vmatpush1.bf16.msra.mxu0 %v1432
    %1640 = vmatprep.subr.bf16.mxu0 %v1437
    %1641 = vmatpush1.bf16.msra.mxu0 %v1436
    %1642 = vmatprep.subr.bf16.mxu0 %v1441
    %1643 = vmatpush1.bf16.msra.mxu0 %v1440
    %1644 = vmatprep.subr.bf16.mxu0 %v1445
    %1645 = vmatpush1.bf16.msra.mxu0 %v1444
    %1646 = vmatprep.subr.bf16.mxu0 %v1449
    %1647 = vmatpush1.bf16.msra.mxu0 %v1448
    %1648 = vmatprep.subr.bf16.mxu0 %v1453
    %1649 = vmatpush1.bf16.msra.mxu0 %v1452
    %1650 = vmatprep.subr.bf16.mxu0 %v1457
    %1651 = vmatpush1.bf16.msra.mxu0 %v1456
    %1652 = vmatprep.subr.bf16.mxu0 %v1461
    %1653 = vmatpush1.bf16.msra.mxu0 %v1460
    %1654 = vmatprep.subr.bf16.mxu0 %v1465
    %1655 = vmatpush1.bf16.msra.mxu0 %v1464
    %1656 = vmatprep.subr.bf16.mxu0 %v1469
    %1657 = vmatpush1.bf16.msra.mxu0 %v1468
    %1658 = vmatprep.subr.bf16.mxu0 %v1473
    %1659 = vmatpush1.bf16.msra.mxu0 %v1472
    %1660 = vmatprep.subr.bf16.mxu0 %v1477
    %1661 = vmatpush1.bf16.msra.mxu0 %v1476
    %1662 = vmatprep.subr.bf16.mxu0 %v1481
    %1663 = vmatpush1.bf16.msra.mxu0 %v1480
    %1664 = vmatprep.subr.bf16.mxu0 %v1485
    %1665 = vmatpush1.bf16.msra.mxu0 %v1484
    %1666 = vmatprep.subr.bf16.mxu0 %v1489
    %1667 = vmatpush1.bf16.msra.mxu0 %v1488
    %1668 = vmatprep.mubr.bf16.mxu0 %v1103
    %1669 = vmatmul.mubr.bf16.gmra.mrb[0].mxu0 %v1102
    %v1670 = vpop.f32.mrb[0].mxu0
    %v1671 = vadd.f32 0.0, %v1670
    %v1672 = vpop.f32.mrb[0].mxu0
    %v1673 = vadd.f32 0.0, %v1672
    %v1674 = vpop.f32.mrb[0].mxu0
    %v1675 = vpop.f32.mrb[0].mxu0
    %1676 = vdwg.mxu0
    %1677 = vmatprep.subr.bf16.mxu0 %v1493
    %1678 = vmatpush1.bf16.msra.mxu0 %v1492
    %1679 = vmatprep.subr.bf16.mxu0 %v1497
    %1680 = vmatpush1.bf16.msra.mxu0 %v1496
    %1681 = vmatprep.subr.bf16.mxu0 %v1501
    %1682 = vmatpush1.bf16.msra.mxu0 %v1500
    %1683 = vmatprep.subr.bf16.mxu0 %v1505
    %1684 = vmatpush1.bf16.msra.mxu0 %v1504
    %1685 = vmatprep.subr.bf16.mxu0 %v1509
    %1686 = vmatpush1.bf16.msra.mxu0 %v1508
    %1687 = vmatprep.subr.bf16.mxu0 %v1513
    %1688 = vmatpush1.bf16.msra.mxu0 %v1512
    %1689 = vmatprep.subr.bf16.mxu0 %v1517
    %1690 = vmatpush1.bf16.msra.mxu0 %v1516
    %1691 = vmatprep.subr.bf16.mxu0 %v1521
    %1692 = vmatpush1.bf16.msra.mxu0 %v1520
    %1693 = vmatprep.subr.bf16.mxu0 %v1525
    %1694 = vmatpush1.bf16.msra.mxu0 %v1524
    %1695 = vmatprep.subr.bf16.mxu0 %v1529
    %1696 = vmatpush1.bf16.msra.mxu0 %v1528
    %1697 = vmatprep.subr.bf16.mxu0 %v1533
    %1698 = vmatpush1.bf16.msra.mxu0 %v1532
    %1699 = vmatprep.subr.bf16.mxu0 %v1537
    %1700 = vmatpush1.bf16.msra.mxu0 %v1536
    %1701 = vmatprep.subr.bf16.mxu0 %v1541
    %1702 = vmatpush1.bf16.msra.mxu0 %v1540
    %1703 = vmatprep.subr.bf16.mxu0 %v1545
    %1704 = vmatpush1.bf16.msra.mxu0 %v1544
    %1705 = vmatprep.subr.bf16.mxu0 %v1549
    %1706 = vmatpush1.bf16.msra.mxu0 %v1548
    %1707 = vmatprep.subr.bf16.mxu0 %v1553
    %1708 = vmatpush1.bf16.msra.mxu0 %v1552
    %1709 = vmatprep.mubr.bf16.mxu0 %v1105
    %1710 = vmatmul.mubr.bf16.gmra.mrb[0].mxu0 %v1104
    %v1711 = vpop.f32.mrb[0].mxu0
    %v1712 = vadd.f32 %v1671, %v1711
    %v1713 = vpop.f32.mrb[0].mxu0
    %v1714 = vadd.f32 %v1673, %v1713
    %v1715 = vpop.f32.mrb[0].mxu0
    %v1716 = vpop.f32.mrb[0].mxu0
    %1717 = vdwg.mxu0
    %v1718 = vadd.f32 %v687, %v1630
    %v1719 = vadd.f32 %v689, %v1632
    %v1720 = vadd.f32 %v760, %v1712
    %v1721 = vadd.f32 %v762, %v1714
    %v1722 = vxor.u32 %v1718, 2147483648
    %v1723 = vxor.u32 %v1719, 2147483648
    %v1724 = vxor.u32 %v1720, 2147483648
    %v1725 = vxor.u32 %v1721, 2147483648
    %v1726 = vmul.f32 %v1722, 1.442695
    %v1727 = vpow.pop %v1726
    %v1728 = vmul.f32 %v1723, 1.442695
    %v1729 = vpow.pop %v1728
    %v1730 = vmul.f32 %v1724, 1.442695
    %v1731 = vpow.pop %v1730
    %v1732 = vmul.f32 %v1725, 1.442695
    %v1733 = vpow.pop %v1732
    %v1734 = vadd.f32 %v1727, 1.0
    %v1735 = vadd.f32 %v1729, 1.0
    %v1736 = vadd.f32 %v1731, 1.0
    %v1737 = vadd.f32 %v1733, 1.0
    %v1738 = vrcp.pop %v1734
    %v1739 = vmul.f32 1.0, %v1738
    %v1740 = vrcp.pop %v1735
    %v1741 = vmul.f32 1.0, %v1740
    %v1742 = vrcp.pop %v1736
    %v1743 = vmul.f32 1.0, %v1742
    %v1744 = vrcp.pop %v1737
    %v1745 = vmul.f32 1.0, %v1744
    %v1746 = vld [vmem:[#allocation2 + $0x40] sm:$0xff]
    %v1747 = vld [vmem:[#allocation2 + $0x48] sm:$0xff]
    %v1748 = vld [vmem:[#allocation2 + $0x50] sm:$0xff]
    %v1749 = vld [vmem:[#allocation2 + $0x58] sm:$0xff]
    %v1750 = vld [vmem:[#allocation2 + $0xc0] sm:$0xff]
    %v1751 = vld [vmem:[#allocation2 + $0xc8] sm:$0xff]
    %v1752 = vld [vmem:[#allocation2 + $0xd0] sm:$0xff]
    %v1753 = vld [vmem:[#allocation2 + $0xd8] sm:$0xff]
    %v1754 = vld [vmem:[#allocation2 + $0x140] sm:$0xff]
    %v1755 = vld [vmem:[#allocation2 + $0x148] sm:$0xff]
    %v1756 = vld [vmem:[#allocation2 + $0x150] sm:$0xff]
    %v1757 = vld [vmem:[#allocation2 + $0x158] sm:$0xff]
    %v1758 = vld [vmem:[#allocation2 + $0x1c0] sm:$0xff]
    %v1759 = vld [vmem:[#allocation2 + $0x1c8] sm:$0xff]
    %v1760 = vld [vmem:[#allocation2 + $0x1d0] sm:$0xff]
    %v1761 = vld [vmem:[#allocation2 + $0x1d8] sm:$0xff]
    %v1762 = vld [vmem:[#allocation2 + $0x240] sm:$0xff]
    %v1763 = vld [vmem:[#allocation2 + $0x248] sm:$0xff]
    %v1764 = vld [vmem:[#allocation2 + $0x250] sm:$0xff]
    %v1765 = vld [vmem:[#allocation2 + $0x258] sm:$0xff]
    %v1766 = vld [vmem:[#allocation2 + $0x2c0] sm:$0xff]
    %v1767 = vld [vmem:[#allocation2 + $0x2c8] sm:$0xff]
    %v1768 = vld [vmem:[#allocation2 + $0x2d0] sm:$0xff]
    %v1769 = vld [vmem:[#allocation2 + $0x2d8] sm:$0xff]
    %v1770 = vld [vmem:[#allocation2 + $0x340] sm:$0xff]
    %v1771 = vld [vmem:[#allocation2 + $0x348] sm:$0xff]
    %v1772 = vld [vmem:[#allocation2 + $0x350] sm:$0xff]
    %v1773 = vld [vmem:[#allocation2 + $0x358] sm:$0xff]
    %v1774 = vld [vmem:[#allocation2 + $0x3c0] sm:$0xff]
    %v1775 = vld [vmem:[#allocation2 + $0x3c8] sm:$0xff]
    %v1776 = vld [vmem:[#allocation2 + $0x3d0] sm:$0xff]
    %v1777 = vld [vmem:[#allocation2 + $0x3d8] sm:$0xff]
    %v1778 = vld [vmem:[#allocation2 + $0x440] sm:$0xff]
    %v1779 = vld [vmem:[#allocation2 + $0x448] sm:$0xff]
    %v1780 = vld [vmem:[#allocation2 + $0x450] sm:$0xff]
    %v1781 = vld [vmem:[#allocation2 + $0x458] sm:$0xff]
    %v1782 = vld [vmem:[#allocation2 + $0x4c0] sm:$0xff]
    %v1783 = vld [vmem:[#allocation2 + $0x4c8] sm:$0xff]
    %v1784 = vld [vmem:[#allocation2 + $0x4d0] sm:$0xff]
    %v1785 = vld [vmem:[#allocation2 + $0x4d8] sm:$0xff]
    %v1786 = vld [vmem:[#allocation2 + $0x540] sm:$0xff]
    %v1787 = vld [vmem:[#allocation2 + $0x548] sm:$0xff]
    %v1788 = vld [vmem:[#allocation2 + $0x550] sm:$0xff]
    %v1789 = vld [vmem:[#allocation2 + $0x558] sm:$0xff]
    %v1790 = vld [vmem:[#allocation2 + $0x5c0] sm:$0xff]
    %v1791 = vld [vmem:[#allocation2 + $0x5c8] sm:$0xff]
    %v1792 = vld [vmem:[#allocation2 + $0x5d0] sm:$0xff]
    %v1793 = vld [vmem:[#allocation2 + $0x5d8] sm:$0xff]
    %v1794 = vld [vmem:[#allocation2 + $0x640] sm:$0xff]
    %v1795 = vld [vmem:[#allocation2 + $0x648] sm:$0xff]
    %v1796 = vld [vmem:[#allocation2 + $0x650] sm:$0xff]
    %v1797 = vld [vmem:[#allocation2 + $0x658] sm:$0xff]
    %v1798 = vld [vmem:[#allocation2 + $0x6c0] sm:$0xff]
    %v1799 = vld [vmem:[#allocation2 + $0x6c8] sm:$0xff]
    %v1800 = vld [vmem:[#allocation2 + $0x6d0] sm:$0xff]
    %v1801 = vld [vmem:[#allocation2 + $0x6d8] sm:$0xff]
    %v1802 = vld [vmem:[#allocation2 + $0x740] sm:$0xff]
    %v1803 = vld [vmem:[#allocation2 + $0x748] sm:$0xff]
    %v1804 = vld [vmem:[#allocation2 + $0x750] sm:$0xff]
    %v1805 = vld [vmem:[#allocation2 + $0x758] sm:$0xff]
    %v1806 = vld [vmem:[#allocation2 + $0x7c0] sm:$0xff]
    %v1807 = vld [vmem:[#allocation2 + $0x7c8] sm:$0xff]
    %v1808 = vld [vmem:[#allocation2 + $0x7d0] sm:$0xff]
    %v1809 = vld [vmem:[#allocation2 + $0x7d8] sm:$0xff]
    %v1810 = vld [vmem:[#allocation2 + $0x840] sm:$0xff]
    %v1811 = vld [vmem:[#allocation2 + $0x848] sm:$0xff]
    %v1812 = vld [vmem:[#allocation2 + $0x850] sm:$0xff]
    %v1813 = vld [vmem:[#allocation2 + $0x858] sm:$0xff]
    %v1814 = vld [vmem:[#allocation2 + $0x8c0] sm:$0xff]
    %v1815 = vld [vmem:[#allocation2 + $0x8c8] sm:$0xff]
    %v1816 = vld [vmem:[#allocation2 + $0x8d0] sm:$0xff]
    %v1817 = vld [vmem:[#allocation2 + $0x8d8] sm:$0xff]
    %v1818 = vld [vmem:[#allocation2 + $0x940] sm:$0xff]
    %v1819 = vld [vmem:[#allocation2 + $0x948] sm:$0xff]
    %v1820 = vld [vmem:[#allocation2 + $0x950] sm:$0xff]
    %v1821 = vld [vmem:[#allocation2 + $0x958] sm:$0xff]
    %v1822 = vld [vmem:[#allocation2 + $0x9c0] sm:$0xff]
    %v1823 = vld [vmem:[#allocation2 + $0x9c8] sm:$0xff]
    %v1824 = vld [vmem:[#allocation2 + $0x9d0] sm:$0xff]
    %v1825 = vld [vmem:[#allocation2 + $0x9d8] sm:$0xff]
    %v1826 = vld [vmem:[#allocation2 + $0xa40] sm:$0xff]
    %v1827 = vld [vmem:[#allocation2 + $0xa48] sm:$0xff]
    %v1828 = vld [vmem:[#allocation2 + $0xa50] sm:$0xff]
    %v1829 = vld [vmem:[#allocation2 + $0xa58] sm:$0xff]
    %v1830 = vld [vmem:[#allocation2 + $0xac0] sm:$0xff]
    %v1831 = vld [vmem:[#allocation2 + $0xac8] sm:$0xff]
    %v1832 = vld [vmem:[#allocation2 + $0xad0] sm:$0xff]
    %v1833 = vld [vmem:[#allocation2 + $0xad8] sm:$0xff]
    %v1834 = vld [vmem:[#allocation2 + $0xb40] sm:$0xff]
    %v1835 = vld [vmem:[#allocation2 + $0xb48] sm:$0xff]
    %v1836 = vld [vmem:[#allocation2 + $0xb50] sm:$0xff]
    %v1837 = vld [vmem:[#allocation2 + $0xb58] sm:$0xff]
    %v1838 = vld [vmem:[#allocation2 + $0xbc0] sm:$0xff]
    %v1839 = vld [vmem:[#allocation2 + $0xbc8] sm:$0xff]
    %v1840 = vld [vmem:[#allocation2 + $0xbd0] sm:$0xff]
    %v1841 = vld [vmem:[#allocation2 + $0xbd8] sm:$0xff]
    %v1842 = vld [vmem:[#allocation2 + $0xc40] sm:$0xff]
    %v1843 = vld [vmem:[#allocation2 + $0xc48] sm:$0xff]
    %v1844 = vld [vmem:[#allocation2 + $0xc50] sm:$0xff]
    %v1845 = vld [vmem:[#allocation2 + $0xc58] sm:$0xff]
    %v1846 = vld [vmem:[#allocation2 + $0xcc0] sm:$0xff]
    %v1847 = vld [vmem:[#allocation2 + $0xcc8] sm:$0xff]
    %v1848 = vld [vmem:[#allocation2 + $0xcd0] sm:$0xff]
    %v1849 = vld [vmem:[#allocation2 + $0xcd8] sm:$0xff]
    %v1850 = vld [vmem:[#allocation2 + $0xd40] sm:$0xff]
    %v1851 = vld [vmem:[#allocation2 + $0xd48] sm:$0xff]
    %v1852 = vld [vmem:[#allocation2 + $0xd50] sm:$0xff]
    %v1853 = vld [vmem:[#allocation2 + $0xd58] sm:$0xff]
    %v1854 = vld [vmem:[#allocation2 + $0xdc0] sm:$0xff]
    %v1855 = vld [vmem:[#allocation2 + $0xdc8] sm:$0xff]
    %v1856 = vld [vmem:[#allocation2 + $0xdd0] sm:$0xff]
    %v1857 = vld [vmem:[#allocation2 + $0xdd8] sm:$0xff]
    %v1858 = vld [vmem:[#allocation2 + $0xe40] sm:$0xff]
    %v1859 = vld [vmem:[#allocation2 + $0xe48] sm:$0xff]
    %v1860 = vld [vmem:[#allocation2 + $0xe50] sm:$0xff]
    %v1861 = vld [vmem:[#allocation2 + $0xe58] sm:$0xff]
    %v1862 = vld [vmem:[#allocation2 + $0xec0] sm:$0xff]
    %v1863 = vld [vmem:[#allocation2 + $0xec8] sm:$0xff]
    %v1864 = vld [vmem:[#allocation2 + $0xed0] sm:$0xff]
    %v1865 = vld [vmem:[#allocation2 + $0xed8] sm:$0xff]
    %v1866 = vld [vmem:[#allocation2 + $0xf40] sm:$0xff]
    %v1867 = vld [vmem:[#allocation2 + $0xf48] sm:$0xff]
    %v1868 = vld [vmem:[#allocation2 + $0xf50] sm:$0xff]
    %v1869 = vld [vmem:[#allocation2 + $0xf58] sm:$0xff]
    %v1870 = vld [vmem:[#allocation2 + $0xfc0] sm:$0xff]
    %v1871 = vld [vmem:[#allocation2 + $0xfc8] sm:$0xff]
    %v1872 = vld [vmem:[#allocation2 + $0xfd0] sm:$0xff]
    %v1873 = vld [vmem:[#allocation2 + $0xfd8] sm:$0xff]
    %1874 = vmatprep.subr.bf16.mxu0 %v1747
    %1875 = vmatpush1.bf16.msra.mxu0 %v1746
    %1876 = vmatprep.subr.bf16.mxu0 %v1751
    %1877 = vmatpush1.bf16.msra.mxu0 %v1750
    %1878 = vmatprep.subr.bf16.mxu0 %v1755
    %1879 = vmatpush1.bf16.msra.mxu0 %v1754
    %1880 = vmatprep.subr.bf16.mxu0 %v1759
    %1881 = vmatpush1.bf16.msra.mxu0 %v1758
    %1882 = vmatprep.subr.bf16.mxu0 %v1763
    %1883 = vmatpush1.bf16.msra.mxu0 %v1762
    %1884 = vmatprep.subr.bf16.mxu0 %v1767
    %1885 = vmatpush1.bf16.msra.mxu0 %v1766
    %1886 = vmatprep.subr.bf16.mxu0 %v1771
    %1887 = vmatpush1.bf16.msra.mxu0 %v1770
    %1888 = vmatprep.subr.bf16.mxu0 %v1775
    %1889 = vmatpush1.bf16.msra.mxu0 %v1774
    %1890 = vmatprep.subr.bf16.mxu0 %v1779
    %1891 = vmatpush1.bf16.msra.mxu0 %v1778
    %1892 = vmatprep.subr.bf16.mxu0 %v1783
    %1893 = vmatpush1.bf16.msra.mxu0 %v1782
    %1894 = vmatprep.subr.bf16.mxu0 %v1787
    %1895 = vmatpush1.bf16.msra.mxu0 %v1786
    %1896 = vmatprep.subr.bf16.mxu0 %v1791
    %1897 = vmatpush1.bf16.msra.mxu0 %v1790
    %1898 = vmatprep.subr.bf16.mxu0 %v1795
    %1899 = vmatpush1.bf16.msra.mxu0 %v1794
    %1900 = vmatprep.subr.bf16.mxu0 %v1799
    %1901 = vmatpush1.bf16.msra.mxu0 %v1798
    %1902 = vmatprep.subr.bf16.mxu0 %v1803
    %1903 = vmatpush1.bf16.msra.mxu0 %v1802
    %1904 = vmatprep.subr.bf16.mxu0 %v1807
    %1905 = vmatpush1.bf16.msra.mxu0 %v1806
    %1906 = vmatprep.mubr.bf16.mxu0 %v1103
    %1907 = vmatmul.mubr.bf16.gmra.mrb[0].mxu0 %v1102
    %v1908 = vpop.f32.mrb[0].mxu0
    %v1909 = vadd.f32 0.0, %v1908
    %v1910 = vpop.f32.mrb[0].mxu0
    %v1911 = vadd.f32 0.0, %v1910
    %v1912 = vpop.f32.mrb[0].mxu0
    %v1913 = vpop.f32.mrb[0].mxu0
    %1914 = vdwg.mxu0
    %1915 = vmatprep.subr.bf16.mxu0 %v1811
    %1916 = vmatpush1.bf16.msra.mxu0 %v1810
    %1917 = vmatprep.subr.bf16.mxu0 %v1815
    %1918 = vmatpush1.bf16.msra.mxu0 %v1814
    %1919 = vmatprep.subr.bf16.mxu0 %v1819
    %1920 = vmatpush1.bf16.msra.mxu0 %v1818
    %1921 = vmatprep.subr.bf16.mxu0 %v1823
    %1922 = vmatpush1.bf16.msra.mxu0 %v1822
    %1923 = vmatprep.subr.bf16.mxu0 %v1827
    %1924 = vmatpush1.bf16.msra.mxu0 %v1826
    %1925 = vmatprep.subr.bf16.mxu0 %v1831
    %1926 = vmatpush1.bf16.msra.mxu0 %v1830
    %1927 = vmatprep.subr.bf16.mxu0 %v1835
    %1928 = vmatpush1.bf16.msra.mxu0 %v1834
    %1929 = vmatprep.subr.bf16.mxu0 %v1839
    %1930 = vmatpush1.bf16.msra.mxu0 %v1838
    %1931 = vmatprep.subr.bf16.mxu0 %v1843
    %1932 = vmatpush1.bf16.msra.mxu0 %v1842
    %1933 = vmatprep.subr.bf16.mxu0 %v1847
    %1934 = vmatpush1.bf16.msra.mxu0 %v1846
    %1935 = vmatprep.subr.bf16.mxu0 %v1851
    %1936 = vmatpush1.bf16.msra.mxu0 %v1850
    %1937 = vmatprep.subr.bf16.mxu0 %v1855
    %1938 = vmatpush1.bf16.msra.mxu0 %v1854
    %1939 = vmatprep.subr.bf16.mxu0 %v1859
    %1940 = vmatpush1.bf16.msra.mxu0 %v1858
    %1941 = vmatprep.subr.bf16.mxu0 %v1863
    %1942 = vmatpush1.bf16.msra.mxu0 %v1862
    %1943 = vmatprep.subr.bf16.mxu0 %v1867
    %1944 = vmatpush1.bf16.msra.mxu0 %v1866
    %1945 = vmatprep.subr.bf16.mxu0 %v1871
    %1946 = vmatpush1.bf16.msra.mxu0 %v1870
    %1947 = vmatprep.mubr.bf16.mxu0 %v1105
    %1948 = vmatmul.mubr.bf16.gmra.mrb[0].mxu0 %v1104
    %v1949 = vpop.f32.mrb[0].mxu0
    %v1950 = vadd.f32 %v1909, %v1949
    %v1951 = vpop.f32.mrb[0].mxu0
    %v1952 = vadd.f32 %v1911, %v1951
    %v1953 = vpop.f32.mrb[0].mxu0
    %v1954 = vpop.f32.mrb[0].mxu0
    %1955 = vdwg.mxu0
    %1956 = vmatprep.subr.bf16.mxu0 %v1749
    %1957 = vmatpush1.bf16.msra.mxu0 %v1748
    %1958 = vmatprep.subr.bf16.mxu0 %v1753
    %1959 = vmatpush1.bf16.msra.mxu0 %v1752
    %1960 = vmatprep.subr.bf16.mxu0 %v1757
    %1961 = vmatpush1.bf16.msra.mxu0 %v1756
    %1962 = vmatprep.subr.bf16.mxu0 %v1761
    %1963 = vmatpush1.bf16.msra.mxu0 %v1760
    %1964 = vmatprep.subr.bf16.mxu0 %v1765
    %1965 = vmatpush1.bf16.msra.mxu0 %v1764
    %1966 = vmatprep.subr.bf16.mxu0 %v1769
    %1967 = vmatpush1.bf16.msra.mxu0 %v1768
    %1968 = vmatprep.subr.bf16.mxu0 %v1773
    %1969 = vmatpush1.bf16.msra.mxu0 %v1772
    %1970 = vmatprep.subr.bf16.mxu0 %v1777
    %1971 = vmatpush1.bf16.msra.mxu0 %v1776
    %1972 = vmatprep.subr.bf16.mxu0 %v1781
    %1973 = vmatpush1.bf16.msra.mxu0 %v1780
    %1974 = vmatprep.subr.bf16.mxu0 %v1785
    %1975 = vmatpush1.bf16.msra.mxu0 %v1784
    %1976 = vmatprep.subr.bf16.mxu0 %v1789
    %1977 = vmatpush1.bf16.msra.mxu0 %v1788
    %1978 = vmatprep.subr.bf16.mxu0 %v1793
    %1979 = vmatpush1.bf16.msra.mxu0 %v1792
    %1980 = vmatprep.subr.bf16.mxu0 %v1797
    %1981 = vmatpush1.bf16.msra.mxu0 %v1796
    %1982 = vmatprep.subr.bf16.mxu0 %v1801
    %1983 = vmatpush1.bf16.msra.mxu0 %v1800
    %1984 = vmatprep.subr.bf16.mxu0 %v1805
    %1985 = vmatpush1.bf16.msra.mxu0 %v1804
    %1986 = vmatprep.subr.bf16.mxu0 %v1809
    %1987 = vmatpush1.bf16.msra.mxu0 %v1808
    %1988 = vmatprep.mubr.bf16.mxu0 %v1103
    %1989 = vmatmul.mubr.bf16.gmra.mrb[0].mxu0 %v1102
    %v1990 = vpop.f32.mrb[0].mxu0
    %v1991 = vadd.f32 0.0, %v1990
    %v1992 = vpop.f32.mrb[0].mxu0
    %v1993 = vadd.f32 0.0, %v1992
    %v1994 = vpop.f32.mrb[0].mxu0
    %v1995 = vpop.f32.mrb[0].mxu0
    %1996 = vdwg.mxu0
    %1997 = vmatprep.subr.bf16.mxu0 %v1813
    %1998 = vmatpush1.bf16.msra.mxu0 %v1812
    %1999 = vmatprep.subr.bf16.mxu0 %v1817
    %2000 = vmatpush1.bf16.msra.mxu0 %v1816
    %2001 = vmatprep.subr.bf16.mxu0 %v1821
    %2002 = vmatpush1.bf16.msra.mxu0 %v1820
    %2003 = vmatprep.subr.bf16.mxu0 %v1825
    %2004 = vmatpush1.bf16.msra.mxu0 %v1824
    %2005 = vmatprep.subr.bf16.mxu0 %v1829
    %2006 = vmatpush1.bf16.msra.mxu0 %v1828
    %2007 = vmatprep.subr.bf16.mxu0 %v1833
    %2008 = vmatpush1.bf16.msra.mxu0 %v1832
    %2009 = vmatprep.subr.bf16.mxu0 %v1837
    %2010 = vmatpush1.bf16.msra.mxu0 %v1836
    %2011 = vmatprep.subr.bf16.mxu0 %v1841
    %2012 = vmatpush1.bf16.msra.mxu0 %v1840
    %2013 = vmatprep.subr.bf16.mxu0 %v1845
    %2014 = vmatpush1.bf16.msra.mxu0 %v1844
    %2015 = vmatprep.subr.bf16.mxu0 %v1849
    %2016 = vmatpush1.bf16.msra.mxu0 %v1848
    %2017 = vmatprep.subr.bf16.mxu0 %v1853
    %2018 = vmatpush1.bf16.msra.mxu0 %v1852
    %2019 = vmatprep.subr.bf16.mxu0 %v1857
    %2020 = vmatpush1.bf16.msra.mxu0 %v1856
    %2021 = vmatprep.subr.bf16.mxu0 %v1861
    %2022 = vmatpush1.bf16.msra.mxu0 %v1860
    %2023 = vmatprep.subr.bf16.mxu0 %v1865
    %2024 = vmatpush1.bf16.msra.mxu0 %v1864
    %2025 = vmatprep.subr.bf16.mxu0 %v1869
    %2026 = vmatpush1.bf16.msra.mxu0 %v1868
    %2027 = vmatprep.subr.bf16.mxu0 %v1873
    %2028 = vmatpush1.bf16.msra.mxu0 %v1872
    %2029 = vmatprep.mubr.bf16.mxu0 %v1105
    %2030 = vmatmul.mubr.bf16.gmra.mrb[0].mxu0 %v1104
    %v2031 = vpop.f32.mrb[0].mxu0
    %v2032 = vadd.f32 %v1991, %v2031
    %v2033 = vpop.f32.mrb[0].mxu0
    %v2034 = vadd.f32 %v1993, %v2033
    %v2035 = vpop.f32.mrb[0].mxu0
    %v2036 = vpop.f32.mrb[0].mxu0
    %2037 = vdwg.mxu0
    %v2038 = vadd.f32 %v833, %v1950
    %v2039 = vadd.f32 %v835, %v1952
    %v2040 = vadd.f32 %v906, %v2032
    %v2041 = vadd.f32 %v908, %v2034
    %v2042 = vtanh.pop %v2038
    %v2043 = vtanh.pop %v2039
    %v2044 = vtanh.pop %v2040
    %v2045 = vtanh.pop %v2041
    %v2046 = vld [vmem:[#allocation2 + $0x60] sm:$0xff]
    %v2047 = vld [vmem:[#allocation2 + $0x68] sm:$0xff]
    %v2048 = vld [vmem:[#allocation2 + $0x70] sm:$0xff]
    %v2049 = vld [vmem:[#allocation2 + $0x78] sm:$0xff]
    %v2050 = vld [vmem:[#allocation2 + $0xe0] sm:$0xff]
    %v2051 = vld [vmem:[#allocation2 + $0xe8] sm:$0xff]
    %v2052 = vld [vmem:[#allocation2 + $0xf0] sm:$0xff]
    %v2053 = vld [vmem:[#allocation2 + $0xf8] sm:$0xff]
    %v2054 = vld [vmem:[#allocation2 + $0x160] sm:$0xff]
    %v2055 = vld [vmem:[#allocation2 + $0x168] sm:$0xff]
    %v2056 = vld [vmem:[#allocation2 + $0x170] sm:$0xff]
    %v2057 = vld [vmem:[#allocation2 + $0x178] sm:$0xff]
    %v2058 = vld [vmem:[#allocation2 + $0x1e0] sm:$0xff]
    %v2059 = vld [vmem:[#allocation2 + $0x1e8] sm:$0xff]
    %v2060 = vld [vmem:[#allocation2 + $0x1f0] sm:$0xff]
    %v2061 = vld [vmem:[#allocation2 + $0x1f8] sm:$0xff]
    %v2062 = vld [vmem:[#allocation2 + $0x260] sm:$0xff]
    %v2063 = vld [vmem:[#allocation2 + $0x268] sm:$0xff]
    %v2064 = vld [vmem:[#allocation2 + $0x270] sm:$0xff]
    %v2065 = vld [vmem:[#allocation2 + $0x278] sm:$0xff]
    %v2066 = vld [vmem:[#allocation2 + $0x2e0] sm:$0xff]
    %v2067 = vld [vmem:[#allocation2 + $0x2e8] sm:$0xff]
    %v2068 = vld [vmem:[#allocation2 + $0x2f0] sm:$0xff]
    %v2069 = vld [vmem:[#allocation2 + $0x2f8] sm:$0xff]
    %v2070 = vld [vmem:[#allocation2 + $0x360] sm:$0xff]
    %v2071 = vld [vmem:[#allocation2 + $0x368] sm:$0xff]
    %v2072 = vld [vmem:[#allocation2 + $0x370] sm:$0xff]
    %v2073 = vld [vmem:[#allocation2 + $0x378] sm:$0xff]
    %v2074 = vld [vmem:[#allocation2 + $0x3e0] sm:$0xff]
    %v2075 = vld [vmem:[#allocation2 + $0x3e8] sm:$0xff]
    %v2076 = vld [vmem:[#allocation2 + $0x3f0] sm:$0xff]
    %v2077 = vld [vmem:[#allocation2 + $0x3f8] sm:$0xff]
    %v2078 = vld [vmem:[#allocation2 + $0x460] sm:$0xff]
    %v2079 = vld [vmem:[#allocation2 + $0x468] sm:$0xff]
    %v2080 = vld [vmem:[#allocation2 + $0x470] sm:$0xff]
    %v2081 = vld [vmem:[#allocation2 + $0x478] sm:$0xff]
    %v2082 = vld [vmem:[#allocation2 + $0x4e0] sm:$0xff]
    %v2083 = vld [vmem:[#allocation2 + $0x4e8] sm:$0xff]
    %v2084 = vld [vmem:[#allocation2 + $0x4f0] sm:$0xff]
    %v2085 = vld [vmem:[#allocation2 + $0x4f8] sm:$0xff]
    %v2086 = vld [vmem:[#allocation2 + $0x560] sm:$0xff]
    %v2087 = vld [vmem:[#allocation2 + $0x568] sm:$0xff]
    %v2088 = vld [vmem:[#allocation2 + $0x570] sm:$0xff]
    %v2089 = vld [vmem:[#allocation2 + $0x578] sm:$0xff]
    %v2090 = vld [vmem:[#allocation2 + $0x5e0] sm:$0xff]
    %v2091 = vld [vmem:[#allocation2 + $0x5e8] sm:$0xff]
    %v2092 = vld [vmem:[#allocation2 + $0x5f0] sm:$0xff]
    %v2093 = vld [vmem:[#allocation2 + $0x5f8] sm:$0xff]
    %v2094 = vld [vmem:[#allocation2 + $0x660] sm:$0xff]
    %v2095 = vld [vmem:[#allocation2 + $0x668] sm:$0xff]
    %v2096 = vld [vmem:[#allocation2 + $0x670] sm:$0xff]
    %v2097 = vld [vmem:[#allocation2 + $0x678] sm:$0xff]
    %v2098 = vld [vmem:[#allocation2 + $0x6e0] sm:$0xff]
    %v2099 = vld [vmem:[#allocation2 + $0x6e8] sm:$0xff]
    %v2100 = vld [vmem:[#allocation2 + $0x6f0] sm:$0xff]
    %v2101 = vld [vmem:[#allocation2 + $0x6f8] sm:$0xff]
    %v2102 = vld [vmem:[#allocation2 + $0x760] sm:$0xff]
    %v2103 = vld [vmem:[#allocation2 + $0x768] sm:$0xff]
    %v2104 = vld [vmem:[#allocation2 + $0x770] sm:$0xff]
    %v2105 = vld [vmem:[#allocation2 + $0x778] sm:$0xff]
    %v2106 = vld [vmem:[#allocation2 + $0x7e0] sm:$0xff]
    %v2107 = vld [vmem:[#allocation2 + $0x7e8] sm:$0xff]
    %v2108 = vld [vmem:[#allocation2 + $0x7f0] sm:$0xff]
    %v2109 = vld [vmem:[#allocation2 + $0x7f8] sm:$0xff]
    %v2110 = vld [vmem:[#allocation2 + $0x860] sm:$0xff]
    %v2111 = vld [vmem:[#allocation2 + $0x868] sm:$0xff]
    %v2112 = vld [vmem:[#allocation2 + $0x870] sm:$0xff]
    %v2113 = vld [vmem:[#allocation2 + $0x878] sm:$0xff]
    %v2114 = vld [vmem:[#allocation2 + $0x8e0] sm:$0xff]
    %v2115 = vld [vmem:[#allocation2 + $0x8e8] sm:$0xff]
    %v2116 = vld [vmem:[#allocation2 + $0x8f0] sm:$0xff]
    %v2117 = vld [vmem:[#allocation2 + $0x8f8] sm:$0xff]
    %v2118 = vld [vmem:[#allocation2 + $0x960] sm:$0xff]
    %v2119 = vld [vmem:[#allocation2 + $0x968] sm:$0xff]
    %v2120 = vld [vmem:[#allocation2 + $0x970] sm:$0xff]
    %v2121 = vld [vmem:[#allocation2 + $0x978] sm:$0xff]
    %v2122 = vld [vmem:[#allocation2 + $0x9e0] sm:$0xff]
    %v2123 = vld [vmem:[#allocation2 + $0x9e8] sm:$0xff]
    %v2124 = vld [vmem:[#allocation2 + $0x9f0] sm:$0xff]
    %v2125 = vld [vmem:[#allocation2 + $0x9f8] sm:$0xff]
    %v2126 = vld [vmem:[#allocation2 + $0xa60] sm:$0xff]
    %v2127 = vld [vmem:[#allocation2 + $0xa68] sm:$0xff]
    %v2128 = vld [vmem:[#allocation2 + $0xa70] sm:$0xff]
    %v2129 = vld [vmem:[#allocation2 + $0xa78] sm:$0xff]
    %v2130 = vld [vmem:[#allocation2 + $0xae0] sm:$0xff]
    %v2131 = vld [vmem:[#allocation2 + $0xae8] sm:$0xff]
    %v2132 = vld [vmem:[#allocation2 + $0xaf0] sm:$0xff]
    %v2133 = vld [vmem:[#allocation2 + $0xaf8] sm:$0xff]
    %v2134 = vld [vmem:[#allocation2 + $0xb60] sm:$0xff]
    %v2135 = vld [vmem:[#allocation2 + $0xb68] sm:$0xff]
    %v2136 = vld [vmem:[#allocation2 + $0xb70] sm:$0xff]
    %v2137 = vld [vmem:[#allocation2 + $0xb78] sm:$0xff]
    %v2138 = vld [vmem:[#allocation2 + $0xbe0] sm:$0xff]
    %v2139 = vld [vmem:[#allocation2 + $0xbe8] sm:$0xff]
    %v2140 = vld [vmem:[#allocation2 + $0xbf0] sm:$0xff]
    %v2141 = vld [vmem:[#allocation2 + $0xbf8] sm:$0xff]
    %v2142 = vld [vmem:[#allocation2 + $0xc60] sm:$0xff]
    %v2143 = vld [vmem:[#allocation2 + $0xc68] sm:$0xff]
    %v2144 = vld [vmem:[#allocation2 + $0xc70] sm:$0xff]
    %v2145 = vld [vmem:[#allocation2 + $0xc78] sm:$0xff]
    %v2146 = vld [vmem:[#allocation2 + $0xce0] sm:$0xff]
    %v2147 = vld [vmem:[#allocation2 + $0xce8] sm:$0xff]
    %v2148 = vld [vmem:[#allocation2 + $0xcf0] sm:$0xff]
    %v2149 = vld [vmem:[#allocation2 + $0xcf8] sm:$0xff]
    %v2150 = vld [vmem:[#allocation2 + $0xd60] sm:$0xff]
    %v2151 = vld [vmem:[#allocation2 + $0xd68] sm:$0xff]
    %v2152 = vld [vmem:[#allocation2 + $0xd70] sm:$0xff]
    %v2153 = vld [vmem:[#allocation2 + $0xd78] sm:$0xff]
    %v2154 = vld [vmem:[#allocation2 + $0xde0] sm:$0xff]
    %v2155 = vld [vmem:[#allocation2 + $0xde8] sm:$0xff]
    %v2156 = vld [vmem:[#allocation2 + $0xdf0] sm:$0xff]
    %v2157 = vld [vmem:[#allocation2 + $0xdf8] sm:$0xff]
    %v2158 = vld [vmem:[#allocation2 + $0xe60] sm:$0xff]
    %v2159 = vld [vmem:[#allocation2 + $0xe68] sm:$0xff]
    %v2160 = vld [vmem:[#allocation2 + $0xe70] sm:$0xff]
    %v2161 = vld [vmem:[#allocation2 + $0xe78] sm:$0xff]
    %v2162 = vld [vmem:[#allocation2 + $0xee0] sm:$0xff]
    %v2163 = vld [vmem:[#allocation2 + $0xee8] sm:$0xff]
    %v2164 = vld [vmem:[#allocation2 + $0xef0] sm:$0xff]
    %v2165 = vld [vmem:[#allocation2 + $0xef8] sm:$0xff]
    %v2166 = vld [vmem:[#allocation2 + $0xf60] sm:$0xff]
    %v2167 = vld [vmem:[#allocation2 + $0xf68] sm:$0xff]
    %v2168 = vld [vmem:[#allocation2 + $0xf70] sm:$0xff]
    %v2169 = vld [vmem:[#allocation2 + $0xf78] sm:$0xff]
    %v2170 = vld [vmem:[#allocation2 + $0xfe0] sm:$0xff]
    %v2171 = vld [vmem:[#allocation2 + $0xfe8] sm:$0xff]
    %v2172 = vld [vmem:[#allocation2 + $0xff0] sm:$0xff]
    %v2173 = vld [vmem:[#allocation2 + $0xff8] sm:$0xff]
    %2174 = vmatprep.subr.bf16.mxu0 %v2047
    %2175 = vmatpush1.bf16.msra.mxu0 %v2046
    %2176 = vmatprep.subr.bf16.mxu0 %v2051
    %2177 = vmatpush1.bf16.msra.mxu0 %v2050
    %2178 = vmatprep.subr.bf16.mxu0 %v2055
    %2179 = vmatpush1.bf16.msra.mxu0 %v2054
    %2180 = vmatprep.subr.bf16.mxu0 %v2059
    %2181 = vmatpush1.bf16.msra.mxu0 %v2058
    %2182 = vmatprep.subr.bf16.mxu0 %v2063
    %2183 = vmatpush1.bf16.msra.mxu0 %v2062
    %2184 = vmatprep.subr.bf16.mxu0 %v2067
    %2185 = vmatpush1.bf16.msra.mxu0 %v2066
    %2186 = vmatprep.subr.bf16.mxu0 %v2071
    %2187 = vmatpush1.bf16.msra.mxu0 %v2070
    %2188 = vmatprep.subr.bf16.mxu0 %v2075
    %2189 = vmatpush1.bf16.msra.mxu0 %v2074
    %2190 = vmatprep.subr.bf16.mxu0 %v2079
    %2191 = vmatpush1.bf16.msra.mxu0 %v2078
    %2192 = vmatprep.subr.bf16.mxu0 %v2083
    %2193 = vmatpush1.bf16.msra.mxu0 %v2082
    %2194 = vmatprep.subr.bf16.mxu0 %v2087
    %2195 = vmatpush1.bf16.msra.mxu0 %v2086
    %2196 = vmatprep.subr.bf16.mxu0 %v2091
    %2197 = vmatpush1.bf16.msra.mxu0 %v2090
    %2198 = vmatprep.subr.bf16.mxu0 %v2095
    %2199 = vmatpush1.bf16.msra.mxu0 %v2094
    %2200 = vmatprep.subr.bf16.mxu0 %v2099
    %2201 = vmatpush1.bf16.msra.mxu0 %v2098
    %2202 = vmatprep.subr.bf16.mxu0 %v2103
    %2203 = vmatpush1.bf16.msra.mxu0 %v2102
    %2204 = vmatprep.subr.bf16.mxu0 %v2107
    %2205 = vmatpush1.bf16.msra.mxu0 %v2106
    %2206 = vmatprep.mubr.bf16.mxu0 %v1103
    %2207 = vmatmul.mubr.bf16.gmra.mrb[0].mxu0 %v1102
    %v2208 = vpop.f32.mrb[0].mxu0
    %v2209 = vadd.f32 0.0, %v2208
    %v2210 = vpop.f32.mrb[0].mxu0
    %v2211 = vadd.f32 0.0, %v2210
    %v2212 = vpop.f32.mrb[0].mxu0
    %v2213 = vpop.f32.mrb[0].mxu0
    %2214 = vdwg.mxu0
    %2215 = vmatprep.subr.bf16.mxu0 %v2111
    %2216 = vmatpush1.bf16.msra.mxu0 %v2110
    %2217 = vmatprep.subr.bf16.mxu0 %v2115
    %2218 = vmatpush1.bf16.msra.mxu0 %v2114
    %2219 = vmatprep.subr.bf16.mxu0 %v2119
    %2220 = vmatpush1.bf16.msra.mxu0 %v2118
    %2221 = vmatprep.subr.bf16.mxu0 %v2123
    %2222 = vmatpush1.bf16.msra.mxu0 %v2122
    %2223 = vmatprep.subr.bf16.mxu0 %v2127
    %2224 = vmatpush1.bf16.msra.mxu0 %v2126
    %2225 = vmatprep.subr.bf16.mxu0 %v2131
    %2226 = vmatpush1.bf16.msra.mxu0 %v2130
    %2227 = vmatprep.subr.bf16.mxu0 %v2135
    %2228 = vmatpush1.bf16.msra.mxu0 %v2134
    %2229 = vmatprep.subr.bf16.mxu0 %v2139
    %2230 = vmatpush1.bf16.msra.mxu0 %v2138
    %2231 = vmatprep.subr.bf16.mxu0 %v2143
    %2232 = vmatpush1.bf16.msra.mxu0 %v2142
    %2233 = vmatprep.subr.bf16.mxu0 %v2147
    %2234 = vmatpush1.bf16.msra.mxu0 %v2146
    %2235 = vmatprep.subr.bf16.mxu0 %v2151
    %2236 = vmatpush1.bf16.msra.mxu0 %v2150
    %2237 = vmatprep.subr.bf16.mxu0 %v2155
    %2238 = vmatpush1.bf16.msra.mxu0 %v2154
    %2239 = vmatprep.subr.bf16.mxu0 %v2159
    %2240 = vmatpush1.bf16.msra.mxu0 %v2158
    %2241 = vmatprep.subr.bf16.mxu0 %v2163
    %2242 = vmatpush1.bf16.msra.mxu0 %v2162
    %2243 = vmatprep.subr.bf16.mxu0 %v2167
    %2244 = vmatpush1.bf16.msra.mxu0 %v2166
    %2245 = vmatprep.subr.bf16.mxu0 %v2171
    %2246 = vmatpush1.bf16.msra.mxu0 %v2170
    %2247 = vmatprep.mubr.bf16.mxu0 %v1105
    %2248 = vmatmul.mubr.bf16.gmra.mrb[0].mxu0 %v1104
    %v2249 = vpop.f32.mrb[0].mxu0
    %v2250 = vadd.f32 %v2209, %v2249
    %v2251 = vpop.f32.mrb[0].mxu0
    %v2252 = vadd.f32 %v2211, %v2251
    %v2253 = vpop.f32.mrb[0].mxu0
    %v2254 = vpop.f32.mrb[0].mxu0
    %2255 = vdwg.mxu0
    %2256 = vmatprep.subr.bf16.mxu0 %v2049
    %2257 = vmatpush1.bf16.msra.mxu0 %v2048
    %2258 = vmatprep.subr.bf16.mxu0 %v2053
    %2259 = vmatpush1.bf16.msra.mxu0 %v2052
    %2260 = vmatprep.subr.bf16.mxu0 %v2057
    %2261 = vmatpush1.bf16.msra.mxu0 %v2056
    %2262 = vmatprep.subr.bf16.mxu0 %v2061
    %2263 = vmatpush1.bf16.msra.mxu0 %v2060
    %2264 = vmatprep.subr.bf16.mxu0 %v2065
    %2265 = vmatpush1.bf16.msra.mxu0 %v2064
    %2266 = vmatprep.subr.bf16.mxu0 %v2069
    %2267 = vmatpush1.bf16.msra.mxu0 %v2068
    %2268 = vmatprep.subr.bf16.mxu0 %v2073
    %2269 = vmatpush1.bf16.msra.mxu0 %v2072
    %2270 = vmatprep.subr.bf16.mxu0 %v2077
    %2271 = vmatpush1.bf16.msra.mxu0 %v2076
    %2272 = vmatprep.subr.bf16.mxu0 %v2081
    %2273 = vmatpush1.bf16.msra.mxu0 %v2080
    %2274 = vmatprep.subr.bf16.mxu0 %v2085
    %2275 = vmatpush1.bf16.msra.mxu0 %v2084
    %2276 = vmatprep.subr.bf16.mxu0 %v2089
    %2277 = vmatpush1.bf16.msra.mxu0 %v2088
    %2278 = vmatprep.subr.bf16.mxu0 %v2093
    %2279 = vmatpush1.bf16.msra.mxu0 %v2092
    %2280 = vmatprep.subr.bf16.mxu0 %v2097
    %2281 = vmatpush1.bf16.msra.mxu0 %v2096
    %2282 = vmatprep.subr.bf16.mxu0 %v2101
    %2283 = vmatpush1.bf16.msra.mxu0 %v2100
    %2284 = vmatprep.subr.bf16.mxu0 %v2105
    %2285 = vmatpush1.bf16.msra.mxu0 %v2104
    %2286 = vmatprep.subr.bf16.mxu0 %v2109
    %2287 = vmatpush1.bf16.msra.mxu0 %v2108
    %2288 = vmatprep.mubr.bf16.mxu0 %v1103
    %2289 = vmatmul.mubr.bf16.gmra.mrb[0].mxu0 %v1102
    %v2290 = vpop.f32.mrb[0].mxu0
    %v2291 = vadd.f32 0.0, %v2290
    %v2292 = vpop.f32.mrb[0].mxu0
    %v2293 = vadd.f32 0.0, %v2292
    %v2294 = vpop.f32.mrb[0].mxu0
    %v2295 = vpop.f32.mrb[0].mxu0
    %2296 = vdwg.mxu0
    %2297 = vmatprep.subr.bf16.mxu0 %v2113
    %2298 = vmatpush1.bf16.msra.mxu0 %v2112
    %2299 = vmatprep.subr.bf16.mxu0 %v2117
    %2300 = vmatpush1.bf16.msra.mxu0 %v2116
    %2301 = vmatprep.subr.bf16.mxu0 %v2121
    %2302 = vmatpush1.bf16.msra.mxu0 %v2120
    %2303 = vmatprep.subr.bf16.mxu0 %v2125
    %2304 = vmatpush1.bf16.msra.mxu0 %v2124
    %2305 = vmatprep.subr.bf16.mxu0 %v2129
    %2306 = vmatpush1.bf16.msra.mxu0 %v2128
    %2307 = vmatprep.subr.bf16.mxu0 %v2133
    %2308 = vmatpush1.bf16.msra.mxu0 %v2132
    %2309 = vmatprep.subr.bf16.mxu0 %v2137
    %2310 = vmatpush1.bf16.msra.mxu0 %v2136
    %2311 = vmatprep.subr.bf16.mxu0 %v2141
    %2312 = vmatpush1.bf16.msra.mxu0 %v2140
    %2313 = vmatprep.subr.bf16.mxu0 %v2145
    %2314 = vmatpush1.bf16.msra.mxu0 %v2144
    %2315 = vmatprep.subr.bf16.mxu0 %v2149
    %2316 = vmatpush1.bf16.msra.mxu0 %v2148
    %2317 = vmatprep.subr.bf16.mxu0 %v2153
    %2318 = vmatpush1.bf16.msra.mxu0 %v2152
    %2319 = vmatprep.subr.bf16.mxu0 %v2157
    %2320 = vmatpush1.bf16.msra.mxu0 %v2156
    %2321 = vmatprep.subr.bf16.mxu0 %v2161
    %2322 = vmatpush1.bf16.msra.mxu0 %v2160
    %2323 = vmatprep.subr.bf16.mxu0 %v2165
    %2324 = vmatpush1.bf16.msra.mxu0 %v2164
    %2325 = vmatprep.subr.bf16.mxu0 %v2169
    %2326 = vmatpush1.bf16.msra.mxu0 %v2168
    %2327 = vmatprep.subr.bf16.mxu0 %v2173
    %2328 = vmatpush1.bf16.msra.mxu0 %v2172
    %2329 = vmatprep.mubr.bf16.mxu0 %v1105
    %2330 = vmatmul.mubr.bf16.gmra.mrb[0].mxu0 %v1104
    %v2331 = vpop.f32.mrb[0].mxu0
    %v2332 = vadd.f32 %v2291, %v2331
    %v2333 = vpop.f32.mrb[0].mxu0
    %v2334 = vadd.f32 %v2293, %v2333
    %v2335 = vpop.f32.mrb[0].mxu0
    %v2336 = vpop.f32.mrb[0].mxu0
    %2337 = vdwg.mxu0
    %v2338 = vadd.f32 %v979, %v2250
    %v2339 = vadd.f32 %v981, %v2252
    %v2340 = vadd.f32 %v1052, %v2332
    %v2341 = vadd.f32 %v1054, %v2334
    %v2342 = vxor.u32 %v2338, 2147483648
    %v2343 = vxor.u32 %v2339, 2147483648
    %v2344 = vxor.u32 %v2340, 2147483648
    %v2345 = vxor.u32 %v2341, 2147483648
    %v2346 = vmul.f32 %v2342, 1.442695
    %v2347 = vpow.pop %v2346
    %v2348 = vmul.f32 %v2343, 1.442695
    %v2349 = vpow.pop %v2348
    %v2350 = vmul.f32 %v2344, 1.442695
    %v2351 = vpow.pop %v2350
    %v2352 = vmul.f32 %v2345, 1.442695
    %v2353 = vpow.pop %v2352
    %v2354 = vadd.f32 %v2347, 1.0
    %v2355 = vadd.f32 %v2349, 1.0
    %v2356 = vadd.f32 %v2351, 1.0
    %v2357 = vadd.f32 %v2353, 1.0
    %v2358 = vrcp.pop %v2354
    %v2359 = vmul.f32 1.0, %v2358
    %v2360 = vrcp.pop %v2355
    %v2361 = vmul.f32 1.0, %v2360
    %v2362 = vrcp.pop %v2356
    %v2363 = vmul.f32 1.0, %v2362
    %v2364 = vrcp.pop %v2357
    %v2365 = vmul.f32 1.0, %v2364
    %v2366 = vmul.f32 %v1739, %v1094
    %v2367 = vmul.f32 %v1741, %v1095
    %v2368 = vmul.f32 %v1743, %v1096
    %v2369 = vmul.f32 %v1745, %v1097
    %v2370 = vmul.f32 %v1419, %v2042
    %v2371 = vmul.f32 %v1421, %v2043
    %v2372 = vmul.f32 %v1423, %v2044
    %v2373 = vmul.f32 %v1425, %v2045
    %v2374 = vadd.f32 %v2366, %v2370
    %v2375 = vadd.f32 %v2367, %v2371
    %v2376 = vadd.f32 %v2368, %v2372
    %v2377 = vadd.f32 %v2369, %v2373
    %v2378 = vtanh.pop %v2374
    %v2379 = vtanh.pop %v2375
    %v2380 = vtanh.pop %v2376
    %v2381 = vtanh.pop %v2377
    %v2382 = vmul.f32 %v2359, %v2378
    %v2383 = vmul.f32 %v2361, %v2379
    %v2384 = vmul.f32 %v2363, %v2380
    %v2385 = vmul.f32 %v2365, %v2381
    %v2386 = vpack.c.bf16 %v2382, %v2382
    %v2387 = vpack.c.bf16 %v2383, %v2383
    %v2388 = vpack.c.bf16 %v2384, %v2384
    %v2389 = vpack.c.bf16 %v2385, %v2385
    %2390 = vmatprep.subr.bf16.mxu0 %v1107
    %2391 = vmatpush1.bf16.msra.mxu0 %v1106
    %2392 = vmatprep.subr.bf16.mxu0 %v1111
    %2393 = vmatpush1.bf16.msra.mxu0 %v1110
    %2394 = vmatprep.subr.bf16.mxu0 %v1115
    %2395 = vmatpush1.bf16.msra.mxu0 %v1114
    %2396 = vmatprep.subr.bf16.mxu0 %v1119
    %2397 = vmatpush1.bf16.msra.mxu0 %v1118
    %2398 = vmatprep.subr.bf16.mxu0 %v1123
    %2399 = vmatpush1.bf16.msra.mxu0 %v1122
    %2400 = vmatprep.subr.bf16.mxu0 %v1127
    %2401 = vmatpush1.bf16.msra.mxu0 %v1126
    %2402 = vmatprep.subr.bf16.mxu0 %v1131
    %2403 = vmatpush1.bf16.msra.mxu0 %v1130
    %2404 = vmatprep.subr.bf16.mxu0 %v1135
    %2405 = vmatpush1.bf16.msra.mxu0 %v1134
    %2406 = vmatprep.subr.bf16.mxu0 %v1139
    %2407 = vmatpush1.bf16.msra.mxu0 %v1138
    %2408 = vmatprep.subr.bf16.mxu0 %v1143
    %2409 = vmatpush1.bf16.msra.mxu0 %v1142
    %2410 = vmatprep.subr.bf16.mxu0 %v1147
    %2411 = vmatpush1.bf16.msra.mxu0 %v1146
    %2412 = vmatprep.subr.bf16.mxu0 %v1151
    %2413 = vmatpush1.bf16.msra.mxu0 %v1150
    %2414 = vmatprep.subr.bf16.mxu0 %v1155
    %2415 = vmatpush1.bf16.msra.mxu0 %v1154
    %2416 = vmatprep.subr.bf16.mxu0 %v1159
    %2417 = vmatpush1.bf16.msra.mxu0 %v1158
    %2418 = vmatprep.subr.bf16.mxu0 %v1163
    %2419 = vmatpush1.bf16.msra.mxu0 %v1162
    %2420 = vmatprep.subr.bf16.mxu0 %v1167
    %2421 = vmatpush1.bf16.msra.mxu0 %v1166
    %2422 = vmatprep.mubr.bf16.mxu0 %v2387
    %2423 = vmatmul.mubr.bf16.gmra.mrb[0].mxu0 %v2386
    %v2424 = vpop.f32.mrb[0].mxu0
    %v2425 = vadd.f32 0.0, %v2424
    %v2426 = vpop.f32.mrb[0].mxu0
    %v2427 = vadd.f32 0.0, %v2426
    %v2428 = vpop.f32.mrb[0].mxu0
    %v2429 = vpop.f32.mrb[0].mxu0
    %2430 = vdwg.mxu0
    %2431 = vmatprep.subr.bf16.mxu0 %v1171
    %2432 = vmatpush1.bf16.msra.mxu0 %v1170
    %2433 = vmatprep.subr.bf16.mxu0 %v1175
    %2434 = vmatpush1.bf16.msra.mxu0 %v1174
    %2435 = vmatprep.subr.bf16.mxu0 %v1179
    %2436 = vmatpush1.bf16.msra.mxu0 %v1178
    %2437 = vmatprep.subr.bf16.mxu0 %v1183
    %2438 = vmatpush1.bf16.msra.mxu0 %v1182
    %2439 = vmatprep.subr.bf16.mxu0 %v1187
    %2440 = vmatpush1.bf16.msra.mxu0 %v1186
    %2441 = vmatprep.subr.bf16.mxu0 %v1191
    %2442 = vmatpush1.bf16.msra.mxu0 %v1190
    %2443 = vmatprep.subr.bf16.mxu0 %v1195
    %2444 = vmatpush1.bf16.msra.mxu0 %v1194
    %2445 = vmatprep.subr.bf16.mxu0 %v1199
    %2446 = vmatpush1.bf16.msra.mxu0 %v1198
    %2447 = vmatprep.subr.bf16.mxu0 %v1203
    %2448 = vmatpush1.bf16.msra.mxu0 %v1202
    %2449 = vmatprep.subr.bf16.mxu0 %v1207
    %2450 = vmatpush1.bf16.msra.mxu0 %v1206
    %2451 = vmatprep.subr.bf16.mxu0 %v1211
    %2452 = vmatpush1.bf16.msra.mxu0 %v1210
    %2453 = vmatprep.subr.bf16.mxu0 %v1215
    %2454 = vmatpush1.bf16.msra.mxu0 %v1214
    %2455 = vmatprep.subr.bf16.mxu0 %v1219
    %2456 = vmatpush1.bf16.msra.mxu0 %v1218
    %2457 = vmatprep.subr.bf16.mxu0 %v1223
    %2458 = vmatpush1.bf16.msra.mxu0 %v1222
    %2459 = vmatprep.subr.bf16.mxu0 %v1227
    %2460 = vmatpush1.bf16.msra.mxu0 %v1226
    %2461 = vmatprep.subr.bf16.mxu0 %v1231
    %2462 = vmatpush1.bf16.msra.mxu0 %v1230
    %2463 = vmatprep.mubr.bf16.mxu0 %v2389
    %2464 = vmatmul.mubr.bf16.gmra.mrb[0].mxu0 %v2388
    %v2465 = vpop.f32.mrb[0].mxu0
    %v2466 = vadd.f32 %v2425, %v2465
    %v2467 = vpop.f32.mrb[0].mxu0
    %v2468 = vadd.f32 %v2427, %v2467
    %v2469 = vpop.f32.mrb[0].mxu0
    %v2470 = vpop.f32.mrb[0].mxu0
    %2471 = vdwg.mxu0
    %2472 = vmatprep.subr.bf16.mxu0 %v1109
    %2473 = vmatpush1.bf16.msra.mxu0 %v1108
    %2474 = vmatprep.subr.bf16.mxu0 %v1113
    %2475 = vmatpush1.bf16.msra.mxu0 %v1112
    %2476 = vmatprep.subr.bf16.mxu0 %v1117
    %2477 = vmatpush1.bf16.msra.mxu0 %v1116
    %2478 = vmatprep.subr.bf16.mxu0 %v1121
    %2479 = vmatpush1.bf16.msra.mxu0 %v1120
    %2480 = vmatprep.subr.bf16.mxu0 %v1125
    %2481 = vmatpush1.bf16.msra.mxu0 %v1124
    %2482 = vmatprep.subr.bf16.mxu0 %v1129
    %2483 = vmatpush1.bf16.msra.mxu0 %v1128
    %2484 = vmatprep.subr.bf16.mxu0 %v1133
    %2485 = vmatpush1.bf16.msra.mxu0 %v1132
    %2486 = vmatprep.subr.bf16.mxu0 %v1137
    %2487 = vmatpush1.bf16.msra.mxu0 %v1136
    %2488 = vmatprep.subr.bf16.mxu0 %v1141
    %2489 = vmatpush1.bf16.msra.mxu0 %v1140
    %2490 = vmatprep.subr.bf16.mxu0 %v1145
    %2491 = vmatpush1.bf16.msra.mxu0 %v1144
    %2492 = vmatprep.subr.bf16.mxu0 %v1149
    %2493 = vmatpush1.bf16.msra.mxu0 %v1148
    %2494 = vmatprep.subr.bf16.mxu0 %v1153
    %2495 = vmatpush1.bf16.msra.mxu0 %v1152
    %2496 = vmatprep.subr.bf16.mxu0 %v1157
    %2497 = vmatpush1.bf16.msra.mxu0 %v1156
    %2498 = vmatprep.subr.bf16.mxu0 %v1161
    %2499 = vmatpush1.bf16.msra.mxu0 %v1160
    %2500 = vmatprep.subr.bf16.mxu0 %v1165
    %2501 = vmatpush1.bf16.msra.mxu0 %v1164
    %2502 = vmatprep.subr.bf16.mxu0 %v1169
    %2503 = vmatpush1.bf16.msra.mxu0 %v1168
    %2504 = vmatprep.mubr.bf16.mxu0 %v2387
    %2505 = vmatmul.mubr.bf16.gmra.mrb[0].mxu0 %v2386
    %v2506 = vpop.f32.mrb[0].mxu0
    %v2507 = vadd.f32 0.0, %v2506
    %v2508 = vpop.f32.mrb[0].mxu0
    %v2509 = vadd.f32 0.0, %v2508
    %v2510 = vpop.f32.mrb[0].mxu0
    %v2511 = vpop.f32.mrb[0].mxu0
    %2512 = vdwg.mxu0
    %2513 = vmatprep.subr.bf16.mxu0 %v1173
    %2514 = vmatpush1.bf16.msra.mxu0 %v1172
    %2515 = vmatprep.subr.bf16.mxu0 %v1177
    %2516 = vmatpush1.bf16.msra.mxu0 %v1176
    %2517 = vmatprep.subr.bf16.mxu0 %v1181
    %2518 = vmatpush1.bf16.msra.mxu0 %v1180
    %2519 = vmatprep.subr.bf16.mxu0 %v1185
    %2520 = vmatpush1.bf16.msra.mxu0 %v1184
    %2521 = vmatprep.subr.bf16.mxu0 %v1189
    %2522 = vmatpush1.bf16.msra.mxu0 %v1188
    %2523 = vmatprep.subr.bf16.mxu0 %v1193
    %2524 = vmatpush1.bf16.msra.mxu0 %v1192
    %2525 = vmatprep.subr.bf16.mxu0 %v1197
    %2526 = vmatpush1.bf16.msra.mxu0 %v1196
    %2527 = vmatprep.subr.bf16.mxu0 %v1201
    %2528 = vmatpush1.bf16.msra.mxu0 %v1200
    %2529 = vmatprep.subr.bf16.mxu0 %v1205
    %2530 = vmatpush1.bf16.msra.mxu0 %v1204
    %2531 = vmatprep.subr.bf16.mxu0 %v1209
    %2532 = vmatpush1.bf16.msra.mxu0 %v1208
    %2533 = vmatprep.subr.bf16.mxu0 %v1213
    %2534 = vmatpush1.bf16.msra.mxu0 %v1212
    %2535 = vmatprep.subr.bf16.mxu0 %v1217
    %2536 = vmatpush1.bf16.msra.mxu0 %v1216
    %2537 = vmatprep.subr.bf16.mxu0 %v1221
    %2538 = vmatpush1.bf16.msra.mxu0 %v1220
    %2539 = vmatprep.subr.bf16.mxu0 %v1225
    %2540 = vmatpush1.bf16.msra.mxu0 %v1224
    %2541 = vmatprep.subr.bf16.mxu0 %v1229
    %2542 = vmatpush1.bf16.msra.mxu0 %v1228
    %2543 = vmatprep.subr.bf16.mxu0 %v1233
    %2544 = vmatpush1.bf16.msra.mxu0 %v1232
    %2545 = vmatprep.mubr.bf16.mxu0 %v2389
    %2546 = vmatmul.mubr.bf16.gmra.mrb[0].mxu0 %v2388
    %v2547 = vpop.f32.mrb[0].mxu0
    %v2548 = vadd.f32 %v2507, %v2547
    %v2549 = vpop.f32.mrb[0].mxu0
    %v2550 = vadd.f32 %v2509, %v2549
    %v2551 = vpop.f32.mrb[0].mxu0
    %v2552 = vpop.f32.mrb[0].mxu0
    %2553 = vdwg.mxu0
    %v2554 = vadd.f32 %v545, %v2466
    %v2555 = vadd.f32 %v547, %v2468
    %v2556 = vadd.f32 %v618, %v2548
    %v2557 = vadd.f32 %v620, %v2550
    %v2558 = vxor.u32 %v2554, 2147483648
    %v2559 = vxor.u32 %v2555, 2147483648
    %v2560 = vxor.u32 %v2556, 2147483648
    %v2561 = vxor.u32 %v2557, 2147483648
    %v2562 = vmul.f32 %v2558, 1.442695
    %v2563 = vpow.pop %v2562
    %v2564 = vmul.f32 %v2559, 1.442695
    %v2565 = vpow.pop %v2564
    %v2566 = vmul.f32 %v2560, 1.442695
    %v2567 = vpow.pop %v2566
    %v2568 = vmul.f32 %v2561, 1.442695
    %v2569 = vpow.pop %v2568
    %v2570 = vadd.f32 %v2563, 1.0
    %v2571 = vadd.f32 %v2565, 1.0
    %v2572 = vadd.f32 %v2567, 1.0
    %v2573 = vadd.f32 %v2569, 1.0
    %v2574 = vrcp.pop %v2570
    %v2575 = vmul.f32 1.0, %v2574
    %v2576 = vrcp.pop %v2571
    %v2577 = vmul.f32 1.0, %v2576
    %v2578 = vrcp.pop %v2572
    %v2579 = vmul.f32 1.0, %v2578
    %v2580 = vrcp.pop %v2573
    %v2581 = vmul.f32 1.0, %v2580
    %2582 = vmatprep.subr.bf16.mxu0 %v1427
    %2583 = vmatpush1.bf16.msra.mxu0 %v1426
    %2584 = vmatprep.subr.bf16.mxu0 %v1431
    %2585 = vmatpush1.bf16.msra.mxu0 %v1430
    %2586 = vmatprep.subr.bf16.mxu0 %v1435
    %2587 = vmatpush1.bf16.msra.mxu0 %v1434
    %2588 = vmatprep.subr.bf16.mxu0 %v1439
    %2589 = vmatpush1.bf16.msra.mxu0 %v1438
    %2590 = vmatprep.subr.bf16.mxu0 %v1443
    %2591 = vmatpush1.bf16.msra.mxu0 %v1442
    %2592 = vmatprep.subr.bf16.mxu0 %v1447
    %2593 = vmatpush1.bf16.msra.mxu0 %v1446
    %2594 = vmatprep.subr.bf16.mxu0 %v1451
    %2595 = vmatpush1.bf16.msra.mxu0 %v1450
    %2596 = vmatprep.subr.bf16.mxu0 %v1455
    %2597 = vmatpush1.bf16.msra.mxu0 %v1454
    %2598 = vmatprep.subr.bf16.mxu0 %v1459
    %2599 = vmatpush1.bf16.msra.mxu0 %v1458
    %2600 = vmatprep.subr.bf16.mxu0 %v1463
    %2601 = vmatpush1.bf16.msra.mxu0 %v1462
    %2602 = vmatprep.subr.bf16.mxu0 %v1467
    %2603 = vmatpush1.bf16.msra.mxu0 %v1466
    %2604 = vmatprep.subr.bf16.mxu0 %v1471
    %2605 = vmatpush1.bf16.msra.mxu0 %v1470
    %2606 = vmatprep.subr.bf16.mxu0 %v1475
    %2607 = vmatpush1.bf16.msra.mxu0 %v1474
    %2608 = vmatprep.subr.bf16.mxu0 %v1479
    %2609 = vmatpush1.bf16.msra.mxu0 %v1478
    %2610 = vmatprep.subr.bf16.mxu0 %v1483
    %2611 = vmatpush1.bf16.msra.mxu0 %v1482
    %2612 = vmatprep.subr.bf16.mxu0 %v1487
    %2613 = vmatpush1.bf16.msra.mxu0 %v1486
    %2614 = vmatprep.mubr.bf16.mxu0 %v2387
    %2615 = vmatmul.mubr.bf16.gmra.mrb[0].mxu0 %v2386
    %v2616 = vpop.f32.mrb[0].mxu0
    %v2617 = vadd.f32 0.0, %v2616
    %v2618 = vpop.f32.mrb[0].mxu0
    %v2619 = vadd.f32 0.0, %v2618
    %v2620 = vpop.f32.mrb[0].mxu0
    %v2621 = vpop.f32.mrb[0].mxu0
    %2622 = vdwg.mxu0
    %2623 = vmatprep.subr.bf16.mxu0 %v1491
    %2624 = vmatpush1.bf16.msra.mxu0 %v1490
    %2625 = vmatprep.subr.bf16.mxu0 %v1495
    %2626 = vmatpush1.bf16.msra.mxu0 %v1494
    %2627 = vmatprep.subr.bf16.mxu0 %v1499
    %2628 = vmatpush1.bf16.msra.mxu0 %v1498
    %2629 = vmatprep.subr.bf16.mxu0 %v1503
    %2630 = vmatpush1.bf16.msra.mxu0 %v1502
    %2631 = vmatprep.subr.bf16.mxu0 %v1507
    %2632 = vmatpush1.bf16.msra.mxu0 %v1506
    %2633 = vmatprep.subr.bf16.mxu0 %v1511
    %2634 = vmatpush1.bf16.msra.mxu0 %v1510
    %2635 = vmatprep.subr.bf16.mxu0 %v1515
    %2636 = vmatpush1.bf16.msra.mxu0 %v1514
    %2637 = vmatprep.subr.bf16.mxu0 %v1519
    %2638 = vmatpush1.bf16.msra.mxu0 %v1518
    %2639 = vmatprep.subr.bf16.mxu0 %v1523
    %2640 = vmatpush1.bf16.msra.mxu0 %v1522
    %2641 = vmatprep.subr.bf16.mxu0 %v1527
    %2642 = vmatpush1.bf16.msra.mxu0 %v1526
    %2643 = vmatprep.subr.bf16.mxu0 %v1531
    %2644 = vmatpush1.bf16.msra.mxu0 %v1530
    %2645 = vmatprep.subr.bf16.mxu0 %v1535
    %2646 = vmatpush1.bf16.msra.mxu0 %v1534
    %2647 = vmatprep.subr.bf16.mxu0 %v1539
    %2648 = vmatpush1.bf16.msra.mxu0 %v1538
    %2649 = vmatprep.subr.bf16.mxu0 %v1543
    %2650 = vmatpush1.bf16.msra.mxu0 %v1542
    %2651 = vmatprep.subr.bf16.mxu0 %v1547
    %2652 = vmatpush1.bf16.msra.mxu0 %v1546
    %2653 = vmatprep.subr.bf16.mxu0 %v1551
    %2654 = vmatpush1.bf16.msra.mxu0 %v1550
    %2655 = vmatprep.mubr.bf16.mxu0 %v2389
    %2656 = vmatmul.mubr.bf16.gmra.mrb[0].mxu0 %v2388
    %v2657 = vpop.f32.mrb[0].mxu0
    %v2658 = vadd.f32 %v2617, %v2657
    %v2659 = vpop.f32.mrb[0].mxu0
    %v2660 = vadd.f32 %v2619, %v2659
    %v2661 = vpop.f32.mrb[0].mxu0
    %v2662 = vpop.f32.mrb[0].mxu0
    %2663 = vdwg.mxu0
    %2664 = vmatprep.subr.bf16.mxu0 %v1429
    %2665 = vmatpush1.bf16.msra.mxu0 %v1428
    %2666 = vmatprep.subr.bf16.mxu0 %v1433
    %2667 = vmatpush1.bf16.msra.mxu0 %v1432
    %2668 = vmatprep.subr.bf16.mxu0 %v1437
    %2669 = vmatpush1.bf16.msra.mxu0 %v1436
    %2670 = vmatprep.subr.bf16.mxu0 %v1441
    %2671 = vmatpush1.bf16.msra.mxu0 %v1440
    %2672 = vmatprep.subr.bf16.mxu0 %v1445
    %2673 = vmatpush1.bf16.msra.mxu0 %v1444
    %2674 = vmatprep.subr.bf16.mxu0 %v1449
    %2675 = vmatpush1.bf16.msra.mxu0 %v1448
    %2676 = vmatprep.subr.bf16.mxu0 %v1453
    %2677 = vmatpush1.bf16.msra.mxu0 %v1452
    %2678 = vmatprep.subr.bf16.mxu0 %v1457
    %2679 = vmatpush1.bf16.msra.mxu0 %v1456
    %2680 = vmatprep.subr.bf16.mxu0 %v1461
    %2681 = vmatpush1.bf16.msra.mxu0 %v1460
    %2682 = vmatprep.subr.bf16.mxu0 %v1465
    %2683 = vmatpush1.bf16.msra.mxu0 %v1464
    %2684 = vmatprep.subr.bf16.mxu0 %v1469
    %2685 = vmatpush1.bf16.msra.mxu0 %v1468
    %2686 = vmatprep.subr.bf16.mxu0 %v1473
    %2687 = vmatpush1.bf16.msra.mxu0 %v1472
    %2688 = vmatprep.subr.bf16.mxu0 %v1477
    %2689 = vmatpush1.bf16.msra.mxu0 %v1476
    %2690 = vmatprep.subr.bf16.mxu0 %v1481
    %2691 = vmatpush1.bf16.msra.mxu0 %v1480
    %2692 = vmatprep.subr.bf16.mxu0 %v1485
    %2693 = vmatpush1.bf16.msra.mxu0 %v1484
    %2694 = vmatprep.subr.bf16.mxu0 %v1489
    %2695 = vmatpush1.bf16.msra.mxu0 %v1488
    %2696 = vmatprep.mubr.bf16.mxu0 %v2387
    %2697 = vmatmul.mubr.bf16.gmra.mrb[0].mxu0 %v2386
    %v2698 = vpop.f32.mrb[0].mxu0
    %v2699 = vadd.f32 0.0, %v2698
    %v2700 = vpop.f32.mrb[0].mxu0
    %v2701 = vadd.f32 0.0, %v2700
    %v2702 = vpop.f32.mrb[0].mxu0
    %v2703 = vpop.f32.mrb[0].mxu0
    %2704 = vdwg.mxu0
    %2705 = vmatprep.subr.bf16.mxu0 %v1493
    %2706 = vmatpush1.bf16.msra.mxu0 %v1492
    %2707 = vmatprep.subr.bf16.mxu0 %v1497
    %2708 = vmatpush1.bf16.msra.mxu0 %v1496
    %2709 = vmatprep.subr.bf16.mxu0 %v1501
    %2710 = vmatpush1.bf16.msra.mxu0 %v1500
    %2711 = vmatprep.subr.bf16.mxu0 %v1505
    %2712 = vmatpush1.bf16.msra.mxu0 %v1504
    %2713 = vmatprep.subr.bf16.mxu0 %v1509
    %2714 = vmatpush1.bf16.msra.mxu0 %v1508
    %2715 = vmatprep.subr.bf16.mxu0 %v1513
    %2716 = vmatpush1.bf16.msra.mxu0 %v1512
    %2717 = vmatprep.subr.bf16.mxu0 %v1517
    %2718 = vmatpush1.bf16.msra.mxu0 %v1516
    %2719 = vmatprep.subr.bf16.mxu0 %v1521
    %2720 = vmatpush1.bf16.msra.mxu0 %v1520
    %2721 = vmatprep.subr.bf16.mxu0 %v1525
    %2722 = vmatpush1.bf16.msra.mxu0 %v1524
    %2723 = vmatprep.subr.bf16.mxu0 %v1529
    %2724 = vmatpush1.bf16.msra.mxu0 %v1528
    %2725 = vmatprep.subr.bf16.mxu0 %v1533
    %2726 = vmatpush1.bf16.msra.mxu0 %v1532
    %2727 = vmatprep.subr.bf16.mxu0 %v1537
    %2728 = vmatpush1.bf16.msra.mxu0 %v1536
    %2729 = vmatprep.subr.bf16.mxu0 %v1541
    %2730 = vmatpush1.bf16.msra.mxu0 %v1540
    %2731 = vmatprep.subr.bf16.mxu0 %v1545
    %2732 = vmatpush1.bf16.msra.mxu0 %v1544
    %2733 = vmatprep.subr.bf16.mxu0 %v1549
    %2734 = vmatpush1.bf16.msra.mxu0 %v1548
    %2735 = vmatprep.subr.bf16.mxu0 %v1553
    %2736 = vmatpush1.bf16.msra.mxu0 %v1552
    %2737 = vmatprep.mubr.bf16.mxu0 %v2389
    %2738 = vmatmul.mubr.bf16.gmra.mrb[0].mxu0 %v2388
    %v2739 = vpop.f32.mrb[0].mxu0
    %v2740 = vadd.f32 %v2699, %v2739
    %v2741 = vpop.f32.mrb[0].mxu0
    %v2742 = vadd.f32 %v2701, %v2741
    %v2743 = vpop.f32.mrb[0].mxu0
    %v2744 = vpop.f32.mrb[0].mxu0
    %2745 = vdwg.mxu0
    %v2746 = vadd.f32 %v691, %v2658
    %v2747 = vadd.f32 %v693, %v2660
    %v2748 = vadd.f32 %v764, %v2740
    %v2749 = vadd.f32 %v766, %v2742
    %v2750 = vxor.u32 %v2746, 2147483648
    %v2751 = vxor.u32 %v2747, 2147483648
    %v2752 = vxor.u32 %v2748, 2147483648
    %v2753 = vxor.u32 %v2749, 2147483648
    %v2754 = vmul.f32 %v2750, 1.442695
    %v2755 = vpow.pop %v2754
    %v2756 = vmul.f32 %v2751, 1.442695
    %v2757 = vpow.pop %v2756
    %v2758 = vmul.f32 %v2752, 1.442695
    %v2759 = vpow.pop %v2758
    %v2760 = vmul.f32 %v2753, 1.442695
    %v2761 = vpow.pop %v2760
    %v2762 = vadd.f32 %v2755, 1.0
    %v2763 = vadd.f32 %v2757, 1.0
    %v2764 = vadd.f32 %v2759, 1.0
    %v2765 = vadd.f32 %v2761, 1.0
    %v2766 = vrcp.pop %v2762
    %v2767 = vmul.f32 1.0, %v2766
    %v2768 = vrcp.pop %v2763
    %v2769 = vmul.f32 1.0, %v2768
    %v2770 = vrcp.pop %v2764
    %v2771 = vmul.f32 1.0, %v2770
    %v2772 = vrcp.pop %v2765
    %v2773 = vmul.f32 1.0, %v2772
    %2774 = vmatprep.subr.bf16.mxu0 %v1747
    %2775 = vmatpush1.bf16.msra.mxu0 %v1746
    %2776 = vmatprep.subr.bf16.mxu0 %v1751
    %2777 = vmatpush1.bf16.msra.mxu0 %v1750
    %2778 = vmatprep.subr.bf16.mxu0 %v1755
    %2779 = vmatpush1.bf16.msra.mxu0 %v1754
    %2780 = vmatprep.subr.bf16.mxu0 %v1759
    %2781 = vmatpush1.bf16.msra.mxu0 %v1758
    %2782 = vmatprep.subr.bf16.mxu0 %v1763
    %2783 = vmatpush1.bf16.msra.mxu0 %v1762
    %2784 = vmatprep.subr.bf16.mxu0 %v1767
    %2785 = vmatpush1.bf16.msra.mxu0 %v1766
    %2786 = vmatprep.subr.bf16.mxu0 %v1771
    %2787 = vmatpush1.bf16.msra.mxu0 %v1770
    %2788 = vmatprep.subr.bf16.mxu0 %v1775
    %2789 = vmatpush1.bf16.msra.mxu0 %v1774
    %2790 = vmatprep.subr.bf16.mxu0 %v1779
    %2791 = vmatpush1.bf16.msra.mxu0 %v1778
    %2792 = vmatprep.subr.bf16.mxu0 %v1783
    %2793 = vmatpush1.bf16.msra.mxu0 %v1782
    %2794 = vmatprep.subr.bf16.mxu0 %v1787
    %2795 = vmatpush1.bf16.msra.mxu0 %v1786
    %2796 = vmatprep.subr.bf16.mxu0 %v1791
    %2797 = vmatpush1.bf16.msra.mxu0 %v1790
    %2798 = vmatprep.subr.bf16.mxu0 %v1795
    %2799 = vmatpush1.bf16.msra.mxu0 %v1794
    %2800 = vmatprep.subr.bf16.mxu0 %v1799
    %2801 = vmatpush1.bf16.msra.mxu0 %v1798
    %2802 = vmatprep.subr.bf16.mxu0 %v1803
    %2803 = vmatpush1.bf16.msra.mxu0 %v1802
    %2804 = vmatprep.subr.bf16.mxu0 %v1807
    %2805 = vmatpush1.bf16.msra.mxu0 %v1806
    %2806 = vmatprep.mubr.bf16.mxu0 %v2387
    %2807 = vmatmul.mubr.bf16.gmra.mrb[0].mxu0 %v2386
    %v2808 = vpop.f32.mrb[0].mxu0
    %v2809 = vadd.f32 0.0, %v2808
    %v2810 = vpop.f32.mrb[0].mxu0
    %v2811 = vadd.f32 0.0, %v2810
    %v2812 = vpop.f32.mrb[0].mxu0
    %v2813 = vpop.f32.mrb[0].mxu0
    %2814 = vdwg.mxu0
    %2815 = vmatprep.subr.bf16.mxu0 %v1811
    %2816 = vmatpush1.bf16.msra.mxu0 %v1810
    %2817 = vmatprep.subr.bf16.mxu0 %v1815
    %2818 = vmatpush1.bf16.msra.mxu0 %v1814
    %2819 = vmatprep.subr.bf16.mxu0 %v1819
    %2820 = vmatpush1.bf16.msra.mxu0 %v1818
    %2821 = vmatprep.subr.bf16.mxu0 %v1823
    %2822 = vmatpush1.bf16.msra.mxu0 %v1822
    %2823 = vmatprep.subr.bf16.mxu0 %v1827
    %2824 = vmatpush1.bf16.msra.mxu0 %v1826
    %2825 = vmatprep.subr.bf16.mxu0 %v1831
    %2826 = vmatpush1.bf16.msra.mxu0 %v1830
    %2827 = vmatprep.subr.bf16.mxu0 %v1835
    %2828 = vmatpush1.bf16.msra.mxu0 %v1834
    %2829 = vmatprep.subr.bf16.mxu0 %v1839
    %2830 = vmatpush1.bf16.msra.mxu0 %v1838
    %2831 = vmatprep.subr.bf16.mxu0 %v1843
    %2832 = vmatpush1.bf16.msra.mxu0 %v1842
    %2833 = vmatprep.subr.bf16.mxu0 %v1847
    %2834 = vmatpush1.bf16.msra.mxu0 %v1846
    %2835 = vmatprep.subr.bf16.mxu0 %v1851
    %2836 = vmatpush1.bf16.msra.mxu0 %v1850
    %2837 = vmatprep.subr.bf16.mxu0 %v1855
    %2838 = vmatpush1.bf16.msra.mxu0 %v1854
    %2839 = vmatprep.subr.bf16.mxu0 %v1859
    %2840 = vmatpush1.bf16.msra.mxu0 %v1858
    %2841 = vmatprep.subr.bf16.mxu0 %v1863
    %2842 = vmatpush1.bf16.msra.mxu0 %v1862
    %2843 = vmatprep.subr.bf16.mxu0 %v1867
    %2844 = vmatpush1.bf16.msra.mxu0 %v1866
    %2845 = vmatprep.subr.bf16.mxu0 %v1871
    %2846 = vmatpush1.bf16.msra.mxu0 %v1870
    %2847 = vmatprep.mubr.bf16.mxu0 %v2389
    %2848 = vmatmul.mubr.bf16.gmra.mrb[0].mxu0 %v2388
    %v2849 = vpop.f32.mrb[0].mxu0
    %v2850 = vadd.f32 %v2809, %v2849
    %v2851 = vpop.f32.mrb[0].mxu0
    %v2852 = vadd.f32 %v2811, %v2851
    %v2853 = vpop.f32.mrb[0].mxu0
    %v2854 = vpop.f32.mrb[0].mxu0
    %2855 = vdwg.mxu0
    %2856 = vmatprep.subr.bf16.mxu0 %v1749
    %2857 = vmatpush1.bf16.msra.mxu0 %v1748
    %2858 = vmatprep.subr.bf16.mxu0 %v1753
    %2859 = vmatpush1.bf16.msra.mxu0 %v1752
    %2860 = vmatprep.subr.bf16.mxu0 %v1757
    %2861 = vmatpush1.bf16.msra.mxu0 %v1756
    %2862 = vmatprep.subr.bf16.mxu0 %v1761
    %2863 = vmatpush1.bf16.msra.mxu0 %v1760
    %2864 = vmatprep.subr.bf16.mxu0 %v1765
    %2865 = vmatpush1.bf16.msra.mxu0 %v1764
    %2866 = vmatprep.subr.bf16.mxu0 %v1769
    %2867 = vmatpush1.bf16.msra.mxu0 %v1768
    %2868 = vmatprep.subr.bf16.mxu0 %v1773
    %2869 = vmatpush1.bf16.msra.mxu0 %v1772
    %2870 = vmatprep.subr.bf16.mxu0 %v1777
    %2871 = vmatpush1.bf16.msra.mxu0 %v1776
    %2872 = vmatprep.subr.bf16.mxu0 %v1781
    %2873 = vmatpush1.bf16.msra.mxu0 %v1780
    %2874 = vmatprep.subr.bf16.mxu0 %v1785
    %2875 = vmatpush1.bf16.msra.mxu0 %v1784
    %2876 = vmatprep.subr.bf16.mxu0 %v1789
    %2877 = vmatpush1.bf16.msra.mxu0 %v1788
    %2878 = vmatprep.subr.bf16.mxu0 %v1793
    %2879 = vmatpush1.bf16.msra.mxu0 %v1792
    %2880 = vmatprep.subr.bf16.mxu0 %v1797
    %2881 = vmatpush1.bf16.msra.mxu0 %v1796
    %2882 = vmatprep.subr.bf16.mxu0 %v1801
    %2883 = vmatpush1.bf16.msra.mxu0 %v1800
    %2884 = vmatprep.subr.bf16.mxu0 %v1805
    %2885 = vmatpush1.bf16.msra.mxu0 %v1804
    %2886 = vmatprep.subr.bf16.mxu0 %v1809
    %2887 = vmatpush1.bf16.msra.mxu0 %v1808
    %2888 = vmatprep.mubr.bf16.mxu0 %v2387
    %2889 = vmatmul.mubr.bf16.gmra.mrb[0].mxu0 %v2386
    %v2890 = vpop.f32.mrb[0].mxu0
    %v2891 = vadd.f32 0.0, %v2890
    %v2892 = vpop.f32.mrb[0].mxu0
    %v2893 = vadd.f32 0.0, %v2892
    %v2894 = vpop.f32.mrb[0].mxu0
    %v2895 = vpop.f32.mrb[0].mxu0
    %2896 = vdwg.mxu0
    %2897 = vmatprep.subr.bf16.mxu0 %v1813
    %2898 = vmatpush1.bf16.msra.mxu0 %v1812
    %2899 = vmatprep.subr.bf16.mxu0 %v1817
    %2900 = vmatpush1.bf16.msra.mxu0 %v1816
    %2901 = vmatprep.subr.bf16.mxu0 %v1821
    %2902 = vmatpush1.bf16.msra.mxu0 %v1820
    %2903 = vmatprep.subr.bf16.mxu0 %v1825
    %2904 = vmatpush1.bf16.msra.mxu0 %v1824
    %2905 = vmatprep.subr.bf16.mxu0 %v1829
    %2906 = vmatpush1.bf16.msra.mxu0 %v1828
    %2907 = vmatprep.subr.bf16.mxu0 %v1833
    %2908 = vmatpush1.bf16.msra.mxu0 %v1832
    %2909 = vmatprep.subr.bf16.mxu0 %v1837
    %2910 = vmatpush1.bf16.msra.mxu0 %v1836
    %2911 = vmatprep.subr.bf16.mxu0 %v1841
    %2912 = vmatpush1.bf16.msra.mxu0 %v1840
    %2913 = vmatprep.subr.bf16.mxu0 %v1845
    %2914 = vmatpush1.bf16.msra.mxu0 %v1844
    %2915 = vmatprep.subr.bf16.mxu0 %v1849
    %2916 = vmatpush1.bf16.msra.mxu0 %v1848
    %2917 = vmatprep.subr.bf16.mxu0 %v1853
    %2918 = vmatpush1.bf16.msra.mxu0 %v1852
    %2919 = vmatprep.subr.bf16.mxu0 %v1857
    %2920 = vmatpush1.bf16.msra.mxu0 %v1856
    %2921 = vmatprep.subr.bf16.mxu0 %v1861
    %2922 = vmatpush1.bf16.msra.mxu0 %v1860
    %2923 = vmatprep.subr.bf16.mxu0 %v1865
    %2924 = vmatpush1.bf16.msra.mxu0 %v1864
    %2925 = vmatprep.subr.bf16.mxu0 %v1869
    %2926 = vmatpush1.bf16.msra.mxu0 %v1868
    %2927 = vmatprep.subr.bf16.mxu0 %v1873
    %2928 = vmatpush1.bf16.msra.mxu0 %v1872
    %2929 = vmatprep.mubr.bf16.mxu0 %v2389
    %2930 = vmatmul.mubr.bf16.gmra.mrb[0].mxu0 %v2388
    %v2931 = vpop.f32.mrb[0].mxu0
    %v2932 = vadd.f32 %v2891, %v2931
    %v2933 = vpop.f32.mrb[0].mxu0
    %v2934 = vadd.f32 %v2893, %v2933
    %v2935 = vpop.f32.mrb[0].mxu0
    %v2936 = vpop.f32.mrb[0].mxu0
    %2937 = vdwg.mxu0
    %v2938 = vadd.f32 %v837, %v2850
    %v2939 = vadd.f32 %v839, %v2852
    %v2940 = vadd.f32 %v910, %v2932
    %v2941 = vadd.f32 %v912, %v2934
    %v2942 = vtanh.pop %v2938
    %v2943 = vtanh.pop %v2939
    %v2944 = vtanh.pop %v2940
    %v2945 = vtanh.pop %v2941
    %2946 = vmatprep.subr.bf16.mxu0 %v2047
    %2947 = vmatpush1.bf16.msra.mxu0 %v2046
    %2948 = vmatprep.subr.bf16.mxu0 %v2051
    %2949 = vmatpush1.bf16.msra.mxu0 %v2050
    %2950 = vmatprep.subr.bf16.mxu0 %v2055
    %2951 = vmatpush1.bf16.msra.mxu0 %v2054
    %2952 = vmatprep.subr.bf16.mxu0 %v2059
    %2953 = vmatpush1.bf16.msra.mxu0 %v2058
    %2954 = vmatprep.subr.bf16.mxu0 %v2063
    %2955 = vmatpush1.bf16.msra.mxu0 %v2062
    %2956 = vmatprep.subr.bf16.mxu0 %v2067
    %2957 = vmatpush1.bf16.msra.mxu0 %v2066
    %2958 = vmatprep.subr.bf16.mxu0 %v2071
    %2959 = vmatpush1.bf16.msra.mxu0 %v2070
    %2960 = vmatprep.subr.bf16.mxu0 %v2075
    %2961 = vmatpush1.bf16.msra.mxu0 %v2074
    %2962 = vmatprep.subr.bf16.mxu0 %v2079
    %2963 = vmatpush1.bf16.msra.mxu0 %v2078
    %2964 = vmatprep.subr.bf16.mxu0 %v2083
    %2965 = vmatpush1.bf16.msra.mxu0 %v2082
    %2966 = vmatprep.subr.bf16.mxu0 %v2087
    %2967 = vmatpush1.bf16.msra.mxu0 %v2086
    %2968 = vmatprep.subr.bf16.mxu0 %v2091
    %2969 = vmatpush1.bf16.msra.mxu0 %v2090
    %2970 = vmatprep.subr.bf16.mxu0 %v2095
    %2971 = vmatpush1.bf16.msra.mxu0 %v2094
    %2972 = vmatprep.subr.bf16.mxu0 %v2099
    %2973 = vmatpush1.bf16.msra.mxu0 %v2098
    %2974 = vmatprep.subr.bf16.mxu0 %v2103
    %2975 = vmatpush1.bf16.msra.mxu0 %v2102
    %2976 = vmatprep.subr.bf16.mxu0 %v2107
    %2977 = vmatpush1.bf16.msra.mxu0 %v2106
    %2978 = vmatprep.mubr.bf16.mxu0 %v2387
    %2979 = vmatmul.mubr.bf16.gmra.mrb[0].mxu0 %v2386
    %v2980 = vpop.f32.mrb[0].mxu0
    %v2981 = vadd.f32 0.0, %v2980
    %v2982 = vpop.f32.mrb[0].mxu0
    %v2983 = vadd.f32 0.0, %v2982
    %v2984 = vpop.f32.mrb[0].mxu0
    %v2985 = vpop.f32.mrb[0].mxu0
    %2986 = vdwg.mxu0
    %2987 = vmatprep.subr.bf16.mxu0 %v2111
    %2988 = vmatpush1.bf16.msra.mxu0 %v2110
    %2989 = vmatprep.subr.bf16.mxu0 %v2115
    %2990 = vmatpush1.bf16.msra.mxu0 %v2114
    %2991 = vmatprep.subr.bf16.mxu0 %v2119
    %2992 = vmatpush1.bf16.msra.mxu0 %v2118
    %2993 = vmatprep.subr.bf16.mxu0 %v2123
    %2994 = vmatpush1.bf16.msra.mxu0 %v2122
    %2995 = vmatprep.subr.bf16.mxu0 %v2127
    %2996 = vmatpush1.bf16.msra.mxu0 %v2126
    %2997 = vmatprep.subr.bf16.mxu0 %v2131
    %2998 = vmatpush1.bf16.msra.mxu0 %v2130
    %2999 = vmatprep.subr.bf16.mxu0 %v2135
    %3000 = vmatpush1.bf16.msra.mxu0 %v2134
    %3001 = vmatprep.subr.bf16.mxu0 %v2139
    %3002 = vmatpush1.bf16.msra.mxu0 %v2138
    %3003 = vmatprep.subr.bf16.mxu0 %v2143
    %3004 = vmatpush1.bf16.msra.mxu0 %v2142
    %3005 = vmatprep.subr.bf16.mxu0 %v2147
    %3006 = vmatpush1.bf16.msra.mxu0 %v2146
    %3007 = vmatprep.subr.bf16.mxu0 %v2151
    %3008 = vmatpush1.bf16.msra.mxu0 %v2150
    %3009 = vmatprep.subr.bf16.mxu0 %v2155
    %3010 = vmatpush1.bf16.msra.mxu0 %v2154
    %3011 = vmatprep.subr.bf16.mxu0 %v2159
    %3012 = vmatpush1.bf16.msra.mxu0 %v2158
    %3013 = vmatprep.subr.bf16.mxu0 %v2163
    %3014 = vmatpush1.bf16.msra.mxu0 %v2162
    %3015 = vmatprep.subr.bf16.mxu0 %v2167
    %3016 = vmatpush1.bf16.msra.mxu0 %v2166
    %3017 = vmatprep.subr.bf16.mxu0 %v2171
    %3018 = vmatpush1.bf16.msra.mxu0 %v2170
    %3019 = vmatprep.mubr.bf16.mxu0 %v2389
    %3020 = vmatmul.mubr.bf16.gmra.mrb[0].mxu0 %v2388
    %v3021 = vpop.f32.mrb[0].mxu0
    %v3022 = vadd.f32 %v2981, %v3021
    %v3023 = vpop.f32.mrb[0].mxu0
    %v3024 = vadd.f32 %v2983, %v3023
    %v3025 = vpop.f32.mrb[0].mxu0
    %v3026 = vpop.f32.mrb[0].mxu0
    %3027 = vdwg.mxu0
    %3028 = vmatprep.subr.bf16.mxu0 %v2049
    %3029 = vmatpush1.bf16.msra.mxu0 %v2048
    %3030 = vmatprep.subr.bf16.mxu0 %v2053
    %3031 = vmatpush1.bf16.msra.mxu0 %v2052
    %3032 = vmatprep.subr.bf16.mxu0 %v2057
    %3033 = vmatpush1.bf16.msra.mxu0 %v2056
    %3034 = vmatprep.subr.bf16.mxu0 %v2061
    %3035 = vmatpush1.bf16.msra.mxu0 %v2060
    %3036 = vmatprep.subr.bf16.mxu0 %v2065
    %3037 = vmatpush1.bf16.msra.mxu0 %v2064
    %3038 = vmatprep.subr.bf16.mxu0 %v2069
    %3039 = vmatpush1.bf16.msra.mxu0 %v2068
    %3040 = vmatprep.subr.bf16.mxu0 %v2073
    %3041 = vmatpush1.bf16.msra.mxu0 %v2072
    %3042 = vmatprep.subr.bf16.mxu0 %v2077
    %3043 = vmatpush1.bf16.msra.mxu0 %v2076
    %3044 = vmatprep.subr.bf16.mxu0 %v2081
    %3045 = vmatpush1.bf16.msra.mxu0 %v2080
    %3046 = vmatprep.subr.bf16.mxu0 %v2085
    %3047 = vmatpush1.bf16.msra.mxu0 %v2084
    %3048 = vmatprep.subr.bf16.mxu0 %v2089
    %3049 = vmatpush1.bf16.msra.mxu0 %v2088
    %3050 = vmatprep.subr.bf16.mxu0 %v2093
    %3051 = vmatpush1.bf16.msra.mxu0 %v2092
    %3052 = vmatprep.subr.bf16.mxu0 %v2097
    %3053 = vmatpush1.bf16.msra.mxu0 %v2096
    %3054 = vmatprep.subr.bf16.mxu0 %v2101
    %3055 = vmatpush1.bf16.msra.mxu0 %v2100
    %3056 = vmatprep.subr.bf16.mxu0 %v2105
    %3057 = vmatpush1.bf16.msra.mxu0 %v2104
    %3058 = vmatprep.subr.bf16.mxu0 %v2109
    %3059 = vmatpush1.bf16.msra.mxu0 %v2108
    %3060 = vmatprep.mubr.bf16.mxu0 %v2387
    %3061 = vmatmul.mubr.bf16.gmra.mrb[0].mxu0 %v2386
    %v3062 = vpop.f32.mrb[0].mxu0
    %v3063 = vadd.f32 0.0, %v3062
    %v3064 = vpop.f32.mrb[0].mxu0
    %v3065 = vadd.f32 0.0, %v3064
    %v3066 = vpop.f32.mrb[0].mxu0
    %v3067 = vpop.f32.mrb[0].mxu0
    %3068 = vdwg.mxu0
    %3069 = vmatprep.subr.bf16.mxu0 %v2113
    %3070 = vmatpush1.bf16.msra.mxu0 %v2112
    %3071 = vmatprep.subr.bf16.mxu0 %v2117
    %3072 = vmatpush1.bf16.msra.mxu0 %v2116
    %3073 = vmatprep.subr.bf16.mxu0 %v2121
    %3074 = vmatpush1.bf16.msra.mxu0 %v2120
    %3075 = vmatprep.subr.bf16.mxu0 %v2125
    %3076 = vmatpush1.bf16.msra.mxu0 %v2124
    %3077 = vmatprep.subr.bf16.mxu0 %v2129
    %3078 = vmatpush1.bf16.msra.mxu0 %v2128
    %3079 = vmatprep.subr.bf16.mxu0 %v2133
    %3080 = vmatpush1.bf16.msra.mxu0 %v2132
    %3081 = vmatprep.subr.bf16.mxu0 %v2137
    %3082 = vmatpush1.bf16.msra.mxu0 %v2136
    %3083 = vmatprep.subr.bf16.mxu0 %v2141
    %3084 = vmatpush1.bf16.msra.mxu0 %v2140
    %3085 = vmatprep.subr.bf16.mxu0 %v2145
    %3086 = vmatpush1.bf16.msra.mxu0 %v2144
    %3087 = vmatprep.subr.bf16.mxu0 %v2149
    %3088 = vmatpush1.bf16.msra.mxu0 %v2148
    %3089 = vmatprep.subr.bf16.mxu0 %v2153
    %3090 = vmatpush1.bf16.msra.mxu0 %v2152
    %3091 = vmatprep.subr.bf16.mxu0 %v2157
    %3092 = vmatpush1.bf16.msra.mxu0 %v2156
    %3093 = vmatprep.subr.bf16.mxu0 %v2161
    %3094 = vmatpush1.bf16.msra.mxu0 %v2160
    %3095 = vmatprep.subr.bf16.mxu0 %v2165
    %3096 = vmatpush1.bf16.msra.mxu0 %v2164
    %3097 = vmatprep.subr.bf16.mxu0 %v2169
    %3098 = vmatpush1.bf16.msra.mxu0 %v2168
    %3099 = vmatprep.subr.bf16.mxu0 %v2173
    %3100 = vmatpush1.bf16.msra.mxu0 %v2172
    %3101 = vmatprep.mubr.bf16.mxu0 %v2389
    %3102 = vmatmul.mubr.bf16.gmra.mrb[0].mxu0 %v2388
    %v3103 = vpop.f32.mrb[0].mxu0
    %v3104 = vadd.f32 %v3063, %v3103
    %v3105 = vpop.f32.mrb[0].mxu0
    %v3106 = vadd.f32 %v3065, %v3105
    %v3107 = vpop.f32.mrb[0].mxu0
    %v3108 = vpop.f32.mrb[0].mxu0
    %3109 = vdwg.mxu0
    %v3110 = vadd.f32 %v983, %v3022
    %v3111 = vadd.f32 %v985, %v3024
    %v3112 = vadd.f32 %v1056, %v3104
    %v3113 = vadd.f32 %v1058, %v3106
    %v3114 = vxor.u32 %v3110, 2147483648
    %v3115 = vxor.u32 %v3111, 2147483648
    %v3116 = vxor.u32 %v3112, 2147483648
    %v3117 = vxor.u32 %v3113, 2147483648
    %v3118 = vmul.f32 %v3114, 1.442695
    %v3119 = vpow.pop %v3118
    %v3120 = vmul.f32 %v3115, 1.442695
    %v3121 = vpow.pop %v3120
    %v3122 = vmul.f32 %v3116, 1.442695
    %v3123 = vpow.pop %v3122
    %v3124 = vmul.f32 %v3117, 1.442695
    %v3125 = vpow.pop %v3124
    %v3126 = vadd.f32 %v3119, 1.0
    %v3127 = vadd.f32 %v3121, 1.0
    %v3128 = vadd.f32 %v3123, 1.0
    %v3129 = vadd.f32 %v3125, 1.0
    %v3130 = vrcp.pop %v3126
    %v3131 = vmul.f32 1.0, %v3130
    %v3132 = vrcp.pop %v3127
    %v3133 = vmul.f32 1.0, %v3132
    %v3134 = vrcp.pop %v3128
    %v3135 = vmul.f32 1.0, %v3134
    %v3136 = vrcp.pop %v3129
    %v3137 = vmul.f32 1.0, %v3136
    %v3138 = vmul.f32 %v2767, %v2374
    %v3139 = vmul.f32 %v2769, %v2375
    %v3140 = vmul.f32 %v2771, %v2376
    %v3141 = vmul.f32 %v2773, %v2377
    %v3142 = vmul.f32 %v2575, %v2942
    %v3143 = vmul.f32 %v2577, %v2943
    %v3144 = vmul.f32 %v2579, %v2944
    %v3145 = vmul.f32 %v2581, %v2945
    %v3146 = vadd.f32 %v3138, %v3142
    %v3147 = vadd.f32 %v3139, %v3143
    %v3148 = vadd.f32 %v3140, %v3144
    %v3149 = vadd.f32 %v3141, %v3145
    %v3150 = vtanh.pop %v3146
    %v3151 = vtanh.pop %v3147
    %v3152 = vtanh.pop %v3148
    %v3153 = vtanh.pop %v3149
    %v3154 = vmul.f32 %v3131, %v3150
    %v3155 = vmul.f32 %v3133, %v3151
    %v3156 = vmul.f32 %v3135, %v3152
    %v3157 = vmul.f32 %v3137, %v3153
    %v3158 = vpack.c.bf16 %v3154, %v3154
    %v3159 = vpack.c.bf16 %v3155, %v3155
    %v3160 = vpack.c.bf16 %v3156, %v3156
    %v3161 = vpack.c.bf16 %v3157, %v3157
    %3162 = vmatprep.subr.bf16.mxu0 %v1107
    %3163 = vmatpush1.bf16.msra.mxu0 %v1106
    %3164 = vmatprep.subr.bf16.mxu0 %v1111
    %3165 = vmatpush1.bf16.msra.mxu0 %v1110
    %3166 = vmatprep.subr.bf16.mxu0 %v1115
    %3167 = vmatpush1.bf16.msra.mxu0 %v1114
    %3168 = vmatprep.subr.bf16.mxu0 %v1119
    %3169 = vmatpush1.bf16.msra.mxu0 %v1118
    %3170 = vmatprep.subr.bf16.mxu0 %v1123
    %3171 = vmatpush1.bf16.msra.mxu0 %v1122
    %3172 = vmatprep.subr.bf16.mxu0 %v1127
    %3173 = vmatpush1.bf16.msra.mxu0 %v1126
    %3174 = vmatprep.subr.bf16.mxu0 %v1131
    %3175 = vmatpush1.bf16.msra.mxu0 %v1130
    %3176 = vmatprep.subr.bf16.mxu0 %v1135
    %3177 = vmatpush1.bf16.msra.mxu0 %v1134
    %3178 = vmatprep.subr.bf16.mxu0 %v1139
    %3179 = vmatpush1.bf16.msra.mxu0 %v1138
    %3180 = vmatprep.subr.bf16.mxu0 %v1143
    %3181 = vmatpush1.bf16.msra.mxu0 %v1142
    %3182 = vmatprep.subr.bf16.mxu0 %v1147
    %3183 = vmatpush1.bf16.msra.mxu0 %v1146
    %3184 = vmatprep.subr.bf16.mxu0 %v1151
    %3185 = vmatpush1.bf16.msra.mxu0 %v1150
    %3186 = vmatprep.subr.bf16.mxu0 %v1155
    %3187 = vmatpush1.bf16.msra.mxu0 %v1154
    %3188 = vmatprep.subr.bf16.mxu0 %v1159
    %3189 = vmatpush1.bf16.msra.mxu0 %v1158
    %3190 = vmatprep.subr.bf16.mxu0 %v1163
    %3191 = vmatpush1.bf16.msra.mxu0 %v1162
    %3192 = vmatprep.subr.bf16.mxu0 %v1167
    %3193 = vmatpush1.bf16.msra.mxu0 %v1166
    %3194 = vmatprep.mubr.bf16.mxu0 %v3159
    %3195 = vmatmul.mubr.bf16.gmra.mrb[0].mxu0 %v3158
    %v3196 = vpop.f32.mrb[0].mxu0
    %v3197 = vadd.f32 0.0, %v3196
    %v3198 = vpop.f32.mrb[0].mxu0
    %v3199 = vadd.f32 0.0, %v3198
    %v3200 = vpop.f32.mrb[0].mxu0
    %v3201 = vpop.f32.mrb[0].mxu0
    %3202 = vdwg.mxu0
    %3203 = vmatprep.subr.bf16.mxu0 %v1171
    %3204 = vmatpush1.bf16.msra.mxu0 %v1170
    %3205 = vmatprep.subr.bf16.mxu0 %v1175
    %3206 = vmatpush1.bf16.msra.mxu0 %v1174
    %3207 = vmatprep.subr.bf16.mxu0 %v1179
    %3208 = vmatpush1.bf16.msra.mxu0 %v1178
    %3209 = vmatprep.subr.bf16.mxu0 %v1183
    %3210 = vmatpush1.bf16.msra.mxu0 %v1182
    %3211 = vmatprep.subr.bf16.mxu0 %v1187
    %3212 = vmatpush1.bf16.msra.mxu0 %v1186
    %3213 = vmatprep.subr.bf16.mxu0 %v1191
    %3214 = vmatpush1.bf16.msra.mxu0 %v1190
    %3215 = vmatprep.subr.bf16.mxu0 %v1195
    %3216 = vmatpush1.bf16.msra.mxu0 %v1194
    %3217 = vmatprep.subr.bf16.mxu0 %v1199
    %3218 = vmatpush1.bf16.msra.mxu0 %v1198
    %3219 = vmatprep.subr.bf16.mxu0 %v1203
    %3220 = vmatpush1.bf16.msra.mxu0 %v1202
    %3221 = vmatprep.subr.bf16.mxu0 %v1207
    %3222 = vmatpush1.bf16.msra.mxu0 %v1206
    %3223 = vmatprep.subr.bf16.mxu0 %v1211
    %3224 = vmatpush1.bf16.msra.mxu0 %v1210
    %3225 = vmatprep.subr.bf16.mxu0 %v1215
    %3226 = vmatpush1.bf16.msra.mxu0 %v1214
    %3227 = vmatprep.subr.bf16.mxu0 %v1219
    %3228 = vmatpush1.bf16.msra.mxu0 %v1218
    %3229 = vmatprep.subr.bf16.mxu0 %v1223
    %3230 = vmatpush1.bf16.msra.mxu0 %v1222
    %3231 = vmatprep.subr.bf16.mxu0 %v1227
    %3232 = vmatpush1.bf16.msra.mxu0 %v1226
    %3233 = vmatprep.subr.bf16.mxu0 %v1231
    %3234 = vmatpush1.bf16.msra.mxu0 %v1230
    %3235 = vmatprep.mubr.bf16.mxu0 %v3161
    %3236 = vmatmul.mubr.bf16.gmra.mrb[0].mxu0 %v3160
    %v3237 = vpop.f32.mrb[0].mxu0
    %v3238 = vadd.f32 %v3197, %v3237
    %v3239 = vpop.f32.mrb[0].mxu0
    %v3240 = vadd.f32 %v3199, %v3239
    %v3241 = vpop.f32.mrb[0].mxu0
    %v3242 = vpop.f32.mrb[0].mxu0
    %3243 = vdwg.mxu0
    %3244 = vmatprep.subr.bf16.mxu0 %v1109
    %3245 = vmatpush1.bf16.msra.mxu0 %v1108
    %3246 = vmatprep.subr.bf16.mxu0 %v1113
    %3247 = vmatpush1.bf16.msra.mxu0 %v1112
    %3248 = vmatprep.subr.bf16.mxu0 %v1117
    %3249 = vmatpush1.bf16.msra.mxu0 %v1116
    %3250 = vmatprep.subr.bf16.mxu0 %v1121
    %3251 = vmatpush1.bf16.msra.mxu0 %v1120
    %3252 = vmatprep.subr.bf16.mxu0 %v1125
    %3253 = vmatpush1.bf16.msra.mxu0 %v1124
    %3254 = vmatprep.subr.bf16.mxu0 %v1129
    %3255 = vmatpush1.bf16.msra.mxu0 %v1128
    %3256 = vmatprep.subr.bf16.mxu0 %v1133
    %3257 = vmatpush1.bf16.msra.mxu0 %v1132
    %3258 = vmatprep.subr.bf16.mxu0 %v1137
    %3259 = vmatpush1.bf16.msra.mxu0 %v1136
    %3260 = vmatprep.subr.bf16.mxu0 %v1141
    %3261 = vmatpush1.bf16.msra.mxu0 %v1140
    %3262 = vmatprep.subr.bf16.mxu0 %v1145
    %3263 = vmatpush1.bf16.msra.mxu0 %v1144
    %3264 = vmatprep.subr.bf16.mxu0 %v1149
    %3265 = vmatpush1.bf16.msra.mxu0 %v1148
    %3266 = vmatprep.subr.bf16.mxu0 %v1153
    %3267 = vmatpush1.bf16.msra.mxu0 %v1152
    %3268 = vmatprep.subr.bf16.mxu0 %v1157
    %3269 = vmatpush1.bf16.msra.mxu0 %v1156
    %3270 = vmatprep.subr.bf16.mxu0 %v1161
    %3271 = vmatpush1.bf16.msra.mxu0 %v1160
    %3272 = vmatprep.subr.bf16.mxu0 %v1165
    %3273 = vmatpush1.bf16.msra.mxu0 %v1164
    %3274 = vmatprep.subr.bf16.mxu0 %v1169
    %3275 = vmatpush1.bf16.msra.mxu0 %v1168
    %3276 = vmatprep.mubr.bf16.mxu0 %v3159
    %3277 = vmatmul.mubr.bf16.gmra.mrb[0].mxu0 %v3158
    %v3278 = vpop.f32.mrb[0].mxu0
    %v3279 = vadd.f32 0.0, %v3278
    %v3280 = vpop.f32.mrb[0].mxu0
    %v3281 = vadd.f32 0.0, %v3280
    %v3282 = vpop.f32.mrb[0].mxu0
    %v3283 = vpop.f32.mrb[0].mxu0
    %3284 = vdwg.mxu0
    %3285 = vmatprep.subr.bf16.mxu0 %v1173
    %3286 = vmatpush1.bf16.msra.mxu0 %v1172
    %3287 = vmatprep.subr.bf16.mxu0 %v1177
    %3288 = vmatpush1.bf16.msra.mxu0 %v1176
    %3289 = vmatprep.subr.bf16.mxu0 %v1181
    %3290 = vmatpush1.bf16.msra.mxu0 %v1180
    %3291 = vmatprep.subr.bf16.mxu0 %v1185
    %3292 = vmatpush1.bf16.msra.mxu0 %v1184
    %3293 = vmatprep.subr.bf16.mxu0 %v1189
    %3294 = vmatpush1.bf16.msra.mxu0 %v1188
    %3295 = vmatprep.subr.bf16.mxu0 %v1193
    %3296 = vmatpush1.bf16.msra.mxu0 %v1192
    %3297 = vmatprep.subr.bf16.mxu0 %v1197
    %3298 = vmatpush1.bf16.msra.mxu0 %v1196
    %3299 = vmatprep.subr.bf16.mxu0 %v1201
    %3300 = vmatpush1.bf16.msra.mxu0 %v1200
    %3301 = vmatprep.subr.bf16.mxu0 %v1205
    %3302 = vmatpush1.bf16.msra.mxu0 %v1204
    %3303 = vmatprep.subr.bf16.mxu0 %v1209
    %3304 = vmatpush1.bf16.msra.mxu0 %v1208
    %3305 = vmatprep.subr.bf16.mxu0 %v1213
    %3306 = vmatpush1.bf16.msra.mxu0 %v1212
    %3307 = vmatprep.subr.bf16.mxu0 %v1217
    %3308 = vmatpush1.bf16.msra.mxu0 %v1216
    %3309 = vmatprep.subr.bf16.mxu0 %v1221
    %3310 = vmatpush1.bf16.msra.mxu0 %v1220
    %3311 = vmatprep.subr.bf16.mxu0 %v1225
    %3312 = vmatpush1.bf16.msra.mxu0 %v1224
    %3313 = vmatprep.subr.bf16.mxu0 %v1229
    %3314 = vmatpush1.bf16.msra.mxu0 %v1228
    %3315 = vmatprep.subr.bf16.mxu0 %v1233
    %3316 = vmatpush1.bf16.msra.mxu0 %v1232
    %3317 = vmatprep.mubr.bf16.mxu0 %v3161
    %3318 = vmatmul.mubr.bf16.gmra.mrb[0].mxu0 %v3160
    %v3319 = vpop.f32.mrb[0].mxu0
    %v3320 = vadd.f32 %v3279, %v3319
    %v3321 = vpop.f32.mrb[0].mxu0
    %v3322 = vadd.f32 %v3281, %v3321
    %v3323 = vpop.f32.mrb[0].mxu0
    %v3324 = vpop.f32.mrb[0].mxu0
    %3325 = vdwg.mxu0
    %v3326 = vadd.f32 %v551, %v3238
    %v3327 = vadd.f32 %v553, %v3240
    %v3328 = vadd.f32 %v624, %v3320
    %v3329 = vadd.f32 %v626, %v3322
    %v3330 = vxor.u32 %v3326, 2147483648
    %v3331 = vxor.u32 %v3327, 2147483648
    %v3332 = vxor.u32 %v3328, 2147483648
    %v3333 = vxor.u32 %v3329, 2147483648
    %v3334 = vmul.f32 %v3330, 1.442695
    %v3335 = vpow.pop %v3334
    %v3336 = vmul.f32 %v3331, 1.442695
    %v3337 = vpow.pop %v3336
    %v3338 = vmul.f32 %v3332, 1.442695
    %v3339 = vpow.pop %v3338
    %v3340 = vmul.f32 %v3333, 1.442695
    %v3341 = vpow.pop %v3340
    %v3342 = vadd.f32 %v3335, 1.0
    %v3343 = vadd.f32 %v3337, 1.0
    %v3344 = vadd.f32 %v3339, 1.0
    %v3345 = vadd.f32 %v3341, 1.0
    %v3346 = vrcp.pop %v3342
    %v3347 = vmul.f32 1.0, %v3346
    %v3348 = vrcp.pop %v3343
    %v3349 = vmul.f32 1.0, %v3348
    %v3350 = vrcp.pop %v3344
    %v3351 = vmul.f32 1.0, %v3350
    %v3352 = vrcp.pop %v3345
    %v3353 = vmul.f32 1.0, %v3352
    %3354 = vmatprep.subr.bf16.mxu0 %v1427
    %3355 = vmatpush1.bf16.msra.mxu0 %v1426
    %3356 = vmatprep.subr.bf16.mxu0 %v1431
    %3357 = vmatpush1.bf16.msra.mxu0 %v1430
    %3358 = vmatprep.subr.bf16.mxu0 %v1435
    %3359 = vmatpush1.bf16.msra.mxu0 %v1434
    %3360 = vmatprep.subr.bf16.mxu0 %v1439
    %3361 = vmatpush1.bf16.msra.mxu0 %v1438
    %3362 = vmatprep.subr.bf16.mxu0 %v1443
    %3363 = vmatpush1.bf16.msra.mxu0 %v1442
    %3364 = vmatprep.subr.bf16.mxu0 %v1447
    %3365 = vmatpush1.bf16.msra.mxu0 %v1446
    %3366 = vmatprep.subr.bf16.mxu0 %v1451
    %3367 = vmatpush1.bf16.msra.mxu0 %v1450
    %3368 = vmatprep.subr.bf16.mxu0 %v1455
    %3369 = vmatpush1.bf16.msra.mxu0 %v1454
    %3370 = vmatprep.subr.bf16.mxu0 %v1459
    %3371 = vmatpush1.bf16.msra.mxu0 %v1458
    %3372 = vmatprep.subr.bf16.mxu0 %v1463
    %3373 = vmatpush1.bf16.msra.mxu0 %v1462
    %3374 = vmatprep.subr.bf16.mxu0 %v1467
    %3375 = vmatpush1.bf16.msra.mxu0 %v1466
    %3376 = vmatprep.subr.bf16.mxu0 %v1471
    %3377 = vmatpush1.bf16.msra.mxu0 %v1470
    %3378 = vmatprep.subr.bf16.mxu0 %v1475
    %3379 = vmatpush1.bf16.msra.mxu0 %v1474
    %3380 = vmatprep.subr.bf16.mxu0 %v1479
    %3381 = vmatpush1.bf16.msra.mxu0 %v1478
    %3382 = vmatprep.subr.bf16.mxu0 %v1483
    %3383 = vmatpush1.bf16.msra.mxu0 %v1482
    %3384 = vmatprep.subr.bf16.mxu0 %v1487
    %3385 = vmatpush1.bf16.msra.mxu0 %v1486
    %3386 = vmatprep.mubr.bf16.mxu0 %v3159
    %3387 = vmatmul.mubr.bf16.gmra.mrb[0].mxu0 %v3158
    %v3388 = vpop.f32.mrb[0].mxu0
    %v3389 = vadd.f32 0.0, %v3388
    %v3390 = vpop.f32.mrb[0].mxu0
    %v3391 = vadd.f32 0.0, %v3390
    %v3392 = vpop.f32.mrb[0].mxu0
    %v3393 = vpop.f32.mrb[0].mxu0
    %3394 = vdwg.mxu0
    %3395 = vmatprep.subr.bf16.mxu0 %v1491
    %3396 = vmatpush1.bf16.msra.mxu0 %v1490
    %3397 = vmatprep.subr.bf16.mxu0 %v1495
    %3398 = vmatpush1.bf16.msra.mxu0 %v1494
    %3399 = vmatprep.subr.bf16.mxu0 %v1499
    %3400 = vmatpush1.bf16.msra.mxu0 %v1498
    %3401 = vmatprep.subr.bf16.mxu0 %v1503
    %3402 = vmatpush1.bf16.msra.mxu0 %v1502
    %3403 = vmatprep.subr.bf16.mxu0 %v1507
    %3404 = vmatpush1.bf16.msra.mxu0 %v1506
    %3405 = vmatprep.subr.bf16.mxu0 %v1511
    %3406 = vmatpush1.bf16.msra.mxu0 %v1510
    %3407 = vmatprep.subr.bf16.mxu0 %v1515
    %3408 = vmatpush1.bf16.msra.mxu0 %v1514
    %3409 = vmatprep.subr.bf16.mxu0 %v1519
    %3410 = vmatpush1.bf16.msra.mxu0 %v1518
    %3411 = vmatprep.subr.bf16.mxu0 %v1523
    %3412 = vmatpush1.bf16.msra.mxu0 %v1522
    %3413 = vmatprep.subr.bf16.mxu0 %v1527
    %3414 = vmatpush1.bf16.msra.mxu0 %v1526
    %3415 = vmatprep.subr.bf16.mxu0 %v1531
    %3416 = vmatpush1.bf16.msra.mxu0 %v1530
    %3417 = vmatprep.subr.bf16.mxu0 %v1535
    %3418 = vmatpush1.bf16.msra.mxu0 %v1534
    %3419 = vmatprep.subr.bf16.mxu0 %v1539
    %3420 = vmatpush1.bf16.msra.mxu0 %v1538
    %3421 = vmatprep.subr.bf16.mxu0 %v1543
    %3422 = vmatpush1.bf16.msra.mxu0 %v1542
    %3423 = vmatprep.subr.bf16.mxu0 %v1547
    %3424 = vmatpush1.bf16.msra.mxu0 %v1546
    %3425 = vmatprep.subr.bf16.mxu0 %v1551
    %3426 = vmatpush1.bf16.msra.mxu0 %v1550
    %3427 = vmatprep.mubr.bf16.mxu0 %v3161
    %3428 = vmatmul.mubr.bf16.gmra.mrb[0].mxu0 %v3160
    %v3429 = vpop.f32.mrb[0].mxu0
    %v3430 = vadd.f32 %v3389, %v3429
    %v3431 = vpop.f32.mrb[0].mxu0
    %v3432 = vadd.f32 %v3391, %v3431
    %v3433 = vpop.f32.mrb[0].mxu0
    %v3434 = vpop.f32.mrb[0].mxu0
    %3435 = vdwg.mxu0
    %3436 = vmatprep.subr.bf16.mxu0 %v1429
    %3437 = vmatpush1.bf16.msra.mxu0 %v1428
    %3438 = vmatprep.subr.bf16.mxu0 %v1433
    %3439 = vmatpush1.bf16.msra.mxu0 %v1432
    %3440 = vmatprep.subr.bf16.mxu0 %v1437
    %3441 = vmatpush1.bf16.msra.mxu0 %v1436
    %3442 = vmatprep.subr.bf16.mxu0 %v1441
    %3443 = vmatpush1.bf16.msra.mxu0 %v1440
    %3444 = vmatprep.subr.bf16.mxu0 %v1445
    %3445 = vmatpush1.bf16.msra.mxu0 %v1444
    %3446 = vmatprep.subr.bf16.mxu0 %v1449
    %3447 = vmatpush1.bf16.msra.mxu0 %v1448
    %3448 = vmatprep.subr.bf16.mxu0 %v1453
    %3449 = vmatpush1.bf16.msra.mxu0 %v1452
    %3450 = vmatprep.subr.bf16.mxu0 %v1457
    %3451 = vmatpush1.bf16.msra.mxu0 %v1456
    %3452 = vmatprep.subr.bf16.mxu0 %v1461
    %3453 = vmatpush1.bf16.msra.mxu0 %v1460
    %3454 = vmatprep.subr.bf16.mxu0 %v1465
    %3455 = vmatpush1.bf16.msra.mxu0 %v1464
    %3456 = vmatprep.subr.bf16.mxu0 %v1469
    %3457 = vmatpush1.bf16.msra.mxu0 %v1468
    %3458 = vmatprep.subr.bf16.mxu0 %v1473
    %3459 = vmatpush1.bf16.msra.mxu0 %v1472
    %3460 = vmatprep.subr.bf16.mxu0 %v1477
    %3461 = vmatpush1.bf16.msra.mxu0 %v1476
    %3462 = vmatprep.subr.bf16.mxu0 %v1481
    %3463 = vmatpush1.bf16.msra.mxu0 %v1480
    %3464 = vmatprep.subr.bf16.mxu0 %v1485
    %3465 = vmatpush1.bf16.msra.mxu0 %v1484
    %3466 = vmatprep.subr.bf16.mxu0 %v1489
    %3467 = vmatpush1.bf16.msra.mxu0 %v1488
    %3468 = vmatprep.mubr.bf16.mxu0 %v3159
    %3469 = vmatmul.mubr.bf16.gmra.mrb[0].mxu0 %v3158
    %v3470 = vpop.f32.mrb[0].mxu0
    %v3471 = vadd.f32 0.0, %v3470
    %v3472 = vpop.f32.mrb[0].mxu0
    %v3473 = vadd.f32 0.0, %v3472
    %v3474 = vpop.f32.mrb[0].mxu0
    %v3475 = vpop.f32.mrb[0].mxu0
    %3476 = vdwg.mxu0
    %3477 = vmatprep.subr.bf16.mxu0 %v1493
    %3478 = vmatpush1.bf16.msra.mxu0 %v1492
    %3479 = vmatprep.subr.bf16.mxu0 %v1497
    %3480 = vmatpush1.bf16.msra.mxu0 %v1496
    %3481 = vmatprep.subr.bf16.mxu0 %v1501
    %3482 = vmatpush1.bf16.msra.mxu0 %v1500
    %3483 = vmatprep.subr.bf16.mxu0 %v1505
    %3484 = vmatpush1.bf16.msra.mxu0 %v1504
    %3485 = vmatprep.subr.bf16.mxu0 %v1509
    %3486 = vmatpush1.bf16.msra.mxu0 %v1508
    %3487 = vmatprep.subr.bf16.mxu0 %v1513
    %3488 = vmatpush1.bf16.msra.mxu0 %v1512
    %3489 = vmatprep.subr.bf16.mxu0 %v1517
    %3490 = vmatpush1.bf16.msra.mxu0 %v1516
    %3491 = vmatprep.subr.bf16.mxu0 %v1521
    %3492 = vmatpush1.bf16.msra.mxu0 %v1520
    %3493 = vmatprep.subr.bf16.mxu0 %v1525
    %3494 = vmatpush1.bf16.msra.mxu0 %v1524
    %3495 = vmatprep.subr.bf16.mxu0 %v1529
    %3496 = vmatpush1.bf16.msra.mxu0 %v1528
    %3497 = vmatprep.subr.bf16.mxu0 %v1533
    %3498 = vmatpush1.bf16.msra.mxu0 %v1532
    %3499 = vmatprep.subr.bf16.mxu0 %v1537
    %3500 = vmatpush1.bf16.msra.mxu0 %v1536
    %3501 = vmatprep.subr.bf16.mxu0 %v1541
    %3502 = vmatpush1.bf16.msra.mxu0 %v1540
    %3503 = vmatprep.subr.bf16.mxu0 %v1545
    %3504 = vmatpush1.bf16.msra.mxu0 %v1544
    %3505 = vmatprep.subr.bf16.mxu0 %v1549
    %3506 = vmatpush1.bf16.msra.mxu0 %v1548
    %3507 = vmatprep.subr.bf16.mxu0 %v1553
    %3508 = vmatpush1.bf16.msra.mxu0 %v1552
    %3509 = vmatprep.mubr.bf16.mxu0 %v3161
    %3510 = vmatmul.mubr.bf16.gmra.mrb[0].mxu0 %v3160
    %v3511 = vpop.f32.mrb[0].mxu0
    %v3512 = vadd.f32 %v3471, %v3511
    %v3513 = vpop.f32.mrb[0].mxu0
    %v3514 = vadd.f32 %v3473, %v3513
    %v3515 = vpop.f32.mrb[0].mxu0
    %v3516 = vpop.f32.mrb[0].mxu0
    %3517 = vdwg.mxu0
    %v3518 = vadd.f32 %v697, %v3430
    %v3519 = vadd.f32 %v699, %v3432
    %v3520 = vadd.f32 %v770, %v3512
    %v3521 = vadd.f32 %v772, %v3514
    %v3522 = vxor.u32 %v3518, 2147483648
    %v3523 = vxor.u32 %v3519, 2147483648
    %v3524 = vxor.u32 %v3520, 2147483648
    %v3525 = vxor.u32 %v3521, 2147483648
    %v3526 = vmul.f32 %v3522, 1.442695
    %v3527 = vpow.pop %v3526
    %v3528 = vmul.f32 %v3523, 1.442695
    %v3529 = vpow.pop %v3528
    %v3530 = vmul.f32 %v3524, 1.442695
    %v3531 = vpow.pop %v3530
    %v3532 = vmul.f32 %v3525, 1.442695
    %v3533 = vpow.pop %v3532
    %v3534 = vadd.f32 %v3527, 1.0
    %v3535 = vadd.f32 %v3529, 1.0
    %v3536 = vadd.f32 %v3531, 1.0
    %v3537 = vadd.f32 %v3533, 1.0
    %v3538 = vrcp.pop %v3534
    %v3539 = vmul.f32 1.0, %v3538
    %v3540 = vrcp.pop %v3535
    %v3541 = vmul.f32 1.0, %v3540
    %v3542 = vrcp.pop %v3536
    %v3543 = vmul.f32 1.0, %v3542
    %v3544 = vrcp.pop %v3537
    %v3545 = vmul.f32 1.0, %v3544
    %3546 = vmatprep.subr.bf16.mxu0 %v1747
    %3547 = vmatpush1.bf16.msra.mxu0 %v1746
    %3548 = vmatprep.subr.bf16.mxu0 %v1751
    %3549 = vmatpush1.bf16.msra.mxu0 %v1750
    %3550 = vmatprep.subr.bf16.mxu0 %v1755
    %3551 = vmatpush1.bf16.msra.mxu0 %v1754
    %3552 = vmatprep.subr.bf16.mxu0 %v1759
    %3553 = vmatpush1.bf16.msra.mxu0 %v1758
    %3554 = vmatprep.subr.bf16.mxu0 %v1763
    %3555 = vmatpush1.bf16.msra.mxu0 %v1762
    %3556 = vmatprep.subr.bf16.mxu0 %v1767
    %3557 = vmatpush1.bf16.msra.mxu0 %v1766
    %3558 = vmatprep.subr.bf16.mxu0 %v1771
    %3559 = vmatpush1.bf16.msra.mxu0 %v1770
    %3560 = vmatprep.subr.bf16.mxu0 %v1775
    %3561 = vmatpush1.bf16.msra.mxu0 %v1774
    %3562 = vmatprep.subr.bf16.mxu0 %v1779
    %3563 = vmatpush1.bf16.msra.mxu0 %v1778
    %3564 = vmatprep.subr.bf16.mxu0 %v1783
    %3565 = vmatpush1.bf16.msra.mxu0 %v1782
    %3566 = vmatprep.subr.bf16.mxu0 %v1787
    %3567 = vmatpush1.bf16.msra.mxu0 %v1786
    %3568 = vmatprep.subr.bf16.mxu0 %v1791
    %3569 = vmatpush1.bf16.msra.mxu0 %v1790
    %3570 = vmatprep.subr.bf16.mxu0 %v1795
    %3571 = vmatpush1.bf16.msra.mxu0 %v1794
    %3572 = vmatprep.subr.bf16.mxu0 %v1799
    %3573 = vmatpush1.bf16.msra.mxu0 %v1798
    %3574 = vmatprep.subr.bf16.mxu0 %v1803
    %3575 = vmatpush1.bf16.msra.mxu0 %v1802
    %3576 = vmatprep.subr.bf16.mxu0 %v1807
    %3577 = vmatpush1.bf16.msra.mxu0 %v1806
    %3578 = vmatprep.mubr.bf16.mxu0 %v3159
    %3579 = vmatmul.mubr.bf16.gmra.mrb[0].mxu0 %v3158
    %v3580 = vpop.f32.mrb[0].mxu0
    %v3581 = vadd.f32 0.0, %v3580
    %v3582 = vpop.f32.mrb[0].mxu0
    %v3583 = vadd.f32 0.0, %v3582
    %v3584 = vpop.f32.mrb[0].mxu0
    %v3585 = vpop.f32.mrb[0].mxu0
    %3586 = vdwg.mxu0
    %3587 = vmatprep.subr.bf16.mxu0 %v1811
    %3588 = vmatpush1.bf16.msra.mxu0 %v1810
    %3589 = vmatprep.subr.bf16.mxu0 %v1815
    %3590 = vmatpush1.bf16.msra.mxu0 %v1814
    %3591 = vmatprep.subr.bf16.mxu0 %v1819
    %3592 = vmatpush1.bf16.msra.mxu0 %v1818
    %3593 = vmatprep.subr.bf16.mxu0 %v1823
    %3594 = vmatpush1.bf16.msra.mxu0 %v1822
    %3595 = vmatprep.subr.bf16.mxu0 %v1827
    %3596 = vmatpush1.bf16.msra.mxu0 %v1826
    %3597 = vmatprep.subr.bf16.mxu0 %v1831
    %3598 = vmatpush1.bf16.msra.mxu0 %v1830
    %3599 = vmatprep.subr.bf16.mxu0 %v1835
    %3600 = vmatpush1.bf16.msra.mxu0 %v1834
    %3601 = vmatprep.subr.bf16.mxu0 %v1839
    %3602 = vmatpush1.bf16.msra.mxu0 %v1838
    %3603 = vmatprep.subr.bf16.mxu0 %v1843
    %3604 = vmatpush1.bf16.msra.mxu0 %v1842
    %3605 = vmatprep.subr.bf16.mxu0 %v1847
    %3606 = vmatpush1.bf16.msra.mxu0 %v1846
    %3607 = vmatprep.subr.bf16.mxu0 %v1851
    %3608 = vmatpush1.bf16.msra.mxu0 %v1850
    %3609 = vmatprep.subr.bf16.mxu0 %v1855
    %3610 = vmatpush1.bf16.msra.mxu0 %v1854
    %3611 = vmatprep.subr.bf16.mxu0 %v1859
    %3612 = vmatpush1.bf16.msra.mxu0 %v1858
    %3613 = vmatprep.subr.bf16.mxu0 %v1863
    %3614 = vmatpush1.bf16.msra.mxu0 %v1862
    %3615 = vmatprep.subr.bf16.mxu0 %v1867
    %3616 = vmatpush1.bf16.msra.mxu0 %v1866
    %3617 = vmatprep.subr.bf16.mxu0 %v1871
    %3618 = vmatpush1.bf16.msra.mxu0 %v1870
    %3619 = vmatprep.mubr.bf16.mxu0 %v3161
    %3620 = vmatmul.mubr.bf16.gmra.mrb[0].mxu0 %v3160
    %v3621 = vpop.f32.mrb[0].mxu0
    %v3622 = vadd.f32 %v3581, %v3621
    %v3623 = vpop.f32.mrb[0].mxu0
    %v3624 = vadd.f32 %v3583, %v3623
    %v3625 = vpop.f32.mrb[0].mxu0
    %v3626 = vpop.f32.mrb[0].mxu0
    %3627 = vdwg.mxu0
    %3628 = vmatprep.subr.bf16.mxu0 %v1749
    %3629 = vmatpush1.bf16.msra.mxu0 %v1748
    %3630 = vmatprep.subr.bf16.mxu0 %v1753
    %3631 = vmatpush1.bf16.msra.mxu0 %v1752
    %3632 = vmatprep.subr.bf16.mxu0 %v1757
    %3633 = vmatpush1.bf16.msra.mxu0 %v1756
    %3634 = vmatprep.subr.bf16.mxu0 %v1761
    %3635 = vmatpush1.bf16.msra.mxu0 %v1760
    %3636 = vmatprep.subr.bf16.mxu0 %v1765
    %3637 = vmatpush1.bf16.msra.mxu0 %v1764
    %3638 = vmatprep.subr.bf16.mxu0 %v1769
    %3639 = vmatpush1.bf16.msra.mxu0 %v1768
    %3640 = vmatprep.subr.bf16.mxu0 %v1773
    %3641 = vmatpush1.bf16.msra.mxu0 %v1772
    %3642 = vmatprep.subr.bf16.mxu0 %v1777
    %3643 = vmatpush1.bf16.msra.mxu0 %v1776
    %3644 = vmatprep.subr.bf16.mxu0 %v1781
    %3645 = vmatpush1.bf16.msra.mxu0 %v1780
    %3646 = vmatprep.subr.bf16.mxu0 %v1785
    %3647 = vmatpush1.bf16.msra.mxu0 %v1784
    %3648 = vmatprep.subr.bf16.mxu0 %v1789
    %3649 = vmatpush1.bf16.msra.mxu0 %v1788
    %3650 = vmatprep.subr.bf16.mxu0 %v1793
    %3651 = vmatpush1.bf16.msra.mxu0 %v1792
    %3652 = vmatprep.subr.bf16.mxu0 %v1797
    %3653 = vmatpush1.bf16.msra.mxu0 %v1796
    %3654 = vmatprep.subr.bf16.mxu0 %v1801
    %3655 = vmatpush1.bf16.msra.mxu0 %v1800
    %3656 = vmatprep.subr.bf16.mxu0 %v1805
    %3657 = vmatpush1.bf16.msra.mxu0 %v1804
    %3658 = vmatprep.subr.bf16.mxu0 %v1809
    %3659 = vmatpush1.bf16.msra.mxu0 %v1808
    %3660 = vmatprep.mubr.bf16.mxu0 %v3159
    %3661 = vmatmul.mubr.bf16.gmra.mrb[0].mxu0 %v3158
    %v3662 = vpop.f32.mrb[0].mxu0
    %v3663 = vadd.f32 0.0, %v3662
    %v3664 = vpop.f32.mrb[0].mxu0
    %v3665 = vadd.f32 0.0, %v3664
    %v3666 = vpop.f32.mrb[0].mxu0
    %v3667 = vpop.f32.mrb[0].mxu0
    %3668 = vdwg.mxu0
    %3669 = vmatprep.subr.bf16.mxu0 %v1813
    %3670 = vmatpush1.bf16.msra.mxu0 %v1812
    %3671 = vmatprep.subr.bf16.mxu0 %v1817
    %3672 = vmatpush1.bf16.msra.mxu0 %v1816
    %3673 = vmatprep.subr.bf16.mxu0 %v1821
    %3674 = vmatpush1.bf16.msra.mxu0 %v1820
    %3675 = vmatprep.subr.bf16.mxu0 %v1825
    %3676 = vmatpush1.bf16.msra.mxu0 %v1824
    %3677 = vmatprep.subr.bf16.mxu0 %v1829
    %3678 = vmatpush1.bf16.msra.mxu0 %v1828
    %3679 = vmatprep.subr.bf16.mxu0 %v1833
    %3680 = vmatpush1.bf16.msra.mxu0 %v1832
    %3681 = vmatprep.subr.bf16.mxu0 %v1837
    %3682 = vmatpush1.bf16.msra.mxu0 %v1836
    %3683 = vmatprep.subr.bf16.mxu0 %v1841
    %3684 = vmatpush1.bf16.msra.mxu0 %v1840
    %3685 = vmatprep.subr.bf16.mxu0 %v1845
    %3686 = vmatpush1.bf16.msra.mxu0 %v1844
    %3687 = vmatprep.subr.bf16.mxu0 %v1849
    %3688 = vmatpush1.bf16.msra.mxu0 %v1848
    %3689 = vmatprep.subr.bf16.mxu0 %v1853
    %3690 = vmatpush1.bf16.msra.mxu0 %v1852
    %3691 = vmatprep.subr.bf16.mxu0 %v1857
    %3692 = vmatpush1.bf16.msra.mxu0 %v1856
    %3693 = vmatprep.subr.bf16.mxu0 %v1861
    %3694 = vmatpush1.bf16.msra.mxu0 %v1860
    %3695 = vmatprep.subr.bf16.mxu0 %v1865
    %3696 = vmatpush1.bf16.msra.mxu0 %v1864
    %3697 = vmatprep.subr.bf16.mxu0 %v1869
    %3698 = vmatpush1.bf16.msra.mxu0 %v1868
    %3699 = vmatprep.subr.bf16.mxu0 %v1873
    %3700 = vmatpush1.bf16.msra.mxu0 %v1872
    %3701 = vmatprep.mubr.bf16.mxu0 %v3161
    %3702 = vmatmul.mubr.bf16.gmra.mrb[0].mxu0 %v3160
    %v3703 = vpop.f32.mrb[0].mxu0
    %v3704 = vadd.f32 %v3663, %v3703
    %v3705 = vpop.f32.mrb[0].mxu0
    %v3706 = vadd.f32 %v3665, %v3705
    %v3707 = vpop.f32.mrb[0].mxu0
    %v3708 = vpop.f32.mrb[0].mxu0
    %3709 = vdwg.mxu0
    %v3710 = vadd.f32 %v843, %v3622
    %v3711 = vadd.f32 %v845, %v3624
    %v3712 = vadd.f32 %v916, %v3704
    %v3713 = vadd.f32 %v918, %v3706
    %v3714 = vtanh.pop %v3710
    %v3715 = vtanh.pop %v3711
    %v3716 = vtanh.pop %v3712
    %v3717 = vtanh.pop %v3713
    %3718 = vmatprep.subr.bf16.mxu0 %v2047
    %3719 = vmatpush1.bf16.msra.mxu0 %v2046
    %3720 = vmatprep.subr.bf16.mxu0 %v2051
    %3721 = vmatpush1.bf16.msra.mxu0 %v2050
    %3722 = vmatprep.subr.bf16.mxu0 %v2055
    %3723 = vmatpush1.bf16.msra.mxu0 %v2054
    %3724 = vmatprep.subr.bf16.mxu0 %v2059
    %3725 = vmatpush1.bf16.msra.mxu0 %v2058
    %3726 = vmatprep.subr.bf16.mxu0 %v2063
    %3727 = vmatpush1.bf16.msra.mxu0 %v2062
    %3728 = vmatprep.subr.bf16.mxu0 %v2067
    %3729 = vmatpush1.bf16.msra.mxu0 %v2066
    %3730 = vmatprep.subr.bf16.mxu0 %v2071
    %3731 = vmatpush1.bf16.msra.mxu0 %v2070
    %3732 = vmatprep.subr.bf16.mxu0 %v2075
    %3733 = vmatpush1.bf16.msra.mxu0 %v2074
    %3734 = vmatprep.subr.bf16.mxu0 %v2079
    %3735 = vmatpush1.bf16.msra.mxu0 %v2078
    %3736 = vmatprep.subr.bf16.mxu0 %v2083
    %3737 = vmatpush1.bf16.msra.mxu0 %v2082
    %3738 = vmatprep.subr.bf16.mxu0 %v2087
    %3739 = vmatpush1.bf16.msra.mxu0 %v2086
    %3740 = vmatprep.subr.bf16.mxu0 %v2091
    %3741 = vmatpush1.bf16.msra.mxu0 %v2090
    %3742 = vmatprep.subr.bf16.mxu0 %v2095
    %3743 = vmatpush1.bf16.msra.mxu0 %v2094
    %3744 = vmatprep.subr.bf16.mxu0 %v2099
    %3745 = vmatpush1.bf16.msra.mxu0 %v2098
    %3746 = vmatprep.subr.bf16.mxu0 %v2103
    %3747 = vmatpush1.bf16.msra.mxu0 %v2102
    %3748 = vmatprep.subr.bf16.mxu0 %v2107
    %3749 = vmatpush1.bf16.msra.mxu0 %v2106
    %3750 = vmatprep.mubr.bf16.mxu0 %v3159
    %3751 = vmatmul.mubr.bf16.gmra.mrb[0].mxu0 %v3158
    %v3752 = vpop.f32.mrb[0].mxu0
    %v3753 = vadd.f32 0.0, %v3752
    %v3754 = vpop.f32.mrb[0].mxu0
    %v3755 = vadd.f32 0.0, %v3754
    %v3756 = vpop.f32.mrb[0].mxu0
    %v3757 = vpop.f32.mrb[0].mxu0
    %3758 = vdwg.mxu0
    %3759 = vmatprep.subr.bf16.mxu0 %v2111
    %3760 = vmatpush1.bf16.msra.mxu0 %v2110
    %3761 = vmatprep.subr.bf16.mxu0 %v2115
    %3762 = vmatpush1.bf16.msra.mxu0 %v2114
    %3763 = vmatprep.subr.bf16.mxu0 %v2119
    %3764 = vmatpush1.bf16.msra.mxu0 %v2118
    %3765 = vmatprep.subr.bf16.mxu0 %v2123
    %3766 = vmatpush1.bf16.msra.mxu0 %v2122
    %3767 = vmatprep.subr.bf16.mxu0 %v2127
    %3768 = vmatpush1.bf16.msra.mxu0 %v2126
    %3769 = vmatprep.subr.bf16.mxu0 %v2131
    %3770 = vmatpush1.bf16.msra.mxu0 %v2130
    %3771 = vmatprep.subr.bf16.mxu0 %v2135
    %3772 = vmatpush1.bf16.msra.mxu0 %v2134
    %3773 = vmatprep.subr.bf16.mxu0 %v2139
    %3774 = vmatpush1.bf16.msra.mxu0 %v2138
    %3775 = vmatprep.subr.bf16.mxu0 %v2143
    %3776 = vmatpush1.bf16.msra.mxu0 %v2142
    %3777 = vmatprep.subr.bf16.mxu0 %v2147
    %3778 = vmatpush1.bf16.msra.mxu0 %v2146
    %3779 = vmatprep.subr.bf16.mxu0 %v2151
    %3780 = vmatpush1.bf16.msra.mxu0 %v2150
    %3781 = vmatprep.subr.bf16.mxu0 %v2155
    %3782 = vmatpush1.bf16.msra.mxu0 %v2154
    %3783 = vmatprep.subr.bf16.mxu0 %v2159
    %3784 = vmatpush1.bf16.msra.mxu0 %v2158
    %3785 = vmatprep.subr.bf16.mxu0 %v2163
    %3786 = vmatpush1.bf16.msra.mxu0 %v2162
    %3787 = vmatprep.subr.bf16.mxu0 %v2167
    %3788 = vmatpush1.bf16.msra.mxu0 %v2166
    %3789 = vmatprep.subr.bf16.mxu0 %v2171
    %3790 = vmatpush1.bf16.msra.mxu0 %v2170
    %3791 = vmatprep.mubr.bf16.mxu0 %v3161
    %3792 = vmatmul.mubr.bf16.gmra.mrb[0].mxu0 %v3160
    %v3793 = vpop.f32.mrb[0].mxu0
    %v3794 = vadd.f32 %v3753, %v3793
    %v3795 = vpop.f32.mrb[0].mxu0
    %v3796 = vadd.f32 %v3755, %v3795
    %v3797 = vpop.f32.mrb[0].mxu0
    %v3798 = vpop.f32.mrb[0].mxu0
    %3799 = vdwg.mxu0
    %3800 = vmatprep.subr.bf16.mxu0 %v2049
    %3801 = vmatpush1.bf16.msra.mxu0 %v2048
    %3802 = vmatprep.subr.bf16.mxu0 %v2053
    %3803 = vmatpush1.bf16.msra.mxu0 %v2052
    %3804 = vmatprep.subr.bf16.mxu0 %v2057
    %3805 = vmatpush1.bf16.msra.mxu0 %v2056
    %3806 = vmatprep.subr.bf16.mxu0 %v2061
    %3807 = vmatpush1.bf16.msra.mxu0 %v2060
    %3808 = vmatprep.subr.bf16.mxu0 %v2065
    %3809 = vmatpush1.bf16.msra.mxu0 %v2064
    %3810 = vmatprep.subr.bf16.mxu0 %v2069
    %3811 = vmatpush1.bf16.msra.mxu0 %v2068
    %3812 = vmatprep.subr.bf16.mxu0 %v2073
    %3813 = vmatpush1.bf16.msra.mxu0 %v2072
    %3814 = vmatprep.subr.bf16.mxu0 %v2077
    %3815 = vmatpush1.bf16.msra.mxu0 %v2076
    %3816 = vmatprep.subr.bf16.mxu0 %v2081
    %3817 = vmatpush1.bf16.msra.mxu0 %v2080
    %3818 = vmatprep.subr.bf16.mxu0 %v2085
    %3819 = vmatpush1.bf16.msra.mxu0 %v2084
    %3820 = vmatprep.subr.bf16.mxu0 %v2089
    %3821 = vmatpush1.bf16.msra.mxu0 %v2088
    %3822 = vmatprep.subr.bf16.mxu0 %v2093
    %3823 = vmatpush1.bf16.msra.mxu0 %v2092
    %3824 = vmatprep.subr.bf16.mxu0 %v2097
    %3825 = vmatpush1.bf16.msra.mxu0 %v2096
    %3826 = vmatprep.subr.bf16.mxu0 %v2101
    %3827 = vmatpush1.bf16.msra.mxu0 %v2100
    %3828 = vmatprep.subr.bf16.mxu0 %v2105
    %3829 = vmatpush1.bf16.msra.mxu0 %v2104
    %3830 = vmatprep.subr.bf16.mxu0 %v2109
    %3831 = vmatpush1.bf16.msra.mxu0 %v2108
    %3832 = vmatprep.mubr.bf16.mxu0 %v3159
    %3833 = vmatmul.mubr.bf16.gmra.mrb[0].mxu0 %v3158
    %v3834 = vpop.f32.mrb[0].mxu0
    %v3835 = vadd.f32 0.0, %v3834
    %v3836 = vpop.f32.mrb[0].mxu0
    %v3837 = vadd.f32 0.0, %v3836
    %v3838 = vpop.f32.mrb[0].mxu0
    %v3839 = vpop.f32.mrb[0].mxu0
    %3840 = vdwg.mxu0
    %3841 = vmatprep.subr.bf16.mxu0 %v2113
    %3842 = vmatpush1.bf16.msra.mxu0 %v2112
    %3843 = vmatprep.subr.bf16.mxu0 %v2117
    %3844 = vmatpush1.bf16.msra.mxu0 %v2116
    %3845 = vmatprep.subr.bf16.mxu0 %v2121
    %3846 = vmatpush1.bf16.msra.mxu0 %v2120
    %3847 = vmatprep.subr.bf16.mxu0 %v2125
    %3848 = vmatpush1.bf16.msra.mxu0 %v2124
    %3849 = vmatprep.subr.bf16.mxu0 %v2129
    %3850 = vmatpush1.bf16.msra.mxu0 %v2128
    %3851 = vmatprep.subr.bf16.mxu0 %v2133
    %3852 = vmatpush1.bf16.msra.mxu0 %v2132
    %3853 = vmatprep.subr.bf16.mxu0 %v2137
    %3854 = vmatpush1.bf16.msra.mxu0 %v2136
    %3855 = vmatprep.subr.bf16.mxu0 %v2141
    %3856 = vmatpush1.bf16.msra.mxu0 %v2140
    %3857 = vmatprep.subr.bf16.mxu0 %v2145
    %3858 = vmatpush1.bf16.msra.mxu0 %v2144
    %3859 = vmatprep.subr.bf16.mxu0 %v2149
    %3860 = vmatpush1.bf16.msra.mxu0 %v2148
    %3861 = vmatprep.subr.bf16.mxu0 %v2153
    %3862 = vmatpush1.bf16.msra.mxu0 %v2152
    %3863 = vmatprep.subr.bf16.mxu0 %v2157
    %3864 = vmatpush1.bf16.msra.mxu0 %v2156
    %3865 = vmatprep.subr.bf16.mxu0 %v2161
    %3866 = vmatpush1.bf16.msra.mxu0 %v2160
    %3867 = vmatprep.subr.bf16.mxu0 %v2165
    %3868 = vmatpush1.bf16.msra.mxu0 %v2164
    %3869 = vmatprep.subr.bf16.mxu0 %v2169
    %3870 = vmatpush1.bf16.msra.mxu0 %v2168
    %3871 = vmatprep.subr.bf16.mxu0 %v2173
    %3872 = vmatpush1.bf16.msra.mxu0 %v2172
    %3873 = vmatprep.mubr.bf16.mxu0 %v3161
    %3874 = vmatmul.mubr.bf16.gmra.mrb[0].mxu0 %v3160
    %v3875 = vpop.f32.mrb[0].mxu0
    %v3876 = vadd.f32 %v3835, %v3875
    %v3877 = vpop.f32.mrb[0].mxu0
    %v3878 = vadd.f32 %v3837, %v3877
    %v3879 = vpop.f32.mrb[0].mxu0
    %v3880 = vpop.f32.mrb[0].mxu0
    %3881 = vdwg.mxu0
    %v3882 = vadd.f32 %v989, %v3794
    %v3883 = vadd.f32 %v991, %v3796
    %v3884 = vadd.f32 %v1062, %v3876
    %v3885 = vadd.f32 %v1064, %v3878
    %v3886 = vxor.u32 %v3882, 2147483648
    %v3887 = vxor.u32 %v3883, 2147483648
    %v3888 = vxor.u32 %v3884, 2147483648
    %v3889 = vxor.u32 %v3885, 2147483648
    %v3890 = vmul.f32 %v3886, 1.442695
    %v3891 = vpow.pop %v3890
    %v3892 = vmul.f32 %v3887, 1.442695
    %v3893 = vpow.pop %v3892
    %v3894 = vmul.f32 %v3888, 1.442695
    %v3895 = vpow.pop %v3894
    %v3896 = vmul.f32 %v3889, 1.442695
    %v3897 = vpow.pop %v3896
    %v3898 = vadd.f32 %v3891, 1.0
    %v3899 = vadd.f32 %v3893, 1.0
    %v3900 = vadd.f32 %v3895, 1.0
    %v3901 = vadd.f32 %v3897, 1.0
    %v3902 = vrcp.pop %v3898
    %v3903 = vmul.f32 1.0, %v3902
    %v3904 = vrcp.pop %v3899
    %v3905 = vmul.f32 1.0, %v3904
    %v3906 = vrcp.pop %v3900
    %v3907 = vmul.f32 1.0, %v3906
    %v3908 = vrcp.pop %v3901
    %v3909 = vmul.f32 1.0, %v3908
    %v3910 = vmul.f32 %v3539, %v3146
    %v3911 = vmul.f32 %v3541, %v3147
    %v3912 = vmul.f32 %v3543, %v3148
    %v3913 = vmul.f32 %v3545, %v3149
    %v3914 = vmul.f32 %v3347, %v3714
    %v3915 = vmul.f32 %v3349, %v3715
    %v3916 = vmul.f32 %v3351, %v3716
    %v3917 = vmul.f32 %v3353, %v3717
    %v3918 = vadd.f32 %v3910, %v3914
    %v3919 = vadd.f32 %v3911, %v3915
    %v3920 = vadd.f32 %v3912, %v3916
    %v3921 = vadd.f32 %v3913, %v3917
    %v3922 = vtanh.pop %v3918
    %v3923 = vtanh.pop %v3919
    %v3924 = vtanh.pop %v3920
    %v3925 = vtanh.pop %v3921
    %v3926 = vmul.f32 %v3903, %v3922
    %v3927 = vmul.f32 %v3905, %v3923
    %v3928 = vmul.f32 %v3907, %v3924
    %v3929 = vmul.f32 %v3909, %v3925
    %v3930 = vpack.c.bf16 %v3926, %v3926
    %v3931 = vpack.c.bf16 %v3927, %v3927
    %v3932 = vpack.c.bf16 %v3928, %v3928
    %v3933 = vpack.c.bf16 %v3929, %v3929
    %3934 = vmatprep.subr.bf16.mxu0 %v1107
    %3935 = vmatpush1.bf16.msra.mxu0 %v1106
    %3936 = vmatprep.subr.bf16.mxu0 %v1111
    %3937 = vmatpush1.bf16.msra.mxu0 %v1110
    %3938 = vmatprep.subr.bf16.mxu0 %v1115
    %3939 = vmatpush1.bf16.msra.mxu0 %v1114
    %3940 = vmatprep.subr.bf16.mxu0 %v1119
    %3941 = vmatpush1.bf16.msra.mxu0 %v1118
    %3942 = vmatprep.subr.bf16.mxu0 %v1123
    %3943 = vmatpush1.bf16.msra.mxu0 %v1122
    %3944 = vmatprep.subr.bf16.mxu0 %v1127
    %3945 = vmatpush1.bf16.msra.mxu0 %v1126
    %3946 = vmatprep.subr.bf16.mxu0 %v1131
    %3947 = vmatpush1.bf16.msra.mxu0 %v1130
    %3948 = vmatprep.subr.bf16.mxu0 %v1135
    %3949 = vmatpush1.bf16.msra.mxu0 %v1134
    %3950 = vmatprep.subr.bf16.mxu0 %v1139
    %3951 = vmatpush1.bf16.msra.mxu0 %v1138
    %3952 = vmatprep.subr.bf16.mxu0 %v1143
    %3953 = vmatpush1.bf16.msra.mxu0 %v1142
    %3954 = vmatprep.subr.bf16.mxu0 %v1147
    %3955 = vmatpush1.bf16.msra.mxu0 %v1146
    %3956 = vmatprep.subr.bf16.mxu0 %v1151
    %3957 = vmatpush1.bf16.msra.mxu0 %v1150
    %3958 = vmatprep.subr.bf16.mxu0 %v1155
    %3959 = vmatpush1.bf16.msra.mxu0 %v1154
    %3960 = vmatprep.subr.bf16.mxu0 %v1159
    %3961 = vmatpush1.bf16.msra.mxu0 %v1158
    %3962 = vmatprep.subr.bf16.mxu0 %v1163
    %3963 = vmatpush1.bf16.msra.mxu0 %v1162
    %3964 = vmatprep.subr.bf16.mxu0 %v1167
    %3965 = vmatpush1.bf16.msra.mxu0 %v1166
    %3966 = vmatprep.mubr.bf16.mxu0 %v3931
    %3967 = vmatmul.mubr.bf16.gmra.mrb[0].mxu0 %v3930
    %v3968 = vpop.f32.mrb[0].mxu0
    %v3969 = vadd.f32 0.0, %v3968
    %v3970 = vpop.f32.mrb[0].mxu0
    %v3971 = vadd.f32 0.0, %v3970
    %v3972 = vpop.f32.mrb[0].mxu0
    %v3973 = vpop.f32.mrb[0].mxu0
    %3974 = vdwg.mxu0
    %3975 = vmatprep.subr.bf16.mxu0 %v1171
    %3976 = vmatpush1.bf16.msra.mxu0 %v1170
    %3977 = vmatprep.subr.bf16.mxu0 %v1175
    %3978 = vmatpush1.bf16.msra.mxu0 %v1174
    %3979 = vmatprep.subr.bf16.mxu0 %v1179
    %3980 = vmatpush1.bf16.msra.mxu0 %v1178
    %3981 = vmatprep.subr.bf16.mxu0 %v1183
    %3982 = vmatpush1.bf16.msra.mxu0 %v1182
    %3983 = vmatprep.subr.bf16.mxu0 %v1187
    %3984 = vmatpush1.bf16.msra.mxu0 %v1186
    %3985 = vmatprep.subr.bf16.mxu0 %v1191
    %3986 = vmatpush1.bf16.msra.mxu0 %v1190
    %3987 = vmatprep.subr.bf16.mxu0 %v1195
    %3988 = vmatpush1.bf16.msra.mxu0 %v1194
    %3989 = vmatprep.subr.bf16.mxu0 %v1199
    %3990 = vmatpush1.bf16.msra.mxu0 %v1198
    %3991 = vmatprep.subr.bf16.mxu0 %v1203
    %3992 = vmatpush1.bf16.msra.mxu0 %v1202
    %3993 = vmatprep.subr.bf16.mxu0 %v1207
    %3994 = vmatpush1.bf16.msra.mxu0 %v1206
    %3995 = vmatprep.subr.bf16.mxu0 %v1211
    %3996 = vmatpush1.bf16.msra.mxu0 %v1210
    %3997 = vmatprep.subr.bf16.mxu0 %v1215
    %3998 = vmatpush1.bf16.msra.mxu0 %v1214
    %3999 = vmatprep.subr.bf16.mxu0 %v1219
    %4000 = vmatpush1.bf16.msra.mxu0 %v1218
    %4001 = vmatprep.subr.bf16.mxu0 %v1223
    %4002 = vmatpush1.bf16.msra.mxu0 %v1222
    %4003 = vmatprep.subr.bf16.mxu0 %v1227
    %4004 = vmatpush1.bf16.msra.mxu0 %v1226
    %4005 = vmatprep.subr.bf16.mxu0 %v1231
    %4006 = vmatpush1.bf16.msra.mxu0 %v1230
    %4007 = vmatprep.mubr.bf16.mxu0 %v3933
    %4008 = vmatmul.mubr.bf16.gmra.mrb[0].mxu0 %v3932
    %v4009 = vpop.f32.mrb[0].mxu0
    %v4010 = vadd.f32 %v3969, %v4009
    %v4011 = vpop.f32.mrb[0].mxu0
    %v4012 = vadd.f32 %v3971, %v4011
    %v4013 = vpop.f32.mrb[0].mxu0
    %v4014 = vpop.f32.mrb[0].mxu0
    %4015 = vdwg.mxu0
    %4016 = vmatprep.subr.bf16.mxu0 %v1109
    %4017 = vmatpush1.bf16.msra.mxu0 %v1108
    %4018 = vmatprep.subr.bf16.mxu0 %v1113
    %4019 = vmatpush1.bf16.msra.mxu0 %v1112
    %4020 = vmatprep.subr.bf16.mxu0 %v1117
    %4021 = vmatpush1.bf16.msra.mxu0 %v1116
    %4022 = vmatprep.subr.bf16.mxu0 %v1121
    %4023 = vmatpush1.bf16.msra.mxu0 %v1120
    %4024 = vmatprep.subr.bf16.mxu0 %v1125
    %4025 = vmatpush1.bf16.msra.mxu0 %v1124
    %4026 = vmatprep.subr.bf16.mxu0 %v1129
    %4027 = vmatpush1.bf16.msra.mxu0 %v1128
    %4028 = vmatprep.subr.bf16.mxu0 %v1133
    %4029 = vmatpush1.bf16.msra.mxu0 %v1132
    %4030 = vmatprep.subr.bf16.mxu0 %v1137
    %4031 = vmatpush1.bf16.msra.mxu0 %v1136
    %4032 = vmatprep.subr.bf16.mxu0 %v1141
    %4033 = vmatpush1.bf16.msra.mxu0 %v1140
    %4034 = vmatprep.subr.bf16.mxu0 %v1145
    %4035 = vmatpush1.bf16.msra.mxu0 %v1144
    %4036 = vmatprep.subr.bf16.mxu0 %v1149
    %4037 = vmatpush1.bf16.msra.mxu0 %v1148
    %4038 = vmatprep.subr.bf16.mxu0 %v1153
    %4039 = vmatpush1.bf16.msra.mxu0 %v1152
    %4040 = vmatprep.subr.bf16.mxu0 %v1157
    %4041 = vmatpush1.bf16.msra.mxu0 %v1156
    %4042 = vmatprep.subr.bf16.mxu0 %v1161
    %4043 = vmatpush1.bf16.msra.mxu0 %v1160
    %4044 = vmatprep.subr.bf16.mxu0 %v1165
    %4045 = vmatpush1.bf16.msra.mxu0 %v1164
    %4046 = vmatprep.subr.bf16.mxu0 %v1169
    %4047 = vmatpush1.bf16.msra.mxu0 %v1168
    %4048 = vmatprep.mubr.bf16.mxu0 %v3931
    %4049 = vmatmul.mubr.bf16.gmra.mrb[0].mxu0 %v3930
    %v4050 = vpop.f32.mrb[0].mxu0
    %v4051 = vadd.f32 0.0, %v4050
    %v4052 = vpop.f32.mrb[0].mxu0
    %v4053 = vadd.f32 0.0, %v4052
    %v4054 = vpop.f32.mrb[0].mxu0
    %v4055 = vpop.f32.mrb[0].mxu0
    %4056 = vdwg.mxu0
    %4057 = vmatprep.subr.bf16.mxu0 %v1173
    %4058 = vmatpush1.bf16.msra.mxu0 %v1172
    %4059 = vmatprep.subr.bf16.mxu0 %v1177
    %4060 = vmatpush1.bf16.msra.mxu0 %v1176
    %4061 = vmatprep.subr.bf16.mxu0 %v1181
    %4062 = vmatpush1.bf16.msra.mxu0 %v1180
    %4063 = vmatprep.subr.bf16.mxu0 %v1185
    %4064 = vmatpush1.bf16.msra.mxu0 %v1184
    %4065 = vmatprep.subr.bf16.mxu0 %v1189
    %4066 = vmatpush1.bf16.msra.mxu0 %v1188
    %4067 = vmatprep.subr.bf16.mxu0 %v1193
    %4068 = vmatpush1.bf16.msra.mxu0 %v1192
    %4069 = vmatprep.subr.bf16.mxu0 %v1197
    %4070 = vmatpush1.bf16.msra.mxu0 %v1196
    %4071 = vmatprep.subr.bf16.mxu0 %v1201
    %4072 = vmatpush1.bf16.msra.mxu0 %v1200
    %4073 = vmatprep.subr.bf16.mxu0 %v1205
    %4074 = vmatpush1.bf16.msra.mxu0 %v1204
    %4075 = vmatprep.subr.bf16.mxu0 %v1209
    %4076 = vmatpush1.bf16.msra.mxu0 %v1208
    %4077 = vmatprep.subr.bf16.mxu0 %v1213
    %4078 = vmatpush1.bf16.msra.mxu0 %v1212
    %4079 = vmatprep.subr.bf16.mxu0 %v1217
    %4080 = vmatpush1.bf16.msra.mxu0 %v1216
    %4081 = vmatprep.subr.bf16.mxu0 %v1221
    %4082 = vmatpush1.bf16.msra.mxu0 %v1220
    %4083 = vmatprep.subr.bf16.mxu0 %v1225
    %4084 = vmatpush1.bf16.msra.mxu0 %v1224
    %4085 = vmatprep.subr.bf16.mxu0 %v1229
    %4086 = vmatpush1.bf16.msra.mxu0 %v1228
    %4087 = vmatprep.subr.bf16.mxu0 %v1233
    %4088 = vmatpush1.bf16.msra.mxu0 %v1232
    %4089 = vmatprep.mubr.bf16.mxu0 %v3933
    %4090 = vmatmul.mubr.bf16.gmra.mrb[0].mxu0 %v3932
    %v4091 = vpop.f32.mrb[0].mxu0
    %v4092 = vadd.f32 %v4051, %v4091
    %v4093 = vpop.f32.mrb[0].mxu0
    %v4094 = vadd.f32 %v4053, %v4093
    %v4095 = vpop.f32.mrb[0].mxu0
    %v4096 = vpop.f32.mrb[0].mxu0
    %4097 = vdwg.mxu0
    %v4098 = vadd.f32 %v555, %v4010
    %v4099 = vadd.f32 %v557, %v4012
    %v4100 = vadd.f32 %v628, %v4092
    %v4101 = vadd.f32 %v630, %v4094
    %v4102 = vxor.u32 %v4098, 2147483648
    %v4103 = vxor.u32 %v4099, 2147483648
    %v4104 = vxor.u32 %v4100, 2147483648
    %v4105 = vxor.u32 %v4101, 2147483648
    %v4106 = vmul.f32 %v4102, 1.442695
    %v4107 = vpow.pop %v4106
    %v4108 = vmul.f32 %v4103, 1.442695
    %v4109 = vpow.pop %v4108
    %v4110 = vmul.f32 %v4104, 1.442695
    %v4111 = vpow.pop %v4110
    %v4112 = vmul.f32 %v4105, 1.442695
    %v4113 = vpow.pop %v4112
    %v4114 = vadd.f32 %v4107, 1.0
    %v4115 = vadd.f32 %v4109, 1.0
    %v4116 = vadd.f32 %v4111, 1.0
    %v4117 = vadd.f32 %v4113, 1.0
    %v4118 = vrcp.pop %v4114
    %v4119 = vmul.f32 1.0, %v4118
    %v4120 = vrcp.pop %v4115
    %v4121 = vmul.f32 1.0, %v4120
    %v4122 = vrcp.pop %v4116
    %v4123 = vmul.f32 1.0, %v4122
    %v4124 = vrcp.pop %v4117
    %v4125 = vmul.f32 1.0, %v4124
    %4126 = vmatprep.subr.bf16.mxu0 %v1427
    %4127 = vmatpush1.bf16.msra.mxu0 %v1426
    %4128 = vmatprep.subr.bf16.mxu0 %v1431
    %4129 = vmatpush1.bf16.msra.mxu0 %v1430
    %4130 = vmatprep.subr.bf16.mxu0 %v1435
    %4131 = vmatpush1.bf16.msra.mxu0 %v1434
    %4132 = vmatprep.subr.bf16.mxu0 %v1439
    %4133 = vmatpush1.bf16.msra.mxu0 %v1438
    %4134 = vmatprep.subr.bf16.mxu0 %v1443
    %4135 = vmatpush1.bf16.msra.mxu0 %v1442
    %4136 = vmatprep.subr.bf16.mxu0 %v1447
    %4137 = vmatpush1.bf16.msra.mxu0 %v1446
    %4138 = vmatprep.subr.bf16.mxu0 %v1451
    %4139 = vmatpush1.bf16.msra.mxu0 %v1450
    %4140 = vmatprep.subr.bf16.mxu0 %v1455
    %4141 = vmatpush1.bf16.msra.mxu0 %v1454
    %4142 = vmatprep.subr.bf16.mxu0 %v1459
    %4143 = vmatpush1.bf16.msra.mxu0 %v1458
    %4144 = vmatprep.subr.bf16.mxu0 %v1463
    %4145 = vmatpush1.bf16.msra.mxu0 %v1462
    %4146 = vmatprep.subr.bf16.mxu0 %v1467
    %4147 = vmatpush1.bf16.msra.mxu0 %v1466
    %4148 = vmatprep.subr.bf16.mxu0 %v1471
    %4149 = vmatpush1.bf16.msra.mxu0 %v1470
    %4150 = vmatprep.subr.bf16.mxu0 %v1475
    %4151 = vmatpush1.bf16.msra.mxu0 %v1474
    %4152 = vmatprep.subr.bf16.mxu0 %v1479
    %4153 = vmatpush1.bf16.msra.mxu0 %v1478
    %4154 = vmatprep.subr.bf16.mxu0 %v1483
    %4155 = vmatpush1.bf16.msra.mxu0 %v1482
    %4156 = vmatprep.subr.bf16.mxu0 %v1487
    %4157 = vmatpush1.bf16.msra.mxu0 %v1486
    %4158 = vmatprep.mubr.bf16.mxu0 %v3931
    %4159 = vmatmul.mubr.bf16.gmra.mrb[0].mxu0 %v3930
    %v4160 = vpop.f32.mrb[0].mxu0
    %v4161 = vadd.f32 0.0, %v4160
    %v4162 = vpop.f32.mrb[0].mxu0
    %v4163 = vadd.f32 0.0, %v4162
    %v4164 = vpop.f32.mrb[0].mxu0
    %v4165 = vpop.f32.mrb[0].mxu0
    %4166 = vdwg.mxu0
    %4167 = vmatprep.subr.bf16.mxu0 %v1491
    %4168 = vmatpush1.bf16.msra.mxu0 %v1490
    %4169 = vmatprep.subr.bf16.mxu0 %v1495
    %4170 = vmatpush1.bf16.msra.mxu0 %v1494
    %4171 = vmatprep.subr.bf16.mxu0 %v1499
    %4172 = vmatpush1.bf16.msra.mxu0 %v1498
    %4173 = vmatprep.subr.bf16.mxu0 %v1503
    %4174 = vmatpush1.bf16.msra.mxu0 %v1502
    %4175 = vmatprep.subr.bf16.mxu0 %v1507
    %4176 = vmatpush1.bf16.msra.mxu0 %v1506
    %4177 = vmatprep.subr.bf16.mxu0 %v1511
    %4178 = vmatpush1.bf16.msra.mxu0 %v1510
    %4179 = vmatprep.subr.bf16.mxu0 %v1515
    %4180 = vmatpush1.bf16.msra.mxu0 %v1514
    %4181 = vmatprep.subr.bf16.mxu0 %v1519
    %4182 = vmatpush1.bf16.msra.mxu0 %v1518
    %4183 = vmatprep.subr.bf16.mxu0 %v1523
    %4184 = vmatpush1.bf16.msra.mxu0 %v1522
    %4185 = vmatprep.subr.bf16.mxu0 %v1527
    %4186 = vmatpush1.bf16.msra.mxu0 %v1526
    %4187 = vmatprep.subr.bf16.mxu0 %v1531
    %4188 = vmatpush1.bf16.msra.mxu0 %v1530
    %4189 = vmatprep.subr.bf16.mxu0 %v1535
    %4190 = vmatpush1.bf16.msra.mxu0 %v1534
    %4191 = vmatprep.subr.bf16.mxu0 %v1539
    %4192 = vmatpush1.bf16.msra.mxu0 %v1538
    %4193 = vmatprep.subr.bf16.mxu0 %v1543
    %4194 = vmatpush1.bf16.msra.mxu0 %v1542
    %4195 = vmatprep.subr.bf16.mxu0 %v1547
    %4196 = vmatpush1.bf16.msra.mxu0 %v1546
    %4197 = vmatprep.subr.bf16.mxu0 %v1551
    %4198 = vmatpush1.bf16.msra.mxu0 %v1550
    %4199 = vmatprep.mubr.bf16.mxu0 %v3933
    %4200 = vmatmul.mubr.bf16.gmra.mrb[0].mxu0 %v3932
    %v4201 = vpop.f32.mrb[0].mxu0
    %v4202 = vadd.f32 %v4161, %v4201
    %v4203 = vpop.f32.mrb[0].mxu0
    %v4204 = vadd.f32 %v4163, %v4203
    %v4205 = vpop.f32.mrb[0].mxu0
    %v4206 = vpop.f32.mrb[0].mxu0
    %4207 = vdwg.mxu0
    %4208 = vmatprep.subr.bf16.mxu0 %v1429
    %4209 = vmatpush1.bf16.msra.mxu0 %v1428
    %4210 = vmatprep.subr.bf16.mxu0 %v1433
    %4211 = vmatpush1.bf16.msra.mxu0 %v1432
    %4212 = vmatprep.subr.bf16.mxu0 %v1437
    %4213 = vmatpush1.bf16.msra.mxu0 %v1436
    %4214 = vmatprep.subr.bf16.mxu0 %v1441
    %4215 = vmatpush1.bf16.msra.mxu0 %v1440
    %4216 = vmatprep.subr.bf16.mxu0 %v1445
    %4217 = vmatpush1.bf16.msra.mxu0 %v1444
    %4218 = vmatprep.subr.bf16.mxu0 %v1449
    %4219 = vmatpush1.bf16.msra.mxu0 %v1448
    %4220 = vmatprep.subr.bf16.mxu0 %v1453
    %4221 = vmatpush1.bf16.msra.mxu0 %v1452
    %4222 = vmatprep.subr.bf16.mxu0 %v1457
    %4223 = vmatpush1.bf16.msra.mxu0 %v1456
    %4224 = vmatprep.subr.bf16.mxu0 %v1461
    %4225 = vmatpush1.bf16.msra.mxu0 %v1460
    %4226 = vmatprep.subr.bf16.mxu0 %v1465
    %4227 = vmatpush1.bf16.msra.mxu0 %v1464
    %4228 = vmatprep.subr.bf16.mxu0 %v1469
    %4229 = vmatpush1.bf16.msra.mxu0 %v1468
    %4230 = vmatprep.subr.bf16.mxu0 %v1473
    %4231 = vmatpush1.bf16.msra.mxu0 %v1472
    %4232 = vmatprep.subr.bf16.mxu0 %v1477
    %4233 = vmatpush1.bf16.msra.mxu0 %v1476
    %4234 = vmatprep.subr.bf16.mxu0 %v1481
    %4235 = vmatpush1.bf16.msra.mxu0 %v1480
    %4236 = vmatprep.subr.bf16.mxu0 %v1485
    %4237 = vmatpush1.bf16.msra.mxu0 %v1484
    %4238 = vmatprep.subr.bf16.mxu0 %v1489
    %4239 = vmatpush1.bf16.msra.mxu0 %v1488
    %4240 = vmatprep.mubr.bf16.mxu0 %v3931
    %4241 = vmatmul.mubr.bf16.gmra.mrb[0].mxu0 %v3930
    %v4242 = vpop.f32.mrb[0].mxu0
    %v4243 = vadd.f32 0.0, %v4242
    %v4244 = vpop.f32.mrb[0].mxu0
    %v4245 = vadd.f32 0.0, %v4244
    %v4246 = vpop.f32.mrb[0].mxu0
    %v4247 = vpop.f32.mrb[0].mxu0
    %4248 = vdwg.mxu0
    %4249 = vmatprep.subr.bf16.mxu0 %v1493
    %4250 = vmatpush1.bf16.msra.mxu0 %v1492
    %4251 = vmatprep.subr.bf16.mxu0 %v1497
    %4252 = vmatpush1.bf16.msra.mxu0 %v1496
    %4253 = vmatprep.subr.bf16.mxu0 %v1501
    %4254 = vmatpush1.bf16.msra.mxu0 %v1500
    %4255 = vmatprep.subr.bf16.mxu0 %v1505
    %4256 = vmatpush1.bf16.msra.mxu0 %v1504
    %4257 = vmatprep.subr.bf16.mxu0 %v1509
    %4258 = vmatpush1.bf16.msra.mxu0 %v1508
    %4259 = vmatprep.subr.bf16.mxu0 %v1513
    %4260 = vmatpush1.bf16.msra.mxu0 %v1512
    %4261 = vmatprep.subr.bf16.mxu0 %v1517
    %4262 = vmatpush1.bf16.msra.mxu0 %v1516
    %4263 = vmatprep.subr.bf16.mxu0 %v1521
    %4264 = vmatpush1.bf16.msra.mxu0 %v1520
    %4265 = vmatprep.subr.bf16.mxu0 %v1525
    %4266 = vmatpush1.bf16.msra.mxu0 %v1524
    %4267 = vmatprep.subr.bf16.mxu0 %v1529
    %4268 = vmatpush1.bf16.msra.mxu0 %v1528
    %4269 = vmatprep.subr.bf16.mxu0 %v1533
    %4270 = vmatpush1.bf16.msra.mxu0 %v1532
    %4271 = vmatprep.subr.bf16.mxu0 %v1537
    %4272 = vmatpush1.bf16.msra.mxu0 %v1536
    %4273 = vmatprep.subr.bf16.mxu0 %v1541
    %4274 = vmatpush1.bf16.msra.mxu0 %v1540
    %4275 = vmatprep.subr.bf16.mxu0 %v1545
    %4276 = vmatpush1.bf16.msra.mxu0 %v1544
    %4277 = vmatprep.subr.bf16.mxu0 %v1549
    %4278 = vmatpush1.bf16.msra.mxu0 %v1548
    %4279 = vmatprep.subr.bf16.mxu0 %v1553
    %4280 = vmatpush1.bf16.msra.mxu0 %v1552
    %4281 = vmatprep.mubr.bf16.mxu0 %v3933
    %4282 = vmatmul.mubr.bf16.gmra.mrb[0].mxu0 %v3932
    %v4283 = vpop.f32.mrb[0].mxu0
    %v4284 = vadd.f32 %v4243, %v4283
    %v4285 = vpop.f32.mrb[0].mxu0
    %v4286 = vadd.f32 %v4245, %v4285
    %v4287 = vpop.f32.mrb[0].mxu0
    %v4288 = vpop.f32.mrb[0].mxu0
    %4289 = vdwg.mxu0
    %v4290 = vadd.f32 %v701, %v4202
    %v4291 = vadd.f32 %v703, %v4204
    %v4292 = vadd.f32 %v774, %v4284
    %v4293 = vadd.f32 %v776, %v4286
    %v4294 = vxor.u32 %v4290, 2147483648
    %v4295 = vxor.u32 %v4291, 2147483648
    %v4296 = vxor.u32 %v4292, 2147483648
    %v4297 = vxor.u32 %v4293, 2147483648
    %v4298 = vmul.f32 %v4294, 1.442695
    %v4299 = vpow.pop %v4298
    %v4300 = vmul.f32 %v4295, 1.442695
    %v4301 = vpow.pop %v4300
    %v4302 = vmul.f32 %v4296, 1.442695
    %v4303 = vpow.pop %v4302
    %v4304 = vmul.f32 %v4297, 1.442695
    %v4305 = vpow.pop %v4304
    %v4306 = vadd.f32 %v4299, 1.0
    %v4307 = vadd.f32 %v4301, 1.0
    %v4308 = vadd.f32 %v4303, 1.0
    %v4309 = vadd.f32 %v4305, 1.0
    %v4310 = vrcp.pop %v4306
    %v4311 = vmul.f32 1.0, %v4310
    %v4312 = vrcp.pop %v4307
    %v4313 = vmul.f32 1.0, %v4312
    %v4314 = vrcp.pop %v4308
    %v4315 = vmul.f32 1.0, %v4314
    %v4316 = vrcp.pop %v4309
    %v4317 = vmul.f32 1.0, %v4316
    %4318 = vmatprep.subr.bf16.mxu0 %v1747
    %4319 = vmatpush1.bf16.msra.mxu0 %v1746
    %4320 = vmatprep.subr.bf16.mxu0 %v1751
    %4321 = vmatpush1.bf16.msra.mxu0 %v1750
    %4322 = vmatprep.subr.bf16.mxu0 %v1755
    %4323 = vmatpush1.bf16.msra.mxu0 %v1754
    %4324 = vmatprep.subr.bf16.mxu0 %v1759
    %4325 = vmatpush1.bf16.msra.mxu0 %v1758
    %4326 = vmatprep.subr.bf16.mxu0 %v1763
    %4327 = vmatpush1.bf16.msra.mxu0 %v1762
    %4328 = vmatprep.subr.bf16.mxu0 %v1767
    %4329 = vmatpush1.bf16.msra.mxu0 %v1766
    %4330 = vmatprep.subr.bf16.mxu0 %v1771
    %4331 = vmatpush1.bf16.msra.mxu0 %v1770
    %4332 = vmatprep.subr.bf16.mxu0 %v1775
    %4333 = vmatpush1.bf16.msra.mxu0 %v1774
    %4334 = vmatprep.subr.bf16.mxu0 %v1779
    %4335 = vmatpush1.bf16.msra.mxu0 %v1778
    %4336 = vmatprep.subr.bf16.mxu0 %v1783
    %4337 = vmatpush1.bf16.msra.mxu0 %v1782
    %4338 = vmatprep.subr.bf16.mxu0 %v1787
    %4339 = vmatpush1.bf16.msra.mxu0 %v1786
    %4340 = vmatprep.subr.bf16.mxu0 %v1791
    %4341 = vmatpush1.bf16.msra.mxu0 %v1790
    %4342 = vmatprep.subr.bf16.mxu0 %v1795
    %4343 = vmatpush1.bf16.msra.mxu0 %v1794
    %4344 = vmatprep.subr.bf16.mxu0 %v1799
    %4345 = vmatpush1.bf16.msra.mxu0 %v1798
    %4346 = vmatprep.subr.bf16.mxu0 %v1803
    %4347 = vmatpush1.bf16.msra.mxu0 %v1802
    %4348 = vmatprep.subr.bf16.mxu0 %v1807
    %4349 = vmatpush1.bf16.msra.mxu0 %v1806
    %4350 = vmatprep.mubr.bf16.mxu0 %v3931
    %4351 = vmatmul.mubr.bf16.gmra.mrb[0].mxu0 %v3930
    %v4352 = vpop.f32.mrb[0].mxu0
    %v4353 = vadd.f32 0.0, %v4352
    %v4354 = vpop.f32.mrb[0].mxu0
    %v4355 = vadd.f32 0.0, %v4354
    %v4356 = vpop.f32.mrb[0].mxu0
    %v4357 = vpop.f32.mrb[0].mxu0
    %4358 = vdwg.mxu0
    %4359 = vmatprep.subr.bf16.mxu0 %v1811
    %4360 = vmatpush1.bf16.msra.mxu0 %v1810
    %4361 = vmatprep.subr.bf16.mxu0 %v1815
    %4362 = vmatpush1.bf16.msra.mxu0 %v1814
    %4363 = vmatprep.subr.bf16.mxu0 %v1819
    %4364 = vmatpush1.bf16.msra.mxu0 %v1818
    %4365 = vmatprep.subr.bf16.mxu0 %v1823
    %4366 = vmatpush1.bf16.msra.mxu0 %v1822
    %4367 = vmatprep.subr.bf16.mxu0 %v1827
    %4368 = vmatpush1.bf16.msra.mxu0 %v1826
    %4369 = vmatprep.subr.bf16.mxu0 %v1831
    %4370 = vmatpush1.bf16.msra.mxu0 %v1830
    %4371 = vmatprep.subr.bf16.mxu0 %v1835
    %4372 = vmatpush1.bf16.msra.mxu0 %v1834
    %4373 = vmatprep.subr.bf16.mxu0 %v1839
    %4374 = vmatpush1.bf16.msra.mxu0 %v1838
    %4375 = vmatprep.subr.bf16.mxu0 %v1843
    %4376 = vmatpush1.bf16.msra.mxu0 %v1842
    %4377 = vmatprep.subr.bf16.mxu0 %v1847
    %4378 = vmatpush1.bf16.msra.mxu0 %v1846
    %4379 = vmatprep.subr.bf16.mxu0 %v1851
    %4380 = vmatpush1.bf16.msra.mxu0 %v1850
    %4381 = vmatprep.subr.bf16.mxu0 %v1855
    %4382 = vmatpush1.bf16.msra.mxu0 %v1854
    %4383 = vmatprep.subr.bf16.mxu0 %v1859
    %4384 = vmatpush1.bf16.msra.mxu0 %v1858
    %4385 = vmatprep.subr.bf16.mxu0 %v1863
    %4386 = vmatpush1.bf16.msra.mxu0 %v1862
    %4387 = vmatprep.subr.bf16.mxu0 %v1867
    %4388 = vmatpush1.bf16.msra.mxu0 %v1866
    %4389 = vmatprep.subr.bf16.mxu0 %v1871
    %4390 = vmatpush1.bf16.msra.mxu0 %v1870
    %4391 = vmatprep.mubr.bf16.mxu0 %v3933
    %4392 = vmatmul.mubr.bf16.gmra.mrb[0].mxu0 %v3932
    %v4393 = vpop.f32.mrb[0].mxu0
    %v4394 = vadd.f32 %v4353, %v4393
    %v4395 = vpop.f32.mrb[0].mxu0
    %v4396 = vadd.f32 %v4355, %v4395
    %v4397 = vpop.f32.mrb[0].mxu0
    %v4398 = vpop.f32.mrb[0].mxu0
    %4399 = vdwg.mxu0
    %4400 = vmatprep.subr.bf16.mxu0 %v1749
    %4401 = vmatpush1.bf16.msra.mxu0 %v1748
    %4402 = vmatprep.subr.bf16.mxu0 %v1753
    %4403 = vmatpush1.bf16.msra.mxu0 %v1752
    %4404 = vmatprep.subr.bf16.mxu0 %v1757
    %4405 = vmatpush1.bf16.msra.mxu0 %v1756
    %4406 = vmatprep.subr.bf16.mxu0 %v1761
    %4407 = vmatpush1.bf16.msra.mxu0 %v1760
    %4408 = vmatprep.subr.bf16.mxu0 %v1765
    %4409 = vmatpush1.bf16.msra.mxu0 %v1764
    %4410 = vmatprep.subr.bf16.mxu0 %v1769
    %4411 = vmatpush1.bf16.msra.mxu0 %v1768
    %4412 = vmatprep.subr.bf16.mxu0 %v1773
    %4413 = vmatpush1.bf16.msra.mxu0 %v1772
    %4414 = vmatprep.subr.bf16.mxu0 %v1777
    %4415 = vmatpush1.bf16.msra.mxu0 %v1776
    %4416 = vmatprep.subr.bf16.mxu0 %v1781
    %4417 = vmatpush1.bf16.msra.mxu0 %v1780
    %4418 = vmatprep.subr.bf16.mxu0 %v1785
    %4419 = vmatpush1.bf16.msra.mxu0 %v1784
    %4420 = vmatprep.subr.bf16.mxu0 %v1789
    %4421 = vmatpush1.bf16.msra.mxu0 %v1788
    %4422 = vmatprep.subr.bf16.mxu0 %v1793
    %4423 = vmatpush1.bf16.msra.mxu0 %v1792
    %4424 = vmatprep.subr.bf16.mxu0 %v1797
    %4425 = vmatpush1.bf16.msra.mxu0 %v1796
    %4426 = vmatprep.subr.bf16.mxu0 %v1801
    %4427 = vmatpush1.bf16.msra.mxu0 %v1800
    %4428 = vmatprep.subr.bf16.mxu0 %v1805
    %4429 = vmatpush1.bf16.msra.mxu0 %v1804
    %4430 = vmatprep.subr.bf16.mxu0 %v1809
    %4431 = vmatpush1.bf16.msra.mxu0 %v1808
    %4432 = vmatprep.mubr.bf16.mxu0 %v3931
    %4433 = vmatmul.mubr.bf16.gmra.mrb[0].mxu0 %v3930
    %v4434 = vpop.f32.mrb[0].mxu0
    %v4435 = vadd.f32 0.0, %v4434
    %v4436 = vpop.f32.mrb[0].mxu0
    %v4437 = vadd.f32 0.0, %v4436
    %v4438 = vpop.f32.mrb[0].mxu0
    %v4439 = vpop.f32.mrb[0].mxu0
    %4440 = vdwg.mxu0
    %4441 = vmatprep.subr.bf16.mxu0 %v1813
    %4442 = vmatpush1.bf16.msra.mxu0 %v1812
    %4443 = vmatprep.subr.bf16.mxu0 %v1817
    %4444 = vmatpush1.bf16.msra.mxu0 %v1816
    %4445 = vmatprep.subr.bf16.mxu0 %v1821
    %4446 = vmatpush1.bf16.msra.mxu0 %v1820
    %4447 = vmatprep.subr.bf16.mxu0 %v1825
    %4448 = vmatpush1.bf16.msra.mxu0 %v1824
    %4449 = vmatprep.subr.bf16.mxu0 %v1829
    %4450 = vmatpush1.bf16.msra.mxu0 %v1828
    %4451 = vmatprep.subr.bf16.mxu0 %v1833
    %4452 = vmatpush1.bf16.msra.mxu0 %v1832
    %4453 = vmatprep.subr.bf16.mxu0 %v1837
    %4454 = vmatpush1.bf16.msra.mxu0 %v1836
    %4455 = vmatprep.subr.bf16.mxu0 %v1841
    %4456 = vmatpush1.bf16.msra.mxu0 %v1840
    %4457 = vmatprep.subr.bf16.mxu0 %v1845
    %4458 = vmatpush1.bf16.msra.mxu0 %v1844
    %4459 = vmatprep.subr.bf16.mxu0 %v1849
    %4460 = vmatpush1.bf16.msra.mxu0 %v1848
    %4461 = vmatprep.subr.bf16.mxu0 %v1853
    %4462 = vmatpush1.bf16.msra.mxu0 %v1852
    %4463 = vmatprep.subr.bf16.mxu0 %v1857
    %4464 = vmatpush1.bf16.msra.mxu0 %v1856
    %4465 = vmatprep.subr.bf16.mxu0 %v1861
    %4466 = vmatpush1.bf16.msra.mxu0 %v1860
    %4467 = vmatprep.subr.bf16.mxu0 %v1865
    %4468 = vmatpush1.bf16.msra.mxu0 %v1864
    %4469 = vmatprep.subr.bf16.mxu0 %v1869
    %4470 = vmatpush1.bf16.msra.mxu0 %v1868
    %4471 = vmatprep.subr.bf16.mxu0 %v1873
    %4472 = vmatpush1.bf16.msra.mxu0 %v1872
    %4473 = vmatprep.mubr.bf16.mxu0 %v3933
    %4474 = vmatmul.mubr.bf16.gmra.mrb[0].mxu0 %v3932
    %v4475 = vpop.f32.mrb[0].mxu0
    %v4476 = vadd.f32 %v4435, %v4475
    %v4477 = vpop.f32.mrb[0].mxu0
    %v4478 = vadd.f32 %v4437, %v4477
    %v4479 = vpop.f32.mrb[0].mxu0
    %v4480 = vpop.f32.mrb[0].mxu0
    %4481 = vdwg.mxu0
    %v4482 = vadd.f32 %v847, %v4394
    %v4483 = vadd.f32 %v849, %v4396
    %v4484 = vadd.f32 %v920, %v4476
    %v4485 = vadd.f32 %v922, %v4478
    %v4486 = vtanh.pop %v4482
    %v4487 = vtanh.pop %v4483
    %v4488 = vtanh.pop %v4484
    %v4489 = vtanh.pop %v4485
    %4490 = vmatprep.subr.bf16.mxu0 %v2047
    %4491 = vmatpush1.bf16.msra.mxu0 %v2046
    %4492 = vmatprep.subr.bf16.mxu0 %v2051
    %4493 = vmatpush1.bf16.msra.mxu0 %v2050
    %4494 = vmatprep.subr.bf16.mxu0 %v2055
    %4495 = vmatpush1.bf16.msra.mxu0 %v2054
    %4496 = vmatprep.subr.bf16.mxu0 %v2059
    %4497 = vmatpush1.bf16.msra.mxu0 %v2058
    %4498 = vmatprep.subr.bf16.mxu0 %v2063
    %4499 = vmatpush1.bf16.msra.mxu0 %v2062
    %4500 = vmatprep.subr.bf16.mxu0 %v2067
    %4501 = vmatpush1.bf16.msra.mxu0 %v2066
    %4502 = vmatprep.subr.bf16.mxu0 %v2071
    %4503 = vmatpush1.bf16.msra.mxu0 %v2070
    %4504 = vmatprep.subr.bf16.mxu0 %v2075
    %4505 = vmatpush1.bf16.msra.mxu0 %v2074
    %4506 = vmatprep.subr.bf16.mxu0 %v2079
    %4507 = vmatpush1.bf16.msra.mxu0 %v2078
    %4508 = vmatprep.subr.bf16.mxu0 %v2083
    %4509 = vmatpush1.bf16.msra.mxu0 %v2082
    %4510 = vmatprep.subr.bf16.mxu0 %v2087
    %4511 = vmatpush1.bf16.msra.mxu0 %v2086
    %4512 = vmatprep.subr.bf16.mxu0 %v2091
    %4513 = vmatpush1.bf16.msra.mxu0 %v2090
    %4514 = vmatprep.subr.bf16.mxu0 %v2095
    %4515 = vmatpush1.bf16.msra.mxu0 %v2094
    %4516 = vmatprep.subr.bf16.mxu0 %v2099
    %4517 = vmatpush1.bf16.msra.mxu0 %v2098
    %4518 = vmatprep.subr.bf16.mxu0 %v2103
    %4519 = vmatpush1.bf16.msra.mxu0 %v2102
    %4520 = vmatprep.subr.bf16.mxu0 %v2107
    %4521 = vmatpush1.bf16.msra.mxu0 %v2106
    %4522 = vmatprep.mubr.bf16.mxu0 %v3931
    %4523 = vmatmul.mubr.bf16.gmra.mrb[0].mxu0 %v3930
    %v4524 = vpop.f32.mrb[0].mxu0
    %v4525 = vadd.f32 0.0, %v4524
    %v4526 = vpop.f32.mrb[0].mxu0
    %v4527 = vadd.f32 0.0, %v4526
    %v4528 = vpop.f32.mrb[0].mxu0
    %v4529 = vpop.f32.mrb[0].mxu0
    %4530 = vdwg.mxu0
    %4531 = vmatprep.subr.bf16.mxu0 %v2111
    %4532 = vmatpush1.bf16.msra.mxu0 %v2110
    %4533 = vmatprep.subr.bf16.mxu0 %v2115
    %4534 = vmatpush1.bf16.msra.mxu0 %v2114
    %4535 = vmatprep.subr.bf16.mxu0 %v2119
    %4536 = vmatpush1.bf16.msra.mxu0 %v2118
    %4537 = vmatprep.subr.bf16.mxu0 %v2123
    %4538 = vmatpush1.bf16.msra.mxu0 %v2122
    %4539 = vmatprep.subr.bf16.mxu0 %v2127
    %4540 = vmatpush1.bf16.msra.mxu0 %v2126
    %4541 = vmatprep.subr.bf16.mxu0 %v2131
    %4542 = vmatpush1.bf16.msra.mxu0 %v2130
    %4543 = vmatprep.subr.bf16.mxu0 %v2135
    %4544 = vmatpush1.bf16.msra.mxu0 %v2134
    %4545 = vmatprep.subr.bf16.mxu0 %v2139
    %4546 = vmatpush1.bf16.msra.mxu0 %v2138
    %4547 = vmatprep.subr.bf16.mxu0 %v2143
    %4548 = vmatpush1.bf16.msra.mxu0 %v2142
    %4549 = vmatprep.subr.bf16.mxu0 %v2147
    %4550 = vmatpush1.bf16.msra.mxu0 %v2146
    %4551 = vmatprep.subr.bf16.mxu0 %v2151
    %4552 = vmatpush1.bf16.msra.mxu0 %v2150
    %4553 = vmatprep.subr.bf16.mxu0 %v2155
    %4554 = vmatpush1.bf16.msra.mxu0 %v2154
    %4555 = vmatprep.subr.bf16.mxu0 %v2159
    %4556 = vmatpush1.bf16.msra.mxu0 %v2158
    %4557 = vmatprep.subr.bf16.mxu0 %v2163
    %4558 = vmatpush1.bf16.msra.mxu0 %v2162
    %4559 = vmatprep.subr.bf16.mxu0 %v2167
    %4560 = vmatpush1.bf16.msra.mxu0 %v2166
    %4561 = vmatprep.subr.bf16.mxu0 %v2171
    %4562 = vmatpush1.bf16.msra.mxu0 %v2170
    %4563 = vmatprep.mubr.bf16.mxu0 %v3933
    %4564 = vmatmul.mubr.bf16.gmra.mrb[0].mxu0 %v3932
    %v4565 = vpop.f32.mrb[0].mxu0
    %v4566 = vadd.f32 %v4525, %v4565
    %v4567 = vpop.f32.mrb[0].mxu0
    %v4568 = vadd.f32 %v4527, %v4567
    %v4569 = vpop.f32.mrb[0].mxu0
    %v4570 = vpop.f32.mrb[0].mxu0
    %4571 = vdwg.mxu0
    %4572 = vmatprep.subr.bf16.mxu0 %v2049
    %4573 = vmatpush1.bf16.msra.mxu0 %v2048
    %4574 = vmatprep.subr.bf16.mxu0 %v2053
    %4575 = vmatpush1.bf16.msra.mxu0 %v2052
    %4576 = vmatprep.subr.bf16.mxu0 %v2057
    %4577 = vmatpush1.bf16.msra.mxu0 %v2056
    %4578 = vmatprep.subr.bf16.mxu0 %v2061
    %4579 = vmatpush1.bf16.msra.mxu0 %v2060
    %4580 = vmatprep.subr.bf16.mxu0 %v2065
    %4581 = vmatpush1.bf16.msra.mxu0 %v2064
    %4582 = vmatprep.subr.bf16.mxu0 %v2069
    %4583 = vmatpush1.bf16.msra.mxu0 %v2068
    %4584 = vmatprep.subr.bf16.mxu0 %v2073
    %4585 = vmatpush1.bf16.msra.mxu0 %v2072
    %4586 = vmatprep.subr.bf16.mxu0 %v2077
    %4587 = vmatpush1.bf16.msra.mxu0 %v2076
    %4588 = vmatprep.subr.bf16.mxu0 %v2081
    %4589 = vmatpush1.bf16.msra.mxu0 %v2080
    %4590 = vmatprep.subr.bf16.mxu0 %v2085
    %4591 = vmatpush1.bf16.msra.mxu0 %v2084
    %4592 = vmatprep.subr.bf16.mxu0 %v2089
    %4593 = vmatpush1.bf16.msra.mxu0 %v2088
    %4594 = vmatprep.subr.bf16.mxu0 %v2093
    %4595 = vmatpush1.bf16.msra.mxu0 %v2092
    %4596 = vmatprep.subr.bf16.mxu0 %v2097
    %4597 = vmatpush1.bf16.msra.mxu0 %v2096
    %4598 = vmatprep.subr.bf16.mxu0 %v2101
    %4599 = vmatpush1.bf16.msra.mxu0 %v2100
    %4600 = vmatprep.subr.bf16.mxu0 %v2105
    %4601 = vmatpush1.bf16.msra.mxu0 %v2104
    %4602 = vmatprep.subr.bf16.mxu0 %v2109
    %4603 = vmatpush1.bf16.msra.mxu0 %v2108
    %4604 = vmatprep.mubr.bf16.mxu0 %v3931
    %4605 = vmatmul.mubr.bf16.gmra.mrb[0].mxu0 %v3930
    %v4606 = vpop.f32.mrb[0].mxu0
    %v4607 = vadd.f32 0.0, %v4606
    %v4608 = vpop.f32.mrb[0].mxu0
    %v4609 = vadd.f32 0.0, %v4608
    %v4610 = vpop.f32.mrb[0].mxu0
    %v4611 = vpop.f32.mrb[0].mxu0
    %4612 = vdwg.mxu0
    %4613 = vmatprep.subr.bf16.mxu0 %v2113
    %4614 = vmatpush1.bf16.msra.mxu0 %v2112
    %4615 = vmatprep.subr.bf16.mxu0 %v2117
    %4616 = vmatpush1.bf16.msra.mxu0 %v2116
    %4617 = vmatprep.subr.bf16.mxu0 %v2121
    %4618 = vmatpush1.bf16.msra.mxu0 %v2120
    %4619 = vmatprep.subr.bf16.mxu0 %v2125
    %4620 = vmatpush1.bf16.msra.mxu0 %v2124
    %4621 = vmatprep.subr.bf16.mxu0 %v2129
    %4622 = vmatpush1.bf16.msra.mxu0 %v2128
    %4623 = vmatprep.subr.bf16.mxu0 %v2133
    %4624 = vmatpush1.bf16.msra.mxu0 %v2132
    %4625 = vmatprep.subr.bf16.mxu0 %v2137
    %4626 = vmatpush1.bf16.msra.mxu0 %v2136
    %4627 = vmatprep.subr.bf16.mxu0 %v2141
    %4628 = vmatpush1.bf16.msra.mxu0 %v2140
    %4629 = vmatprep.subr.bf16.mxu0 %v2145
    %4630 = vmatpush1.bf16.msra.mxu0 %v2144
    %4631 = vmatprep.subr.bf16.mxu0 %v2149
    %4632 = vmatpush1.bf16.msra.mxu0 %v2148
    %4633 = vmatprep.subr.bf16.mxu0 %v2153
    %4634 = vmatpush1.bf16.msra.mxu0 %v2152
    %4635 = vmatprep.subr.bf16.mxu0 %v2157
    %4636 = vmatpush1.bf16.msra.mxu0 %v2156
    %4637 = vmatprep.subr.bf16.mxu0 %v2161
    %4638 = vmatpush1.bf16.msra.mxu0 %v2160
    %4639 = vmatprep.subr.bf16.mxu0 %v2165
    %4640 = vmatpush1.bf16.msra.mxu0 %v2164
    %4641 = vmatprep.subr.bf16.mxu0 %v2169
    %4642 = vmatpush1.bf16.msra.mxu0 %v2168
    %4643 = vmatprep.subr.bf16.mxu0 %v2173
    %4644 = vmatpush1.bf16.msra.mxu0 %v2172
    %4645 = vmatprep.mubr.bf16.mxu0 %v3933
    %4646 = vmatmul.mubr.bf16.gmra.mrb[0].mxu0 %v3932
    %v4647 = vpop.f32.mrb[0].mxu0
    %v4648 = vadd.f32 %v4607, %v4647
    %v4649 = vpop.f32.mrb[0].mxu0
    %v4650 = vadd.f32 %v4609, %v4649
    %v4651 = vpop.f32.mrb[0].mxu0
    %v4652 = vpop.f32.mrb[0].mxu0
    %4653 = vdwg.mxu0
    %v4654 = vadd.f32 %v993, %v4566
    %v4655 = vadd.f32 %v995, %v4568
    %v4656 = vadd.f32 %v1066, %v4648
    %v4657 = vadd.f32 %v1068, %v4650
    %v4658 = vxor.u32 %v4654, 2147483648
    %v4659 = vxor.u32 %v4655, 2147483648
    %v4660 = vxor.u32 %v4656, 2147483648
    %v4661 = vxor.u32 %v4657, 2147483648
    %v4662 = vmul.f32 %v4658, 1.442695
    %v4663 = vpow.pop %v4662
    %v4664 = vmul.f32 %v4659, 1.442695
    %v4665 = vpow.pop %v4664
    %v4666 = vmul.f32 %v4660, 1.442695
    %v4667 = vpow.pop %v4666
    %v4668 = vmul.f32 %v4661, 1.442695
    %v4669 = vpow.pop %v4668
    %v4670 = vadd.f32 %v4663, 1.0
    %v4671 = vadd.f32 %v4665, 1.0
    %v4672 = vadd.f32 %v4667, 1.0
    %v4673 = vadd.f32 %v4669, 1.0
    %v4674 = vrcp.pop %v4670
    %v4675 = vmul.f32 1.0, %v4674
    %v4676 = vrcp.pop %v4671
    %v4677 = vmul.f32 1.0, %v4676
    %v4678 = vrcp.pop %v4672
    %v4679 = vmul.f32 1.0, %v4678
    %v4680 = vrcp.pop %v4673
    %v4681 = vmul.f32 1.0, %v4680
    %v4682 = vmul.f32 %v4311, %v3918
    %v4683 = vmul.f32 %v4313, %v3919
    %v4684 = vmul.f32 %v4315, %v3920
    %v4685 = vmul.f32 %v4317, %v3921
    %v4686 = vmul.f32 %v4119, %v4486
    %v4687 = vmul.f32 %v4121, %v4487
    %v4688 = vmul.f32 %v4123, %v4488
    %v4689 = vmul.f32 %v4125, %v4489
    %v4690 = vadd.f32 %v4682, %v4686
    %v4691 = vadd.f32 %v4683, %v4687
    %v4692 = vadd.f32 %v4684, %v4688
    %v4693 = vadd.f32 %v4685, %v4689
    %v4694 = vtanh.pop %v4690
    %v4695 = vtanh.pop %v4691
    %v4696 = vtanh.pop %v4692
    %v4697 = vtanh.pop %v4693
    %v4698 = vmul.f32 %v4675, %v4694
    %v4699 = vmul.f32 %v4677, %v4695
    %v4700 = vmul.f32 %v4679, %v4696
    %v4701 = vmul.f32 %v4681, %v4697
    %v4702 = vpack.c.bf16 %v4698, %v4698
    %v4703 = vpack.c.bf16 %v4699, %v4699
    %v4704 = vpack.c.bf16 %v4700, %v4700
    %v4705 = vpack.c.bf16 %v4701, %v4701
    %4706 = vmatprep.subr.bf16.mxu0 %v1107
    %4707 = vmatpush1.bf16.msra.mxu0 %v1106
    %4708 = vmatprep.subr.bf16.mxu0 %v1111
    %4709 = vmatpush1.bf16.msra.mxu0 %v1110
    %4710 = vmatprep.subr.bf16.mxu0 %v1115
    %4711 = vmatpush1.bf16.msra.mxu0 %v1114
    %4712 = vmatprep.subr.bf16.mxu0 %v1119
    %4713 = vmatpush1.bf16.msra.mxu0 %v1118
    %4714 = vmatprep.subr.bf16.mxu0 %v1123
    %4715 = vmatpush1.bf16.msra.mxu0 %v1122
    %4716 = vmatprep.subr.bf16.mxu0 %v1127
    %4717 = vmatpush1.bf16.msra.mxu0 %v1126
    %4718 = vmatprep.subr.bf16.mxu0 %v1131
    %4719 = vmatpush1.bf16.msra.mxu0 %v1130
    %4720 = vmatprep.subr.bf16.mxu0 %v1135
    %4721 = vmatpush1.bf16.msra.mxu0 %v1134
    %4722 = vmatprep.subr.bf16.mxu0 %v1139
    %4723 = vmatpush1.bf16.msra.mxu0 %v1138
    %4724 = vmatprep.subr.bf16.mxu0 %v1143
    %4725 = vmatpush1.bf16.msra.mxu0 %v1142
    %4726 = vmatprep.subr.bf16.mxu0 %v1147
    %4727 = vmatpush1.bf16.msra.mxu0 %v1146
    %4728 = vmatprep.subr.bf16.mxu0 %v1151
    %4729 = vmatpush1.bf16.msra.mxu0 %v1150
    %4730 = vmatprep.subr.bf16.mxu0 %v1155
    %4731 = vmatpush1.bf16.msra.mxu0 %v1154
    %4732 = vmatprep.subr.bf16.mxu0 %v1159
    %4733 = vmatpush1.bf16.msra.mxu0 %v1158
    %4734 = vmatprep.subr.bf16.mxu0 %v1163
    %4735 = vmatpush1.bf16.msra.mxu0 %v1162
    %4736 = vmatprep.subr.bf16.mxu0 %v1167
    %4737 = vmatpush1.bf16.msra.mxu0 %v1166
    %4738 = vmatprep.mubr.bf16.mxu0 %v4703
    %4739 = vmatmul.mubr.bf16.gmra.mrb[0].mxu0 %v4702
    %v4740 = vpop.f32.mrb[0].mxu0
    %v4741 = vadd.f32 0.0, %v4740
    %v4742 = vpop.f32.mrb[0].mxu0
    %v4743 = vadd.f32 0.0, %v4742
    %v4744 = vpop.f32.mrb[0].mxu0
    %v4745 = vpop.f32.mrb[0].mxu0
    %4746 = vdwg.mxu0
    %4747 = vmatprep.subr.bf16.mxu0 %v1171
    %4748 = vmatpush1.bf16.msra.mxu0 %v1170
    %4749 = vmatprep.subr.bf16.mxu0 %v1175
    %4750 = vmatpush1.bf16.msra.mxu0 %v1174
    %4751 = vmatprep.subr.bf16.mxu0 %v1179
    %4752 = vmatpush1.bf16.msra.mxu0 %v1178
    %4753 = vmatprep.subr.bf16.mxu0 %v1183
    %4754 = vmatpush1.bf16.msra.mxu0 %v1182
    %4755 = vmatprep.subr.bf16.mxu0 %v1187
    %4756 = vmatpush1.bf16.msra.mxu0 %v1186
    %4757 = vmatprep.subr.bf16.mxu0 %v1191
    %4758 = vmatpush1.bf16.msra.mxu0 %v1190
    %4759 = vmatprep.subr.bf16.mxu0 %v1195
    %4760 = vmatpush1.bf16.msra.mxu0 %v1194
    %4761 = vmatprep.subr.bf16.mxu0 %v1199
    %4762 = vmatpush1.bf16.msra.mxu0 %v1198
    %4763 = vmatprep.subr.bf16.mxu0 %v1203
    %4764 = vmatpush1.bf16.msra.mxu0 %v1202
    %4765 = vmatprep.subr.bf16.mxu0 %v1207
    %4766 = vmatpush1.bf16.msra.mxu0 %v1206
    %4767 = vmatprep.subr.bf16.mxu0 %v1211
    %4768 = vmatpush1.bf16.msra.mxu0 %v1210
    %4769 = vmatprep.subr.bf16.mxu0 %v1215
    %4770 = vmatpush1.bf16.msra.mxu0 %v1214
    %4771 = vmatprep.subr.bf16.mxu0 %v1219
    %4772 = vmatpush1.bf16.msra.mxu0 %v1218
    %4773 = vmatprep.subr.bf16.mxu0 %v1223
    %4774 = vmatpush1.bf16.msra.mxu0 %v1222
    %4775 = vmatprep.subr.bf16.mxu0 %v1227
    %4776 = vmatpush1.bf16.msra.mxu0 %v1226
    %4777 = vmatprep.subr.bf16.mxu0 %v1231
    %4778 = vmatpush1.bf16.msra.mxu0 %v1230
    %4779 = vmatprep.mubr.bf16.mxu0 %v4705
    %4780 = vmatmul.mubr.bf16.gmra.mrb[0].mxu0 %v4704
    %v4781 = vpop.f32.mrb[0].mxu0
    %v4782 = vadd.f32 %v4741, %v4781
    %v4783 = vpop.f32.mrb[0].mxu0
    %v4784 = vadd.f32 %v4743, %v4783
    %v4785 = vpop.f32.mrb[0].mxu0
    %v4786 = vpop.f32.mrb[0].mxu0
    %4787 = vdwg.mxu0
    %4788 = vmatprep.subr.bf16.mxu0 %v1109
    %4789 = vmatpush1.bf16.msra.mxu0 %v1108
    %4790 = vmatprep.subr.bf16.mxu0 %v1113
    %4791 = vmatpush1.bf16.msra.mxu0 %v1112
    %4792 = vmatprep.subr.bf16.mxu0 %v1117
    %4793 = vmatpush1.bf16.msra.mxu0 %v1116
    %4794 = vmatprep.subr.bf16.mxu0 %v1121
    %4795 = vmatpush1.bf16.msra.mxu0 %v1120
    %4796 = vmatprep.subr.bf16.mxu0 %v1125
    %4797 = vmatpush1.bf16.msra.mxu0 %v1124
    %4798 = vmatprep.subr.bf16.mxu0 %v1129
    %4799 = vmatpush1.bf16.msra.mxu0 %v1128
    %4800 = vmatprep.subr.bf16.mxu0 %v1133
    %4801 = vmatpush1.bf16.msra.mxu0 %v1132
    %4802 = vmatprep.subr.bf16.mxu0 %v1137
    %4803 = vmatpush1.bf16.msra.mxu0 %v1136
    %4804 = vmatprep.subr.bf16.mxu0 %v1141
    %4805 = vmatpush1.bf16.msra.mxu0 %v1140
    %4806 = vmatprep.subr.bf16.mxu0 %v1145
    %4807 = vmatpush1.bf16.msra.mxu0 %v1144
    %4808 = vmatprep.subr.bf16.mxu0 %v1149
    %4809 = vmatpush1.bf16.msra.mxu0 %v1148
    %4810 = vmatprep.subr.bf16.mxu0 %v1153
    %4811 = vmatpush1.bf16.msra.mxu0 %v1152
    %4812 = vmatprep.subr.bf16.mxu0 %v1157
    %4813 = vmatpush1.bf16.msra.mxu0 %v1156
    %4814 = vmatprep.subr.bf16.mxu0 %v1161
    %4815 = vmatpush1.bf16.msra.mxu0 %v1160
    %4816 = vmatprep.subr.bf16.mxu0 %v1165
    %4817 = vmatpush1.bf16.msra.mxu0 %v1164
    %4818 = vmatprep.subr.bf16.mxu0 %v1169
    %4819 = vmatpush1.bf16.msra.mxu0 %v1168
    %4820 = vmatprep.mubr.bf16.mxu0 %v4703
    %4821 = vmatmul.mubr.bf16.gmra.mrb[0].mxu0 %v4702
    %v4822 = vpop.f32.mrb[0].mxu0
    %v4823 = vadd.f32 0.0, %v4822
    %v4824 = vpop.f32.mrb[0].mxu0
    %v4825 = vadd.f32 0.0, %v4824
    %v4826 = vpop.f32.mrb[0].mxu0
    %v4827 = vpop.f32.mrb[0].mxu0
    %4828 = vdwg.mxu0
    %4829 = vmatprep.subr.bf16.mxu0 %v1173
    %4830 = vmatpush1.bf16.msra.mxu0 %v1172
    %4831 = vmatprep.subr.bf16.mxu0 %v1177
    %4832 = vmatpush1.bf16.msra.mxu0 %v1176
    %4833 = vmatprep.subr.bf16.mxu0 %v1181
    %4834 = vmatpush1.bf16.msra.mxu0 %v1180
    %4835 = vmatprep.subr.bf16.mxu0 %v1185
    %4836 = vmatpush1.bf16.msra.mxu0 %v1184
    %4837 = vmatprep.subr.bf16.mxu0 %v1189
    %4838 = vmatpush1.bf16.msra.mxu0 %v1188
    %4839 = vmatprep.subr.bf16.mxu0 %v1193
    %4840 = vmatpush1.bf16.msra.mxu0 %v1192
    %4841 = vmatprep.subr.bf16.mxu0 %v1197
    %4842 = vmatpush1.bf16.msra.mxu0 %v1196
    %4843 = vmatprep.subr.bf16.mxu0 %v1201
    %4844 = vmatpush1.bf16.msra.mxu0 %v1200
    %4845 = vmatprep.subr.bf16.mxu0 %v1205
    %4846 = vmatpush1.bf16.msra.mxu0 %v1204
    %4847 = vmatprep.subr.bf16.mxu0 %v1209
    %4848 = vmatpush1.bf16.msra.mxu0 %v1208
    %4849 = vmatprep.subr.bf16.mxu0 %v1213
    %4850 = vmatpush1.bf16.msra.mxu0 %v1212
    %4851 = vmatprep.subr.bf16.mxu0 %v1217
    %4852 = vmatpush1.bf16.msra.mxu0 %v1216
    %4853 = vmatprep.subr.bf16.mxu0 %v1221
    %4854 = vmatpush1.bf16.msra.mxu0 %v1220
    %4855 = vmatprep.subr.bf16.mxu0 %v1225
    %4856 = vmatpush1.bf16.msra.mxu0 %v1224
    %4857 = vmatprep.subr.bf16.mxu0 %v1229
    %4858 = vmatpush1.bf16.msra.mxu0 %v1228
    %4859 = vmatprep.subr.bf16.mxu0 %v1233
    %4860 = vmatpush1.bf16.msra.mxu0 %v1232
    %4861 = vmatprep.mubr.bf16.mxu0 %v4705
    %4862 = vmatmul.mubr.bf16.gmra.mrb[0].mxu0 %v4704
    %v4863 = vpop.f32.mrb[0].mxu0
    %v4864 = vadd.f32 %v4823, %v4863
    %v4865 = vpop.f32.mrb[0].mxu0
    %v4866 = vadd.f32 %v4825, %v4865
    %v4867 = vpop.f32.mrb[0].mxu0
    %v4868 = vpop.f32.mrb[0].mxu0
    %4869 = vdwg.mxu0
    %v4870 = vadd.f32 %v561, %v4782
    %v4871 = vadd.f32 %v563, %v4784
    %v4872 = vadd.f32 %v634, %v4864
    %v4873 = vadd.f32 %v636, %v4866
    %v4874 = vxor.u32 %v4870, 2147483648
    %v4875 = vxor.u32 %v4871, 2147483648
    %v4876 = vxor.u32 %v4872, 2147483648
    %v4877 = vxor.u32 %v4873, 2147483648
    %v4878 = vmul.f32 %v4874, 1.442695
    %v4879 = vpow.pop %v4878
    %v4880 = vmul.f32 %v4875, 1.442695
    %v4881 = vpow.pop %v4880
    %v4882 = vmul.f32 %v4876, 1.442695
    %v4883 = vpow.pop %v4882
    %v4884 = vmul.f32 %v4877, 1.442695
    %v4885 = vpow.pop %v4884
    %v4886 = vadd.f32 %v4879, 1.0
    %v4887 = vadd.f32 %v4881, 1.0
    %v4888 = vadd.f32 %v4883, 1.0
    %v4889 = vadd.f32 %v4885, 1.0
    %v4890 = vrcp.pop %v4886
    %v4891 = vmul.f32 1.0, %v4890
    %v4892 = vrcp.pop %v4887
    %v4893 = vmul.f32 1.0, %v4892
    %v4894 = vrcp.pop %v4888
    %v4895 = vmul.f32 1.0, %v4894
    %v4896 = vrcp.pop %v4889
    %v4897 = vmul.f32 1.0, %v4896
    %4898 = vmatprep.subr.bf16.mxu0 %v1427
    %4899 = vmatpush1.bf16.msra.mxu0 %v1426
    %4900 = vmatprep.subr.bf16.mxu0 %v1431
    %4901 = vmatpush1.bf16.msra.mxu0 %v1430
    %4902 = vmatprep.subr.bf16.mxu0 %v1435
    %4903 = vmatpush1.bf16.msra.mxu0 %v1434
    %4904 = vmatprep.subr.bf16.mxu0 %v1439
    %4905 = vmatpush1.bf16.msra.mxu0 %v1438
    %4906 = vmatprep.subr.bf16.mxu0 %v1443
    %4907 = vmatpush1.bf16.msra.mxu0 %v1442
    %4908 = vmatprep.subr.bf16.mxu0 %v1447
    %4909 = vmatpush1.bf16.msra.mxu0 %v1446
    %4910 = vmatprep.subr.bf16.mxu0 %v1451
    %4911 = vmatpush1.bf16.msra.mxu0 %v1450
    %4912 = vmatprep.subr.bf16.mxu0 %v1455
    %4913 = vmatpush1.bf16.msra.mxu0 %v1454
    %4914 = vmatprep.subr.bf16.mxu0 %v1459
    %4915 = vmatpush1.bf16.msra.mxu0 %v1458
    %4916 = vmatprep.subr.bf16.mxu0 %v1463
    %4917 = vmatpush1.bf16.msra.mxu0 %v1462
    %4918 = vmatprep.subr.bf16.mxu0 %v1467
    %4919 = vmatpush1.bf16.msra.mxu0 %v1466
    %4920 = vmatprep.subr.bf16.mxu0 %v1471
    %4921 = vmatpush1.bf16.msra.mxu0 %v1470
    %4922 = vmatprep.subr.bf16.mxu0 %v1475
    %4923 = vmatpush1.bf16.msra.mxu0 %v1474
    %4924 = vmatprep.subr.bf16.mxu0 %v1479
    %4925 = vmatpush1.bf16.msra.mxu0 %v1478
    %4926 = vmatprep.subr.bf16.mxu0 %v1483
    %4927 = vmatpush1.bf16.msra.mxu0 %v1482
    %4928 = vmatprep.subr.bf16.mxu0 %v1487
    %4929 = vmatpush1.bf16.msra.mxu0 %v1486
    %4930 = vmatprep.mubr.bf16.mxu0 %v4703
    %4931 = vmatmul.mubr.bf16.gmra.mrb[0].mxu0 %v4702
    %v4932 = vpop.f32.mrb[0].mxu0
    %v4933 = vadd.f32 0.0, %v4932
    %v4934 = vpop.f32.mrb[0].mxu0
    %v4935 = vadd.f32 0.0, %v4934
    %v4936 = vpop.f32.mrb[0].mxu0
    %v4937 = vpop.f32.mrb[0].mxu0
    %4938 = vdwg.mxu0
    %4939 = vmatprep.subr.bf16.mxu0 %v1491
    %4940 = vmatpush1.bf16.msra.mxu0 %v1490
    %4941 = vmatprep.subr.bf16.mxu0 %v1495
    %4942 = vmatpush1.bf16.msra.mxu0 %v1494
    %4943 = vmatprep.subr.bf16.mxu0 %v1499
    %4944 = vmatpush1.bf16.msra.mxu0 %v1498
    %4945 = vmatprep.subr.bf16.mxu0 %v1503
    %4946 = vmatpush1.bf16.msra.mxu0 %v1502
    %4947 = vmatprep.subr.bf16.mxu0 %v1507
    %4948 = vmatpush1.bf16.msra.mxu0 %v1506
    %4949 = vmatprep.subr.bf16.mxu0 %v1511
    %4950 = vmatpush1.bf16.msra.mxu0 %v1510
    %4951 = vmatprep.subr.bf16.mxu0 %v1515
    %4952 = vmatpush1.bf16.msra.mxu0 %v1514
    %4953 = vmatprep.subr.bf16.mxu0 %v1519
    %4954 = vmatpush1.bf16.msra.mxu0 %v1518
    %4955 = vmatprep.subr.bf16.mxu0 %v1523
    %4956 = vmatpush1.bf16.msra.mxu0 %v1522
    %4957 = vmatprep.subr.bf16.mxu0 %v1527
    %4958 = vmatpush1.bf16.msra.mxu0 %v1526
    %4959 = vmatprep.subr.bf16.mxu0 %v1531
    %4960 = vmatpush1.bf16.msra.mxu0 %v1530
    %4961 = vmatprep.subr.bf16.mxu0 %v1535
    %4962 = vmatpush1.bf16.msra.mxu0 %v1534
    %4963 = vmatprep.subr.bf16.mxu0 %v1539
    %4964 = vmatpush1.bf16.msra.mxu0 %v1538
    %4965 = vmatprep.subr.bf16.mxu0 %v1543
    %4966 = vmatpush1.bf16.msra.mxu0 %v1542
    %4967 = vmatprep.subr.bf16.mxu0 %v1547
    %4968 = vmatpush1.bf16.msra.mxu0 %v1546
    %4969 = vmatprep.subr.bf16.mxu0 %v1551
    %4970 = vmatpush1.bf16.msra.mxu0 %v1550
    %4971 = vmatprep.mubr.bf16.mxu0 %v4705
    %4972 = vmatmul.mubr.bf16.gmra.mrb[0].mxu0 %v4704
    %v4973 = vpop.f32.mrb[0].mxu0
    %v4974 = vadd.f32 %v4933, %v4973
    %v4975 = vpop.f32.mrb[0].mxu0
    %v4976 = vadd.f32 %v4935, %v4975
    %v4977 = vpop.f32.mrb[0].mxu0
    %v4978 = vpop.f32.mrb[0].mxu0
    %4979 = vdwg.mxu0
    %4980 = vmatprep.subr.bf16.mxu0 %v1429
    %4981 = vmatpush1.bf16.msra.mxu0 %v1428
    %4982 = vmatprep.subr.bf16.mxu0 %v1433
    %4983 = vmatpush1.bf16.msra.mxu0 %v1432
    %4984 = vmatprep.subr.bf16.mxu0 %v1437
    %4985 = vmatpush1.bf16.msra.mxu0 %v1436
    %4986 = vmatprep.subr.bf16.mxu0 %v1441
    %4987 = vmatpush1.bf16.msra.mxu0 %v1440
    %4988 = vmatprep.subr.bf16.mxu0 %v1445
    %4989 = vmatpush1.bf16.msra.mxu0 %v1444
    %4990 = vmatprep.subr.bf16.mxu0 %v1449
    %4991 = vmatpush1.bf16.msra.mxu0 %v1448
    %4992 = vmatprep.subr.bf16.mxu0 %v1453
    %4993 = vmatpush1.bf16.msra.mxu0 %v1452
    %4994 = vmatprep.subr.bf16.mxu0 %v1457
    %4995 = vmatpush1.bf16.msra.mxu0 %v1456
    %4996 = vmatprep.subr.bf16.mxu0 %v1461
    %4997 = vmatpush1.bf16.msra.mxu0 %v1460
    %4998 = vmatprep.subr.bf16.mxu0 %v1465
    %4999 = vmatpush1.bf16.msra.mxu0 %v1464
    %5000 = vmatprep.subr.bf16.mxu0 %v1469
    %5001 = vmatpush1.bf16.msra.mxu0 %v1468
    %5002 = vmatprep.subr.bf16.mxu0 %v1473
    %5003 = vmatpush1.bf16.msra.mxu0 %v1472
    %5004 = vmatprep.subr.bf16.mxu0 %v1477
    %5005 = vmatpush1.bf16.msra.mxu0 %v1476
    %5006 = vmatprep.subr.bf16.mxu0 %v1481
    %5007 = vmatpush1.bf16.msra.mxu0 %v1480
    %5008 = vmatprep.subr.bf16.mxu0 %v1485
    %5009 = vmatpush1.bf16.msra.mxu0 %v1484
    %5010 = vmatprep.subr.bf16.mxu0 %v1489
    %5011 = vmatpush1.bf16.msra.mxu0 %v1488
    %5012 = vmatprep.mubr.bf16.mxu0 %v4703
    %5013 = vmatmul.mubr.bf16.gmra.mrb[0].mxu0 %v4702
    %v5014 = vpop.f32.mrb[0].mxu0
    %v5015 = vadd.f32 0.0, %v5014
    %v5016 = vpop.f32.mrb[0].mxu0
    %v5017 = vadd.f32 0.0, %v5016
    %v5018 = vpop.f32.mrb[0].mxu0
    %v5019 = vpop.f32.mrb[0].mxu0
    %5020 = vdwg.mxu0
    %5021 = vmatprep.subr.bf16.mxu0 %v1493
    %5022 = vmatpush1.bf16.msra.mxu0 %v1492
    %5023 = vmatprep.subr.bf16.mxu0 %v1497
    %5024 = vmatpush1.bf16.msra.mxu0 %v1496
    %5025 = vmatprep.subr.bf16.mxu0 %v1501
    %5026 = vmatpush1.bf16.msra.mxu0 %v1500
    %5027 = vmatprep.subr.bf16.mxu0 %v1505
    %5028 = vmatpush1.bf16.msra.mxu0 %v1504
    %5029 = vmatprep.subr.bf16.mxu0 %v1509
    %5030 = vmatpush1.bf16.msra.mxu0 %v1508
    %5031 = vmatprep.subr.bf16.mxu0 %v1513
    %5032 = vmatpush1.bf16.msra.mxu0 %v1512
    %5033 = vmatprep.subr.bf16.mxu0 %v1517
    %5034 = vmatpush1.bf16.msra.mxu0 %v1516
    %5035 = vmatprep.subr.bf16.mxu0 %v1521
    %5036 = vmatpush1.bf16.msra.mxu0 %v1520
    %5037 = vmatprep.subr.bf16.mxu0 %v1525
    %5038 = vmatpush1.bf16.msra.mxu0 %v1524
    %5039 = vmatprep.subr.bf16.mxu0 %v1529
    %5040 = vmatpush1.bf16.msra.mxu0 %v1528
    %5041 = vmatprep.subr.bf16.mxu0 %v1533
    %5042 = vmatpush1.bf16.msra.mxu0 %v1532
    %5043 = vmatprep.subr.bf16.mxu0 %v1537
    %5044 = vmatpush1.bf16.msra.mxu0 %v1536
    %5045 = vmatprep.subr.bf16.mxu0 %v1541
    %5046 = vmatpush1.bf16.msra.mxu0 %v1540
    %5047 = vmatprep.subr.bf16.mxu0 %v1545
    %5048 = vmatpush1.bf16.msra.mxu0 %v1544
    %5049 = vmatprep.subr.bf16.mxu0 %v1549
    %5050 = vmatpush1.bf16.msra.mxu0 %v1548
    %5051 = vmatprep.subr.bf16.mxu0 %v1553
    %5052 = vmatpush1.bf16.msra.mxu0 %v1552
    %5053 = vmatprep.mubr.bf16.mxu0 %v4705
    %5054 = vmatmul.mubr.bf16.gmra.mrb[0].mxu0 %v4704
    %v5055 = vpop.f32.mrb[0].mxu0
    %v5056 = vadd.f32 %v5015, %v5055
    %v5057 = vpop.f32.mrb[0].mxu0
    %v5058 = vadd.f32 %v5017, %v5057
    %v5059 = vpop.f32.mrb[0].mxu0
    %v5060 = vpop.f32.mrb[0].mxu0
    %5061 = vdwg.mxu0
    %v5062 = vadd.f32 %v707, %v4974
    %v5063 = vadd.f32 %v709, %v4976
    %v5064 = vadd.f32 %v780, %v5056
    %v5065 = vadd.f32 %v782, %v5058
    %v5066 = vxor.u32 %v5062, 2147483648
    %v5067 = vxor.u32 %v5063, 2147483648
    %v5068 = vxor.u32 %v5064, 2147483648
    %v5069 = vxor.u32 %v5065, 2147483648
    %v5070 = vmul.f32 %v5066, 1.442695
    %v5071 = vpow.pop %v5070
    %v5072 = vmul.f32 %v5067, 1.442695
    %v5073 = vpow.pop %v5072
    %v5074 = vmul.f32 %v5068, 1.442695
    %v5075 = vpow.pop %v5074
    %v5076 = vmul.f32 %v5069, 1.442695
    %v5077 = vpow.pop %v5076
    %v5078 = vadd.f32 %v5071, 1.0
    %v5079 = vadd.f32 %v5073, 1.0
    %v5080 = vadd.f32 %v5075, 1.0
    %v5081 = vadd.f32 %v5077, 1.0
    %v5082 = vrcp.pop %v5078
    %v5083 = vmul.f32 1.0, %v5082
    %v5084 = vrcp.pop %v5079
    %v5085 = vmul.f32 1.0, %v5084
    %v5086 = vrcp.pop %v5080
    %v5087 = vmul.f32 1.0, %v5086
    %v5088 = vrcp.pop %v5081
    %v5089 = vmul.f32 1.0, %v5088
    %5090 = vmatprep.subr.bf16.mxu0 %v1747
    %5091 = vmatpush1.bf16.msra.mxu0 %v1746
    %5092 = vmatprep.subr.bf16.mxu0 %v1751
    %5093 = vmatpush1.bf16.msra.mxu0 %v1750
    %5094 = vmatprep.subr.bf16.mxu0 %v1755
    %5095 = vmatpush1.bf16.msra.mxu0 %v1754
    %5096 = vmatprep.subr.bf16.mxu0 %v1759
    %5097 = vmatpush1.bf16.msra.mxu0 %v1758
    %5098 = vmatprep.subr.bf16.mxu0 %v1763
    %5099 = vmatpush1.bf16.msra.mxu0 %v1762
    %5100 = vmatprep.subr.bf16.mxu0 %v1767
    %5101 = vmatpush1.bf16.msra.mxu0 %v1766
    %5102 = vmatprep.subr.bf16.mxu0 %v1771
    %5103 = vmatpush1.bf16.msra.mxu0 %v1770
    %5104 = vmatprep.subr.bf16.mxu0 %v1775
    %5105 = vmatpush1.bf16.msra.mxu0 %v1774
    %5106 = vmatprep.subr.bf16.mxu0 %v1779
    %5107 = vmatpush1.bf16.msra.mxu0 %v1778
    %5108 = vmatprep.subr.bf16.mxu0 %v1783
    %5109 = vmatpush1.bf16.msra.mxu0 %v1782
    %5110 = vmatprep.subr.bf16.mxu0 %v1787
    %5111 = vmatpush1.bf16.msra.mxu0 %v1786
    %5112 = vmatprep.subr.bf16.mxu0 %v1791
    %5113 = vmatpush1.bf16.msra.mxu0 %v1790
    %5114 = vmatprep.subr.bf16.mxu0 %v1795
    %5115 = vmatpush1.bf16.msra.mxu0 %v1794
    %5116 = vmatprep.subr.bf16.mxu0 %v1799
    %5117 = vmatpush1.bf16.msra.mxu0 %v1798
    %5118 = vmatprep.subr.bf16.mxu0 %v1803
    %5119 = vmatpush1.bf16.msra.mxu0 %v1802
    %5120 = vmatprep.subr.bf16.mxu0 %v1807
    %5121 = vmatpush1.bf16.msra.mxu0 %v1806
    %5122 = vmatprep.mubr.bf16.mxu0 %v4703
    %5123 = vmatmul.mubr.bf16.gmra.mrb[0].mxu0 %v4702
    %v5124 = vpop.f32.mrb[0].mxu0
    %v5125 = vadd.f32 0.0, %v5124
    %v5126 = vpop.f32.mrb[0].mxu0
    %v5127 = vadd.f32 0.0, %v5126
    %v5128 = vpop.f32.mrb[0].mxu0
    %v5129 = vpop.f32.mrb[0].mxu0
    %5130 = vdwg.mxu0
    %5131 = vmatprep.subr.bf16.mxu0 %v1811
    %5132 = vmatpush1.bf16.msra.mxu0 %v1810
    %5133 = vmatprep.subr.bf16.mxu0 %v1815
    %5134 = vmatpush1.bf16.msra.mxu0 %v1814
    %5135 = vmatprep.subr.bf16.mxu0 %v1819
    %5136 = vmatpush1.bf16.msra.mxu0 %v1818
    %5137 = vmatprep.subr.bf16.mxu0 %v1823
    %5138 = vmatpush1.bf16.msra.mxu0 %v1822
    %5139 = vmatprep.subr.bf16.mxu0 %v1827
    %5140 = vmatpush1.bf16.msra.mxu0 %v1826
    %5141 = vmatprep.subr.bf16.mxu0 %v1831
    %5142 = vmatpush1.bf16.msra.mxu0 %v1830
    %5143 = vmatprep.subr.bf16.mxu0 %v1835
    %5144 = vmatpush1.bf16.msra.mxu0 %v1834
    %5145 = vmatprep.subr.bf16.mxu0 %v1839
    %5146 = vmatpush1.bf16.msra.mxu0 %v1838
    %5147 = vmatprep.subr.bf16.mxu0 %v1843
    %5148 = vmatpush1.bf16.msra.mxu0 %v1842
    %5149 = vmatprep.subr.bf16.mxu0 %v1847
    %5150 = vmatpush1.bf16.msra.mxu0 %v1846
    %5151 = vmatprep.subr.bf16.mxu0 %v1851
    %5152 = vmatpush1.bf16.msra.mxu0 %v1850
    %5153 = vmatprep.subr.bf16.mxu0 %v1855
    %5154 = vmatpush1.bf16.msra.mxu0 %v1854
    %5155 = vmatprep.subr.bf16.mxu0 %v1859
    %5156 = vmatpush1.bf16.msra.mxu0 %v1858
    %5157 = vmatprep.subr.bf16.mxu0 %v1863
    %5158 = vmatpush1.bf16.msra.mxu0 %v1862
    %5159 = vmatprep.subr.bf16.mxu0 %v1867
    %5160 = vmatpush1.bf16.msra.mxu0 %v1866
    %5161 = vmatprep.subr.bf16.mxu0 %v1871
    %5162 = vmatpush1.bf16.msra.mxu0 %v1870
    %5163 = vmatprep.mubr.bf16.mxu0 %v4705
    %5164 = vmatmul.mubr.bf16.gmra.mrb[0].mxu0 %v4704
    %v5165 = vpop.f32.mrb[0].mxu0
    %v5166 = vadd.f32 %v5125, %v5165
    %v5167 = vpop.f32.mrb[0].mxu0
    %v5168 = vadd.f32 %v5127, %v5167
    %v5169 = vpop.f32.mrb[0].mxu0
    %v5170 = vpop.f32.mrb[0].mxu0
    %5171 = vdwg.mxu0
    %5172 = vmatprep.subr.bf16.mxu0 %v1749
    %5173 = vmatpush1.bf16.msra.mxu0 %v1748
    %5174 = vmatprep.subr.bf16.mxu0 %v1753
    %5175 = vmatpush1.bf16.msra.mxu0 %v1752
    %5176 = vmatprep.subr.bf16.mxu0 %v1757
    %5177 = vmatpush1.bf16.msra.mxu0 %v1756
    %5178 = vmatprep.subr.bf16.mxu0 %v1761
    %5179 = vmatpush1.bf16.msra.mxu0 %v1760
    %5180 = vmatprep.subr.bf16.mxu0 %v1765
    %5181 = vmatpush1.bf16.msra.mxu0 %v1764
    %5182 = vmatprep.subr.bf16.mxu0 %v1769
    %5183 = vmatpush1.bf16.msra.mxu0 %v1768
    %5184 = vmatprep.subr.bf16.mxu0 %v1773
    %5185 = vmatpush1.bf16.msra.mxu0 %v1772
    %5186 = vmatprep.subr.bf16.mxu0 %v1777
    %5187 = vmatpush1.bf16.msra.mxu0 %v1776
    %5188 = vmatprep.subr.bf16.mxu0 %v1781
    %5189 = vmatpush1.bf16.msra.mxu0 %v1780
    %5190 = vmatprep.subr.bf16.mxu0 %v1785
    %5191 = vmatpush1.bf16.msra.mxu0 %v1784
    %5192 = vmatprep.subr.bf16.mxu0 %v1789
    %5193 = vmatpush1.bf16.msra.mxu0 %v1788
    %5194 = vmatprep.subr.bf16.mxu0 %v1793
    %5195 = vmatpush1.bf16.msra.mxu0 %v1792
    %5196 = vmatprep.subr.bf16.mxu0 %v1797
    %5197 = vmatpush1.bf16.msra.mxu0 %v1796
    %5198 = vmatprep.subr.bf16.mxu0 %v1801
    %5199 = vmatpush1.bf16.msra.mxu0 %v1800
    %5200 = vmatprep.subr.bf16.mxu0 %v1805
    %5201 = vmatpush1.bf16.msra.mxu0 %v1804
    %5202 = vmatprep.subr.bf16.mxu0 %v1809
    %5203 = vmatpush1.bf16.msra.mxu0 %v1808
    %5204 = vmatprep.mubr.bf16.mxu0 %v4703
    %5205 = vmatmul.mubr.bf16.gmra.mrb[0].mxu0 %v4702
    %v5206 = vpop.f32.mrb[0].mxu0
    %v5207 = vadd.f32 0.0, %v5206
    %v5208 = vpop.f32.mrb[0].mxu0
    %v5209 = vadd.f32 0.0, %v5208
    %v5210 = vpop.f32.mrb[0].mxu0
    %v5211 = vpop.f32.mrb[0].mxu0
    %5212 = vdwg.mxu0
    %5213 = vmatprep.subr.bf16.mxu0 %v1813
    %5214 = vmatpush1.bf16.msra.mxu0 %v1812
    %5215 = vmatprep.subr.bf16.mxu0 %v1817
    %5216 = vmatpush1.bf16.msra.mxu0 %v1816
    %5217 = vmatprep.subr.bf16.mxu0 %v1821
    %5218 = vmatpush1.bf16.msra.mxu0 %v1820
    %5219 = vmatprep.subr.bf16.mxu0 %v1825
    %5220 = vmatpush1.bf16.msra.mxu0 %v1824
    %5221 = vmatprep.subr.bf16.mxu0 %v1829
    %5222 = vmatpush1.bf16.msra.mxu0 %v1828
    %5223 = vmatprep.subr.bf16.mxu0 %v1833
    %5224 = vmatpush1.bf16.msra.mxu0 %v1832
    %5225 = vmatprep.subr.bf16.mxu0 %v1837
    %5226 = vmatpush1.bf16.msra.mxu0 %v1836
    %5227 = vmatprep.subr.bf16.mxu0 %v1841
    %5228 = vmatpush1.bf16.msra.mxu0 %v1840
    %5229 = vmatprep.subr.bf16.mxu0 %v1845
    %5230 = vmatpush1.bf16.msra.mxu0 %v1844
    %5231 = vmatprep.subr.bf16.mxu0 %v1849
    %5232 = vmatpush1.bf16.msra.mxu0 %v1848
    %5233 = vmatprep.subr.bf16.mxu0 %v1853
    %5234 = vmatpush1.bf16.msra.mxu0 %v1852
    %5235 = vmatprep.subr.bf16.mxu0 %v1857
    %5236 = vmatpush1.bf16.msra.mxu0 %v1856
    %5237 = vmatprep.subr.bf16.mxu0 %v1861
    %5238 = vmatpush1.bf16.msra.mxu0 %v1860
    %5239 = vmatprep.subr.bf16.mxu0 %v1865
    %5240 = vmatpush1.bf16.msra.mxu0 %v1864
    %5241 = vmatprep.subr.bf16.mxu0 %v1869
    %5242 = vmatpush1.bf16.msra.mxu0 %v1868
    %5243 = vmatprep.subr.bf16.mxu0 %v1873
    %5244 = vmatpush1.bf16.msra.mxu0 %v1872
    %5245 = vmatprep.mubr.bf16.mxu0 %v4705
    %5246 = vmatmul.mubr.bf16.gmra.mrb[0].mxu0 %v4704
    %v5247 = vpop.f32.mrb[0].mxu0
    %v5248 = vadd.f32 %v5207, %v5247
    %v5249 = vpop.f32.mrb[0].mxu0
    %v5250 = vadd.f32 %v5209, %v5249
    %v5251 = vpop.f32.mrb[0].mxu0
    %v5252 = vpop.f32.mrb[0].mxu0
    %5253 = vdwg.mxu0
    %v5254 = vadd.f32 %v853, %v5166
    %v5255 = vadd.f32 %v855, %v5168
    %v5256 = vadd.f32 %v926, %v5248
    %v5257 = vadd.f32 %v928, %v5250
    %v5258 = vtanh.pop %v5254
    %v5259 = vtanh.pop %v5255
    %v5260 = vtanh.pop %v5256
    %v5261 = vtanh.pop %v5257
    %5262 = vmatprep.subr.bf16.mxu0 %v2047
    %5263 = vmatpush1.bf16.msra.mxu0 %v2046
    %5264 = vmatprep.subr.bf16.mxu0 %v2051
    %5265 = vmatpush1.bf16.msra.mxu0 %v2050
    %5266 = vmatprep.subr.bf16.mxu0 %v2055
    %5267 = vmatpush1.bf16.msra.mxu0 %v2054
    %5268 = vmatprep.subr.bf16.mxu0 %v2059
    %5269 = vmatpush1.bf16.msra.mxu0 %v2058
    %5270 = vmatprep.subr.bf16.mxu0 %v2063
    %5271 = vmatpush1.bf16.msra.mxu0 %v2062
    %5272 = vmatprep.subr.bf16.mxu0 %v2067
    %5273 = vmatpush1.bf16.msra.mxu0 %v2066
    %5274 = vmatprep.subr.bf16.mxu0 %v2071
    %5275 = vmatpush1.bf16.msra.mxu0 %v2070
    %5276 = vmatprep.subr.bf16.mxu0 %v2075
    %5277 = vmatpush1.bf16.msra.mxu0 %v2074
    %5278 = vmatprep.subr.bf16.mxu0 %v2079
    %5279 = vmatpush1.bf16.msra.mxu0 %v2078
    %5280 = vmatprep.subr.bf16.mxu0 %v2083
    %5281 = vmatpush1.bf16.msra.mxu0 %v2082
    %5282 = vmatprep.subr.bf16.mxu0 %v2087
    %5283 = vmatpush1.bf16.msra.mxu0 %v2086
    %5284 = vmatprep.subr.bf16.mxu0 %v2091
    %5285 = vmatpush1.bf16.msra.mxu0 %v2090
    %5286 = vmatprep.subr.bf16.mxu0 %v2095
    %5287 = vmatpush1.bf16.msra.mxu0 %v2094
    %5288 = vmatprep.subr.bf16.mxu0 %v2099
    %5289 = vmatpush1.bf16.msra.mxu0 %v2098
    %5290 = vmatprep.subr.bf16.mxu0 %v2103
    %5291 = vmatpush1.bf16.msra.mxu0 %v2102
    %5292 = vmatprep.subr.bf16.mxu0 %v2107
    %5293 = vmatpush1.bf16.msra.mxu0 %v2106
    %5294 = vmatprep.mubr.bf16.mxu0 %v4703
    %5295 = vmatmul.mubr.bf16.gmra.mrb[0].mxu0 %v4702
    %v5296 = vpop.f32.mrb[0].mxu0
    %v5297 = vadd.f32 0.0, %v5296
    %v5298 = vpop.f32.mrb[0].mxu0
    %v5299 = vadd.f32 0.0, %v5298
    %v5300 = vpop.f32.mrb[0].mxu0
    %v5301 = vpop.f32.mrb[0].mxu0
    %5302 = vdwg.mxu0
    %5303 = vmatprep.subr.bf16.mxu0 %v2111
    %5304 = vmatpush1.bf16.msra.mxu0 %v2110
    %5305 = vmatprep.subr.bf16.mxu0 %v2115
    %5306 = vmatpush1.bf16.msra.mxu0 %v2114
    %5307 = vmatprep.subr.bf16.mxu0 %v2119
    %5308 = vmatpush1.bf16.msra.mxu0 %v2118
    %5309 = vmatprep.subr.bf16.mxu0 %v2123
    %5310 = vmatpush1.bf16.msra.mxu0 %v2122
    %5311 = vmatprep.subr.bf16.mxu0 %v2127
    %5312 = vmatpush1.bf16.msra.mxu0 %v2126
    %5313 = vmatprep.subr.bf16.mxu0 %v2131
    %5314 = vmatpush1.bf16.msra.mxu0 %v2130
    %5315 = vmatprep.subr.bf16.mxu0 %v2135
    %5316 = vmatpush1.bf16.msra.mxu0 %v2134
    %5317 = vmatprep.subr.bf16.mxu0 %v2139
    %5318 = vmatpush1.bf16.msra.mxu0 %v2138
    %5319 = vmatprep.subr.bf16.mxu0 %v2143
    %5320 = vmatpush1.bf16.msra.mxu0 %v2142
    %5321 = vmatprep.subr.bf16.mxu0 %v2147
    %5322 = vmatpush1.bf16.msra.mxu0 %v2146
    %5323 = vmatprep.subr.bf16.mxu0 %v2151
    %5324 = vmatpush1.bf16.msra.mxu0 %v2150
    %5325 = vmatprep.subr.bf16.mxu0 %v2155
    %5326 = vmatpush1.bf16.msra.mxu0 %v2154
    %5327 = vmatprep.subr.bf16.mxu0 %v2159
    %5328 = vmatpush1.bf16.msra.mxu0 %v2158
    %5329 = vmatprep.subr.bf16.mxu0 %v2163
    %5330 = vmatpush1.bf16.msra.mxu0 %v2162
    %5331 = vmatprep.subr.bf16.mxu0 %v2167
    %5332 = vmatpush1.bf16.msra.mxu0 %v2166
    %5333 = vmatprep.subr.bf16.mxu0 %v2171
    %5334 = vmatpush1.bf16.msra.mxu0 %v2170
    %5335 = vmatprep.mubr.bf16.mxu0 %v4705
    %5336 = vmatmul.mubr.bf16.gmra.mrb[0].mxu0 %v4704
    %v5337 = vpop.f32.mrb[0].mxu0
    %v5338 = vadd.f32 %v5297, %v5337
    %v5339 = vpop.f32.mrb[0].mxu0
    %v5340 = vadd.f32 %v5299, %v5339
    %v5341 = vpop.f32.mrb[0].mxu0
    %v5342 = vpop.f32.mrb[0].mxu0
    %5343 = vdwg.mxu0
    %5344 = vmatprep.subr.bf16.mxu0 %v2049
    %5345 = vmatpush1.bf16.msra.mxu0 %v2048
    %5346 = vmatprep.subr.bf16.mxu0 %v2053
    %5347 = vmatpush1.bf16.msra.mxu0 %v2052
    %5348 = vmatprep.subr.bf16.mxu0 %v2057
    %5349 = vmatpush1.bf16.msra.mxu0 %v2056
    %5350 = vmatprep.subr.bf16.mxu0 %v2061
    %5351 = vmatpush1.bf16.msra.mxu0 %v2060
    %5352 = vmatprep.subr.bf16.mxu0 %v2065
    %5353 = vmatpush1.bf16.msra.mxu0 %v2064
    %5354 = vmatprep.subr.bf16.mxu0 %v2069
    %5355 = vmatpush1.bf16.msra.mxu0 %v2068
    %5356 = vmatprep.subr.bf16.mxu0 %v2073
    %5357 = vmatpush1.bf16.msra.mxu0 %v2072
    %5358 = vmatprep.subr.bf16.mxu0 %v2077
    %5359 = vmatpush1.bf16.msra.mxu0 %v2076
    %5360 = vmatprep.subr.bf16.mxu0 %v2081
    %5361 = vmatpush1.bf16.msra.mxu0 %v2080
    %5362 = vmatprep.subr.bf16.mxu0 %v2085
    %5363 = vmatpush1.bf16.msra.mxu0 %v2084
    %5364 = vmatprep.subr.bf16.mxu0 %v2089
    %5365 = vmatpush1.bf16.msra.mxu0 %v2088
    %5366 = vmatprep.subr.bf16.mxu0 %v2093
    %5367 = vmatpush1.bf16.msra.mxu0 %v2092
    %5368 = vmatprep.subr.bf16.mxu0 %v2097
    %5369 = vmatpush1.bf16.msra.mxu0 %v2096
    %5370 = vmatprep.subr.bf16.mxu0 %v2101
    %5371 = vmatpush1.bf16.msra.mxu0 %v2100
    %5372 = vmatprep.subr.bf16.mxu0 %v2105
    %5373 = vmatpush1.bf16.msra.mxu0 %v2104
    %5374 = vmatprep.subr.bf16.mxu0 %v2109
    %5375 = vmatpush1.bf16.msra.mxu0 %v2108
    %5376 = vmatprep.mubr.bf16.mxu0 %v4703
    %5377 = vmatmul.mubr.bf16.gmra.mrb[0].mxu0 %v4702
    %v5378 = vpop.f32.mrb[0].mxu0
    %v5379 = vadd.f32 0.0, %v5378
    %v5380 = vpop.f32.mrb[0].mxu0
    %v5381 = vadd.f32 0.0, %v5380
    %v5382 = vpop.f32.mrb[0].mxu0
    %v5383 = vpop.f32.mrb[0].mxu0
    %5384 = vdwg.mxu0
    %5385 = vmatprep.subr.bf16.mxu0 %v2113
    %5386 = vmatpush1.bf16.msra.mxu0 %v2112
    %5387 = vmatprep.subr.bf16.mxu0 %v2117
    %5388 = vmatpush1.bf16.msra.mxu0 %v2116
    %5389 = vmatprep.subr.bf16.mxu0 %v2121
    %5390 = vmatpush1.bf16.msra.mxu0 %v2120
    %5391 = vmatprep.subr.bf16.mxu0 %v2125
    %5392 = vmatpush1.bf16.msra.mxu0 %v2124
    %5393 = vmatprep.subr.bf16.mxu0 %v2129
    %5394 = vmatpush1.bf16.msra.mxu0 %v2128
    %5395 = vmatprep.subr.bf16.mxu0 %v2133
    %5396 = vmatpush1.bf16.msra.mxu0 %v2132
    %5397 = vmatprep.subr.bf16.mxu0 %v2137
    %5398 = vmatpush1.bf16.msra.mxu0 %v2136
    %5399 = vmatprep.subr.bf16.mxu0 %v2141
    %5400 = vmatpush1.bf16.msra.mxu0 %v2140
    %5401 = vmatprep.subr.bf16.mxu0 %v2145
    %5402 = vmatpush1.bf16.msra.mxu0 %v2144
    %5403 = vmatprep.subr.bf16.mxu0 %v2149
    %5404 = vmatpush1.bf16.msra.mxu0 %v2148
    %5405 = vmatprep.subr.bf16.mxu0 %v2153
    %5406 = vmatpush1.bf16.msra.mxu0 %v2152
    %5407 = vmatprep.subr.bf16.mxu0 %v2157
    %5408 = vmatpush1.bf16.msra.mxu0 %v2156
    %5409 = vmatprep.subr.bf16.mxu0 %v2161
    %5410 = vmatpush1.bf16.msra.mxu0 %v2160
    %5411 = vmatprep.subr.bf16.mxu0 %v2165
    %5412 = vmatpush1.bf16.msra.mxu0 %v2164
    %5413 = vmatprep.subr.bf16.mxu0 %v2169
    %5414 = vmatpush1.bf16.msra.mxu0 %v2168
    %5415 = vmatprep.subr.bf16.mxu0 %v2173
    %5416 = vmatpush1.bf16.msra.mxu0 %v2172
    %5417 = vmatprep.mubr.bf16.mxu0 %v4705
    %5418 = vmatmul.mubr.bf16.gmra.mrb[0].mxu0 %v4704
    %v5419 = vpop.f32.mrb[0].mxu0
    %v5420 = vadd.f32 %v5379, %v5419
    %v5421 = vpop.f32.mrb[0].mxu0
    %v5422 = vadd.f32 %v5381, %v5421
    %v5423 = vpop.f32.mrb[0].mxu0
    %v5424 = vpop.f32.mrb[0].mxu0
    %5425 = vdwg.mxu0
    %v5426 = vadd.f32 %v999, %v5338
    %v5427 = vadd.f32 %v1001, %v5340
    %v5428 = vadd.f32 %v1072, %v5420
    %v5429 = vadd.f32 %v1074, %v5422
    %v5430 = vxor.u32 %v5426, 2147483648
    %v5431 = vxor.u32 %v5427, 2147483648
    %v5432 = vxor.u32 %v5428, 2147483648
    %v5433 = vxor.u32 %v5429, 2147483648
    %v5434 = vmul.f32 %v5430, 1.442695
    %v5435 = vpow.pop %v5434
    %v5436 = vmul.f32 %v5431, 1.442695
    %v5437 = vpow.pop %v5436
    %v5438 = vmul.f32 %v5432, 1.442695
    %v5439 = vpow.pop %v5438
    %v5440 = vmul.f32 %v5433, 1.442695
    %v5441 = vpow.pop %v5440
    %v5442 = vadd.f32 %v5435, 1.0
    %v5443 = vadd.f32 %v5437, 1.0
    %v5444 = vadd.f32 %v5439, 1.0
    %v5445 = vadd.f32 %v5441, 1.0
    %v5446 = vrcp.pop %v5442
    %v5447 = vmul.f32 1.0, %v5446
    %v5448 = vrcp.pop %v5443
    %v5449 = vmul.f32 1.0, %v5448
    %v5450 = vrcp.pop %v5444
    %v5451 = vmul.f32 1.0, %v5450
    %v5452 = vrcp.pop %v5445
    %v5453 = vmul.f32 1.0, %v5452
    %v5454 = vmul.f32 %v5083, %v4690
    %v5455 = vmul.f32 %v5085, %v4691
    %v5456 = vmul.f32 %v5087, %v4692
    %v5457 = vmul.f32 %v5089, %v4693
    %v5458 = vmul.f32 %v4891, %v5258
    %v5459 = vmul.f32 %v4893, %v5259
    %v5460 = vmul.f32 %v4895, %v5260
    %v5461 = vmul.f32 %v4897, %v5261
    %v5462 = vadd.f32 %v5454, %v5458
    %v5463 = vadd.f32 %v5455, %v5459
    %v5464 = vadd.f32 %v5456, %v5460
    %v5465 = vadd.f32 %v5457, %v5461
    %v5466 = vtanh.pop %v5462
    %v5467 = vtanh.pop %v5463
    %v5468 = vtanh.pop %v5464
    %v5469 = vtanh.pop %v5465
    %v5470 = vmul.f32 %v5447, %v5466
    %v5471 = vmul.f32 %v5449, %v5467
    %v5472 = vmul.f32 %v5451, %v5468
    %v5473 = vmul.f32 %v5453, %v5469
    %v5474 = vpack.c.bf16 %v5470, %v5470
    %v5475 = vpack.c.bf16 %v5471, %v5471
    %v5476 = vpack.c.bf16 %v5472, %v5472
    %v5477 = vpack.c.bf16 %v5473, %v5473
    %5478 = vmatprep.subr.bf16.mxu0 %v1107
    %5479 = vmatpush1.bf16.msra.mxu0 %v1106
    %5480 = vmatprep.subr.bf16.mxu0 %v1111
    %5481 = vmatpush1.bf16.msra.mxu0 %v1110
    %5482 = vmatprep.subr.bf16.mxu0 %v1115
    %5483 = vmatpush1.bf16.msra.mxu0 %v1114
    %5484 = vmatprep.subr.bf16.mxu0 %v1119
    %5485 = vmatpush1.bf16.msra.mxu0 %v1118
    %5486 = vmatprep.subr.bf16.mxu0 %v1123
    %5487 = vmatpush1.bf16.msra.mxu0 %v1122
    %5488 = vmatprep.subr.bf16.mxu0 %v1127
    %5489 = vmatpush1.bf16.msra.mxu0 %v1126
    %5490 = vmatprep.subr.bf16.mxu0 %v1131
    %5491 = vmatpush1.bf16.msra.mxu0 %v1130
    %5492 = vmatprep.subr.bf16.mxu0 %v1135
    %5493 = vmatpush1.bf16.msra.mxu0 %v1134
    %5494 = vmatprep.subr.bf16.mxu0 %v1139
    %5495 = vmatpush1.bf16.msra.mxu0 %v1138
    %5496 = vmatprep.subr.bf16.mxu0 %v1143
    %5497 = vmatpush1.bf16.msra.mxu0 %v1142
    %5498 = vmatprep.subr.bf16.mxu0 %v1147
    %5499 = vmatpush1.bf16.msra.mxu0 %v1146
    %5500 = vmatprep.subr.bf16.mxu0 %v1151
    %5501 = vmatpush1.bf16.msra.mxu0 %v1150
    %5502 = vmatprep.subr.bf16.mxu0 %v1155
    %5503 = vmatpush1.bf16.msra.mxu0 %v1154
    %5504 = vmatprep.subr.bf16.mxu0 %v1159
    %5505 = vmatpush1.bf16.msra.mxu0 %v1158
    %5506 = vmatprep.subr.bf16.mxu0 %v1163
    %5507 = vmatpush1.bf16.msra.mxu0 %v1162
    %5508 = vmatprep.subr.bf16.mxu0 %v1167
    %5509 = vmatpush1.bf16.msra.mxu0 %v1166
    %5510 = vmatprep.mubr.bf16.mxu0 %v5475
    %5511 = vmatmul.mubr.bf16.gmra.mrb[0].mxu0 %v5474
    %v5512 = vpop.f32.mrb[0].mxu0
    %v5513 = vadd.f32 0.0, %v5512
    %v5514 = vpop.f32.mrb[0].mxu0
    %v5515 = vadd.f32 0.0, %v5514
    %v5516 = vpop.f32.mrb[0].mxu0
    %v5517 = vpop.f32.mrb[0].mxu0
    %5518 = vdwg.mxu0
    %5519 = vmatprep.subr.bf16.mxu0 %v1171
    %5520 = vmatpush1.bf16.msra.mxu0 %v1170
    %5521 = vmatprep.subr.bf16.mxu0 %v1175
    %5522 = vmatpush1.bf16.msra.mxu0 %v1174
    %5523 = vmatprep.subr.bf16.mxu0 %v1179
    %5524 = vmatpush1.bf16.msra.mxu0 %v1178
    %5525 = vmatprep.subr.bf16.mxu0 %v1183
    %5526 = vmatpush1.bf16.msra.mxu0 %v1182
    %5527 = vmatprep.subr.bf16.mxu0 %v1187
    %5528 = vmatpush1.bf16.msra.mxu0 %v1186
    %5529 = vmatprep.subr.bf16.mxu0 %v1191
    %5530 = vmatpush1.bf16.msra.mxu0 %v1190
    %5531 = vmatprep.subr.bf16.mxu0 %v1195
    %5532 = vmatpush1.bf16.msra.mxu0 %v1194
    %5533 = vmatprep.subr.bf16.mxu0 %v1199
    %5534 = vmatpush1.bf16.msra.mxu0 %v1198
    %5535 = vmatprep.subr.bf16.mxu0 %v1203
    %5536 = vmatpush1.bf16.msra.mxu0 %v1202
    %5537 = vmatprep.subr.bf16.mxu0 %v1207
    %5538 = vmatpush1.bf16.msra.mxu0 %v1206
    %5539 = vmatprep.subr.bf16.mxu0 %v1211
    %5540 = vmatpush1.bf16.msra.mxu0 %v1210
    %5541 = vmatprep.subr.bf16.mxu0 %v1215
    %5542 = vmatpush1.bf16.msra.mxu0 %v1214
    %5543 = vmatprep.subr.bf16.mxu0 %v1219
    %5544 = vmatpush1.bf16.msra.mxu0 %v1218
    %5545 = vmatprep.subr.bf16.mxu0 %v1223
    %5546 = vmatpush1.bf16.msra.mxu0 %v1222
    %5547 = vmatprep.subr.bf16.mxu0 %v1227
    %5548 = vmatpush1.bf16.msra.mxu0 %v1226
    %5549 = vmatprep.subr.bf16.mxu0 %v1231
    %5550 = vmatpush1.bf16.msra.mxu0 %v1230
    %5551 = vmatprep.mubr.bf16.mxu0 %v5477
    %5552 = vmatmul.mubr.bf16.gmra.mrb[0].mxu0 %v5476
    %v5553 = vpop.f32.mrb[0].mxu0
    %v5554 = vadd.f32 %v5513, %v5553
    %v5555 = vpop.f32.mrb[0].mxu0
    %v5556 = vadd.f32 %v5515, %v5555
    %v5557 = vpop.f32.mrb[0].mxu0
    %v5558 = vpop.f32.mrb[0].mxu0
    %5559 = vdwg.mxu0
    %5560 = vmatprep.subr.bf16.mxu0 %v1109
    %5561 = vmatpush1.bf16.msra.mxu0 %v1108
    %5562 = vmatprep.subr.bf16.mxu0 %v1113
    %5563 = vmatpush1.bf16.msra.mxu0 %v1112
    %5564 = vmatprep.subr.bf16.mxu0 %v1117
    %5565 = vmatpush1.bf16.msra.mxu0 %v1116
    %5566 = vmatprep.subr.bf16.mxu0 %v1121
    %5567 = vmatpush1.bf16.msra.mxu0 %v1120
    %5568 = vmatprep.subr.bf16.mxu0 %v1125
    %5569 = vmatpush1.bf16.msra.mxu0 %v1124
    %5570 = vmatprep.subr.bf16.mxu0 %v1129
    %5571 = vmatpush1.bf16.msra.mxu0 %v1128
    %5572 = vmatprep.subr.bf16.mxu0 %v1133
    %5573 = vmatpush1.bf16.msra.mxu0 %v1132
    %5574 = vmatprep.subr.bf16.mxu0 %v1137
    %5575 = vmatpush1.bf16.msra.mxu0 %v1136
    %5576 = vmatprep.subr.bf16.mxu0 %v1141
    %5577 = vmatpush1.bf16.msra.mxu0 %v1140
    %5578 = vmatprep.subr.bf16.mxu0 %v1145
    %5579 = vmatpush1.bf16.msra.mxu0 %v1144
    %5580 = vmatprep.subr.bf16.mxu0 %v1149
    %5581 = vmatpush1.bf16.msra.mxu0 %v1148
    %5582 = vmatprep.subr.bf16.mxu0 %v1153
    %5583 = vmatpush1.bf16.msra.mxu0 %v1152
    %5584 = vmatprep.subr.bf16.mxu0 %v1157
    %5585 = vmatpush1.bf16.msra.mxu0 %v1156
    %5586 = vmatprep.subr.bf16.mxu0 %v1161
    %5587 = vmatpush1.bf16.msra.mxu0 %v1160
    %5588 = vmatprep.subr.bf16.mxu0 %v1165
    %5589 = vmatpush1.bf16.msra.mxu0 %v1164
    %5590 = vmatprep.subr.bf16.mxu0 %v1169
    %5591 = vmatpush1.bf16.msra.mxu0 %v1168
    %5592 = vmatprep.mubr.bf16.mxu0 %v5475
    %5593 = vmatmul.mubr.bf16.gmra.mrb[0].mxu0 %v5474
    %v5594 = vpop.f32.mrb[0].mxu0
    %v5595 = vadd.f32 0.0, %v5594
    %v5596 = vpop.f32.mrb[0].mxu0
    %v5597 = vadd.f32 0.0, %v5596
    %v5598 = vpop.f32.mrb[0].mxu0
    %v5599 = vpop.f32.mrb[0].mxu0
    %5600 = vdwg.mxu0
    %5601 = vmatprep.subr.bf16.mxu0 %v1173
    %5602 = vmatpush1.bf16.msra.mxu0 %v1172
    %5603 = vmatprep.subr.bf16.mxu0 %v1177
    %5604 = vmatpush1.bf16.msra.mxu0 %v1176
    %5605 = vmatprep.subr.bf16.mxu0 %v1181
    %5606 = vmatpush1.bf16.msra.mxu0 %v1180
    %5607 = vmatprep.subr.bf16.mxu0 %v1185
    %5608 = vmatpush1.bf16.msra.mxu0 %v1184
    %5609 = vmatprep.subr.bf16.mxu0 %v1189
    %5610 = vmatpush1.bf16.msra.mxu0 %v1188
    %5611 = vmatprep.subr.bf16.mxu0 %v1193
    %5612 = vmatpush1.bf16.msra.mxu0 %v1192
    %5613 = vmatprep.subr.bf16.mxu0 %v1197
    %5614 = vmatpush1.bf16.msra.mxu0 %v1196
    %5615 = vmatprep.subr.bf16.mxu0 %v1201
    %5616 = vmatpush1.bf16.msra.mxu0 %v1200
    %5617 = vmatprep.subr.bf16.mxu0 %v1205
    %5618 = vmatpush1.bf16.msra.mxu0 %v1204
    %5619 = vmatprep.subr.bf16.mxu0 %v1209
    %5620 = vmatpush1.bf16.msra.mxu0 %v1208
    %5621 = vmatprep.subr.bf16.mxu0 %v1213
    %5622 = vmatpush1.bf16.msra.mxu0 %v1212
    %5623 = vmatprep.subr.bf16.mxu0 %v1217
    %5624 = vmatpush1.bf16.msra.mxu0 %v1216
    %5625 = vmatprep.subr.bf16.mxu0 %v1221
    %5626 = vmatpush1.bf16.msra.mxu0 %v1220
    %5627 = vmatprep.subr.bf16.mxu0 %v1225
    %5628 = vmatpush1.bf16.msra.mxu0 %v1224
    %5629 = vmatprep.subr.bf16.mxu0 %v1229
    %5630 = vmatpush1.bf16.msra.mxu0 %v1228
    %5631 = vmatprep.subr.bf16.mxu0 %v1233
    %5632 = vmatpush1.bf16.msra.mxu0 %v1232
    %5633 = vmatprep.mubr.bf16.mxu0 %v5477
    %5634 = vmatmul.mubr.bf16.gmra.mrb[0].mxu0 %v5476
    %v5635 = vpop.f32.mrb[0].mxu0
    %v5636 = vadd.f32 %v5595, %v5635
    %v5637 = vpop.f32.mrb[0].mxu0
    %v5638 = vadd.f32 %v5597, %v5637
    %v5639 = vpop.f32.mrb[0].mxu0
    %v5640 = vpop.f32.mrb[0].mxu0
    %5641 = vdwg.mxu0
    %v5642 = vadd.f32 %v565, %v5554
    %v5643 = vadd.f32 %v567, %v5556
    %v5644 = vadd.f32 %v638, %v5636
    %v5645 = vadd.f32 %v640, %v5638
    %v5646 = vxor.u32 %v5642, 2147483648
    %v5647 = vxor.u32 %v5643, 2147483648
    %v5648 = vxor.u32 %v5644, 2147483648
    %v5649 = vxor.u32 %v5645, 2147483648
    %v5650 = vmul.f32 %v5646, 1.442695
    %v5651 = vpow.pop %v5650
    %v5652 = vmul.f32 %v5647, 1.442695
    %v5653 = vpow.pop %v5652
    %v5654 = vmul.f32 %v5648, 1.442695
    %v5655 = vpow.pop %v5654
    %v5656 = vmul.f32 %v5649, 1.442695
    %v5657 = vpow.pop %v5656
    %v5658 = vadd.f32 %v5651, 1.0
    %v5659 = vadd.f32 %v5653, 1.0
    %v5660 = vadd.f32 %v5655, 1.0
    %v5661 = vadd.f32 %v5657, 1.0
    %v5662 = vrcp.pop %v5658
    %v5663 = vmul.f32 1.0, %v5662
    %v5664 = vrcp.pop %v5659
    %v5665 = vmul.f32 1.0, %v5664
    %v5666 = vrcp.pop %v5660
    %v5667 = vmul.f32 1.0, %v5666
    %v5668 = vrcp.pop %v5661
    %v5669 = vmul.f32 1.0, %v5668
    %5670 = vmatprep.subr.bf16.mxu0 %v1427
    %5671 = vmatpush1.bf16.msra.mxu0 %v1426
    %5672 = vmatprep.subr.bf16.mxu0 %v1431
    %5673 = vmatpush1.bf16.msra.mxu0 %v1430
    %5674 = vmatprep.subr.bf16.mxu0 %v1435
    %5675 = vmatpush1.bf16.msra.mxu0 %v1434
    %5676 = vmatprep.subr.bf16.mxu0 %v1439
    %5677 = vmatpush1.bf16.msra.mxu0 %v1438
    %5678 = vmatprep.subr.bf16.mxu0 %v1443
    %5679 = vmatpush1.bf16.msra.mxu0 %v1442
    %5680 = vmatprep.subr.bf16.mxu0 %v1447
    %5681 = vmatpush1.bf16.msra.mxu0 %v1446
    %5682 = vmatprep.subr.bf16.mxu0 %v1451
    %5683 = vmatpush1.bf16.msra.mxu0 %v1450
    %5684 = vmatprep.subr.bf16.mxu0 %v1455
    %5685 = vmatpush1.bf16.msra.mxu0 %v1454
    %5686 = vmatprep.subr.bf16.mxu0 %v1459
    %5687 = vmatpush1.bf16.msra.mxu0 %v1458
    %5688 = vmatprep.subr.bf16.mxu0 %v1463
    %5689 = vmatpush1.bf16.msra.mxu0 %v1462
    %5690 = vmatprep.subr.bf16.mxu0 %v1467
    %5691 = vmatpush1.bf16.msra.mxu0 %v1466
    %5692 = vmatprep.subr.bf16.mxu0 %v1471
    %5693 = vmatpush1.bf16.msra.mxu0 %v1470
    %5694 = vmatprep.subr.bf16.mxu0 %v1475
    %5695 = vmatpush1.bf16.msra.mxu0 %v1474
    %5696 = vmatprep.subr.bf16.mxu0 %v1479
    %5697 = vmatpush1.bf16.msra.mxu0 %v1478
    %5698 = vmatprep.subr.bf16.mxu0 %v1483
    %5699 = vmatpush1.bf16.msra.mxu0 %v1482
    %5700 = vmatprep.subr.bf16.mxu0 %v1487
    %5701 = vmatpush1.bf16.msra.mxu0 %v1486
    %5702 = vmatprep.mubr.bf16.mxu0 %v5475
    %5703 = vmatmul.mubr.bf16.gmra.mrb[0].mxu0 %v5474
    %v5704 = vpop.f32.mrb[0].mxu0
    %v5705 = vadd.f32 0.0, %v5704
    %v5706 = vpop.f32.mrb[0].mxu0
    %v5707 = vadd.f32 0.0, %v5706
    %v5708 = vpop.f32.mrb[0].mxu0
    %v5709 = vpop.f32.mrb[0].mxu0
    %5710 = vdwg.mxu0
    %5711 = vmatprep.subr.bf16.mxu0 %v1491
    %5712 = vmatpush1.bf16.msra.mxu0 %v1490
    %5713 = vmatprep.subr.bf16.mxu0 %v1495
    %5714 = vmatpush1.bf16.msra.mxu0 %v1494
    %5715 = vmatprep.subr.bf16.mxu0 %v1499
    %5716 = vmatpush1.bf16.msra.mxu0 %v1498
    %5717 = vmatprep.subr.bf16.mxu0 %v1503
    %5718 = vmatpush1.bf16.msra.mxu0 %v1502
    %5719 = vmatprep.subr.bf16.mxu0 %v1507
    %5720 = vmatpush1.bf16.msra.mxu0 %v1506
    %5721 = vmatprep.subr.bf16.mxu0 %v1511
    %5722 = vmatpush1.bf16.msra.mxu0 %v1510
    %5723 = vmatprep.subr.bf16.mxu0 %v1515
    %5724 = vmatpush1.bf16.msra.mxu0 %v1514
    %5725 = vmatprep.subr.bf16.mxu0 %v1519
    %5726 = vmatpush1.bf16.msra.mxu0 %v1518
    %5727 = vmatprep.subr.bf16.mxu0 %v1523
    %5728 = vmatpush1.bf16.msra.mxu0 %v1522
    %5729 = vmatprep.subr.bf16.mxu0 %v1527
    %5730 = vmatpush1.bf16.msra.mxu0 %v1526
    %5731 = vmatprep.subr.bf16.mxu0 %v1531
    %5732 = vmatpush1.bf16.msra.mxu0 %v1530
    %5733 = vmatprep.subr.bf16.mxu0 %v1535
    %5734 = vmatpush1.bf16.msra.mxu0 %v1534
    %5735 = vmatprep.subr.bf16.mxu0 %v1539
    %5736 = vmatpush1.bf16.msra.mxu0 %v1538
    %5737 = vmatprep.subr.bf16.mxu0 %v1543
    %5738 = vmatpush1.bf16.msra.mxu0 %v1542
    %5739 = vmatprep.subr.bf16.mxu0 %v1547
    %5740 = vmatpush1.bf16.msra.mxu0 %v1546
    %5741 = vmatprep.subr.bf16.mxu0 %v1551
    %5742 = vmatpush1.bf16.msra.mxu0 %v1550
    %5743 = vmatprep.mubr.bf16.mxu0 %v5477
    %5744 = vmatmul.mubr.bf16.gmra.mrb[0].mxu0 %v5476
    %v5745 = vpop.f32.mrb[0].mxu0
    %v5746 = vadd.f32 %v5705, %v5745
    %v5747 = vpop.f32.mrb[0].mxu0
    %v5748 = vadd.f32 %v5707, %v5747
    %v5749 = vpop.f32.mrb[0].mxu0
    %v5750 = vpop.f32.mrb[0].mxu0
    %5751 = vdwg.mxu0
    %5752 = vmatprep.subr.bf16.mxu0 %v1429
    %5753 = vmatpush1.bf16.msra.mxu0 %v1428
    %5754 = vmatprep.subr.bf16.mxu0 %v1433
    %5755 = vmatpush1.bf16.msra.mxu0 %v1432
    %5756 = vmatprep.subr.bf16.mxu0 %v1437
    %5757 = vmatpush1.bf16.msra.mxu0 %v1436
    %5758 = vmatprep.subr.bf16.mxu0 %v1441
    %5759 = vmatpush1.bf16.msra.mxu0 %v1440
    %5760 = vmatprep.subr.bf16.mxu0 %v1445
    %5761 = vmatpush1.bf16.msra.mxu0 %v1444
    %5762 = vmatprep.subr.bf16.mxu0 %v1449
    %5763 = vmatpush1.bf16.msra.mxu0 %v1448
    %5764 = vmatprep.subr.bf16.mxu0 %v1453
    %5765 = vmatpush1.bf16.msra.mxu0 %v1452
    %5766 = vmatprep.subr.bf16.mxu0 %v1457
    %5767 = vmatpush1.bf16.msra.mxu0 %v1456
    %5768 = vmatprep.subr.bf16.mxu0 %v1461
    %5769 = vmatpush1.bf16.msra.mxu0 %v1460
    %5770 = vmatprep.subr.bf16.mxu0 %v1465
    %5771 = vmatpush1.bf16.msra.mxu0 %v1464
    %5772 = vmatprep.subr.bf16.mxu0 %v1469
    %5773 = vmatpush1.bf16.msra.mxu0 %v1468
    %5774 = vmatprep.subr.bf16.mxu0 %v1473
    %5775 = vmatpush1.bf16.msra.mxu0 %v1472
    %5776 = vmatprep.subr.bf16.mxu0 %v1477
    %5777 = vmatpush1.bf16.msra.mxu0 %v1476
    %5778 = vmatprep.subr.bf16.mxu0 %v1481
    %5779 = vmatpush1.bf16.msra.mxu0 %v1480
    %5780 = vmatprep.subr.bf16.mxu0 %v1485
    %5781 = vmatpush1.bf16.msra.mxu0 %v1484
    %5782 = vmatprep.subr.bf16.mxu0 %v1489
    %5783 = vmatpush1.bf16.msra.mxu0 %v1488
    %5784 = vmatprep.mubr.bf16.mxu0 %v5475
    %5785 = vmatmul.mubr.bf16.gmra.mrb[0].mxu0 %v5474
    %v5786 = vpop.f32.mrb[0].mxu0
    %v5787 = vadd.f32 0.0, %v5786
    %v5788 = vpop.f32.mrb[0].mxu0
    %v5789 = vadd.f32 0.0, %v5788
    %v5790 = vpop.f32.mrb[0].mxu0
    %v5791 = vpop.f32.mrb[0].mxu0
    %5792 = vdwg.mxu0
    %5793 = vmatprep.subr.bf16.mxu0 %v1493
    %5794 = vmatpush1.bf16.msra.mxu0 %v1492
    %5795 = vmatprep.subr.bf16.mxu0 %v1497
    %5796 = vmatpush1.bf16.msra.mxu0 %v1496
    %5797 = vmatprep.subr.bf16.mxu0 %v1501
    %5798 = vmatpush1.bf16.msra.mxu0 %v1500
    %5799 = vmatprep.subr.bf16.mxu0 %v1505
    %5800 = vmatpush1.bf16.msra.mxu0 %v1504
    %5801 = vmatprep.subr.bf16.mxu0 %v1509
    %5802 = vmatpush1.bf16.msra.mxu0 %v1508
    %5803 = vmatprep.subr.bf16.mxu0 %v1513
    %5804 = vmatpush1.bf16.msra.mxu0 %v1512
    %5805 = vmatprep.subr.bf16.mxu0 %v1517
    %5806 = vmatpush1.bf16.msra.mxu0 %v1516
    %5807 = vmatprep.subr.bf16.mxu0 %v1521
    %5808 = vmatpush1.bf16.msra.mxu0 %v1520
    %5809 = vmatprep.subr.bf16.mxu0 %v1525
    %5810 = vmatpush1.bf16.msra.mxu0 %v1524
    %5811 = vmatprep.subr.bf16.mxu0 %v1529
    %5812 = vmatpush1.bf16.msra.mxu0 %v1528
    %5813 = vmatprep.subr.bf16.mxu0 %v1533
    %5814 = vmatpush1.bf16.msra.mxu0 %v1532
    %5815 = vmatprep.subr.bf16.mxu0 %v1537
    %5816 = vmatpush1.bf16.msra.mxu0 %v1536
    %5817 = vmatprep.subr.bf16.mxu0 %v1541
    %5818 = vmatpush1.bf16.msra.mxu0 %v1540
    %5819 = vmatprep.subr.bf16.mxu0 %v1545
    %5820 = vmatpush1.bf16.msra.mxu0 %v1544
    %5821 = vmatprep.subr.bf16.mxu0 %v1549
    %5822 = vmatpush1.bf16.msra.mxu0 %v1548
    %5823 = vmatprep.subr.bf16.mxu0 %v1553
    %5824 = vmatpush1.bf16.msra.mxu0 %v1552
    %5825 = vmatprep.mubr.bf16.mxu0 %v5477
    %5826 = vmatmul.mubr.bf16.gmra.mrb[0].mxu0 %v5476
    %v5827 = vpop.f32.mrb[0].mxu0
    %v5828 = vadd.f32 %v5787, %v5827
    %v5829 = vpop.f32.mrb[0].mxu0
    %v5830 = vadd.f32 %v5789, %v5829
    %v5831 = vpop.f32.mrb[0].mxu0
    %v5832 = vpop.f32.mrb[0].mxu0
    %5833 = vdwg.mxu0
    %v5834 = vadd.f32 %v711, %v5746
    %v5835 = vadd.f32 %v713, %v5748
    %v5836 = vadd.f32 %v784, %v5828
    %v5837 = vadd.f32 %v786, %v5830
    %v5838 = vxor.u32 %v5834, 2147483648
    %v5839 = vxor.u32 %v5835, 2147483648
    %v5840 = vxor.u32 %v5836, 2147483648
    %v5841 = vxor.u32 %v5837, 2147483648
    %v5842 = vmul.f32 %v5838, 1.442695
    %v5843 = vpow.pop %v5842
    %v5844 = vmul.f32 %v5839, 1.442695
    %v5845 = vpow.pop %v5844
    %v5846 = vmul.f32 %v5840, 1.442695
    %v5847 = vpow.pop %v5846
    %v5848 = vmul.f32 %v5841, 1.442695
    %v5849 = vpow.pop %v5848
    %v5850 = vadd.f32 %v5843, 1.0
    %v5851 = vadd.f32 %v5845, 1.0
    %v5852 = vadd.f32 %v5847, 1.0
    %v5853 = vadd.f32 %v5849, 1.0
    %v5854 = vrcp.pop %v5850
    %v5855 = vmul.f32 1.0, %v5854
    %v5856 = vrcp.pop %v5851
    %v5857 = vmul.f32 1.0, %v5856
    %v5858 = vrcp.pop %v5852
    %v5859 = vmul.f32 1.0, %v5858
    %v5860 = vrcp.pop %v5853
    %v5861 = vmul.f32 1.0, %v5860
    %5862 = vmatprep.subr.bf16.mxu0 %v1747
    %5863 = vmatpush1.bf16.msra.mxu0 %v1746
    %5864 = vmatprep.subr.bf16.mxu0 %v1751
    %5865 = vmatpush1.bf16.msra.mxu0 %v1750
    %5866 = vmatprep.subr.bf16.mxu0 %v1755
    %5867 = vmatpush1.bf16.msra.mxu0 %v1754
    %5868 = vmatprep.subr.bf16.mxu0 %v1759
    %5869 = vmatpush1.bf16.msra.mxu0 %v1758
    %5870 = vmatprep.subr.bf16.mxu0 %v1763
    %5871 = vmatpush1.bf16.msra.mxu0 %v1762
    %5872 = vmatprep.subr.bf16.mxu0 %v1767
    %5873 = vmatpush1.bf16.msra.mxu0 %v1766
    %5874 = vmatprep.subr.bf16.mxu0 %v1771
    %5875 = vmatpush1.bf16.msra.mxu0 %v1770
    %5876 = vmatprep.subr.bf16.mxu0 %v1775
    %5877 = vmatpush1.bf16.msra.mxu0 %v1774
    %5878 = vmatprep.subr.bf16.mxu0 %v1779
    %5879 = vmatpush1.bf16.msra.mxu0 %v1778
    %5880 = vmatprep.subr.bf16.mxu0 %v1783
    %5881 = vmatpush1.bf16.msra.mxu0 %v1782
    %5882 = vmatprep.subr.bf16.mxu0 %v1787
    %5883 = vmatpush1.bf16.msra.mxu0 %v1786
    %5884 = vmatprep.subr.bf16.mxu0 %v1791
    %5885 = vmatpush1.bf16.msra.mxu0 %v1790
    %5886 = vmatprep.subr.bf16.mxu0 %v1795
    %5887 = vmatpush1.bf16.msra.mxu0 %v1794
    %5888 = vmatprep.subr.bf16.mxu0 %v1799
    %5889 = vmatpush1.bf16.msra.mxu0 %v1798
    %5890 = vmatprep.subr.bf16.mxu0 %v1803
    %5891 = vmatpush1.bf16.msra.mxu0 %v1802
    %5892 = vmatprep.subr.bf16.mxu0 %v1807
    %5893 = vmatpush1.bf16.msra.mxu0 %v1806
    %5894 = vmatprep.mubr.bf16.mxu0 %v5475
    %5895 = vmatmul.mubr.bf16.gmra.mrb[0].mxu0 %v5474
    %v5896 = vpop.f32.mrb[0].mxu0
    %v5897 = vadd.f32 0.0, %v5896
    %v5898 = vpop.f32.mrb[0].mxu0
    %v5899 = vadd.f32 0.0, %v5898
    %v5900 = vpop.f32.mrb[0].mxu0
    %v5901 = vpop.f32.mrb[0].mxu0
    %5902 = vdwg.mxu0
    %5903 = vmatprep.subr.bf16.mxu0 %v1811
    %5904 = vmatpush1.bf16.msra.mxu0 %v1810
    %5905 = vmatprep.subr.bf16.mxu0 %v1815
    %5906 = vmatpush1.bf16.msra.mxu0 %v1814
    %5907 = vmatprep.subr.bf16.mxu0 %v1819
    %5908 = vmatpush1.bf16.msra.mxu0 %v1818
    %5909 = vmatprep.subr.bf16.mxu0 %v1823
    %5910 = vmatpush1.bf16.msra.mxu0 %v1822
    %5911 = vmatprep.subr.bf16.mxu0 %v1827
    %5912 = vmatpush1.bf16.msra.mxu0 %v1826
    %5913 = vmatprep.subr.bf16.mxu0 %v1831
    %5914 = vmatpush1.bf16.msra.mxu0 %v1830
    %5915 = vmatprep.subr.bf16.mxu0 %v1835
    %5916 = vmatpush1.bf16.msra.mxu0 %v1834
    %5917 = vmatprep.subr.bf16.mxu0 %v1839
    %5918 = vmatpush1.bf16.msra.mxu0 %v1838
    %5919 = vmatprep.subr.bf16.mxu0 %v1843
    %5920 = vmatpush1.bf16.msra.mxu0 %v1842
    %5921 = vmatprep.subr.bf16.mxu0 %v1847
    %5922 = vmatpush1.bf16.msra.mxu0 %v1846
    %5923 = vmatprep.subr.bf16.mxu0 %v1851
    %5924 = vmatpush1.bf16.msra.mxu0 %v1850
    %5925 = vmatprep.subr.bf16.mxu0 %v1855
    %5926 = vmatpush1.bf16.msra.mxu0 %v1854
    %5927 = vmatprep.subr.bf16.mxu0 %v1859
    %5928 = vmatpush1.bf16.msra.mxu0 %v1858
    %5929 = vmatprep.subr.bf16.mxu0 %v1863
    %5930 = vmatpush1.bf16.msra.mxu0 %v1862
    %5931 = vmatprep.subr.bf16.mxu0 %v1867
    %5932 = vmatpush1.bf16.msra.mxu0 %v1866
    %5933 = vmatprep.subr.bf16.mxu0 %v1871
    %5934 = vmatpush1.bf16.msra.mxu0 %v1870
    %5935 = vmatprep.mubr.bf16.mxu0 %v5477
    %5936 = vmatmul.mubr.bf16.gmra.mrb[0].mxu0 %v5476
    %v5937 = vpop.f32.mrb[0].mxu0
    %v5938 = vadd.f32 %v5897, %v5937
    %v5939 = vpop.f32.mrb[0].mxu0
    %v5940 = vadd.f32 %v5899, %v5939
    %v5941 = vpop.f32.mrb[0].mxu0
    %v5942 = vpop.f32.mrb[0].mxu0
    %5943 = vdwg.mxu0
    %5944 = vmatprep.subr.bf16.mxu0 %v1749
    %5945 = vmatpush1.bf16.msra.mxu0 %v1748
    %5946 = vmatprep.subr.bf16.mxu0 %v1753
    %5947 = vmatpush1.bf16.msra.mxu0 %v1752
    %5948 = vmatprep.subr.bf16.mxu0 %v1757
    %5949 = vmatpush1.bf16.msra.mxu0 %v1756
    %5950 = vmatprep.subr.bf16.mxu0 %v1761
    %5951 = vmatpush1.bf16.msra.mxu0 %v1760
    %5952 = vmatprep.subr.bf16.mxu0 %v1765
    %5953 = vmatpush1.bf16.msra.mxu0 %v1764
    %5954 = vmatprep.subr.bf16.mxu0 %v1769
    %5955 = vmatpush1.bf16.msra.mxu0 %v1768
    %5956 = vmatprep.subr.bf16.mxu0 %v1773
    %5957 = vmatpush1.bf16.msra.mxu0 %v1772
    %5958 = vmatprep.subr.bf16.mxu0 %v1777
    %5959 = vmatpush1.bf16.msra.mxu0 %v1776
    %5960 = vmatprep.subr.bf16.mxu0 %v1781
    %5961 = vmatpush1.bf16.msra.mxu0 %v1780
    %5962 = vmatprep.subr.bf16.mxu0 %v1785
    %5963 = vmatpush1.bf16.msra.mxu0 %v1784
    %5964 = vmatprep.subr.bf16.mxu0 %v1789
    %5965 = vmatpush1.bf16.msra.mxu0 %v1788
    %5966 = vmatprep.subr.bf16.mxu0 %v1793
    %5967 = vmatpush1.bf16.msra.mxu0 %v1792
    %5968 = vmatprep.subr.bf16.mxu0 %v1797
    %5969 = vmatpush1.bf16.msra.mxu0 %v1796
    %5970 = vmatprep.subr.bf16.mxu0 %v1801
    %5971 = vmatpush1.bf16.msra.mxu0 %v1800
    %5972 = vmatprep.subr.bf16.mxu0 %v1805
    %5973 = vmatpush1.bf16.msra.mxu0 %v1804
    %5974 = vmatprep.subr.bf16.mxu0 %v1809
    %5975 = vmatpush1.bf16.msra.mxu0 %v1808
    %5976 = vmatprep.mubr.bf16.mxu0 %v5475
    %5977 = vmatmul.mubr.bf16.gmra.mrb[0].mxu0 %v5474
    %v5978 = vpop.f32.mrb[0].mxu0
    %v5979 = vadd.f32 0.0, %v5978
    %v5980 = vpop.f32.mrb[0].mxu0
    %v5981 = vadd.f32 0.0, %v5980
    %v5982 = vpop.f32.mrb[0].mxu0
    %v5983 = vpop.f32.mrb[0].mxu0
    %5984 = vdwg.mxu0
    %5985 = vmatprep.subr.bf16.mxu0 %v1813
    %5986 = vmatpush1.bf16.msra.mxu0 %v1812
    %5987 = vmatprep.subr.bf16.mxu0 %v1817
    %5988 = vmatpush1.bf16.msra.mxu0 %v1816
    %5989 = vmatprep.subr.bf16.mxu0 %v1821
    %5990 = vmatpush1.bf16.msra.mxu0 %v1820
    %5991 = vmatprep.subr.bf16.mxu0 %v1825
    %5992 = vmatpush1.bf16.msra.mxu0 %v1824
    %5993 = vmatprep.subr.bf16.mxu0 %v1829
    %5994 = vmatpush1.bf16.msra.mxu0 %v1828
    %5995 = vmatprep.subr.bf16.mxu0 %v1833
    %5996 = vmatpush1.bf16.msra.mxu0 %v1832
    %5997 = vmatprep.subr.bf16.mxu0 %v1837
    %5998 = vmatpush1.bf16.msra.mxu0 %v1836
    %5999 = vmatprep.subr.bf16.mxu0 %v1841
    %6000 = vmatpush1.bf16.msra.mxu0 %v1840
    %6001 = vmatprep.subr.bf16.mxu0 %v1845
    %6002 = vmatpush1.bf16.msra.mxu0 %v1844
    %6003 = vmatprep.subr.bf16.mxu0 %v1849
    %6004 = vmatpush1.bf16.msra.mxu0 %v1848
    %6005 = vmatprep.subr.bf16.mxu0 %v1853
    %6006 = vmatpush1.bf16.msra.mxu0 %v1852
    %6007 = vmatprep.subr.bf16.mxu0 %v1857
    %6008 = vmatpush1.bf16.msra.mxu0 %v1856
    %6009 = vmatprep.subr.bf16.mxu0 %v1861
    %6010 = vmatpush1.bf16.msra.mxu0 %v1860
    %6011 = vmatprep.subr.bf16.mxu0 %v1865
    %6012 = vmatpush1.bf16.msra.mxu0 %v1864
    %6013 = vmatprep.subr.bf16.mxu0 %v1869
    %6014 = vmatpush1.bf16.msra.mxu0 %v1868
    %6015 = vmatprep.subr.bf16.mxu0 %v1873
    %6016 = vmatpush1.bf16.msra.mxu0 %v1872
    %6017 = vmatprep.mubr.bf16.mxu0 %v5477
    %6018 = vmatmul.mubr.bf16.gmra.mrb[0].mxu0 %v5476
    %v6019 = vpop.f32.mrb[0].mxu0
    %v6020 = vadd.f32 %v5979, %v6019
    %v6021 = vpop.f32.mrb[0].mxu0
    %v6022 = vadd.f32 %v5981, %v6021
    %v6023 = vpop.f32.mrb[0].mxu0
    %v6024 = vpop.f32.mrb[0].mxu0
    %6025 = vdwg.mxu0
    %v6026 = vadd.f32 %v857, %v5938
    %v6027 = vadd.f32 %v859, %v5940
    %v6028 = vadd.f32 %v930, %v6020
    %v6029 = vadd.f32 %v932, %v6022
    %v6030 = vtanh.pop %v6026
    %v6031 = vtanh.pop %v6027
    %v6032 = vtanh.pop %v6028
    %v6033 = vtanh.pop %v6029
    %6034 = vmatprep.subr.bf16.mxu0 %v2047
    %6035 = vmatpush1.bf16.msra.mxu0 %v2046
    %6036 = vmatprep.subr.bf16.mxu0 %v2051
    %6037 = vmatpush1.bf16.msra.mxu0 %v2050
    %6038 = vmatprep.subr.bf16.mxu0 %v2055
    %6039 = vmatpush1.bf16.msra.mxu0 %v2054
    %6040 = vmatprep.subr.bf16.mxu0 %v2059
    %6041 = vmatpush1.bf16.msra.mxu0 %v2058
    %6042 = vmatprep.subr.bf16.mxu0 %v2063
    %6043 = vmatpush1.bf16.msra.mxu0 %v2062
    %6044 = vmatprep.subr.bf16.mxu0 %v2067
    %6045 = vmatpush1.bf16.msra.mxu0 %v2066
    %6046 = vmatprep.subr.bf16.mxu0 %v2071
    %6047 = vmatpush1.bf16.msra.mxu0 %v2070
    %6048 = vmatprep.subr.bf16.mxu0 %v2075
    %6049 = vmatpush1.bf16.msra.mxu0 %v2074
    %6050 = vmatprep.subr.bf16.mxu0 %v2079
    %6051 = vmatpush1.bf16.msra.mxu0 %v2078
    %6052 = vmatprep.subr.bf16.mxu0 %v2083
    %6053 = vmatpush1.bf16.msra.mxu0 %v2082
    %6054 = vmatprep.subr.bf16.mxu0 %v2087
    %6055 = vmatpush1.bf16.msra.mxu0 %v2086
    %6056 = vmatprep.subr.bf16.mxu0 %v2091
    %6057 = vmatpush1.bf16.msra.mxu0 %v2090
    %6058 = vmatprep.subr.bf16.mxu0 %v2095
    %6059 = vmatpush1.bf16.msra.mxu0 %v2094
    %6060 = vmatprep.subr.bf16.mxu0 %v2099
    %6061 = vmatpush1.bf16.msra.mxu0 %v2098
    %6062 = vmatprep.subr.bf16.mxu0 %v2103
    %6063 = vmatpush1.bf16.msra.mxu0 %v2102
    %6064 = vmatprep.subr.bf16.mxu0 %v2107
    %6065 = vmatpush1.bf16.msra.mxu0 %v2106
    %6066 = vmatprep.mubr.bf16.mxu0 %v5475
    %6067 = vmatmul.mubr.bf16.gmra.mrb[0].mxu0 %v5474
    %v6068 = vpop.f32.mrb[0].mxu0
    %v6069 = vadd.f32 0.0, %v6068
    %v6070 = vpop.f32.mrb[0].mxu0
    %v6071 = vadd.f32 0.0, %v6070
    %v6072 = vpop.f32.mrb[0].mxu0
    %v6073 = vpop.f32.mrb[0].mxu0
    %6074 = vdwg.mxu0
    %6075 = vmatprep.subr.bf16.mxu0 %v2111
    %6076 = vmatpush1.bf16.msra.mxu0 %v2110
    %6077 = vmatprep.subr.bf16.mxu0 %v2115
    %6078 = vmatpush1.bf16.msra.mxu0 %v2114
    %6079 = vmatprep.subr.bf16.mxu0 %v2119
    %6080 = vmatpush1.bf16.msra.mxu0 %v2118
    %6081 = vmatprep.subr.bf16.mxu0 %v2123
    %6082 = vmatpush1.bf16.msra.mxu0 %v2122
    %6083 = vmatprep.subr.bf16.mxu0 %v2127
    %6084 = vmatpush1.bf16.msra.mxu0 %v2126
    %6085 = vmatprep.subr.bf16.mxu0 %v2131
    %6086 = vmatpush1.bf16.msra.mxu0 %v2130
    %6087 = vmatprep.subr.bf16.mxu0 %v2135
    %6088 = vmatpush1.bf16.msra.mxu0 %v2134
    %6089 = vmatprep.subr.bf16.mxu0 %v2139
    %6090 = vmatpush1.bf16.msra.mxu0 %v2138
    %6091 = vmatprep.subr.bf16.mxu0 %v2143
    %6092 = vmatpush1.bf16.msra.mxu0 %v2142
    %6093 = vmatprep.subr.bf16.mxu0 %v2147
    %6094 = vmatpush1.bf16.msra.mxu0 %v2146
    %6095 = vmatprep.subr.bf16.mxu0 %v2151
    %6096 = vmatpush1.bf16.msra.mxu0 %v2150
    %6097 = vmatprep.subr.bf16.mxu0 %v2155
    %6098 = vmatpush1.bf16.msra.mxu0 %v2154
    %6099 = vmatprep.subr.bf16.mxu0 %v2159
    %6100 = vmatpush1.bf16.msra.mxu0 %v2158
    %6101 = vmatprep.subr.bf16.mxu0 %v2163
    %6102 = vmatpush1.bf16.msra.mxu0 %v2162
    %6103 = vmatprep.subr.bf16.mxu0 %v2167
    %6104 = vmatpush1.bf16.msra.mxu0 %v2166
    %6105 = vmatprep.subr.bf16.mxu0 %v2171
    %6106 = vmatpush1.bf16.msra.mxu0 %v2170
    %6107 = vmatprep.mubr.bf16.mxu0 %v5477
    %6108 = vmatmul.mubr.bf16.gmra.mrb[0].mxu0 %v5476
    %v6109 = vpop.f32.mrb[0].mxu0
    %v6110 = vadd.f32 %v6069, %v6109
    %v6111 = vpop.f32.mrb[0].mxu0
    %v6112 = vadd.f32 %v6071, %v6111
    %v6113 = vpop.f32.mrb[0].mxu0
    %v6114 = vpop.f32.mrb[0].mxu0
    %6115 = vdwg.mxu0
    %6116 = vmatprep.subr.bf16.mxu0 %v2049
    %6117 = vmatpush1.bf16.msra.mxu0 %v2048
    %6118 = vmatprep.subr.bf16.mxu0 %v2053
    %6119 = vmatpush1.bf16.msra.mxu0 %v2052
    %6120 = vmatprep.subr.bf16.mxu0 %v2057
    %6121 = vmatpush1.bf16.msra.mxu0 %v2056
    %6122 = vmatprep.subr.bf16.mxu0 %v2061
    %6123 = vmatpush1.bf16.msra.mxu0 %v2060
    %6124 = vmatprep.subr.bf16.mxu0 %v2065
    %6125 = vmatpush1.bf16.msra.mxu0 %v2064
    %6126 = vmatprep.subr.bf16.mxu0 %v2069
    %6127 = vmatpush1.bf16.msra.mxu0 %v2068
    %6128 = vmatprep.subr.bf16.mxu0 %v2073
    %6129 = vmatpush1.bf16.msra.mxu0 %v2072
    %6130 = vmatprep.subr.bf16.mxu0 %v2077
    %6131 = vmatpush1.bf16.msra.mxu0 %v2076
    %6132 = vmatprep.subr.bf16.mxu0 %v2081
    %6133 = vmatpush1.bf16.msra.mxu0 %v2080
    %6134 = vmatprep.subr.bf16.mxu0 %v2085
    %6135 = vmatpush1.bf16.msra.mxu0 %v2084
    %6136 = vmatprep.subr.bf16.mxu0 %v2089
    %6137 = vmatpush1.bf16.msra.mxu0 %v2088
    %6138 = vmatprep.subr.bf16.mxu0 %v2093
    %6139 = vmatpush1.bf16.msra.mxu0 %v2092
    %6140 = vmatprep.subr.bf16.mxu0 %v2097
    %6141 = vmatpush1.bf16.msra.mxu0 %v2096
    %6142 = vmatprep.subr.bf16.mxu0 %v2101
    %6143 = vmatpush1.bf16.msra.mxu0 %v2100
    %6144 = vmatprep.subr.bf16.mxu0 %v2105
    %6145 = vmatpush1.bf16.msra.mxu0 %v2104
    %6146 = vmatprep.subr.bf16.mxu0 %v2109
    %6147 = vmatpush1.bf16.msra.mxu0 %v2108
    %6148 = vmatprep.mubr.bf16.mxu0 %v5475
    %6149 = vmatmul.mubr.bf16.gmra.mrb[0].mxu0 %v5474
    %v6150 = vpop.f32.mrb[0].mxu0
    %v6151 = vadd.f32 0.0, %v6150
    %v6152 = vpop.f32.mrb[0].mxu0
    %v6153 = vadd.f32 0.0, %v6152
    %v6154 = vpop.f32.mrb[0].mxu0
    %v6155 = vpop.f32.mrb[0].mxu0
    %6156 = vdwg.mxu0
    %6157 = vmatprep.subr.bf16.mxu0 %v2113
    %6158 = vmatpush1.bf16.msra.mxu0 %v2112
    %6159 = vmatprep.subr.bf16.mxu0 %v2117
    %6160 = vmatpush1.bf16.msra.mxu0 %v2116
    %6161 = vmatprep.subr.bf16.mxu0 %v2121
    %6162 = vmatpush1.bf16.msra.mxu0 %v2120
    %6163 = vmatprep.subr.bf16.mxu0 %v2125
    %6164 = vmatpush1.bf16.msra.mxu0 %v2124
    %6165 = vmatprep.subr.bf16.mxu0 %v2129
    %6166 = vmatpush1.bf16.msra.mxu0 %v2128
    %6167 = vmatprep.subr.bf16.mxu0 %v2133
    %6168 = vmatpush1.bf16.msra.mxu0 %v2132
    %6169 = vmatprep.subr.bf16.mxu0 %v2137
    %6170 = vmatpush1.bf16.msra.mxu0 %v2136
    %6171 = vmatprep.subr.bf16.mxu0 %v2141
    %6172 = vmatpush1.bf16.msra.mxu0 %v2140
    %6173 = vmatprep.subr.bf16.mxu0 %v2145
    %6174 = vmatpush1.bf16.msra.mxu0 %v2144
    %6175 = vmatprep.subr.bf16.mxu0 %v2149
    %6176 = vmatpush1.bf16.msra.mxu0 %v2148
    %6177 = vmatprep.subr.bf16.mxu0 %v2153
    %6178 = vmatpush1.bf16.msra.mxu0 %v2152
    %6179 = vmatprep.subr.bf16.mxu0 %v2157
    %6180 = vmatpush1.bf16.msra.mxu0 %v2156
    %6181 = vmatprep.subr.bf16.mxu0 %v2161
    %6182 = vmatpush1.bf16.msra.mxu0 %v2160
    %6183 = vmatprep.subr.bf16.mxu0 %v2165
    %6184 = vmatpush1.bf16.msra.mxu0 %v2164
    %6185 = vmatprep.subr.bf16.mxu0 %v2169
    %6186 = vmatpush1.bf16.msra.mxu0 %v2168
    %6187 = vmatprep.subr.bf16.mxu0 %v2173
    %6188 = vmatpush1.bf16.msra.mxu0 %v2172
    %6189 = vmatprep.mubr.bf16.mxu0 %v5477
    %6190 = vmatmul.mubr.bf16.gmra.mrb[0].mxu0 %v5476
    %v6191 = vpop.f32.mrb[0].mxu0
    %v6192 = vadd.f32 %v6151, %v6191
    %v6193 = vpop.f32.mrb[0].mxu0
    %v6194 = vadd.f32 %v6153, %v6193
    %v6195 = vpop.f32.mrb[0].mxu0
    %v6196 = vpop.f32.mrb[0].mxu0
    %6197 = vdwg.mxu0
    %v6198 = vadd.f32 %v1003, %v6110
    %v6199 = vadd.f32 %v1005, %v6112
    %v6200 = vadd.f32 %v1076, %v6192
    %v6201 = vadd.f32 %v1078, %v6194
    %v6202 = vxor.u32 %v6198, 2147483648
    %v6203 = vxor.u32 %v6199, 2147483648
    %v6204 = vxor.u32 %v6200, 2147483648
    %v6205 = vxor.u32 %v6201, 2147483648
    %v6206 = vmul.f32 %v6202, 1.442695
    %v6207 = vpow.pop %v6206
    %v6208 = vmul.f32 %v6203, 1.442695
    %v6209 = vpow.pop %v6208
    %v6210 = vmul.f32 %v6204, 1.442695
    %v6211 = vpow.pop %v6210
    %v6212 = vmul.f32 %v6205, 1.442695
    %v6213 = vpow.pop %v6212
    %v6214 = vadd.f32 %v6207, 1.0
    %v6215 = vadd.f32 %v6209, 1.0
    %v6216 = vadd.f32 %v6211, 1.0
    %v6217 = vadd.f32 %v6213, 1.0
    %v6218 = vrcp.pop %v6214
    %v6219 = vmul.f32 1.0, %v6218
    %v6220 = vrcp.pop %v6215
    %v6221 = vmul.f32 1.0, %v6220
    %v6222 = vrcp.pop %v6216
    %v6223 = vmul.f32 1.0, %v6222
    %v6224 = vrcp.pop %v6217
    %v6225 = vmul.f32 1.0, %v6224
    %v6226 = vmul.f32 %v5855, %v5462
    %v6227 = vmul.f32 %v5857, %v5463
    %v6228 = vmul.f32 %v5859, %v5464
    %v6229 = vmul.f32 %v5861, %v5465
    %v6230 = vmul.f32 %v5663, %v6030
    %v6231 = vmul.f32 %v5665, %v6031
    %v6232 = vmul.f32 %v5667, %v6032
    %v6233 = vmul.f32 %v5669, %v6033
    %v6234 = vadd.f32 %v6226, %v6230
    %v6235 = vadd.f32 %v6227, %v6231
    %v6236 = vadd.f32 %v6228, %v6232
    %v6237 = vadd.f32 %v6229, %v6233
    %v6238 = vtanh.pop %v6234
    %v6239 = vtanh.pop %v6235
    %v6240 = vtanh.pop %v6236
    %v6241 = vtanh.pop %v6237
    %v6242 = vmul.f32 %v6219, %v6238
    %v6243 = vmul.f32 %v6221, %v6239
    %v6244 = vmul.f32 %v6223, %v6240
    %v6245 = vmul.f32 %v6225, %v6241
    %v6246 = vpack.c.bf16 %v6242, %v6242
    %v6247 = vpack.c.bf16 %v6243, %v6243
    %v6248 = vpack.c.bf16 %v6244, %v6244
    %v6249 = vpack.c.bf16 %v6245, %v6245
    %6250 = vmatprep.subr.bf16.mxu0 %v1107
    %6251 = vmatpush1.bf16.msra.mxu0 %v1106
    %6252 = vmatprep.subr.bf16.mxu0 %v1111
    %6253 = vmatpush1.bf16.msra.mxu0 %v1110
    %6254 = vmatprep.subr.bf16.mxu0 %v1115
    %6255 = vmatpush1.bf16.msra.mxu0 %v1114
    %6256 = vmatprep.subr.bf16.mxu0 %v1119
    %6257 = vmatpush1.bf16.msra.mxu0 %v1118
    %6258 = vmatprep.subr.bf16.mxu0 %v1123
    %6259 = vmatpush1.bf16.msra.mxu0 %v1122
    %6260 = vmatprep.subr.bf16.mxu0 %v1127
    %6261 = vmatpush1.bf16.msra.mxu0 %v1126
    %6262 = vmatprep.subr.bf16.mxu0 %v1131
    %6263 = vmatpush1.bf16.msra.mxu0 %v1130
    %6264 = vmatprep.subr.bf16.mxu0 %v1135
    %6265 = vmatpush1.bf16.msra.mxu0 %v1134
    %6266 = vmatprep.subr.bf16.mxu0 %v1139
    %6267 = vmatpush1.bf16.msra.mxu0 %v1138
    %6268 = vmatprep.subr.bf16.mxu0 %v1143
    %6269 = vmatpush1.bf16.msra.mxu0 %v1142
    %6270 = vmatprep.subr.bf16.mxu0 %v1147
    %6271 = vmatpush1.bf16.msra.mxu0 %v1146
    %6272 = vmatprep.subr.bf16.mxu0 %v1151
    %6273 = vmatpush1.bf16.msra.mxu0 %v1150
    %6274 = vmatprep.subr.bf16.mxu0 %v1155
    %6275 = vmatpush1.bf16.msra.mxu0 %v1154
    %6276 = vmatprep.subr.bf16.mxu0 %v1159
    %6277 = vmatpush1.bf16.msra.mxu0 %v1158
    %6278 = vmatprep.subr.bf16.mxu0 %v1163
    %6279 = vmatpush1.bf16.msra.mxu0 %v1162
    %6280 = vmatprep.subr.bf16.mxu0 %v1167
    %6281 = vmatpush1.bf16.msra.mxu0 %v1166
    %6282 = vmatprep.mubr.bf16.mxu0 %v6247
    %6283 = vmatmul.mubr.bf16.gmra.mrb[0].mxu0 %v6246
    %v6284 = vpop.f32.mrb[0].mxu0
    %v6285 = vadd.f32 0.0, %v6284
    %v6286 = vpop.f32.mrb[0].mxu0
    %v6287 = vadd.f32 0.0, %v6286
    %v6288 = vpop.f32.mrb[0].mxu0
    %v6289 = vpop.f32.mrb[0].mxu0
    %6290 = vdwg.mxu0
    %6291 = vmatprep.subr.bf16.mxu0 %v1171
    %6292 = vmatpush1.bf16.msra.mxu0 %v1170
    %6293 = vmatprep.subr.bf16.mxu0 %v1175
    %6294 = vmatpush1.bf16.msra.mxu0 %v1174
    %6295 = vmatprep.subr.bf16.mxu0 %v1179
    %6296 = vmatpush1.bf16.msra.mxu0 %v1178
    %6297 = vmatprep.subr.bf16.mxu0 %v1183
    %6298 = vmatpush1.bf16.msra.mxu0 %v1182
    %6299 = vmatprep.subr.bf16.mxu0 %v1187
    %6300 = vmatpush1.bf16.msra.mxu0 %v1186
    %6301 = vmatprep.subr.bf16.mxu0 %v1191
    %6302 = vmatpush1.bf16.msra.mxu0 %v1190
    %6303 = vmatprep.subr.bf16.mxu0 %v1195
    %6304 = vmatpush1.bf16.msra.mxu0 %v1194
    %6305 = vmatprep.subr.bf16.mxu0 %v1199
    %6306 = vmatpush1.bf16.msra.mxu0 %v1198
    %6307 = vmatprep.subr.bf16.mxu0 %v1203
    %6308 = vmatpush1.bf16.msra.mxu0 %v1202
    %6309 = vmatprep.subr.bf16.mxu0 %v1207
    %6310 = vmatpush1.bf16.msra.mxu0 %v1206
    %6311 = vmatprep.subr.bf16.mxu0 %v1211
    %6312 = vmatpush1.bf16.msra.mxu0 %v1210
    %6313 = vmatprep.subr.bf16.mxu0 %v1215
    %6314 = vmatpush1.bf16.msra.mxu0 %v1214
    %6315 = vmatprep.subr.bf16.mxu0 %v1219
    %6316 = vmatpush1.bf16.msra.mxu0 %v1218
    %6317 = vmatprep.subr.bf16.mxu0 %v1223
    %6318 = vmatpush1.bf16.msra.mxu0 %v1222
    %6319 = vmatprep.subr.bf16.mxu0 %v1227
    %6320 = vmatpush1.bf16.msra.mxu0 %v1226
    %6321 = vmatprep.subr.bf16.mxu0 %v1231
    %6322 = vmatpush1.bf16.msra.mxu0 %v1230
    %6323 = vmatprep.mubr.bf16.mxu0 %v6249
    %6324 = vmatmul.mubr.bf16.gmra.mrb[0].mxu0 %v6248
    %v6325 = vpop.f32.mrb[0].mxu0
    %v6326 = vadd.f32 %v6285, %v6325
    %v6327 = vpop.f32.mrb[0].mxu0
    %v6328 = vadd.f32 %v6287, %v6327
    %v6329 = vpop.f32.mrb[0].mxu0
    %v6330 = vpop.f32.mrb[0].mxu0
    %6331 = vdwg.mxu0
    %6332 = vmatprep.subr.bf16.mxu0 %v1109
    %6333 = vmatpush1.bf16.msra.mxu0 %v1108
    %6334 = vmatprep.subr.bf16.mxu0 %v1113
    %6335 = vmatpush1.bf16.msra.mxu0 %v1112
    %6336 = vmatprep.subr.bf16.mxu0 %v1117
    %6337 = vmatpush1.bf16.msra.mxu0 %v1116
    %6338 = vmatprep.subr.bf16.mxu0 %v1121
    %6339 = vmatpush1.bf16.msra.mxu0 %v1120
    %6340 = vmatprep.subr.bf16.mxu0 %v1125
    %6341 = vmatpush1.bf16.msra.mxu0 %v1124
    %6342 = vmatprep.subr.bf16.mxu0 %v1129
    %6343 = vmatpush1.bf16.msra.mxu0 %v1128
    %6344 = vmatprep.subr.bf16.mxu0 %v1133
    %6345 = vmatpush1.bf16.msra.mxu0 %v1132
    %6346 = vmatprep.subr.bf16.mxu0 %v1137
    %6347 = vmatpush1.bf16.msra.mxu0 %v1136
    %6348 = vmatprep.subr.bf16.mxu0 %v1141
    %6349 = vmatpush1.bf16.msra.mxu0 %v1140
    %6350 = vmatprep.subr.bf16.mxu0 %v1145
    %6351 = vmatpush1.bf16.msra.mxu0 %v1144
    %6352 = vmatprep.subr.bf16.mxu0 %v1149
    %6353 = vmatpush1.bf16.msra.mxu0 %v1148
    %6354 = vmatprep.subr.bf16.mxu0 %v1153
    %6355 = vmatpush1.bf16.msra.mxu0 %v1152
    %6356 = vmatprep.subr.bf16.mxu0 %v1157
    %6357 = vmatpush1.bf16.msra.mxu0 %v1156
    %6358 = vmatprep.subr.bf16.mxu0 %v1161
    %6359 = vmatpush1.bf16.msra.mxu0 %v1160
    %6360 = vmatprep.subr.bf16.mxu0 %v1165
    %6361 = vmatpush1.bf16.msra.mxu0 %v1164
    %6362 = vmatprep.subr.bf16.mxu0 %v1169
    %6363 = vmatpush1.bf16.msra.mxu0 %v1168
    %6364 = vmatprep.mubr.bf16.mxu0 %v6247
    %6365 = vmatmul.mubr.bf16.gmra.mrb[0].mxu0 %v6246
    %v6366 = vpop.f32.mrb[0].mxu0
    %v6367 = vadd.f32 0.0, %v6366
    %v6368 = vpop.f32.mrb[0].mxu0
    %v6369 = vadd.f32 0.0, %v6368
    %v6370 = vpop.f32.mrb[0].mxu0
    %v6371 = vpop.f32.mrb[0].mxu0
    %6372 = vdwg.mxu0
    %6373 = vmatprep.subr.bf16.mxu0 %v1173
    %6374 = vmatpush1.bf16.msra.mxu0 %v1172
    %6375 = vmatprep.subr.bf16.mxu0 %v1177
    %6376 = vmatpush1.bf16.msra.mxu0 %v1176
    %6377 = vmatprep.subr.bf16.mxu0 %v1181
    %6378 = vmatpush1.bf16.msra.mxu0 %v1180
    %6379 = vmatprep.subr.bf16.mxu0 %v1185
    %6380 = vmatpush1.bf16.msra.mxu0 %v1184
    %6381 = vmatprep.subr.bf16.mxu0 %v1189
    %6382 = vmatpush1.bf16.msra.mxu0 %v1188
    %6383 = vmatprep.subr.bf16.mxu0 %v1193
    %6384 = vmatpush1.bf16.msra.mxu0 %v1192
    %6385 = vmatprep.subr.bf16.mxu0 %v1197
    %6386 = vmatpush1.bf16.msra.mxu0 %v1196
    %6387 = vmatprep.subr.bf16.mxu0 %v1201
    %6388 = vmatpush1.bf16.msra.mxu0 %v1200
    %6389 = vmatprep.subr.bf16.mxu0 %v1205
    %6390 = vmatpush1.bf16.msra.mxu0 %v1204
    %6391 = vmatprep.subr.bf16.mxu0 %v1209
    %6392 = vmatpush1.bf16.msra.mxu0 %v1208
    %6393 = vmatprep.subr.bf16.mxu0 %v1213
    %6394 = vmatpush1.bf16.msra.mxu0 %v1212
    %6395 = vmatprep.subr.bf16.mxu0 %v1217
    %6396 = vmatpush1.bf16.msra.mxu0 %v1216
    %6397 = vmatprep.subr.bf16.mxu0 %v1221
    %6398 = vmatpush1.bf16.msra.mxu0 %v1220
    %6399 = vmatprep.subr.bf16.mxu0 %v1225
    %6400 = vmatpush1.bf16.msra.mxu0 %v1224
    %6401 = vmatprep.subr.bf16.mxu0 %v1229
    %6402 = vmatpush1.bf16.msra.mxu0 %v1228
    %6403 = vmatprep.subr.bf16.mxu0 %v1233
    %6404 = vmatpush1.bf16.msra.mxu0 %v1232
    %6405 = vmatprep.mubr.bf16.mxu0 %v6249
    %6406 = vmatmul.mubr.bf16.gmra.mrb[0].mxu0 %v6248
    %v6407 = vpop.f32.mrb[0].mxu0
    %v6408 = vadd.f32 %v6367, %v6407
    %v6409 = vpop.f32.mrb[0].mxu0
    %v6410 = vadd.f32 %v6369, %v6409
    %v6411 = vpop.f32.mrb[0].mxu0
    %v6412 = vpop.f32.mrb[0].mxu0
    %6413 = vdwg.mxu0
    %v6414 = vadd.f32 %v571, %v6326
    %v6415 = vadd.f32 %v573, %v6328
    %v6416 = vadd.f32 %v644, %v6408
    %v6417 = vadd.f32 %v646, %v6410
    %v6418 = vxor.u32 %v6414, 2147483648
    %v6419 = vxor.u32 %v6415, 2147483648
    %v6420 = vxor.u32 %v6416, 2147483648
    %v6421 = vxor.u32 %v6417, 2147483648
    %v6422 = vmul.f32 %v6418, 1.442695
    %v6423 = vpow.pop %v6422
    %v6424 = vmul.f32 %v6419, 1.442695
    %v6425 = vpow.pop %v6424
    %v6426 = vmul.f32 %v6420, 1.442695
    %v6427 = vpow.pop %v6426
    %v6428 = vmul.f32 %v6421, 1.442695
    %v6429 = vpow.pop %v6428
    %v6430 = vadd.f32 %v6423, 1.0
    %v6431 = vadd.f32 %v6425, 1.0
    %v6432 = vadd.f32 %v6427, 1.0
    %v6433 = vadd.f32 %v6429, 1.0
    %v6434 = vrcp.pop %v6430
    %v6435 = vmul.f32 1.0, %v6434
    %v6436 = vrcp.pop %v6431
    %v6437 = vmul.f32 1.0, %v6436
    %v6438 = vrcp.pop %v6432
    %v6439 = vmul.f32 1.0, %v6438
    %v6440 = vrcp.pop %v6433
    %v6441 = vmul.f32 1.0, %v6440
    %6442 = vmatprep.subr.bf16.mxu0 %v1427
    %6443 = vmatpush1.bf16.msra.mxu0 %v1426
    %6444 = vmatprep.subr.bf16.mxu0 %v1431
    %6445 = vmatpush1.bf16.msra.mxu0 %v1430
    %6446 = vmatprep.subr.bf16.mxu0 %v1435
    %6447 = vmatpush1.bf16.msra.mxu0 %v1434
    %6448 = vmatprep.subr.bf16.mxu0 %v1439
    %6449 = vmatpush1.bf16.msra.mxu0 %v1438
    %6450 = vmatprep.subr.bf16.mxu0 %v1443
    %6451 = vmatpush1.bf16.msra.mxu0 %v1442
    %6452 = vmatprep.subr.bf16.mxu0 %v1447
    %6453 = vmatpush1.bf16.msra.mxu0 %v1446
    %6454 = vmatprep.subr.bf16.mxu0 %v1451
    %6455 = vmatpush1.bf16.msra.mxu0 %v1450
    %6456 = vmatprep.subr.bf16.mxu0 %v1455
    %6457 = vmatpush1.bf16.msra.mxu0 %v1454
    %6458 = vmatprep.subr.bf16.mxu0 %v1459
    %6459 = vmatpush1.bf16.msra.mxu0 %v1458
    %6460 = vmatprep.subr.bf16.mxu0 %v1463
    %6461 = vmatpush1.bf16.msra.mxu0 %v1462
    %6462 = vmatprep.subr.bf16.mxu0 %v1467
    %6463 = vmatpush1.bf16.msra.mxu0 %v1466
    %6464 = vmatprep.subr.bf16.mxu0 %v1471
    %6465 = vmatpush1.bf16.msra.mxu0 %v1470
    %6466 = vmatprep.subr.bf16.mxu0 %v1475
    %6467 = vmatpush1.bf16.msra.mxu0 %v1474
    %6468 = vmatprep.subr.bf16.mxu0 %v1479
    %6469 = vmatpush1.bf16.msra.mxu0 %v1478
    %6470 = vmatprep.subr.bf16.mxu0 %v1483
    %6471 = vmatpush1.bf16.msra.mxu0 %v1482
    %6472 = vmatprep.subr.bf16.mxu0 %v1487
    %6473 = vmatpush1.bf16.msra.mxu0 %v1486
    %6474 = vmatprep.mubr.bf16.mxu0 %v6247
    %6475 = vmatmul.mubr.bf16.gmra.mrb[0].mxu0 %v6246
    %v6476 = vpop.f32.mrb[0].mxu0
    %v6477 = vadd.f32 0.0, %v6476
    %v6478 = vpop.f32.mrb[0].mxu0
    %v6479 = vadd.f32 0.0, %v6478
    %v6480 = vpop.f32.mrb[0].mxu0
    %v6481 = vpop.f32.mrb[0].mxu0
    %6482 = vdwg.mxu0
    %6483 = vmatprep.subr.bf16.mxu0 %v1491
    %6484 = vmatpush1.bf16.msra.mxu0 %v1490
    %6485 = vmatprep.subr.bf16.mxu0 %v1495
    %6486 = vmatpush1.bf16.msra.mxu0 %v1494
    %6487 = vmatprep.subr.bf16.mxu0 %v1499
    %6488 = vmatpush1.bf16.msra.mxu0 %v1498
    %6489 = vmatprep.subr.bf16.mxu0 %v1503
    %6490 = vmatpush1.bf16.msra.mxu0 %v1502
    %6491 = vmatprep.subr.bf16.mxu0 %v1507
    %6492 = vmatpush1.bf16.msra.mxu0 %v1506
    %6493 = vmatprep.subr.bf16.mxu0 %v1511
    %6494 = vmatpush1.bf16.msra.mxu0 %v1510
    %6495 = vmatprep.subr.bf16.mxu0 %v1515
    %6496 = vmatpush1.bf16.msra.mxu0 %v1514
    %6497 = vmatprep.subr.bf16.mxu0 %v1519
    %6498 = vmatpush1.bf16.msra.mxu0 %v1518
    %6499 = vmatprep.subr.bf16.mxu0 %v1523
    %6500 = vmatpush1.bf16.msra.mxu0 %v1522
    %6501 = vmatprep.subr.bf16.mxu0 %v1527
    %6502 = vmatpush1.bf16.msra.mxu0 %v1526
    %6503 = vmatprep.subr.bf16.mxu0 %v1531
    %6504 = vmatpush1.bf16.msra.mxu0 %v1530
    %6505 = vmatprep.subr.bf16.mxu0 %v1535
    %6506 = vmatpush1.bf16.msra.mxu0 %v1534
    %6507 = vmatprep.subr.bf16.mxu0 %v1539
    %6508 = vmatpush1.bf16.msra.mxu0 %v1538
    %6509 = vmatprep.subr.bf16.mxu0 %v1543
    %6510 = vmatpush1.bf16.msra.mxu0 %v1542
    %6511 = vmatprep.subr.bf16.mxu0 %v1547
    %6512 = vmatpush1.bf16.msra.mxu0 %v1546
    %6513 = vmatprep.subr.bf16.mxu0 %v1551
    %6514 = vmatpush1.bf16.msra.mxu0 %v1550
    %6515 = vmatprep.mubr.bf16.mxu0 %v6249
    %6516 = vmatmul.mubr.bf16.gmra.mrb[0].mxu0 %v6248
    %v6517 = vpop.f32.mrb[0].mxu0
    %v6518 = vadd.f32 %v6477, %v6517
    %v6519 = vpop.f32.mrb[0].mxu0
    %v6520 = vadd.f32 %v6479, %v6519
    %v6521 = vpop.f32.mrb[0].mxu0
    %v6522 = vpop.f32.mrb[0].mxu0
    %6523 = vdwg.mxu0
    %6524 = vmatprep.subr.bf16.mxu0 %v1429
    %6525 = vmatpush1.bf16.msra.mxu0 %v1428
    %6526 = vmatprep.subr.bf16.mxu0 %v1433
    %6527 = vmatpush1.bf16.msra.mxu0 %v1432
    %6528 = vmatprep.subr.bf16.mxu0 %v1437
    %6529 = vmatpush1.bf16.msra.mxu0 %v1436
    %6530 = vmatprep.subr.bf16.mxu0 %v1441
    %6531 = vmatpush1.bf16.msra.mxu0 %v1440
    %6532 = vmatprep.subr.bf16.mxu0 %v1445
    %6533 = vmatpush1.bf16.msra.mxu0 %v1444
    %6534 = vmatprep.subr.bf16.mxu0 %v1449
    %6535 = vmatpush1.bf16.msra.mxu0 %v1448
    %6536 = vmatprep.subr.bf16.mxu0 %v1453
    %6537 = vmatpush1.bf16.msra.mxu0 %v1452
    %6538 = vmatprep.subr.bf16.mxu0 %v1457
    %6539 = vmatpush1.bf16.msra.mxu0 %v1456
    %6540 = vmatprep.subr.bf16.mxu0 %v1461
    %6541 = vmatpush1.bf16.msra.mxu0 %v1460
    %6542 = vmatprep.subr.bf16.mxu0 %v1465
    %6543 = vmatpush1.bf16.msra.mxu0 %v1464
    %6544 = vmatprep.subr.bf16.mxu0 %v1469
    %6545 = vmatpush1.bf16.msra.mxu0 %v1468
    %6546 = vmatprep.subr.bf16.mxu0 %v1473
    %6547 = vmatpush1.bf16.msra.mxu0 %v1472
    %6548 = vmatprep.subr.bf16.mxu0 %v1477
    %6549 = vmatpush1.bf16.msra.mxu0 %v1476
    %6550 = vmatprep.subr.bf16.mxu0 %v1481
    %6551 = vmatpush1.bf16.msra.mxu0 %v1480
    %6552 = vmatprep.subr.bf16.mxu0 %v1485
    %6553 = vmatpush1.bf16.msra.mxu0 %v1484
    %6554 = vmatprep.subr.bf16.mxu0 %v1489
    %6555 = vmatpush1.bf16.msra.mxu0 %v1488
    %6556 = vmatprep.mubr.bf16.mxu0 %v6247
    %6557 = vmatmul.mubr.bf16.gmra.mrb[0].mxu0 %v6246
    %v6558 = vpop.f32.mrb[0].mxu0
    %v6559 = vadd.f32 0.0, %v6558
    %v6560 = vpop.f32.mrb[0].mxu0
    %v6561 = vadd.f32 0.0, %v6560
    %v6562 = vpop.f32.mrb[0].mxu0
    %v6563 = vpop.f32.mrb[0].mxu0
    %6564 = vdwg.mxu0
    %6565 = vmatprep.subr.bf16.mxu0 %v1493
    %6566 = vmatpush1.bf16.msra.mxu0 %v1492
    %6567 = vmatprep.subr.bf16.mxu0 %v1497
    %6568 = vmatpush1.bf16.msra.mxu0 %v1496
    %6569 = vmatprep.subr.bf16.mxu0 %v1501
    %6570 = vmatpush1.bf16.msra.mxu0 %v1500
    %6571 = vmatprep.subr.bf16.mxu0 %v1505
    %6572 = vmatpush1.bf16.msra.mxu0 %v1504
    %6573 = vmatprep.subr.bf16.mxu0 %v1509
    %6574 = vmatpush1.bf16.msra.mxu0 %v1508
    %6575 = vmatprep.subr.bf16.mxu0 %v1513
    %6576 = vmatpush1.bf16.msra.mxu0 %v1512
    %6577 = vmatprep.subr.bf16.mxu0 %v1517
    %6578 = vmatpush1.bf16.msra.mxu0 %v1516
    %6579 = vmatprep.subr.bf16.mxu0 %v1521
    %6580 = vmatpush1.bf16.msra.mxu0 %v1520
    %6581 = vmatprep.subr.bf16.mxu0 %v1525
    %6582 = vmatpush1.bf16.msra.mxu0 %v1524
    %6583 = vmatprep.subr.bf16.mxu0 %v1529
    %6584 = vmatpush1.bf16.msra.mxu0 %v1528
    %6585 = vmatprep.subr.bf16.mxu0 %v1533
    %6586 = vmatpush1.bf16.msra.mxu0 %v1532
    %6587 = vmatprep.subr.bf16.mxu0 %v1537
    %6588 = vmatpush1.bf16.msra.mxu0 %v1536
    %6589 = vmatprep.subr.bf16.mxu0 %v1541
    %6590 = vmatpush1.bf16.msra.mxu0 %v1540
    %6591 = vmatprep.subr.bf16.mxu0 %v1545
    %6592 = vmatpush1.bf16.msra.mxu0 %v1544
    %6593 = vmatprep.subr.bf16.mxu0 %v1549
    %6594 = vmatpush1.bf16.msra.mxu0 %v1548
    %6595 = vmatprep.subr.bf16.mxu0 %v1553
    %6596 = vmatpush1.bf16.msra.mxu0 %v1552
    %6597 = vmatprep.mubr.bf16.mxu0 %v6249
    %6598 = vmatmul.mubr.bf16.gmra.mrb[0].mxu0 %v6248
    %v6599 = vpop.f32.mrb[0].mxu0
    %v6600 = vadd.f32 %v6559, %v6599
    %v6601 = vpop.f32.mrb[0].mxu0
    %v6602 = vadd.f32 %v6561, %v6601
    %v6603 = vpop.f32.mrb[0].mxu0
    %v6604 = vpop.f32.mrb[0].mxu0
    %6605 = vdwg.mxu0
    %v6606 = vadd.f32 %v717, %v6518
    %v6607 = vadd.f32 %v719, %v6520
    %v6608 = vadd.f32 %v790, %v6600
    %v6609 = vadd.f32 %v792, %v6602
    %v6610 = vxor.u32 %v6606, 2147483648
    %v6611 = vxor.u32 %v6607, 2147483648
    %v6612 = vxor.u32 %v6608, 2147483648
    %v6613 = vxor.u32 %v6609, 2147483648
    %v6614 = vmul.f32 %v6610, 1.442695
    %v6615 = vpow.pop %v6614
    %v6616 = vmul.f32 %v6611, 1.442695
    %v6617 = vpow.pop %v6616
    %v6618 = vmul.f32 %v6612, 1.442695
    %v6619 = vpow.pop %v6618
    %v6620 = vmul.f32 %v6613, 1.442695
    %v6621 = vpow.pop %v6620
    %v6622 = vadd.f32 %v6615, 1.0
    %v6623 = vadd.f32 %v6617, 1.0
    %v6624 = vadd.f32 %v6619, 1.0
    %v6625 = vadd.f32 %v6621, 1.0
    %v6626 = vrcp.pop %v6622
    %v6627 = vmul.f32 1.0, %v6626
    %v6628 = vrcp.pop %v6623
    %v6629 = vmul.f32 1.0, %v6628
    %v6630 = vrcp.pop %v6624
    %v6631 = vmul.f32 1.0, %v6630
    %v6632 = vrcp.pop %v6625
    %v6633 = vmul.f32 1.0, %v6632
    %6634 = vmatprep.subr.bf16.mxu0 %v1747
    %6635 = vmatpush1.bf16.msra.mxu0 %v1746
    %6636 = vmatprep.subr.bf16.mxu0 %v1751
    %6637 = vmatpush1.bf16.msra.mxu0 %v1750
    %6638 = vmatprep.subr.bf16.mxu0 %v1755
    %6639 = vmatpush1.bf16.msra.mxu0 %v1754
    %6640 = vmatprep.subr.bf16.mxu0 %v1759
    %6641 = vmatpush1.bf16.msra.mxu0 %v1758
    %6642 = vmatprep.subr.bf16.mxu0 %v1763
    %6643 = vmatpush1.bf16.msra.mxu0 %v1762
    %6644 = vmatprep.subr.bf16.mxu0 %v1767
    %6645 = vmatpush1.bf16.msra.mxu0 %v1766
    %6646 = vmatprep.subr.bf16.mxu0 %v1771
    %6647 = vmatpush1.bf16.msra.mxu0 %v1770
    %6648 = vmatprep.subr.bf16.mxu0 %v1775
    %6649 = vmatpush1.bf16.msra.mxu0 %v1774
    %6650 = vmatprep.subr.bf16.mxu0 %v1779
    %6651 = vmatpush1.bf16.msra.mxu0 %v1778
    %6652 = vmatprep.subr.bf16.mxu0 %v1783
    %6653 = vmatpush1.bf16.msra.mxu0 %v1782
    %6654 = vmatprep.subr.bf16.mxu0 %v1787
    %6655 = vmatpush1.bf16.msra.mxu0 %v1786
    %6656 = vmatprep.subr.bf16.mxu0 %v1791
    %6657 = vmatpush1.bf16.msra.mxu0 %v1790
    %6658 = vmatprep.subr.bf16.mxu0 %v1795
    %6659 = vmatpush1.bf16.msra.mxu0 %v1794
    %6660 = vmatprep.subr.bf16.mxu0 %v1799
    %6661 = vmatpush1.bf16.msra.mxu0 %v1798
    %6662 = vmatprep.subr.bf16.mxu0 %v1803
    %6663 = vmatpush1.bf16.msra.mxu0 %v1802
    %6664 = vmatprep.subr.bf16.mxu0 %v1807
    %6665 = vmatpush1.bf16.msra.mxu0 %v1806
    %6666 = vmatprep.mubr.bf16.mxu0 %v6247
    %6667 = vmatmul.mubr.bf16.gmra.mrb[0].mxu0 %v6246
    %v6668 = vpop.f32.mrb[0].mxu0
    %v6669 = vadd.f32 0.0, %v6668
    %v6670 = vpop.f32.mrb[0].mxu0
    %v6671 = vadd.f32 0.0, %v6670
    %v6672 = vpop.f32.mrb[0].mxu0
    %v6673 = vpop.f32.mrb[0].mxu0
    %6674 = vdwg.mxu0
    %6675 = vmatprep.subr.bf16.mxu0 %v1811
    %6676 = vmatpush1.bf16.msra.mxu0 %v1810
    %6677 = vmatprep.subr.bf16.mxu0 %v1815
    %6678 = vmatpush1.bf16.msra.mxu0 %v1814
    %6679 = vmatprep.subr.bf16.mxu0 %v1819
    %6680 = vmatpush1.bf16.msra.mxu0 %v1818
    %6681 = vmatprep.subr.bf16.mxu0 %v1823
    %6682 = vmatpush1.bf16.msra.mxu0 %v1822
    %6683 = vmatprep.subr.bf16.mxu0 %v1827
    %6684 = vmatpush1.bf16.msra.mxu0 %v1826
    %6685 = vmatprep.subr.bf16.mxu0 %v1831
    %6686 = vmatpush1.bf16.msra.mxu0 %v1830
    %6687 = vmatprep.subr.bf16.mxu0 %v1835
    %6688 = vmatpush1.bf16.msra.mxu0 %v1834
    %6689 = vmatprep.subr.bf16.mxu0 %v1839
    %6690 = vmatpush1.bf16.msra.mxu0 %v1838
    %6691 = vmatprep.subr.bf16.mxu0 %v1843
    %6692 = vmatpush1.bf16.msra.mxu0 %v1842
    %6693 = vmatprep.subr.bf16.mxu0 %v1847
    %6694 = vmatpush1.bf16.msra.mxu0 %v1846
    %6695 = vmatprep.subr.bf16.mxu0 %v1851
    %6696 = vmatpush1.bf16.msra.mxu0 %v1850
    %6697 = vmatprep.subr.bf16.mxu0 %v1855
    %6698 = vmatpush1.bf16.msra.mxu0 %v1854
    %6699 = vmatprep.subr.bf16.mxu0 %v1859
    %6700 = vmatpush1.bf16.msra.mxu0 %v1858
    %6701 = vmatprep.subr.bf16.mxu0 %v1863
    %6702 = vmatpush1.bf16.msra.mxu0 %v1862
    %6703 = vmatprep.subr.bf16.mxu0 %v1867
    %6704 = vmatpush1.bf16.msra.mxu0 %v1866
    %6705 = vmatprep.subr.bf16.mxu0 %v1871
    %6706 = vmatpush1.bf16.msra.mxu0 %v1870
    %6707 = vmatprep.mubr.bf16.mxu0 %v6249
    %6708 = vmatmul.mubr.bf16.gmra.mrb[0].mxu0 %v6248
    %v6709 = vpop.f32.mrb[0].mxu0
    %v6710 = vadd.f32 %v6669, %v6709
    %v6711 = vpop.f32.mrb[0].mxu0
    %v6712 = vadd.f32 %v6671, %v6711
    %v6713 = vpop.f32.mrb[0].mxu0
    %v6714 = vpop.f32.mrb[0].mxu0
    %6715 = vdwg.mxu0
    %6716 = vmatprep.subr.bf16.mxu0 %v1749
    %6717 = vmatpush1.bf16.msra.mxu0 %v1748
    %6718 = vmatprep.subr.bf16.mxu0 %v1753
    %6719 = vmatpush1.bf16.msra.mxu0 %v1752
    %6720 = vmatprep.subr.bf16.mxu0 %v1757
    %6721 = vmatpush1.bf16.msra.mxu0 %v1756
    %6722 = vmatprep.subr.bf16.mxu0 %v1761
    %6723 = vmatpush1.bf16.msra.mxu0 %v1760
    %6724 = vmatprep.subr.bf16.mxu0 %v1765
    %6725 = vmatpush1.bf16.msra.mxu0 %v1764
    %6726 = vmatprep.subr.bf16.mxu0 %v1769
    %6727 = vmatpush1.bf16.msra.mxu0 %v1768
    %6728 = vmatprep.subr.bf16.mxu0 %v1773
    %6729 = vmatpush1.bf16.msra.mxu0 %v1772
    %6730 = vmatprep.subr.bf16.mxu0 %v1777
    %6731 = vmatpush1.bf16.msra.mxu0 %v1776
    %6732 = vmatprep.subr.bf16.mxu0 %v1781
    %6733 = vmatpush1.bf16.msra.mxu0 %v1780
    %6734 = vmatprep.subr.bf16.mxu0 %v1785
    %6735 = vmatpush1.bf16.msra.mxu0 %v1784
    %6736 = vmatprep.subr.bf16.mxu0 %v1789
    %6737 = vmatpush1.bf16.msra.mxu0 %v1788
    %6738 = vmatprep.subr.bf16.mxu0 %v1793
    %6739 = vmatpush1.bf16.msra.mxu0 %v1792
    %6740 = vmatprep.subr.bf16.mxu0 %v1797
    %6741 = vmatpush1.bf16.msra.mxu0 %v1796
    %6742 = vmatprep.subr.bf16.mxu0 %v1801
    %6743 = vmatpush1.bf16.msra.mxu0 %v1800
    %6744 = vmatprep.subr.bf16.mxu0 %v1805
    %6745 = vmatpush1.bf16.msra.mxu0 %v1804
    %6746 = vmatprep.subr.bf16.mxu0 %v1809
    %6747 = vmatpush1.bf16.msra.mxu0 %v1808
    %6748 = vmatprep.mubr.bf16.mxu0 %v6247
    %6749 = vmatmul.mubr.bf16.gmra.mrb[0].mxu0 %v6246
    %v6750 = vpop.f32.mrb[0].mxu0
    %v6751 = vadd.f32 0.0, %v6750
    %v6752 = vpop.f32.mrb[0].mxu0
    %v6753 = vadd.f32 0.0, %v6752
    %v6754 = vpop.f32.mrb[0].mxu0
    %v6755 = vpop.f32.mrb[0].mxu0
    %6756 = vdwg.mxu0
    %6757 = vmatprep.subr.bf16.mxu0 %v1813
    %6758 = vmatpush1.bf16.msra.mxu0 %v1812
    %6759 = vmatprep.subr.bf16.mxu0 %v1817
    %6760 = vmatpush1.bf16.msra.mxu0 %v1816
    %6761 = vmatprep.subr.bf16.mxu0 %v1821
    %6762 = vmatpush1.bf16.msra.mxu0 %v1820
    %6763 = vmatprep.subr.bf16.mxu0 %v1825
    %6764 = vmatpush1.bf16.msra.mxu0 %v1824
    %6765 = vmatprep.subr.bf16.mxu0 %v1829
    %6766 = vmatpush1.bf16.msra.mxu0 %v1828
    %6767 = vmatprep.subr.bf16.mxu0 %v1833
    %6768 = vmatpush1.bf16.msra.mxu0 %v1832
    %6769 = vmatprep.subr.bf16.mxu0 %v1837
    %6770 = vmatpush1.bf16.msra.mxu0 %v1836
    %6771 = vmatprep.subr.bf16.mxu0 %v1841
    %6772 = vmatpush1.bf16.msra.mxu0 %v1840
    %6773 = vmatprep.subr.bf16.mxu0 %v1845
    %6774 = vmatpush1.bf16.msra.mxu0 %v1844
    %6775 = vmatprep.subr.bf16.mxu0 %v1849
    %6776 = vmatpush1.bf16.msra.mxu0 %v1848
    %6777 = vmatprep.subr.bf16.mxu0 %v1853
    %6778 = vmatpush1.bf16.msra.mxu0 %v1852
    %6779 = vmatprep.subr.bf16.mxu0 %v1857
    %6780 = vmatpush1.bf16.msra.mxu0 %v1856
    %6781 = vmatprep.subr.bf16.mxu0 %v1861
    %6782 = vmatpush1.bf16.msra.mxu0 %v1860
    %6783 = vmatprep.subr.bf16.mxu0 %v1865
    %6784 = vmatpush1.bf16.msra.mxu0 %v1864
    %6785 = vmatprep.subr.bf16.mxu0 %v1869
    %6786 = vmatpush1.bf16.msra.mxu0 %v1868
    %6787 = vmatprep.subr.bf16.mxu0 %v1873
    %6788 = vmatpush1.bf16.msra.mxu0 %v1872
    %6789 = vmatprep.mubr.bf16.mxu0 %v6249
    %6790 = vmatmul.mubr.bf16.gmra.mrb[0].mxu0 %v6248
    %v6791 = vpop.f32.mrb[0].mxu0
    %v6792 = vadd.f32 %v6751, %v6791
    %v6793 = vpop.f32.mrb[0].mxu0
    %v6794 = vadd.f32 %v6753, %v6793
    %v6795 = vpop.f32.mrb[0].mxu0
    %v6796 = vpop.f32.mrb[0].mxu0
    %6797 = vdwg.mxu0
    %v6798 = vadd.f32 %v863, %v6710
    %v6799 = vadd.f32 %v865, %v6712
    %v6800 = vadd.f32 %v936, %v6792
    %v6801 = vadd.f32 %v938, %v6794
    %v6802 = vtanh.pop %v6798
    %v6803 = vtanh.pop %v6799
    %v6804 = vtanh.pop %v6800
    %v6805 = vtanh.pop %v6801
    %6806 = vmatprep.subr.bf16.mxu0 %v2047
    %6807 = vmatpush1.bf16.msra.mxu0 %v2046
    %6808 = vmatprep.subr.bf16.mxu0 %v2051
    %6809 = vmatpush1.bf16.msra.mxu0 %v2050
    %6810 = vmatprep.subr.bf16.mxu0 %v2055
    %6811 = vmatpush1.bf16.msra.mxu0 %v2054
    %6812 = vmatprep.subr.bf16.mxu0 %v2059
    %6813 = vmatpush1.bf16.msra.mxu0 %v2058
    %6814 = vmatprep.subr.bf16.mxu0 %v2063
    %6815 = vmatpush1.bf16.msra.mxu0 %v2062
    %6816 = vmatprep.subr.bf16.mxu0 %v2067
    %6817 = vmatpush1.bf16.msra.mxu0 %v2066
    %6818 = vmatprep.subr.bf16.mxu0 %v2071
    %6819 = vmatpush1.bf16.msra.mxu0 %v2070
    %6820 = vmatprep.subr.bf16.mxu0 %v2075
    %6821 = vmatpush1.bf16.msra.mxu0 %v2074
    %6822 = vmatprep.subr.bf16.mxu0 %v2079
    %6823 = vmatpush1.bf16.msra.mxu0 %v2078
    %6824 = vmatprep.subr.bf16.mxu0 %v2083
    %6825 = vmatpush1.bf16.msra.mxu0 %v2082
    %6826 = vmatprep.subr.bf16.mxu0 %v2087
    %6827 = vmatpush1.bf16.msra.mxu0 %v2086
    %6828 = vmatprep.subr.bf16.mxu0 %v2091
    %6829 = vmatpush1.bf16.msra.mxu0 %v2090
    %6830 = vmatprep.subr.bf16.mxu0 %v2095
    %6831 = vmatpush1.bf16.msra.mxu0 %v2094
    %6832 = vmatprep.subr.bf16.mxu0 %v2099
    %6833 = vmatpush1.bf16.msra.mxu0 %v2098
    %6834 = vmatprep.subr.bf16.mxu0 %v2103
    %6835 = vmatpush1.bf16.msra.mxu0 %v2102
    %6836 = vmatprep.subr.bf16.mxu0 %v2107
    %6837 = vmatpush1.bf16.msra.mxu0 %v2106
    %6838 = vmatprep.mubr.bf16.mxu0 %v6247
    %6839 = vmatmul.mubr.bf16.gmra.mrb[0].mxu0 %v6246
    %v6840 = vpop.f32.mrb[0].mxu0
    %v6841 = vadd.f32 0.0, %v6840
    %v6842 = vpop.f32.mrb[0].mxu0
    %v6843 = vadd.f32 0.0, %v6842
    %v6844 = vpop.f32.mrb[0].mxu0
    %v6845 = vpop.f32.mrb[0].mxu0
    %6846 = vdwg.mxu0
    %6847 = vmatprep.subr.bf16.mxu0 %v2111
    %6848 = vmatpush1.bf16.msra.mxu0 %v2110
    %6849 = vmatprep.subr.bf16.mxu0 %v2115
    %6850 = vmatpush1.bf16.msra.mxu0 %v2114
    %6851 = vmatprep.subr.bf16.mxu0 %v2119
    %6852 = vmatpush1.bf16.msra.mxu0 %v2118
    %6853 = vmatprep.subr.bf16.mxu0 %v2123
    %6854 = vmatpush1.bf16.msra.mxu0 %v2122
    %6855 = vmatprep.subr.bf16.mxu0 %v2127
    %6856 = vmatpush1.bf16.msra.mxu0 %v2126
    %6857 = vmatprep.subr.bf16.mxu0 %v2131
    %6858 = vmatpush1.bf16.msra.mxu0 %v2130
    %6859 = vmatprep.subr.bf16.mxu0 %v2135
    %6860 = vmatpush1.bf16.msra.mxu0 %v2134
    %6861 = vmatprep.subr.bf16.mxu0 %v2139
    %6862 = vmatpush1.bf16.msra.mxu0 %v2138
    %6863 = vmatprep.subr.bf16.mxu0 %v2143
    %6864 = vmatpush1.bf16.msra.mxu0 %v2142
    %6865 = vmatprep.subr.bf16.mxu0 %v2147
    %6866 = vmatpush1.bf16.msra.mxu0 %v2146
    %6867 = vmatprep.subr.bf16.mxu0 %v2151
    %6868 = vmatpush1.bf16.msra.mxu0 %v2150
    %6869 = vmatprep.subr.bf16.mxu0 %v2155
    %6870 = vmatpush1.bf16.msra.mxu0 %v2154
    %6871 = vmatprep.subr.bf16.mxu0 %v2159
    %6872 = vmatpush1.bf16.msra.mxu0 %v2158
    %6873 = vmatprep.subr.bf16.mxu0 %v2163
    %6874 = vmatpush1.bf16.msra.mxu0 %v2162
    %6875 = vmatprep.subr.bf16.mxu0 %v2167
    %6876 = vmatpush1.bf16.msra.mxu0 %v2166
    %6877 = vmatprep.subr.bf16.mxu0 %v2171
    %6878 = vmatpush1.bf16.msra.mxu0 %v2170
    %6879 = vmatprep.mubr.bf16.mxu0 %v6249
    %6880 = vmatmul.mubr.bf16.gmra.mrb[0].mxu0 %v6248
    %v6881 = vpop.f32.mrb[0].mxu0
    %v6882 = vadd.f32 %v6841, %v6881
    %v6883 = vpop.f32.mrb[0].mxu0
    %v6884 = vadd.f32 %v6843, %v6883
    %v6885 = vpop.f32.mrb[0].mxu0
    %v6886 = vpop.f32.mrb[0].mxu0
    %6887 = vdwg.mxu0
    %6888 = vmatprep.subr.bf16.mxu0 %v2049
    %6889 = vmatpush1.bf16.msra.mxu0 %v2048
    %6890 = vmatprep.subr.bf16.mxu0 %v2053
    %6891 = vmatpush1.bf16.msra.mxu0 %v2052
    %6892 = vmatprep.subr.bf16.mxu0 %v2057
    %6893 = vmatpush1.bf16.msra.mxu0 %v2056
    %6894 = vmatprep.subr.bf16.mxu0 %v2061
    %6895 = vmatpush1.bf16.msra.mxu0 %v2060
    %6896 = vmatprep.subr.bf16.mxu0 %v2065
    %6897 = vmatpush1.bf16.msra.mxu0 %v2064
    %6898 = vmatprep.subr.bf16.mxu0 %v2069
    %6899 = vmatpush1.bf16.msra.mxu0 %v2068
    %6900 = vmatprep.subr.bf16.mxu0 %v2073
    %6901 = vmatpush1.bf16.msra.mxu0 %v2072
    %6902 = vmatprep.subr.bf16.mxu0 %v2077
    %6903 = vmatpush1.bf16.msra.mxu0 %v2076
    %6904 = vmatprep.subr.bf16.mxu0 %v2081
    %6905 = vmatpush1.bf16.msra.mxu0 %v2080
    %6906 = vmatprep.subr.bf16.mxu0 %v2085
    %6907 = vmatpush1.bf16.msra.mxu0 %v2084
    %6908 = vmatprep.subr.bf16.mxu0 %v2089
    %6909 = vmatpush1.bf16.msra.mxu0 %v2088
    %6910 = vmatprep.subr.bf16.mxu0 %v2093
    %6911 = vmatpush1.bf16.msra.mxu0 %v2092
    %6912 = vmatprep.subr.bf16.mxu0 %v2097
    %6913 = vmatpush1.bf16.msra.mxu0 %v2096
    %6914 = vmatprep.subr.bf16.mxu0 %v2101
    %6915 = vmatpush1.bf16.msra.mxu0 %v2100
    %6916 = vmatprep.subr.bf16.mxu0 %v2105
    %6917 = vmatpush1.bf16.msra.mxu0 %v2104
    %6918 = vmatprep.subr.bf16.mxu0 %v2109
    %6919 = vmatpush1.bf16.msra.mxu0 %v2108
    %6920 = vmatprep.mubr.bf16.mxu0 %v6247
    %6921 = vmatmul.mubr.bf16.gmra.mrb[0].mxu0 %v6246
    %v6922 = vpop.f32.mrb[0].mxu0
    %v6923 = vadd.f32 0.0, %v6922
    %v6924 = vpop.f32.mrb[0].mxu0
    %v6925 = vadd.f32 0.0, %v6924
    %v6926 = vpop.f32.mrb[0].mxu0
    %v6927 = vpop.f32.mrb[0].mxu0
    %6928 = vdwg.mxu0
    %6929 = vmatprep.subr.bf16.mxu0 %v2113
    %6930 = vmatpush1.bf16.msra.mxu0 %v2112
    %6931 = vmatprep.subr.bf16.mxu0 %v2117
    %6932 = vmatpush1.bf16.msra.mxu0 %v2116
    %6933 = vmatprep.subr.bf16.mxu0 %v2121
    %6934 = vmatpush1.bf16.msra.mxu0 %v2120
    %6935 = vmatprep.subr.bf16.mxu0 %v2125
    %6936 = vmatpush1.bf16.msra.mxu0 %v2124
    %6937 = vmatprep.subr.bf16.mxu0 %v2129
    %6938 = vmatpush1.bf16.msra.mxu0 %v2128
    %6939 = vmatprep.subr.bf16.mxu0 %v2133
    %6940 = vmatpush1.bf16.msra.mxu0 %v2132
    %6941 = vmatprep.subr.bf16.mxu0 %v2137
    %6942 = vmatpush1.bf16.msra.mxu0 %v2136
    %6943 = vmatprep.subr.bf16.mxu0 %v2141
    %6944 = vmatpush1.bf16.msra.mxu0 %v2140
    %6945 = vmatprep.subr.bf16.mxu0 %v2145
    %6946 = vmatpush1.bf16.msra.mxu0 %v2144
    %6947 = vmatprep.subr.bf16.mxu0 %v2149
    %6948 = vmatpush1.bf16.msra.mxu0 %v2148
    %6949 = vmatprep.subr.bf16.mxu0 %v2153
    %6950 = vmatpush1.bf16.msra.mxu0 %v2152
    %6951 = vmatprep.subr.bf16.mxu0 %v2157
    %6952 = vmatpush1.bf16.msra.mxu0 %v2156
    %6953 = vmatprep.subr.bf16.mxu0 %v2161
    %6954 = vmatpush1.bf16.msra.mxu0 %v2160
    %6955 = vmatprep.subr.bf16.mxu0 %v2165
    %6956 = vmatpush1.bf16.msra.mxu0 %v2164
    %6957 = vmatprep.subr.bf16.mxu0 %v2169
    %6958 = vmatpush1.bf16.msra.mxu0 %v2168
    %6959 = vmatprep.subr.bf16.mxu0 %v2173
    %6960 = vmatpush1.bf16.msra.mxu0 %v2172
    %6961 = vmatprep.mubr.bf16.mxu0 %v6249
    %6962 = vmatmul.mubr.bf16.gmra.mrb[0].mxu0 %v6248
    %v6963 = vpop.f32.mrb[0].mxu0
    %v6964 = vadd.f32 %v6923, %v6963
    %v6965 = vpop.f32.mrb[0].mxu0
    %v6966 = vadd.f32 %v6925, %v6965
    %v6967 = vpop.f32.mrb[0].mxu0
    %v6968 = vpop.f32.mrb[0].mxu0
    %6969 = vdwg.mxu0
    %v6970 = vadd.f32 %v1009, %v6882
    %v6971 = vadd.f32 %v1011, %v6884
    %v6972 = vadd.f32 %v1082, %v6964
    %v6973 = vadd.f32 %v1084, %v6966
    %v6974 = vxor.u32 %v6970, 2147483648
    %v6975 = vxor.u32 %v6971, 2147483648
    %v6976 = vxor.u32 %v6972, 2147483648
    %v6977 = vxor.u32 %v6973, 2147483648
    %v6978 = vmul.f32 %v6974, 1.442695
    %v6979 = vpow.pop %v6978
    %v6980 = vmul.f32 %v6975, 1.442695
    %v6981 = vpow.pop %v6980
    %v6982 = vmul.f32 %v6976, 1.442695
    %v6983 = vpow.pop %v6982
    %v6984 = vmul.f32 %v6977, 1.442695
    %v6985 = vpow.pop %v6984
    %v6986 = vadd.f32 %v6979, 1.0
    %v6987 = vadd.f32 %v6981, 1.0
    %v6988 = vadd.f32 %v6983, 1.0
    %v6989 = vadd.f32 %v6985, 1.0
    %v6990 = vrcp.pop %v6986
    %v6991 = vmul.f32 1.0, %v6990
    %v6992 = vrcp.pop %v6987
    %v6993 = vmul.f32 1.0, %v6992
    %v6994 = vrcp.pop %v6988
    %v6995 = vmul.f32 1.0, %v6994
    %v6996 = vrcp.pop %v6989
    %v6997 = vmul.f32 1.0, %v6996
    %v6998 = vmul.f32 %v6627, %v6234
    %v6999 = vmul.f32 %v6629, %v6235
    %v7000 = vmul.f32 %v6631, %v6236
    %v7001 = vmul.f32 %v6633, %v6237
    %v7002 = vmul.f32 %v6435, %v6802
    %v7003 = vmul.f32 %v6437, %v6803
    %v7004 = vmul.f32 %v6439, %v6804
    %v7005 = vmul.f32 %v6441, %v6805
    %v7006 = vadd.f32 %v6998, %v7002
    %v7007 = vadd.f32 %v6999, %v7003
    %v7008 = vadd.f32 %v7000, %v7004
    %v7009 = vadd.f32 %v7001, %v7005
    %v7010 = vtanh.pop %v7006
    %v7011 = vtanh.pop %v7007
    %v7012 = vtanh.pop %v7008
    %v7013 = vtanh.pop %v7009
    %v7014 = vmul.f32 %v6991, %v7010
    %v7015 = vmul.f32 %v6993, %v7011
    %v7016 = vmul.f32 %v6995, %v7012
    %v7017 = vmul.f32 %v6997, %v7013
    %v7018 = vpack.c.bf16 %v7014, %v7014
    %v7019 = vpack.c.bf16 %v7015, %v7015
    %v7020 = vpack.c.bf16 %v7016, %v7016
    %v7021 = vpack.c.bf16 %v7017, %v7017
    %7022 = vmatprep.subr.bf16.mxu0 %v1107
    %7023 = vmatpush1.bf16.msra.mxu0 %v1106
    %7024 = vmatprep.subr.bf16.mxu0 %v1111
    %7025 = vmatpush1.bf16.msra.mxu0 %v1110
    %7026 = vmatprep.subr.bf16.mxu0 %v1115
    %7027 = vmatpush1.bf16.msra.mxu0 %v1114
    %7028 = vmatprep.subr.bf16.mxu0 %v1119
    %7029 = vmatpush1.bf16.msra.mxu0 %v1118
    %7030 = vmatprep.subr.bf16.mxu0 %v1123
    %7031 = vmatpush1.bf16.msra.mxu0 %v1122
    %7032 = vmatprep.subr.bf16.mxu0 %v1127
    %7033 = vmatpush1.bf16.msra.mxu0 %v1126
    %7034 = vmatprep.subr.bf16.mxu0 %v1131
    %7035 = vmatpush1.bf16.msra.mxu0 %v1130
    %7036 = vmatprep.subr.bf16.mxu0 %v1135
    %7037 = vmatpush1.bf16.msra.mxu0 %v1134
    %7038 = vmatprep.subr.bf16.mxu0 %v1139
    %7039 = vmatpush1.bf16.msra.mxu0 %v1138
    %7040 = vmatprep.subr.bf16.mxu0 %v1143
    %7041 = vmatpush1.bf16.msra.mxu0 %v1142
    %7042 = vmatprep.subr.bf16.mxu0 %v1147
    %7043 = vmatpush1.bf16.msra.mxu0 %v1146
    %7044 = vmatprep.subr.bf16.mxu0 %v1151
    %7045 = vmatpush1.bf16.msra.mxu0 %v1150
    %7046 = vmatprep.subr.bf16.mxu0 %v1155
    %7047 = vmatpush1.bf16.msra.mxu0 %v1154
    %7048 = vmatprep.subr.bf16.mxu0 %v1159
    %7049 = vmatpush1.bf16.msra.mxu0 %v1158
    %7050 = vmatprep.subr.bf16.mxu0 %v1163
    %7051 = vmatpush1.bf16.msra.mxu0 %v1162
    %7052 = vmatprep.subr.bf16.mxu0 %v1167
    %7053 = vmatpush1.bf16.msra.mxu0 %v1166
    %7054 = vmatprep.mubr.bf16.mxu0 %v7019
    %7055 = vmatmul.mubr.bf16.gmra.mrb[0].mxu0 %v7018
    %v7056 = vpop.f32.mrb[0].mxu0
    %v7057 = vadd.f32 0.0, %v7056
    %v7058 = vpop.f32.mrb[0].mxu0
    %v7059 = vadd.f32 0.0, %v7058
    %v7060 = vpop.f32.mrb[0].mxu0
    %v7061 = vpop.f32.mrb[0].mxu0
    %7062 = vdwg.mxu0
    %7063 = vmatprep.subr.bf16.mxu0 %v1171
    %7064 = vmatpush1.bf16.msra.mxu0 %v1170
    %7065 = vmatprep.subr.bf16.mxu0 %v1175
    %7066 = vmatpush1.bf16.msra.mxu0 %v1174
    %7067 = vmatprep.subr.bf16.mxu0 %v1179
    %7068 = vmatpush1.bf16.msra.mxu0 %v1178
    %7069 = vmatprep.subr.bf16.mxu0 %v1183
    %7070 = vmatpush1.bf16.msra.mxu0 %v1182
    %7071 = vmatprep.subr.bf16.mxu0 %v1187
    %7072 = vmatpush1.bf16.msra.mxu0 %v1186
    %7073 = vmatprep.subr.bf16.mxu0 %v1191
    %7074 = vmatpush1.bf16.msra.mxu0 %v1190
    %7075 = vmatprep.subr.bf16.mxu0 %v1195
    %7076 = vmatpush1.bf16.msra.mxu0 %v1194
    %7077 = vmatprep.subr.bf16.mxu0 %v1199
    %7078 = vmatpush1.bf16.msra.mxu0 %v1198
    %7079 = vmatprep.subr.bf16.mxu0 %v1203
    %7080 = vmatpush1.bf16.msra.mxu0 %v1202
    %7081 = vmatprep.subr.bf16.mxu0 %v1207
    %7082 = vmatpush1.bf16.msra.mxu0 %v1206
    %7083 = vmatprep.subr.bf16.mxu0 %v1211
    %7084 = vmatpush1.bf16.msra.mxu0 %v1210
    %7085 = vmatprep.subr.bf16.mxu0 %v1215
    %7086 = vmatpush1.bf16.msra.mxu0 %v1214
    %7087 = vmatprep.subr.bf16.mxu0 %v1219
    %7088 = vmatpush1.bf16.msra.mxu0 %v1218
    %7089 = vmatprep.subr.bf16.mxu0 %v1223
    %7090 = vmatpush1.bf16.msra.mxu0 %v1222
    %7091 = vmatprep.subr.bf16.mxu0 %v1227
    %7092 = vmatpush1.bf16.msra.mxu0 %v1226
    %7093 = vmatprep.subr.bf16.mxu0 %v1231
    %7094 = vmatpush1.bf16.msra.mxu0 %v1230
    %7095 = vmatprep.mubr.bf16.mxu0 %v7021
    %7096 = vmatmul.mubr.bf16.gmra.mrb[0].mxu0 %v7020
    %v7097 = vpop.f32.mrb[0].mxu0
    %v7098 = vadd.f32 %v7057, %v7097
    %v7099 = vpop.f32.mrb[0].mxu0
    %v7100 = vadd.f32 %v7059, %v7099
    %v7101 = vpop.f32.mrb[0].mxu0
    %v7102 = vpop.f32.mrb[0].mxu0
    %7103 = vdwg.mxu0
    %7104 = vmatprep.subr.bf16.mxu0 %v1109
    %7105 = vmatpush1.bf16.msra.mxu0 %v1108
    %7106 = vmatprep.subr.bf16.mxu0 %v1113
    %7107 = vmatpush1.bf16.msra.mxu0 %v1112
    %7108 = vmatprep.subr.bf16.mxu0 %v1117
    %7109 = vmatpush1.bf16.msra.mxu0 %v1116
    %7110 = vmatprep.subr.bf16.mxu0 %v1121
    %7111 = vmatpush1.bf16.msra.mxu0 %v1120
    %7112 = vmatprep.subr.bf16.mxu0 %v1125
    %7113 = vmatpush1.bf16.msra.mxu0 %v1124
    %7114 = vmatprep.subr.bf16.mxu0 %v1129
    %7115 = vmatpush1.bf16.msra.mxu0 %v1128
    %7116 = vmatprep.subr.bf16.mxu0 %v1133
    %7117 = vmatpush1.bf16.msra.mxu0 %v1132
    %7118 = vmatprep.subr.bf16.mxu0 %v1137
    %7119 = vmatpush1.bf16.msra.mxu0 %v1136
    %7120 = vmatprep.subr.bf16.mxu0 %v1141
    %7121 = vmatpush1.bf16.msra.mxu0 %v1140
    %7122 = vmatprep.subr.bf16.mxu0 %v1145
    %7123 = vmatpush1.bf16.msra.mxu0 %v1144
    %7124 = vmatprep.subr.bf16.mxu0 %v1149
    %7125 = vmatpush1.bf16.msra.mxu0 %v1148
    %7126 = vmatprep.subr.bf16.mxu0 %v1153
    %7127 = vmatpush1.bf16.msra.mxu0 %v1152
    %7128 = vmatprep.subr.bf16.mxu0 %v1157
    %7129 = vmatpush1.bf16.msra.mxu0 %v1156
    %7130 = vmatprep.subr.bf16.mxu0 %v1161
    %7131 = vmatpush1.bf16.msra.mxu0 %v1160
    %7132 = vmatprep.subr.bf16.mxu0 %v1165
    %7133 = vmatpush1.bf16.msra.mxu0 %v1164
    %7134 = vmatprep.subr.bf16.mxu0 %v1169
    %7135 = vmatpush1.bf16.msra.mxu0 %v1168
    %7136 = vmatprep.mubr.bf16.mxu0 %v7019
    %7137 = vmatmul.mubr.bf16.gmra.mrb[0].mxu0 %v7018
    %v7138 = vpop.f32.mrb[0].mxu0
    %v7139 = vadd.f32 0.0, %v7138
    %v7140 = vpop.f32.mrb[0].mxu0
    %v7141 = vadd.f32 0.0, %v7140
    %v7142 = vpop.f32.mrb[0].mxu0
    %v7143 = vpop.f32.mrb[0].mxu0
    %7144 = vdwg.mxu0
    %7145 = vmatprep.subr.bf16.mxu0 %v1173
    %7146 = vmatpush1.bf16.msra.mxu0 %v1172
    %7147 = vmatprep.subr.bf16.mxu0 %v1177
    %7148 = vmatpush1.bf16.msra.mxu0 %v1176
    %7149 = vmatprep.subr.bf16.mxu0 %v1181
    %7150 = vmatpush1.bf16.msra.mxu0 %v1180
    %7151 = vmatprep.subr.bf16.mxu0 %v1185
    %7152 = vmatpush1.bf16.msra.mxu0 %v1184
    %7153 = vmatprep.subr.bf16.mxu0 %v1189
    %7154 = vmatpush1.bf16.msra.mxu0 %v1188
    %7155 = vmatprep.subr.bf16.mxu0 %v1193
    %7156 = vmatpush1.bf16.msra.mxu0 %v1192
    %7157 = vmatprep.subr.bf16.mxu0 %v1197
    %7158 = vmatpush1.bf16.msra.mxu0 %v1196
    %7159 = vmatprep.subr.bf16.mxu0 %v1201
    %7160 = vmatpush1.bf16.msra.mxu0 %v1200
    %7161 = vmatprep.subr.bf16.mxu0 %v1205
    %7162 = vmatpush1.bf16.msra.mxu0 %v1204
    %7163 = vmatprep.subr.bf16.mxu0 %v1209
    %7164 = vmatpush1.bf16.msra.mxu0 %v1208
    %7165 = vmatprep.subr.bf16.mxu0 %v1213
    %7166 = vmatpush1.bf16.msra.mxu0 %v1212
    %7167 = vmatprep.subr.bf16.mxu0 %v1217
    %7168 = vmatpush1.bf16.msra.mxu0 %v1216
    %7169 = vmatprep.subr.bf16.mxu0 %v1221
    %7170 = vmatpush1.bf16.msra.mxu0 %v1220
    %7171 = vmatprep.subr.bf16.mxu0 %v1225
    %7172 = vmatpush1.bf16.msra.mxu0 %v1224
    %7173 = vmatprep.subr.bf16.mxu0 %v1229
    %7174 = vmatpush1.bf16.msra.mxu0 %v1228
    %7175 = vmatprep.subr.bf16.mxu0 %v1233
    %7176 = vmatpush1.bf16.msra.mxu0 %v1232
    %7177 = vmatprep.mubr.bf16.mxu0 %v7021
    %7178 = vmatmul.mubr.bf16.gmra.mrb[0].mxu0 %v7020
    %v7179 = vpop.f32.mrb[0].mxu0
    %v7180 = vadd.f32 %v7139, %v7179
    %v7181 = vpop.f32.mrb[0].mxu0
    %v7182 = vadd.f32 %v7141, %v7181
    %v7183 = vpop.f32.mrb[0].mxu0
    %v7184 = vpop.f32.mrb[0].mxu0
    %7185 = vdwg.mxu0
    %v7186 = vadd.f32 %v575, %v7098
    %v7187 = vadd.f32 %v577, %v7100
    %v7188 = vadd.f32 %v648, %v7180
    %v7189 = vadd.f32 %v650, %v7182
    %v7190 = vxor.u32 %v7186, 2147483648
    %v7191 = vxor.u32 %v7187, 2147483648
    %v7192 = vxor.u32 %v7188, 2147483648
    %v7193 = vxor.u32 %v7189, 2147483648
    %v7194 = vmul.f32 %v7190, 1.442695
    %v7195 = vpow.pop %v7194
    %v7196 = vmul.f32 %v7191, 1.442695
    %v7197 = vpow.pop %v7196
    %v7198 = vmul.f32 %v7192, 1.442695
    %v7199 = vpow.pop %v7198
    %v7200 = vmul.f32 %v7193, 1.442695
    %v7201 = vpow.pop %v7200
    %v7202 = vadd.f32 %v7195, 1.0
    %v7203 = vadd.f32 %v7197, 1.0
    %v7204 = vadd.f32 %v7199, 1.0
    %v7205 = vadd.f32 %v7201, 1.0
    %v7206 = vrcp.pop %v7202
    %v7207 = vmul.f32 1.0, %v7206
    %v7208 = vrcp.pop %v7203
    %v7209 = vmul.f32 1.0, %v7208
    %v7210 = vrcp.pop %v7204
    %v7211 = vmul.f32 1.0, %v7210
    %v7212 = vrcp.pop %v7205
    %v7213 = vmul.f32 1.0, %v7212
    %7214 = vmatprep.subr.bf16.mxu0 %v1427
    %7215 = vmatpush1.bf16.msra.mxu0 %v1426
    %7216 = vmatprep.subr.bf16.mxu0 %v1431
    %7217 = vmatpush1.bf16.msra.mxu0 %v1430
    %7218 = vmatprep.subr.bf16.mxu0 %v1435
    %7219 = vmatpush1.bf16.msra.mxu0 %v1434
    %7220 = vmatprep.subr.bf16.mxu0 %v1439
    %7221 = vmatpush1.bf16.msra.mxu0 %v1438
    %7222 = vmatprep.subr.bf16.mxu0 %v1443
    %7223 = vmatpush1.bf16.msra.mxu0 %v1442
    %7224 = vmatprep.subr.bf16.mxu0 %v1447
    %7225 = vmatpush1.bf16.msra.mxu0 %v1446
    %7226 = vmatprep.subr.bf16.mxu0 %v1451
    %7227 = vmatpush1.bf16.msra.mxu0 %v1450
    %7228 = vmatprep.subr.bf16.mxu0 %v1455
    %7229 = vmatpush1.bf16.msra.mxu0 %v1454
    %7230 = vmatprep.subr.bf16.mxu0 %v1459
    %7231 = vmatpush1.bf16.msra.mxu0 %v1458
    %7232 = vmatprep.subr.bf16.mxu0 %v1463
    %7233 = vmatpush1.bf16.msra.mxu0 %v1462
    %7234 = vmatprep.subr.bf16.mxu0 %v1467
    %7235 = vmatpush1.bf16.msra.mxu0 %v1466
    %7236 = vmatprep.subr.bf16.mxu0 %v1471
    %7237 = vmatpush1.bf16.msra.mxu0 %v1470
    %7238 = vmatprep.subr.bf16.mxu0 %v1475
    %7239 = vmatpush1.bf16.msra.mxu0 %v1474
    %7240 = vmatprep.subr.bf16.mxu0 %v1479
    %7241 = vmatpush1.bf16.msra.mxu0 %v1478
    %7242 = vmatprep.subr.bf16.mxu0 %v1483
    %7243 = vmatpush1.bf16.msra.mxu0 %v1482
    %7244 = vmatprep.subr.bf16.mxu0 %v1487
    %7245 = vmatpush1.bf16.msra.mxu0 %v1486
    %7246 = vmatprep.mubr.bf16.mxu0 %v7019
    %7247 = vmatmul.mubr.bf16.gmra.mrb[0].mxu0 %v7018
    %v7248 = vpop.f32.mrb[0].mxu0
    %v7249 = vadd.f32 0.0, %v7248
    %v7250 = vpop.f32.mrb[0].mxu0
    %v7251 = vadd.f32 0.0, %v7250
    %v7252 = vpop.f32.mrb[0].mxu0
    %v7253 = vpop.f32.mrb[0].mxu0
    %7254 = vdwg.mxu0
    %7255 = vmatprep.subr.bf16.mxu0 %v1491
    %7256 = vmatpush1.bf16.msra.mxu0 %v1490
    %7257 = vmatprep.subr.bf16.mxu0 %v1495
    %7258 = vmatpush1.bf16.msra.mxu0 %v1494
    %7259 = vmatprep.subr.bf16.mxu0 %v1499
    %7260 = vmatpush1.bf16.msra.mxu0 %v1498
    %7261 = vmatprep.subr.bf16.mxu0 %v1503
    %7262 = vmatpush1.bf16.msra.mxu0 %v1502
    %7263 = vmatprep.subr.bf16.mxu0 %v1507
    %7264 = vmatpush1.bf16.msra.mxu0 %v1506
    %7265 = vmatprep.subr.bf16.mxu0 %v1511
    %7266 = vmatpush1.bf16.msra.mxu0 %v1510
    %7267 = vmatprep.subr.bf16.mxu0 %v1515
    %7268 = vmatpush1.bf16.msra.mxu0 %v1514
    %7269 = vmatprep.subr.bf16.mxu0 %v1519
    %7270 = vmatpush1.bf16.msra.mxu0 %v1518
    %7271 = vmatprep.subr.bf16.mxu0 %v1523
    %7272 = vmatpush1.bf16.msra.mxu0 %v1522
    %7273 = vmatprep.subr.bf16.mxu0 %v1527
    %7274 = vmatpush1.bf16.msra.mxu0 %v1526
    %7275 = vmatprep.subr.bf16.mxu0 %v1531
    %7276 = vmatpush1.bf16.msra.mxu0 %v1530
    %7277 = vmatprep.subr.bf16.mxu0 %v1535
    %7278 = vmatpush1.bf16.msra.mxu0 %v1534
    %7279 = vmatprep.subr.bf16.mxu0 %v1539
    %7280 = vmatpush1.bf16.msra.mxu0 %v1538
    %7281 = vmatprep.subr.bf16.mxu0 %v1543
    %7282 = vmatpush1.bf16.msra.mxu0 %v1542
    %7283 = vmatprep.subr.bf16.mxu0 %v1547
    %7284 = vmatpush1.bf16.msra.mxu0 %v1546
    %7285 = vmatprep.subr.bf16.mxu0 %v1551
    %7286 = vmatpush1.bf16.msra.mxu0 %v1550
    %7287 = vmatprep.mubr.bf16.mxu0 %v7021
    %7288 = vmatmul.mubr.bf16.gmra.mrb[0].mxu0 %v7020
    %v7289 = vpop.f32.mrb[0].mxu0
    %v7290 = vadd.f32 %v7249, %v7289
    %v7291 = vpop.f32.mrb[0].mxu0
    %v7292 = vadd.f32 %v7251, %v7291
    %v7293 = vpop.f32.mrb[0].mxu0
    %v7294 = vpop.f32.mrb[0].mxu0
    %7295 = vdwg.mxu0
    %7296 = vmatprep.subr.bf16.mxu0 %v1429
    %7297 = vmatpush1.bf16.msra.mxu0 %v1428
    %7298 = vmatprep.subr.bf16.mxu0 %v1433
    %7299 = vmatpush1.bf16.msra.mxu0 %v1432
    %7300 = vmatprep.subr.bf16.mxu0 %v1437
    %7301 = vmatpush1.bf16.msra.mxu0 %v1436
    %7302 = vmatprep.subr.bf16.mxu0 %v1441
    %7303 = vmatpush1.bf16.msra.mxu0 %v1440
    %7304 = vmatprep.subr.bf16.mxu0 %v1445
    %7305 = vmatpush1.bf16.msra.mxu0 %v1444
    %7306 = vmatprep.subr.bf16.mxu0 %v1449
    %7307 = vmatpush1.bf16.msra.mxu0 %v1448
    %7308 = vmatprep.subr.bf16.mxu0 %v1453
    %7309 = vmatpush1.bf16.msra.mxu0 %v1452
    %7310 = vmatprep.subr.bf16.mxu0 %v1457
    %7311 = vmatpush1.bf16.msra.mxu0 %v1456
    %7312 = vmatprep.subr.bf16.mxu0 %v1461
    %7313 = vmatpush1.bf16.msra.mxu0 %v1460
    %7314 = vmatprep.subr.bf16.mxu0 %v1465
    %7315 = vmatpush1.bf16.msra.mxu0 %v1464
    %7316 = vmatprep.subr.bf16.mxu0 %v1469
    %7317 = vmatpush1.bf16.msra.mxu0 %v1468
    %7318 = vmatprep.subr.bf16.mxu0 %v1473
    %7319 = vmatpush1.bf16.msra.mxu0 %v1472
    %7320 = vmatprep.subr.bf16.mxu0 %v1477
    %7321 = vmatpush1.bf16.msra.mxu0 %v1476
    %7322 = vmatprep.subr.bf16.mxu0 %v1481
    %7323 = vmatpush1.bf16.msra.mxu0 %v1480
    %7324 = vmatprep.subr.bf16.mxu0 %v1485
    %7325 = vmatpush1.bf16.msra.mxu0 %v1484
    %7326 = vmatprep.subr.bf16.mxu0 %v1489
    %7327 = vmatpush1.bf16.msra.mxu0 %v1488
    %7328 = vmatprep.mubr.bf16.mxu0 %v7019
    %7329 = vmatmul.mubr.bf16.gmra.mrb[0].mxu0 %v7018
    %v7330 = vpop.f32.mrb[0].mxu0
    %v7331 = vadd.f32 0.0, %v7330
    %v7332 = vpop.f32.mrb[0].mxu0
    %v7333 = vadd.f32 0.0, %v7332
    %v7334 = vpop.f32.mrb[0].mxu0
    %v7335 = vpop.f32.mrb[0].mxu0
    %7336 = vdwg.mxu0
    %7337 = vmatprep.subr.bf16.mxu0 %v1493
    %7338 = vmatpush1.bf16.msra.mxu0 %v1492
    %7339 = vmatprep.subr.bf16.mxu0 %v1497
    %7340 = vmatpush1.bf16.msra.mxu0 %v1496
    %7341 = vmatprep.subr.bf16.mxu0 %v1501
    %7342 = vmatpush1.bf16.msra.mxu0 %v1500
    %7343 = vmatprep.subr.bf16.mxu0 %v1505
    %7344 = vmatpush1.bf16.msra.mxu0 %v1504
    %7345 = vmatprep.subr.bf16.mxu0 %v1509
    %7346 = vmatpush1.bf16.msra.mxu0 %v1508
    %7347 = vmatprep.subr.bf16.mxu0 %v1513
    %7348 = vmatpush1.bf16.msra.mxu0 %v1512
    %7349 = vmatprep.subr.bf16.mxu0 %v1517
    %7350 = vmatpush1.bf16.msra.mxu0 %v1516
    %7351 = vmatprep.subr.bf16.mxu0 %v1521
    %7352 = vmatpush1.bf16.msra.mxu0 %v1520
    %7353 = vmatprep.subr.bf16.mxu0 %v1525
    %7354 = vmatpush1.bf16.msra.mxu0 %v1524
    %7355 = vmatprep.subr.bf16.mxu0 %v1529
    %7356 = vmatpush1.bf16.msra.mxu0 %v1528
    %7357 = vmatprep.subr.bf16.mxu0 %v1533
    %7358 = vmatpush1.bf16.msra.mxu0 %v1532
    %7359 = vmatprep.subr.bf16.mxu0 %v1537
    %7360 = vmatpush1.bf16.msra.mxu0 %v1536
    %7361 = vmatprep.subr.bf16.mxu0 %v1541
    %7362 = vmatpush1.bf16.msra.mxu0 %v1540
    %7363 = vmatprep.subr.bf16.mxu0 %v1545
    %7364 = vmatpush1.bf16.msra.mxu0 %v1544
    %7365 = vmatprep.subr.bf16.mxu0 %v1549
    %7366 = vmatpush1.bf16.msra.mxu0 %v1548
    %7367 = vmatprep.subr.bf16.mxu0 %v1553
    %7368 = vmatpush1.bf16.msra.mxu0 %v1552
    %7369 = vmatprep.mubr.bf16.mxu0 %v7021
    %7370 = vmatmul.mubr.bf16.gmra.mrb[0].mxu0 %v7020
    %v7371 = vpop.f32.mrb[0].mxu0
    %v7372 = vadd.f32 %v7331, %v7371
    %v7373 = vpop.f32.mrb[0].mxu0
    %v7374 = vadd.f32 %v7333, %v7373
    %v7375 = vpop.f32.mrb[0].mxu0
    %v7376 = vpop.f32.mrb[0].mxu0
    %7377 = vdwg.mxu0
    %v7378 = vadd.f32 %v721, %v7290
    %v7379 = vadd.f32 %v723, %v7292
    %v7380 = vadd.f32 %v794, %v7372
    %v7381 = vadd.f32 %v796, %v7374
    %v7382 = vxor.u32 %v7378, 2147483648
    %v7383 = vxor.u32 %v7379, 2147483648
    %v7384 = vxor.u32 %v7380, 2147483648
    %v7385 = vxor.u32 %v7381, 2147483648
    %v7386 = vmul.f32 %v7382, 1.442695
    %v7387 = vpow.pop %v7386
    %v7388 = vmul.f32 %v7383, 1.442695
    %v7389 = vpow.pop %v7388
    %v7390 = vmul.f32 %v7384, 1.442695
    %v7391 = vpow.pop %v7390
    %v7392 = vmul.f32 %v7385, 1.442695
    %v7393 = vpow.pop %v7392
    %v7394 = vadd.f32 %v7387, 1.0
    %v7395 = vadd.f32 %v7389, 1.0
    %v7396 = vadd.f32 %v7391, 1.0
    %v7397 = vadd.f32 %v7393, 1.0
    %v7398 = vrcp.pop %v7394
    %v7399 = vmul.f32 1.0, %v7398
    %v7400 = vrcp.pop %v7395
    %v7401 = vmul.f32 1.0, %v7400
    %v7402 = vrcp.pop %v7396
    %v7403 = vmul.f32 1.0, %v7402
    %v7404 = vrcp.pop %v7397
    %v7405 = vmul.f32 1.0, %v7404
    %7406 = vmatprep.subr.bf16.mxu0 %v1747
    %7407 = vmatpush1.bf16.msra.mxu0 %v1746
    %7408 = vmatprep.subr.bf16.mxu0 %v1751
    %7409 = vmatpush1.bf16.msra.mxu0 %v1750
    %7410 = vmatprep.subr.bf16.mxu0 %v1755
    %7411 = vmatpush1.bf16.msra.mxu0 %v1754
    %7412 = vmatprep.subr.bf16.mxu0 %v1759
    %7413 = vmatpush1.bf16.msra.mxu0 %v1758
    %7414 = vmatprep.subr.bf16.mxu0 %v1763
    %7415 = vmatpush1.bf16.msra.mxu0 %v1762
    %7416 = vmatprep.subr.bf16.mxu0 %v1767
    %7417 = vmatpush1.bf16.msra.mxu0 %v1766
    %7418 = vmatprep.subr.bf16.mxu0 %v1771
    %7419 = vmatpush1.bf16.msra.mxu0 %v1770
    %7420 = vmatprep.subr.bf16.mxu0 %v1775
    %7421 = vmatpush1.bf16.msra.mxu0 %v1774
    %7422 = vmatprep.subr.bf16.mxu0 %v1779
    %7423 = vmatpush1.bf16.msra.mxu0 %v1778
    %7424 = vmatprep.subr.bf16.mxu0 %v1783
    %7425 = vmatpush1.bf16.msra.mxu0 %v1782
    %7426 = vmatprep.subr.bf16.mxu0 %v1787
    %7427 = vmatpush1.bf16.msra.mxu0 %v1786
    %7428 = vmatprep.subr.bf16.mxu0 %v1791
    %7429 = vmatpush1.bf16.msra.mxu0 %v1790
    %7430 = vmatprep.subr.bf16.mxu0 %v1795
    %7431 = vmatpush1.bf16.msra.mxu0 %v1794
    %7432 = vmatprep.subr.bf16.mxu0 %v1799
    %7433 = vmatpush1.bf16.msra.mxu0 %v1798
    %7434 = vmatprep.subr.bf16.mxu0 %v1803
    %7435 = vmatpush1.bf16.msra.mxu0 %v1802
    %7436 = vmatprep.subr.bf16.mxu0 %v1807
    %7437 = vmatpush1.bf16.msra.mxu0 %v1806
    %7438 = vmatprep.mubr.bf16.mxu0 %v7019
    %7439 = vmatmul.mubr.bf16.gmra.mrb[0].mxu0 %v7018
    %v7440 = vpop.f32.mrb[0].mxu0
    %v7441 = vadd.f32 0.0, %v7440
    %v7442 = vpop.f32.mrb[0].mxu0
    %v7443 = vadd.f32 0.0, %v7442
    %v7444 = vpop.f32.mrb[0].mxu0
    %v7445 = vpop.f32.mrb[0].mxu0
    %7446 = vdwg.mxu0
    %7447 = vmatprep.subr.bf16.mxu0 %v1811
    %7448 = vmatpush1.bf16.msra.mxu0 %v1810
    %7449 = vmatprep.subr.bf16.mxu0 %v1815
    %7450 = vmatpush1.bf16.msra.mxu0 %v1814
    %7451 = vmatprep.subr.bf16.mxu0 %v1819
    %7452 = vmatpush1.bf16.msra.mxu0 %v1818
    %7453 = vmatprep.subr.bf16.mxu0 %v1823
    %7454 = vmatpush1.bf16.msra.mxu0 %v1822
    %7455 = vmatprep.subr.bf16.mxu0 %v1827
    %7456 = vmatpush1.bf16.msra.mxu0 %v1826
    %7457 = vmatprep.subr.bf16.mxu0 %v1831
    %7458 = vmatpush1.bf16.msra.mxu0 %v1830
    %7459 = vmatprep.subr.bf16.mxu0 %v1835
    %7460 = vmatpush1.bf16.msra.mxu0 %v1834
    %7461 = vmatprep.subr.bf16.mxu0 %v1839
    %7462 = vmatpush1.bf16.msra.mxu0 %v1838
    %7463 = vmatprep.subr.bf16.mxu0 %v1843
    %7464 = vmatpush1.bf16.msra.mxu0 %v1842
    %7465 = vmatprep.subr.bf16.mxu0 %v1847
    %7466 = vmatpush1.bf16.msra.mxu0 %v1846
    %7467 = vmatprep.subr.bf16.mxu0 %v1851
    %7468 = vmatpush1.bf16.msra.mxu0 %v1850
    %7469 = vmatprep.subr.bf16.mxu0 %v1855
    %7470 = vmatpush1.bf16.msra.mxu0 %v1854
    %7471 = vmatprep.subr.bf16.mxu0 %v1859
    %7472 = vmatpush1.bf16.msra.mxu0 %v1858
    %7473 = vmatprep.subr.bf16.mxu0 %v1863
    %7474 = vmatpush1.bf16.msra.mxu0 %v1862
    %7475 = vmatprep.subr.bf16.mxu0 %v1867
    %7476 = vmatpush1.bf16.msra.mxu0 %v1866
    %7477 = vmatprep.subr.bf16.mxu0 %v1871
    %7478 = vmatpush1.bf16.msra.mxu0 %v1870
    %7479 = vmatprep.mubr.bf16.mxu0 %v7021
    %7480 = vmatmul.mubr.bf16.gmra.mrb[0].mxu0 %v7020
    %v7481 = vpop.f32.mrb[0].mxu0
    %v7482 = vadd.f32 %v7441, %v7481
    %v7483 = vpop.f32.mrb[0].mxu0
    %v7484 = vadd.f32 %v7443, %v7483
    %v7485 = vpop.f32.mrb[0].mxu0
    %v7486 = vpop.f32.mrb[0].mxu0
    %7487 = vdwg.mxu0
    %7488 = vmatprep.subr.bf16.mxu0 %v1749
    %7489 = vmatpush1.bf16.msra.mxu0 %v1748
    %7490 = vmatprep.subr.bf16.mxu0 %v1753
    %7491 = vmatpush1.bf16.msra.mxu0 %v1752
    %7492 = vmatprep.subr.bf16.mxu0 %v1757
    %7493 = vmatpush1.bf16.msra.mxu0 %v1756
    %7494 = vmatprep.subr.bf16.mxu0 %v1761
    %7495 = vmatpush1.bf16.msra.mxu0 %v1760
    %7496 = vmatprep.subr.bf16.mxu0 %v1765
    %7497 = vmatpush1.bf16.msra.mxu0 %v1764
    %7498 = vmatprep.subr.bf16.mxu0 %v1769
    %7499 = vmatpush1.bf16.msra.mxu0 %v1768
    %7500 = vmatprep.subr.bf16.mxu0 %v1773
    %7501 = vmatpush1.bf16.msra.mxu0 %v1772
    %7502 = vmatprep.subr.bf16.mxu0 %v1777
    %7503 = vmatpush1.bf16.msra.mxu0 %v1776
    %7504 = vmatprep.subr.bf16.mxu0 %v1781
    %7505 = vmatpush1.bf16.msra.mxu0 %v1780
    %7506 = vmatprep.subr.bf16.mxu0 %v1785
    %7507 = vmatpush1.bf16.msra.mxu0 %v1784
    %7508 = vmatprep.subr.bf16.mxu0 %v1789
    %7509 = vmatpush1.bf16.msra.mxu0 %v1788
    %7510 = vmatprep.subr.bf16.mxu0 %v1793
    %7511 = vmatpush1.bf16.msra.mxu0 %v1792
    %7512 = vmatprep.subr.bf16.mxu0 %v1797
    %7513 = vmatpush1.bf16.msra.mxu0 %v1796
    %7514 = vmatprep.subr.bf16.mxu0 %v1801
    %7515 = vmatpush1.bf16.msra.mxu0 %v1800
    %7516 = vmatprep.subr.bf16.mxu0 %v1805
    %7517 = vmatpush1.bf16.msra.mxu0 %v1804
    %7518 = vmatprep.subr.bf16.mxu0 %v1809
    %7519 = vmatpush1.bf16.msra.mxu0 %v1808
    %7520 = vmatprep.mubr.bf16.mxu0 %v7019
    %7521 = vmatmul.mubr.bf16.gmra.mrb[0].mxu0 %v7018
    %v7522 = vpop.f32.mrb[0].mxu0
    %v7523 = vadd.f32 0.0, %v7522
    %v7524 = vpop.f32.mrb[0].mxu0
    %v7525 = vadd.f32 0.0, %v7524
    %v7526 = vpop.f32.mrb[0].mxu0
    %v7527 = vpop.f32.mrb[0].mxu0
    %7528 = vdwg.mxu0
    %7529 = vmatprep.subr.bf16.mxu0 %v1813
    %7530 = vmatpush1.bf16.msra.mxu0 %v1812
    %7531 = vmatprep.subr.bf16.mxu0 %v1817
    %7532 = vmatpush1.bf16.msra.mxu0 %v1816
    %7533 = vmatprep.subr.bf16.mxu0 %v1821
    %7534 = vmatpush1.bf16.msra.mxu0 %v1820
    %7535 = vmatprep.subr.bf16.mxu0 %v1825
    %7536 = vmatpush1.bf16.msra.mxu0 %v1824
    %7537 = vmatprep.subr.bf16.mxu0 %v1829
    %7538 = vmatpush1.bf16.msra.mxu0 %v1828
    %7539 = vmatprep.subr.bf16.mxu0 %v1833
    %7540 = vmatpush1.bf16.msra.mxu0 %v1832
    %7541 = vmatprep.subr.bf16.mxu0 %v1837
    %7542 = vmatpush1.bf16.msra.mxu0 %v1836
    %7543 = vmatprep.subr.bf16.mxu0 %v1841
    %7544 = vmatpush1.bf16.msra.mxu0 %v1840
    %7545 = vmatprep.subr.bf16.mxu0 %v1845
    %7546 = vmatpush1.bf16.msra.mxu0 %v1844
    %7547 = vmatprep.subr.bf16.mxu0 %v1849
    %7548 = vmatpush1.bf16.msra.mxu0 %v1848
    %7549 = vmatprep.subr.bf16.mxu0 %v1853
    %7550 = vmatpush1.bf16.msra.mxu0 %v1852
    %7551 = vmatprep.subr.bf16.mxu0 %v1857
    %7552 = vmatpush1.bf16.msra.mxu0 %v1856
    %7553 = vmatprep.subr.bf16.mxu0 %v1861
    %7554 = vmatpush1.bf16.msra.mxu0 %v1860
    %7555 = vmatprep.subr.bf16.mxu0 %v1865
    %7556 = vmatpush1.bf16.msra.mxu0 %v1864
    %7557 = vmatprep.subr.bf16.mxu0 %v1869
    %7558 = vmatpush1.bf16.msra.mxu0 %v1868
    %7559 = vmatprep.subr.bf16.mxu0 %v1873
    %7560 = vmatpush1.bf16.msra.mxu0 %v1872
    %7561 = vmatprep.mubr.bf16.mxu0 %v7021
    %7562 = vmatmul.mubr.bf16.gmra.mrb[0].mxu0 %v7020
    %v7563 = vpop.f32.mrb[0].mxu0
    %v7564 = vadd.f32 %v7523, %v7563
    %v7565 = vpop.f32.mrb[0].mxu0
    %v7566 = vadd.f32 %v7525, %v7565
    %v7567 = vpop.f32.mrb[0].mxu0
    %v7568 = vpop.f32.mrb[0].mxu0
    %7569 = vdwg.mxu0
    %v7570 = vadd.f32 %v867, %v7482
    %v7571 = vadd.f32 %v869, %v7484
    %v7572 = vadd.f32 %v940, %v7564
    %v7573 = vadd.f32 %v942, %v7566
    %v7574 = vtanh.pop %v7570
    %v7575 = vtanh.pop %v7571
    %v7576 = vtanh.pop %v7572
    %v7577 = vtanh.pop %v7573
    %7578 = vmatprep.subr.bf16.mxu0 %v2047
    %7579 = vmatpush1.bf16.msra.mxu0 %v2046
    %7580 = vmatprep.subr.bf16.mxu0 %v2051
    %7581 = vmatpush1.bf16.msra.mxu0 %v2050
    %7582 = vmatprep.subr.bf16.mxu0 %v2055
    %7583 = vmatpush1.bf16.msra.mxu0 %v2054
    %7584 = vmatprep.subr.bf16.mxu0 %v2059
    %7585 = vmatpush1.bf16.msra.mxu0 %v2058
    %7586 = vmatprep.subr.bf16.mxu0 %v2063
    %7587 = vmatpush1.bf16.msra.mxu0 %v2062
    %7588 = vmatprep.subr.bf16.mxu0 %v2067
    %7589 = vmatpush1.bf16.msra.mxu0 %v2066
    %7590 = vmatprep.subr.bf16.mxu0 %v2071
    %7591 = vmatpush1.bf16.msra.mxu0 %v2070
    %7592 = vmatprep.subr.bf16.mxu0 %v2075
    %7593 = vmatpush1.bf16.msra.mxu0 %v2074
    %7594 = vmatprep.subr.bf16.mxu0 %v2079
    %7595 = vmatpush1.bf16.msra.mxu0 %v2078
    %7596 = vmatprep.subr.bf16.mxu0 %v2083
    %7597 = vmatpush1.bf16.msra.mxu0 %v2082
    %7598 = vmatprep.subr.bf16.mxu0 %v2087
    %7599 = vmatpush1.bf16.msra.mxu0 %v2086
    %7600 = vmatprep.subr.bf16.mxu0 %v2091
    %7601 = vmatpush1.bf16.msra.mxu0 %v2090
    %7602 = vmatprep.subr.bf16.mxu0 %v2095
    %7603 = vmatpush1.bf16.msra.mxu0 %v2094
    %7604 = vmatprep.subr.bf16.mxu0 %v2099
    %7605 = vmatpush1.bf16.msra.mxu0 %v2098
    %7606 = vmatprep.subr.bf16.mxu0 %v2103
    %7607 = vmatpush1.bf16.msra.mxu0 %v2102
    %7608 = vmatprep.subr.bf16.mxu0 %v2107
    %7609 = vmatpush1.bf16.msra.mxu0 %v2106
    %7610 = vmatprep.mubr.bf16.mxu0 %v7019
    %7611 = vmatmul.mubr.bf16.gmra.mrb[0].mxu0 %v7018
    %v7612 = vpop.f32.mrb[0].mxu0
    %v7613 = vadd.f32 0.0, %v7612
    %v7614 = vpop.f32.mrb[0].mxu0
    %v7615 = vadd.f32 0.0, %v7614
    %v7616 = vpop.f32.mrb[0].mxu0
    %v7617 = vpop.f32.mrb[0].mxu0
    %7618 = vdwg.mxu0
    %7619 = vmatprep.subr.bf16.mxu0 %v2111
    %7620 = vmatpush1.bf16.msra.mxu0 %v2110
    %7621 = vmatprep.subr.bf16.mxu0 %v2115
    %7622 = vmatpush1.bf16.msra.mxu0 %v2114
    %7623 = vmatprep.subr.bf16.mxu0 %v2119
    %7624 = vmatpush1.bf16.msra.mxu0 %v2118
    %7625 = vmatprep.subr.bf16.mxu0 %v2123
    %7626 = vmatpush1.bf16.msra.mxu0 %v2122
    %7627 = vmatprep.subr.bf16.mxu0 %v2127
    %7628 = vmatpush1.bf16.msra.mxu0 %v2126
    %7629 = vmatprep.subr.bf16.mxu0 %v2131
    %7630 = vmatpush1.bf16.msra.mxu0 %v2130
    %7631 = vmatprep.subr.bf16.mxu0 %v2135
    %7632 = vmatpush1.bf16.msra.mxu0 %v2134
    %7633 = vmatprep.subr.bf16.mxu0 %v2139
    %7634 = vmatpush1.bf16.msra.mxu0 %v2138
    %7635 = vmatprep.subr.bf16.mxu0 %v2143
    %7636 = vmatpush1.bf16.msra.mxu0 %v2142
    %7637 = vmatprep.subr.bf16.mxu0 %v2147
    %7638 = vmatpush1.bf16.msra.mxu0 %v2146
    %7639 = vmatprep.subr.bf16.mxu0 %v2151
    %7640 = vmatpush1.bf16.msra.mxu0 %v2150
    %7641 = vmatprep.subr.bf16.mxu0 %v2155
    %7642 = vmatpush1.bf16.msra.mxu0 %v2154
    %7643 = vmatprep.subr.bf16.mxu0 %v2159
    %7644 = vmatpush1.bf16.msra.mxu0 %v2158
    %7645 = vmatprep.subr.bf16.mxu0 %v2163
    %7646 = vmatpush1.bf16.msra.mxu0 %v2162
    %7647 = vmatprep.subr.bf16.mxu0 %v2167
    %7648 = vmatpush1.bf16.msra.mxu0 %v2166
    %7649 = vmatprep.subr.bf16.mxu0 %v2171
    %7650 = vmatpush1.bf16.msra.mxu0 %v2170
    %7651 = vmatprep.mubr.bf16.mxu0 %v7021
    %7652 = vmatmul.mubr.bf16.gmra.mrb[0].mxu0 %v7020
    %v7653 = vpop.f32.mrb[0].mxu0
    %v7654 = vadd.f32 %v7613, %v7653
    %v7655 = vpop.f32.mrb[0].mxu0
    %v7656 = vadd.f32 %v7615, %v7655
    %v7657 = vpop.f32.mrb[0].mxu0
    %v7658 = vpop.f32.mrb[0].mxu0
    %7659 = vdwg.mxu0
    %7660 = vmatprep.subr.bf16.mxu0 %v2049
    %7661 = vmatpush1.bf16.msra.mxu0 %v2048
    %7662 = vmatprep.subr.bf16.mxu0 %v2053
    %7663 = vmatpush1.bf16.msra.mxu0 %v2052
    %7664 = vmatprep.subr.bf16.mxu0 %v2057
    %7665 = vmatpush1.bf16.msra.mxu0 %v2056
    %7666 = vmatprep.subr.bf16.mxu0 %v2061
    %7667 = vmatpush1.bf16.msra.mxu0 %v2060
    %7668 = vmatprep.subr.bf16.mxu0 %v2065
    %7669 = vmatpush1.bf16.msra.mxu0 %v2064
    %7670 = vmatprep.subr.bf16.mxu0 %v2069
    %7671 = vmatpush1.bf16.msra.mxu0 %v2068
    %7672 = vmatprep.subr.bf16.mxu0 %v2073
    %7673 = vmatpush1.bf16.msra.mxu0 %v2072
    %7674 = vmatprep.subr.bf16.mxu0 %v2077
    %7675 = vmatpush1.bf16.msra.mxu0 %v2076
    %7676 = vmatprep.subr.bf16.mxu0 %v2081
    %7677 = vmatpush1.bf16.msra.mxu0 %v2080
    %7678 = vmatprep.subr.bf16.mxu0 %v2085
    %7679 = vmatpush1.bf16.msra.mxu0 %v2084
    %7680 = vmatprep.subr.bf16.mxu0 %v2089
    %7681 = vmatpush1.bf16.msra.mxu0 %v2088
    %7682 = vmatprep.subr.bf16.mxu0 %v2093
    %7683 = vmatpush1.bf16.msra.mxu0 %v2092
    %7684 = vmatprep.subr.bf16.mxu0 %v2097
    %7685 = vmatpush1.bf16.msra.mxu0 %v2096
    %7686 = vmatprep.subr.bf16.mxu0 %v2101
    %7687 = vmatpush1.bf16.msra.mxu0 %v2100
    %7688 = vmatprep.subr.bf16.mxu0 %v2105
    %7689 = vmatpush1.bf16.msra.mxu0 %v2104
    %7690 = vmatprep.subr.bf16.mxu0 %v2109
    %7691 = vmatpush1.bf16.msra.mxu0 %v2108
    %7692 = vmatprep.mubr.bf16.mxu0 %v7019
    %7693 = vmatmul.mubr.bf16.gmra.mrb[0].mxu0 %v7018
    %v7694 = vpop.f32.mrb[0].mxu0
    %v7695 = vadd.f32 0.0, %v7694
    %v7696 = vpop.f32.mrb[0].mxu0
    %v7697 = vadd.f32 0.0, %v7696
    %v7698 = vpop.f32.mrb[0].mxu0
    %v7699 = vpop.f32.mrb[0].mxu0
    %7700 = vdwg.mxu0
    %7701 = vmatprep.subr.bf16.mxu0 %v2113
    %7702 = vmatpush1.bf16.msra.mxu0 %v2112
    %7703 = vmatprep.subr.bf16.mxu0 %v2117
    %7704 = vmatpush1.bf16.msra.mxu0 %v2116
    %7705 = vmatprep.subr.bf16.mxu0 %v2121
    %7706 = vmatpush1.bf16.msra.mxu0 %v2120
    %7707 = vmatprep.subr.bf16.mxu0 %v2125
    %7708 = vmatpush1.bf16.msra.mxu0 %v2124
    %7709 = vmatprep.subr.bf16.mxu0 %v2129
    %7710 = vmatpush1.bf16.msra.mxu0 %v2128
    %7711 = vmatprep.subr.bf16.mxu0 %v2133
    %7712 = vmatpush1.bf16.msra.mxu0 %v2132
    %7713 = vmatprep.subr.bf16.mxu0 %v2137
    %7714 = vmatpush1.bf16.msra.mxu0 %v2136
    %7715 = vmatprep.subr.bf16.mxu0 %v2141
    %7716 = vmatpush1.bf16.msra.mxu0 %v2140
    %7717 = vmatprep.subr.bf16.mxu0 %v2145
    %7718 = vmatpush1.bf16.msra.mxu0 %v2144
    %7719 = vmatprep.subr.bf16.mxu0 %v2149
    %7720 = vmatpush1.bf16.msra.mxu0 %v2148
    %7721 = vmatprep.subr.bf16.mxu0 %v2153
    %7722 = vmatpush1.bf16.msra.mxu0 %v2152
    %7723 = vmatprep.subr.bf16.mxu0 %v2157
    %7724 = vmatpush1.bf16.msra.mxu0 %v2156
    %7725 = vmatprep.subr.bf16.mxu0 %v2161
    %7726 = vmatpush1.bf16.msra.mxu0 %v2160
    %7727 = vmatprep.subr.bf16.mxu0 %v2165
    %7728 = vmatpush1.bf16.msra.mxu0 %v2164
    %7729 = vmatprep.subr.bf16.mxu0 %v2169
    %7730 = vmatpush1.bf16.msra.mxu0 %v2168
    %7731 = vmatprep.subr.bf16.mxu0 %v2173
    %7732 = vmatpush1.bf16.msra.mxu0 %v2172
    %7733 = vmatprep.mubr.bf16.mxu0 %v7021
    %7734 = vmatmul.mubr.bf16.gmra.mrb[0].mxu0 %v7020
    %v7735 = vpop.f32.mrb[0].mxu0
    %v7736 = vadd.f32 %v7695, %v7735
    %v7737 = vpop.f32.mrb[0].mxu0
    %v7738 = vadd.f32 %v7697, %v7737
    %v7739 = vpop.f32.mrb[0].mxu0
    %v7740 = vpop.f32.mrb[0].mxu0
    %7741 = vdwg.mxu0
    %v7742 = vadd.f32 %v1013, %v7654
    %v7743 = vadd.f32 %v1015, %v7656
    %v7744 = vadd.f32 %v1086, %v7736
    %v7745 = vadd.f32 %v1088, %v7738
    %v7746 = vxor.u32 %v7742, 2147483648
    %v7747 = vxor.u32 %v7743, 2147483648
    %v7748 = vxor.u32 %v7744, 2147483648
    %v7749 = vxor.u32 %v7745, 2147483648
    %v7750 = vmul.f32 %v7746, 1.442695
    %v7751 = vpow.pop %v7750
    %v7752 = vmul.f32 %v7747, 1.442695
    %v7753 = vpow.pop %v7752
    %v7754 = vmul.f32 %v7748, 1.442695
    %v7755 = vpow.pop %v7754
    %v7756 = vmul.f32 %v7749, 1.442695
    %v7757 = vpow.pop %v7756
    %v7758 = vadd.f32 %v7751, 1.0
    %v7759 = vadd.f32 %v7753, 1.0
    %v7760 = vadd.f32 %v7755, 1.0
    %v7761 = vadd.f32 %v7757, 1.0
    %v7762 = vrcp.pop %v7758
    %v7763 = vmul.f32 1.0, %v7762
    %v7764 = vrcp.pop %v7759
    %v7765 = vmul.f32 1.0, %v7764
    %v7766 = vrcp.pop %v7760
    %v7767 = vmul.f32 1.0, %v7766
    %v7768 = vrcp.pop %v7761
    %v7769 = vmul.f32 1.0, %v7768
    %v7770 = vmul.f32 %v7399, %v7006
    %v7771 = vmul.f32 %v7401, %v7007
    %v7772 = vmul.f32 %v7403, %v7008
    %v7773 = vmul.f32 %v7405, %v7009
    %v7774 = vmul.f32 %v7207, %v7574
    %v7775 = vmul.f32 %v7209, %v7575
    %v7776 = vmul.f32 %v7211, %v7576
    %v7777 = vmul.f32 %v7213, %v7577
    %v7778 = vadd.f32 %v7770, %v7774
    %v7779 = vadd.f32 %v7771, %v7775
    %v7780 = vadd.f32 %v7772, %v7776
    %v7781 = vadd.f32 %v7773, %v7777
    %v7782 = vtanh.pop %v7778
    %v7783 = vtanh.pop %v7779
    %v7784 = vtanh.pop %v7780
    %v7785 = vtanh.pop %v7781
    %v7786 = vmul.f32 %v7763, %v7782
    %v7787 = vmul.f32 %v7765, %v7783
    %v7788 = vmul.f32 %v7767, %v7784
    %v7789 = vmul.f32 %v7769, %v7785
    %7790 = vst [vmem:[#allocation17] sm:$0xff] %v7786
    %7791 = vst [vmem:[#allocation17 + $0x8] sm:$0xff] %v7787
    %7792 = vst [vmem:[#allocation17 + $0x10] sm:$0xff] %v7788
    %7793 = vst [vmem:[#allocation17 + $0x18] sm:$0xff] %v7789
    %7794 = vst [vmem:[#allocation18] sm:$0xff] %v7778
    %7795 = vst [vmem:[#allocation18 + $0x8] sm:$0xff] %v7779
    %7796 = vst [vmem:[#allocation18 + $0x10] sm:$0xff] %v7780
    %7797 = vst [vmem:[#allocation18 + $0x18] sm:$0xff] %v7781
    %s7798 = smul.u32 %s1098, 3
    %s7799 = sshll.u32 %s7798, 4
    %7800 = dma.done %s142, %s7799
    %v7801 = vpack.c.bf16 %v7786, %v7786
    %v7802 = vpack.c.bf16 %v7787, %v7787
    %v7803 = vpack.c.bf16 %v7788, %v7788
    %v7804 = vpack.c.bf16 %v7789, %v7789
    %v7805 = vld [vmem:[#allocation3] sm:$0xff]
    %v7806 = vld [vmem:[#allocation3 + $0x8] sm:$0xff]
    %v7807 = vld [vmem:[#allocation3 + $0x10] sm:$0xff]
    %v7808 = vld [vmem:[#allocation3 + $0x18] sm:$0xff]
    %v7809 = vld [vmem:[#allocation3 + $0x20] sm:$0xff]
    %v7810 = vld [vmem:[#allocation3 + $0x28] sm:$0xff]
    %v7811 = vld [vmem:[#allocation3 + $0x30] sm:$0xff]
    %v7812 = vld [vmem:[#allocation3 + $0x38] sm:$0xff]
    %v7813 = vld [vmem:[#allocation3 + $0x40] sm:$0xff]
    %v7814 = vld [vmem:[#allocation3 + $0x48] sm:$0xff]
    %v7815 = vld [vmem:[#allocation3 + $0x50] sm:$0xff]
    %v7816 = vld [vmem:[#allocation3 + $0x58] sm:$0xff]
    %v7817 = vld [vmem:[#allocation3 + $0x60] sm:$0xff]
    %v7818 = vld [vmem:[#allocation3 + $0x68] sm:$0xff]
    %v7819 = vld [vmem:[#allocation3 + $0x70] sm:$0xff]
    %v7820 = vld [vmem:[#allocation3 + $0x78] sm:$0xff]
    %v7821 = vld [vmem:[#allocation3 + $0x80] sm:$0xff]
    %v7822 = vld [vmem:[#allocation3 + $0x88] sm:$0xff]
    %v7823 = vld [vmem:[#allocation3 + $0x90] sm:$0xff]
    %v7824 = vld [vmem:[#allocation3 + $0x98] sm:$0xff]
    %v7825 = vld [vmem:[#allocation3 + $0xa0] sm:$0xff]
    %v7826 = vld [vmem:[#allocation3 + $0xa8] sm:$0xff]
    %v7827 = vld [vmem:[#allocation3 + $0xb0] sm:$0xff]
    %v7828 = vld [vmem:[#allocation3 + $0xb8] sm:$0xff]
    %v7829 = vld [vmem:[#allocation3 + $0xc0] sm:$0xff]
    %v7830 = vld [vmem:[#allocation3 + $0xc8] sm:$0xff]
    %v7831 = vld [vmem:[#allocation3 + $0xd0] sm:$0xff]
    %v7832 = vld [vmem:[#allocation3 + $0xd8] sm:$0xff]
    %v7833 = vld [vmem:[#allocation3 + $0xe0] sm:$0xff]
    %v7834 = vld [vmem:[#allocation3 + $0xe8] sm:$0xff]
    %v7835 = vld [vmem:[#allocation3 + $0xf0] sm:$0xff]
    %v7836 = vld [vmem:[#allocation3 + $0xf8] sm:$0xff]
    %v7837 = vld [vmem:[#allocation3 + $0x100] sm:$0xff]
    %v7838 = vld [vmem:[#allocation3 + $0x108] sm:$0xff]
    %v7839 = vld [vmem:[#allocation3 + $0x110] sm:$0xff]
    %v7840 = vld [vmem:[#allocation3 + $0x118] sm:$0xff]
    %v7841 = vld [vmem:[#allocation3 + $0x120] sm:$0xff]
    %v7842 = vld [vmem:[#allocation3 + $0x128] sm:$0xff]
    %v7843 = vld [vmem:[#allocation3 + $0x130] sm:$0xff]
    %v7844 = vld [vmem:[#allocation3 + $0x138] sm:$0xff]
    %v7845 = vld [vmem:[#allocation3 + $0x140] sm:$0xff]
    %v7846 = vld [vmem:[#allocation3 + $0x148] sm:$0xff]
    %v7847 = vld [vmem:[#allocation3 + $0x150] sm:$0xff]
    %v7848 = vld [vmem:[#allocation3 + $0x158] sm:$0xff]
    %v7849 = vld [vmem:[#allocation3 + $0x160] sm:$0xff]
    %v7850 = vld [vmem:[#allocation3 + $0x168] sm:$0xff]
    %v7851 = vld [vmem:[#allocation3 + $0x170] sm:$0xff]
    %v7852 = vld [vmem:[#allocation3 + $0x178] sm:$0xff]
    %v7853 = vld [vmem:[#allocation3 + $0x180] sm:$0xff]
    %v7854 = vld [vmem:[#allocation3 + $0x188] sm:$0xff]
    %v7855 = vld [vmem:[#allocation3 + $0x190] sm:$0xff]
    %v7856 = vld [vmem:[#allocation3 + $0x198] sm:$0xff]
    %v7857 = vld [vmem:[#allocation3 + $0x1a0] sm:$0xff]
    %v7858 = vld [vmem:[#allocation3 + $0x1a8] sm:$0xff]
    %v7859 = vld [vmem:[#allocation3 + $0x1b0] sm:$0xff]
    %v7860 = vld [vmem:[#allocation3 + $0x1b8] sm:$0xff]
    %v7861 = vld [vmem:[#allocation3 + $0x1c0] sm:$0xff]
    %v7862 = vld [vmem:[#allocation3 + $0x1c8] sm:$0xff]
    %v7863 = vld [vmem:[#allocation3 + $0x1d0] sm:$0xff]
    %v7864 = vld [vmem:[#allocation3 + $0x1d8] sm:$0xff]
    %v7865 = vld [vmem:[#allocation3 + $0x1e0] sm:$0xff]
    %v7866 = vld [vmem:[#allocation3 + $0x1e8] sm:$0xff]
    %v7867 = vld [vmem:[#allocation3 + $0x1f0] sm:$0xff]
    %v7868 = vld [vmem:[#allocation3 + $0x1f8] sm:$0xff]
    %v7869 = vld [vmem:[#allocation3 + $0x200] sm:$0xff]
    %v7870 = vld [vmem:[#allocation3 + $0x208] sm:$0xff]
    %v7871 = vld [vmem:[#allocation3 + $0x210] sm:$0xff]
    %v7872 = vld [vmem:[#allocation3 + $0x218] sm:$0xff]
    %v7873 = vld [vmem:[#allocation3 + $0x220] sm:$0xff]
    %v7874 = vld [vmem:[#allocation3 + $0x228] sm:$0xff]
    %v7875 = vld [vmem:[#allocation3 + $0x230] sm:$0xff]
    %v7876 = vld [vmem:[#allocation3 + $0x238] sm:$0xff]
    %v7877 = vld [vmem:[#allocation3 + $0x240] sm:$0xff]
    %v7878 = vld [vmem:[#allocation3 + $0x248] sm:$0xff]
    %v7879 = vld [vmem:[#allocation3 + $0x250] sm:$0xff]
    %v7880 = vld [vmem:[#allocation3 + $0x258] sm:$0xff]
    %v7881 = vld [vmem:[#allocation3 + $0x260] sm:$0xff]
    %v7882 = vld [vmem:[#allocation3 + $0x268] sm:$0xff]
    %v7883 = vld [vmem:[#allocation3 + $0x270] sm:$0xff]
    %v7884 = vld [vmem:[#allocation3 + $0x278] sm:$0xff]
    %v7885 = vld [vmem:[#allocation3 + $0x280] sm:$0xff]
    %v7886 = vld [vmem:[#allocation3 + $0x288] sm:$0xff]
    %v7887 = vld [vmem:[#allocation3 + $0x290] sm:$0xff]
    %v7888 = vld [vmem:[#allocation3 + $0x298] sm:$0xff]
    %v7889 = vld [vmem:[#allocation3 + $0x2a0] sm:$0xff]
    %v7890 = vld [vmem:[#allocation3 + $0x2a8] sm:$0xff]
    %v7891 = vld [vmem:[#allocation3 + $0x2b0] sm:$0xff]
    %v7892 = vld [vmem:[#allocation3 + $0x2b8] sm:$0xff]
    %v7893 = vld [vmem:[#allocation3 + $0x2c0] sm:$0xff]
    %v7894 = vld [vmem:[#allocation3 + $0x2c8] sm:$0xff]
    %v7895 = vld [vmem:[#allocation3 + $0x2d0] sm:$0xff]
    %v7896 = vld [vmem:[#allocation3 + $0x2d8] sm:$0xff]
    %v7897 = vld [vmem:[#allocation3 + $0x2e0] sm:$0xff]
    %v7898 = vld [vmem:[#allocation3 + $0x2e8] sm:$0xff]
    %v7899 = vld [vmem:[#allocation3 + $0x2f0] sm:$0xff]
    %v7900 = vld [vmem:[#allocation3 + $0x2f8] sm:$0xff]
    %v7901 = vld [vmem:[#allocation14] sm:$0x7]
    %v7903 = vlaneseq
    %v7904 = vshrl.u32 %v7903, 7
    %v7905 = vsub.s32 0, %v7904
    %v7906 = vrot.slane %v7901, %v7905
    %v7907 = vlaneseq
    %v7908 = vshrl.u32 %v7907, 7
    %v7909 = vsub.s32 1, %v7908
    %v7910 = vrot.slane %v7901, %v7909
    %v7911 = vlaneseq
    %v7912 = vshrl.u32 %v7911, 7
    %v7913 = vsub.s32 2, %v7912
    %v7914 = vrot.slane %v7901, %v7913
    %7918 = vmatprep.subr.bf16.mxu0 %v7806
    %7919 = vmatpush1.bf16.msra.mxu0 %v7805
    %7920 = vmatprep.subr.bf16.mxu0 %v7809
    %7921 = vmatpush1.bf16.msra.mxu0 %v7808
    %7922 = vmatprep.subr.bf16.mxu0 %v7812
    %7923 = vmatpush1.bf16.msra.mxu0 %v7811
    %7924 = vmatprep.subr.bf16.mxu0 %v7815
    %7925 = vmatpush1.bf16.msra.mxu0 %v7814
    %7926 = vmatprep.subr.bf16.mxu0 %v7818
    %7927 = vmatpush1.bf16.msra.mxu0 %v7817
    %7928 = vmatprep.subr.bf16.mxu0 %v7821
    %7929 = vmatpush1.bf16.msra.mxu0 %v7820
    %7930 = vmatprep.subr.bf16.mxu0 %v7824
    %7931 = vmatpush1.bf16.msra.mxu0 %v7823
    %7932 = vmatprep.subr.bf16.mxu0 %v7827
    %7933 = vmatpush1.bf16.msra.mxu0 %v7826
    %7934 = vmatprep.subr.bf16.mxu0 %v7830
    %7935 = vmatpush1.bf16.msra.mxu0 %v7829
    %7936 = vmatprep.subr.bf16.mxu0 %v7833
    %7937 = vmatpush1.bf16.msra.mxu0 %v7832
    %7938 = vmatprep.subr.bf16.mxu0 %v7836
    %7939 = vmatpush1.bf16.msra.mxu0 %v7835
    %7940 = vmatprep.subr.bf16.mxu0 %v7839
    %7941 = vmatpush1.bf16.msra.mxu0 %v7838
    %7942 = vmatprep.subr.bf16.mxu0 %v7842
    %7943 = vmatpush1.bf16.msra.mxu0 %v7841
    %7944 = vmatprep.subr.bf16.mxu0 %v7845
    %7945 = vmatpush1.bf16.msra.mxu0 %v7844
    %7946 = vmatprep.subr.bf16.mxu0 %v7848
    %7947 = vmatpush1.bf16.msra.mxu0 %v7847
    %7948 = vmatprep.subr.bf16.mxu0 %v7851
    %7949 = vmatpush1.bf16.msra.mxu0 %v7850
    %7950 = vmatprep.mubr.bf16.mxu0 %v7802
    %7951 = vmatmul.mubr.bf16.gmra.mrb[0].mxu0 %v7801
    %v7952 = vpop.f32.mrb[0].mxu0
    %v7953 = vadd.f32 %v7906, %v7952
    %v7954 = vpop.f32.mrb[0].mxu0
    %v7955 = vadd.f32 %v7910, %v7954
    %v7956 = vpop.f32.mrb[0].mxu0
    %v7957 = vpop.f32.mrb[0].mxu0
    %7958 = vdwg.mxu0
    %7959 = vmatprep.subr.bf16.mxu0 %v7854
    %7960 = vmatpush1.bf16.msra.mxu0 %v7853
    %7961 = vmatprep.subr.bf16.mxu0 %v7857
    %7962 = vmatpush1.bf16.msra.mxu0 %v7856
    %7963 = vmatprep.subr.bf16.mxu0 %v7860
    %7964 = vmatpush1.bf16.msra.mxu0 %v7859
    %7965 = vmatprep.subr.bf16.mxu0 %v7863
    %7966 = vmatpush1.bf16.msra.mxu0 %v7862
    %7967 = vmatprep.subr.bf16.mxu0 %v7866
    %7968 = vmatpush1.bf16.msra.mxu0 %v7865
    %7969 = vmatprep.subr.bf16.mxu0 %v7869
    %7970 = vmatpush1.bf16.msra.mxu0 %v7868
    %7971 = vmatprep.subr.bf16.mxu0 %v7872
    %7972 = vmatpush1.bf16.msra.mxu0 %v7871
    %7973 = vmatprep.subr.bf16.mxu0 %v7875
    %7974 = vmatpush1.bf16.msra.mxu0 %v7874
    %7975 = vmatprep.subr.bf16.mxu0 %v7878
    %7976 = vmatpush1.bf16.msra.mxu0 %v7877
    %7977 = vmatprep.subr.bf16.mxu0 %v7881
    %7978 = vmatpush1.bf16.msra.mxu0 %v7880
    %7979 = vmatprep.subr.bf16.mxu0 %v7884
    %7980 = vmatpush1.bf16.msra.mxu0 %v7883
    %7981 = vmatprep.subr.bf16.mxu0 %v7887
    %7982 = vmatpush1.bf16.msra.mxu0 %v7886
    %7983 = vmatprep.subr.bf16.mxu0 %v7890
    %7984 = vmatpush1.bf16.msra.mxu0 %v7889
    %7985 = vmatprep.subr.bf16.mxu0 %v7893
    %7986 = vmatpush1.bf16.msra.mxu0 %v7892
    %7987 = vmatprep.subr.bf16.mxu0 %v7896
    %7988 = vmatpush1.bf16.msra.mxu0 %v7895
    %7989 = vmatprep.subr.bf16.mxu0 %v7899
    %7990 = vmatpush1.bf16.msra.mxu0 %v7898
    %7991 = vmatprep.mubr.bf16.mxu0 %v7804
    %7992 = vmatmul.mubr.bf16.gmra.mrb[0].mxu0 %v7803
    %v7993 = vpop.f32.mrb[0].mxu0
    %v7994 = vadd.f32 %v7953, %v7993
    %v7995 = vpop.f32.mrb[0].mxu0
    %v7996 = vadd.f32 %v7955, %v7995
    %v7997 = vpop.f32.mrb[0].mxu0
    %v7998 = vpop.f32.mrb[0].mxu0
    %7999 = vdwg.mxu0
    %8000 = vmatprep.subr.bf16.mxu0 0
    %8001 = vmatpush1.bf16.msra.mxu0 %v7807
    %8002 = vmatprep.subr.bf16.mxu0 0
    %8003 = vmatpush1.bf16.msra.mxu0 %v7810
    %8004 = vmatprep.subr.bf16.mxu0 0
    %8005 = vmatpush1.bf16.msra.mxu0 %v7813
    %8006 = vmatprep.subr.bf16.mxu0 0
    %8007 = vmatpush1.bf16.msra.mxu0 %v7816
    %8008 = vmatprep.subr.bf16.mxu0 0
    %8009 = vmatpush1.bf16.msra.mxu0 %v7819
    %8010 = vmatprep.subr.bf16.mxu0 0
    %8011 = vmatpush1.bf16.msra.mxu0 %v7822
    %8012 = vmatprep.subr.bf16.mxu0 0
    %8013 = vmatpush1.bf16.msra.mxu0 %v7825
    %8014 = vmatprep.subr.bf16.mxu0 0
    %8015 = vmatpush1.bf16.msra.mxu0 %v7828
    %8016 = vmatprep.subr.bf16.mxu0 0
    %8017 = vmatpush1.bf16.msra.mxu0 %v7831
    %8018 = vmatprep.subr.bf16.mxu0 0
    %8019 = vmatpush1.bf16.msra.mxu0 %v7834
    %8020 = vmatprep.subr.bf16.mxu0 0
    %8021 = vmatpush1.bf16.msra.mxu0 %v7837
    %8022 = vmatprep.subr.bf16.mxu0 0
    %8023 = vmatpush1.bf16.msra.mxu0 %v7840
    %8024 = vmatprep.subr.bf16.mxu0 0
    %8025 = vmatpush1.bf16.msra.mxu0 %v7843
    %8026 = vmatprep.subr.bf16.mxu0 0
    %8027 = vmatpush1.bf16.msra.mxu0 %v7846
    %8028 = vmatprep.subr.bf16.mxu0 0
    %8029 = vmatpush1.bf16.msra.mxu0 %v7849
    %8030 = vmatprep.subr.bf16.mxu0 0
    %8031 = vmatpush1.bf16.msra.mxu0 %v7852
    %8032 = vmatprep.mubr.bf16.mxu0 %v7802
    %8033 = vmatmul.mubr.bf16.gmra.mrb[0].mxu0 %v7801
    %v8034 = vpop.f32.mrb[0].mxu0
    %v8035 = vadd.f32 %v7914, %v8034
    %v8036 = vpop.f32.mrb[0].mxu0
    %v8037 = vpop.f32.mrb[0].mxu0
    %v8038 = vpop.f32.mrb[0].mxu0
    %8039 = vdwg.mxu0
    %8040 = vmatprep.subr.bf16.mxu0 0
    %8041 = vmatpush1.bf16.msra.mxu0 %v7855
    %8042 = vmatprep.subr.bf16.mxu0 0
    %8043 = vmatpush1.bf16.msra.mxu0 %v7858
    %8044 = vmatprep.subr.bf16.mxu0 0
    %8045 = vmatpush1.bf16.msra.mxu0 %v7861
    %8046 = vmatprep.subr.bf16.mxu0 0
    %8047 = vmatpush1.bf16.msra.mxu0 %v7864
    %8048 = vmatprep.subr.bf16.mxu0 0
    %8049 = vmatpush1.bf16.msra.mxu0 %v7867
    %8050 = vmatprep.subr.bf16.mxu0 0
    %8051 = vmatpush1.bf16.msra.mxu0 %v7870
    %8052 = vmatprep.subr.bf16.mxu0 0
    %8053 = vmatpush1.bf16.msra.mxu0 %v7873
    %8054 = vmatprep.subr.bf16.mxu0 0
    %8055 = vmatpush1.bf16.msra.mxu0 %v7876
    %8056 = vmatprep.subr.bf16.mxu0 0
    %8057 = vmatpush1.bf16.msra.mxu0 %v7879
    %8058 = vmatprep.subr.bf16.mxu0 0
    %8059 = vmatpush1.bf16.msra.mxu0 %v7882
    %8060 = vmatprep.subr.bf16.mxu0 0
    %8061 = vmatpush1.bf16.msra.mxu0 %v7885
    %8062 = vmatprep.subr.bf16.mxu0 0
    %8063 = vmatpush1.bf16.msra.mxu0 %v7888
    %8064 = vmatprep.subr.bf16.mxu0 0
    %8065 = vmatpush1.bf16.msra.mxu0 %v7891
    %8066 = vmatprep.subr.bf16.mxu0 0
    %8067 = vmatpush1.bf16.msra.mxu0 %v7894
    %8068 = vmatprep.subr.bf16.mxu0 0
    %8069 = vmatpush1.bf16.msra.mxu0 %v7897
    %8070 = vmatprep.subr.bf16.mxu0 0
    %8071 = vmatpush1.bf16.msra.mxu0 %v7900
    %8072 = vmatprep.mubr.bf16.mxu0 %v7804
    %8073 = vmatmul.mubr.bf16.gmra.mrb[0].mxu0 %v7803
    %v8074 = vpop.f32.mrb[0].mxu0
    %v8075 = vadd.f32 %v8035, %v8074
    %v8076 = vpop.f32.mrb[0].mxu0
    %v8077 = vpop.f32.mrb[0].mxu0
    %v8078 = vpop.f32.mrb[0].mxu0
    %8079 = vdwg.mxu0
    %v8080 = vxor.u32 %v7994, 2147483648
    %v8081 = vxor.u32 %v7996, 2147483648
    %v8082 = vxor.u32 %v8075, 2147483648
    %v8083 = vmul.f32 %v8080, 1.442695
    %v8084 = vpow.pop %v8083
    %v8085 = vmul.f32 %v8081, 1.442695
    %v8086 = vpow.pop %v8085
    %v8087 = vmul.f32 %v8082, 1.442695
    %v8088 = vpow.pop %v8087
    %v8089 = vadd.f32 %v8084, 1.0
    %v8090 = vadd.f32 %v8086, 1.0
    %v8091 = vadd.f32 %v8088, 1.0
    %v8092 = vrcp.pop %v8089
    %v8093 = vmul.f32 1.0, %v8092
    %v8094 = vrcp.pop %v8090
    %v8095 = vmul.f32 1.0, %v8094
    %v8096 = vrcp.pop %v8091
    %v8097 = vmul.f32 1.0, %v8096
    %s8098 = smul.u32 4, 48
    %s8099 = smul.u32 %s8098, 1
    %s8100 = sshll.u32 %s8099, 4
    %8101 = dma.done %s177, %s8100
    %v8102 = vpack.c.bf16 %v8093, %v8093
    %v8103 = vpack.c.bf16 %v8095, %v8095
    %v8104 = vpack.c.bf16 %v8097, %v8097
    %v8105 = vld [vmem:[#allocation4] sm:$0xff]
    %v8106 = vld [vmem:[#allocation4 + $0x8] sm:$0xff]
    %v8107 = vld [vmem:[#allocation4 + $0x10] sm:$0xff]
    %v8108 = vld [vmem:[#allocation4 + $0x18] sm:$0xff]
    %v8109 = vld [vmem:[#allocation4 + $0x20] sm:$0xff]
    %v8110 = vld [vmem:[#allocation4 + $0x28] sm:$0xff]
    %v8111 = vld [vmem:[#allocation4 + $0x30] sm:$0xff]
    %v8112 = vld [vmem:[#allocation4 + $0x38] sm:$0xff]
    %v8113 = vld [vmem:[#allocation4 + $0x40] sm:$0xff]
    %v8114 = vld [vmem:[#allocation4 + $0x48] sm:$0xff]
    %v8115 = vld [vmem:[#allocation4 + $0x50] sm:$0xff]
    %v8116 = vld [vmem:[#allocation4 + $0x58] sm:$0xff]
    %v8117 = vld [vmem:[#allocation4 + $0x60] sm:$0xff]
    %v8118 = vld [vmem:[#allocation4 + $0x68] sm:$0xff]
    %v8119 = vld [vmem:[#allocation4 + $0x70] sm:$0xff]
    %v8120 = vld [vmem:[#allocation4 + $0x78] sm:$0xff]
    %v8121 = vld [vmem:[#allocation4 + $0x80] sm:$0xff]
    %v8122 = vld [vmem:[#allocation4 + $0x88] sm:$0xff]
    %v8123 = vld [vmem:[#allocation4 + $0x90] sm:$0xff]
    %v8124 = vld [vmem:[#allocation4 + $0x98] sm:$0xff]
    %v8125 = vld [vmem:[#allocation4 + $0xa0] sm:$0xff]
    %v8126 = vld [vmem:[#allocation4 + $0xa8] sm:$0xff]
    %v8127 = vld [vmem:[#allocation4 + $0xb0] sm:$0xff]
    %v8128 = vld [vmem:[#allocation4 + $0xb8] sm:$0xff]
    %v8129 = vld [vmem:[#allocation15] sm:$0x1]
    %v8131 = vlaneseq
    %v8132 = vshrl.u32 %v8131, 7
    %v8133 = vsub.s32 0, %v8132
    %v8134 = vrot.slane %v8129, %v8133
    %8136 = vmatprep.subr.bf16.mxu0 0
    %8137 = vmatpush1.bf16.msra.mxu0 %v8105
    %8138 = vmatprep.subr.bf16.mxu0 0
    %8139 = vmatpush1.bf16.msra.mxu0 %v8106
    %8140 = vmatprep.subr.bf16.mxu0 0
    %8141 = vmatpush1.bf16.msra.mxu0 %v8107
    %8142 = vmatprep.subr.bf16.mxu0 0
    %8143 = vmatpush1.bf16.msra.mxu0 %v8108
    %8144 = vmatprep.subr.bf16.mxu0 0
    %8145 = vmatpush1.bf16.msra.mxu0 %v8109
    %8146 = vmatprep.subr.bf16.mxu0 0
    %8147 = vmatpush1.bf16.msra.mxu0 %v8110
    %8148 = vmatprep.subr.bf16.mxu0 0
    %8149 = vmatpush1.bf16.msra.mxu0 %v8111
    %8150 = vmatprep.subr.bf16.mxu0 0
    %8151 = vmatpush1.bf16.msra.mxu0 %v8112
    %8152 = vmatprep.subr.bf16.mxu0 0
    %8153 = vmatpush1.bf16.msra.mxu0 %v8113
    %8154 = vmatprep.subr.bf16.mxu0 0
    %8155 = vmatpush1.bf16.msra.mxu0 %v8114
    %8156 = vmatprep.subr.bf16.mxu0 0
    %8157 = vmatpush1.bf16.msra.mxu0 %v8115
    %8158 = vmatprep.subr.bf16.mxu0 0
    %8159 = vmatpush1.bf16.msra.mxu0 %v8116
    %8160 = vmatprep.subr.bf16.mxu0 0
    %8161 = vmatpush1.bf16.msra.mxu0 %v8117
    %8162 = vmatprep.subr.bf16.mxu0 0
    %8163 = vmatpush1.bf16.msra.mxu0 %v8118
    %8164 = vmatprep.subr.bf16.mxu0 0
    %8165 = vmatpush1.bf16.msra.mxu0 %v8119
    %8166 = vmatprep.subr.bf16.mxu0 0
    %8167 = vmatpush1.bf16.msra.mxu0 %v8120
    %8168 = vmatprep.mubr.bf16.mxu0 %v8103
    %8169 = vmatmul.mubr.bf16.gmra.mrb[0].mxu0 %v8102
    %v8170 = vpop.f32.mrb[0].mxu0
    %v8171 = vadd.f32 %v8134, %v8170
    %v8172 = vpop.f32.mrb[0].mxu0
    %v8173 = vpop.f32.mrb[0].mxu0
    %v8174 = vpop.f32.mrb[0].mxu0
    %8175 = vdwg.mxu0
    %8176 = vmatprep.subr.bf16.mxu0 0
    %8177 = vmatpush1.bf16.msra.mxu0 %v8121
    %8178 = vmatprep.subr.bf16.mxu0 0
    %8179 = vmatpush1.bf16.msra.mxu0 %v8122
    %8180 = vmatprep.subr.bf16.mxu0 0
    %8181 = vmatpush1.bf16.msra.mxu0 %v8123
    %8182 = vmatprep.subr.bf16.mxu0 0
    %8183 = vmatpush1.bf16.msra.mxu0 %v8124
    %8184 = vmatprep.subr.bf16.mxu0 0
    %8185 = vmatpush1.bf16.msra.mxu0 %v8125
    %8186 = vmatprep.subr.bf16.mxu0 0
    %8187 = vmatpush1.bf16.msra.mxu0 %v8126
    %8188 = vmatprep.subr.bf16.mxu0 0
    %8189 = vmatpush1.bf16.msra.mxu0 %v8127
    %8190 = vmatprep.subr.bf16.mxu0 0
    %8191 = vmatpush1.bf16.msra.mxu0 %v8128
    %8192 = vmatprep.subr.bf16.mxu0 0
    %8193 = vmatpush1.bf16.msra.mxu0 0
    %8194 = vmatprep.subr.bf16.mxu0 0
    %8195 = vmatpush1.bf16.msra.mxu0 0
    %8196 = vmatprep.subr.bf16.mxu0 0
    %8197 = vmatpush1.bf16.msra.mxu0 0
    %8198 = vmatprep.subr.bf16.mxu0 0
    %8199 = vmatpush1.bf16.msra.mxu0 0
    %8200 = vmatprep.subr.bf16.mxu0 0
    %8201 = vmatpush1.bf16.msra.mxu0 0
    %8202 = vmatprep.subr.bf16.mxu0 0
    %8203 = vmatpush1.bf16.msra.mxu0 0
    %8204 = vmatprep.subr.bf16.mxu0 0
    %8205 = vmatpush1.bf16.msra.mxu0 0
    %8206 = vmatprep.subr.bf16.mxu0 0
    %8207 = vmatpush1.bf16.msra.mxu0 0
    %8208 = vmatprep.mubr.bf16.mxu0 0
    %8209 = vmatmul.mubr.bf16.gmra.mrb[0].mxu0 %v8104
    %v8210 = vpop.f32.mrb[0].mxu0
    %v8211 = vadd.f32 %v8171, %v8210
    %v8212 = vpop.f32.mrb[0].mxu0
    %v8213 = vpop.f32.mrb[0].mxu0
    %v8214 = vpop.f32.mrb[0].mxu0
    %8215 = vdwg.mxu0
    %8216 = vst [vmem:[#allocation20] sm:$0xff] %v8211
    // Predicated region
    $region58: #{tpu_custom_call.1} parent=1 // pred_check
      _
    $region59: #{tpu_custom_call.1} parent=1 // pred_check_branch
      %8218 = sbr.rel (0) target = $region61
    $region60: #{tpu_custom_call.1} parent=1 // pred_region
      %s8220 = ssub.s32 512, 512
      %8221 = vsyncadd [#allocation8], %s8220
      %s8223 = sshll.u32 [#allocation17], 4
      %s8224 = int_to_ptr.vmem [resolvable:$true] %s8223
      %8226 = dma.vmem_to_hbm [thread:$0]  %s8224, 512, %s10, [#allocation8]
    $region61: #{tpu_custom_call.1} parent=1 // pred_fallthru
      _
    // Predicated region
    $region62: #{tpu_custom_call.1} parent=1 // pred_check
      _
    $region63: #{tpu_custom_call.1} parent=1 // pred_check_branch
      %8228 = sbr.rel (0) target = $region65
    $region64: #{tpu_custom_call.1} parent=1 // pred_region
      %s8230 = ssub.s32 512, 512
      %8231 = vsyncadd [#allocation19], %s8230
      %s8233 = sshll.u32 [#allocation18], 4
      %s8234 = int_to_ptr.vmem [resolvable:$true] %s8233
      %8236 = dma.vmem_to_hbm [thread:$0]  %s8234, 512, %s11, [#allocation19]
    $region65: #{tpu_custom_call.1} parent=1 // pred_fallthru
      _
    // Predicated region
    $region66: #{tpu_custom_call.1} parent=1 // pred_check
      _
    $region67: #{tpu_custom_call.1} parent=1 // pred_check_branch
      %8238 = sbr.rel (0) target = $region69
    $region68: #{tpu_custom_call.1} parent=1 // pred_region
      %s8240 = ssub.s32 128, 128
      %8241 = vsyncadd [#allocation19], %s8240
      %s8243 = sshll.u32 [#allocation20], 4
      %s8244 = int_to_ptr.vmem [resolvable:$true] %s8243
      %8246 = dma.vmem_to_hbm [thread:$0]  %s8244, 128, %s12, [#allocation19]
    $region69: #{tpu_custom_call.1} parent=1 // pred_fallthru
      _
    // Predicated region
    $region70: #{tpu_custom_call.1} parent=1 // pred_check
      _
    $region71: #{tpu_custom_call.1} parent=1 // pred_check_branch
      %8248 = sbr.rel (0) target = $region73
    $region72: #{tpu_custom_call.1} parent=1 // pred_region
      %8249 = dma.done [#allocation8], 512
    $region73: #{tpu_custom_call.1} parent=1 // pred_fallthru
      _
    // Predicated region
    $region74: #{tpu_custom_call.1} parent=1 // pred_check
      _
    $region75: #{tpu_custom_call.1} parent=1 // pred_check_branch
      %8251 = sbr.rel (0) target = $region77
    $region76: #{tpu_custom_call.1} parent=1 // pred_region
      %8252 = dma.done [#allocation19], 512
    $region77: #{tpu_custom_call.1} parent=1 // pred_fallthru
      _
    // Predicated region
    $region78: #{tpu_custom_call.1} parent=1 // pred_check
      _
    $region79: #{tpu_custom_call.1} parent=1 // pred_check_branch
      %8254 = sbr.rel (0) target = $region81
    $region80: #{tpu_custom_call.1} parent=1 // pred_region
      %8255 = dma.done [#allocation19], 128
    $region81: #{tpu_custom_call.1} parent=1 // pred_fallthru
      _
    %8256 = vsyncpa [#allocation7], 1
    %8257 = vsyncpa [#allocation10], 1
    %8258 = vsyncpa [#allocation13], 1
    %8259 = vsyncpa [#allocation16], 1
    %8260 = vsyncpa [#allocation8], 1
    %8261 = vsyncpa [#allocation19], 1
  %8262 = vsyncmov [#allocation5]
  %s8263 = vpop.sfrf %8262
  %p8264 = scmp.eq.s32.totalorder %s8263, 0
  %p8265 = pneg %p8264
  %8267 = shalt.err (%p8265)
  %s8268 = scalar_lea.sflag [#allocation5], 1
  %8269 = vsyncmov %s8268
  %s8270 = vpop.sfrf %8269
  %p8271 = scmp.eq.s32.totalorder %s8270, 0
  %p8272 = pneg %p8271
  %8274 = shalt.err (%p8272)
  %s8275 = scalar_lea.sflag [#allocation5], 2
  %8276 = vsyncmov %s8275
  %s8277 = vpop.sfrf %8276
  %p8278 = scmp.eq.s32.totalorder %s8277, 0
  %p8279 = pneg %p8278
  %8281 = shalt.err (%p8279)

</llo_original>
